<compile_context>
chip_gen: v5e
topology: v5e:2x2
jax: 0.10.0
libtpu: 0.0.40
codegen_flags: <defaults>
</compile_context>

<pallas_src>
import numpy as np
import jax
import jax.numpy as jnp
from jax import lax
from jax.experimental import pallas as pl
from jax.experimental.pallas import tpu as pltpu


# ------------------------------ fused kernel -------------------------------

def _model_c_kernel(x_ref, t1_ref, b1_ref, t2_ref, b2_ref,
                    w3_ref, b3_ref, w4_ref, b4_ref,
                    out_ref, xw_ref, p1_ref):
    f32, bf16 = jnp.float32, jnp.bfloat16
    tb = x_ref.shape[1]                       # batch tile (always a multiple of 8)

    # Repack the (28, tb, 28) image block into a 2-D (28*tb, 28) slab with rows
    # ordered (h, b): every conv1 row tap is then a contiguous aligned row slice.
    for h in range(28):
        xw_ref[h * tb:(h + 1) * tb, :] = x_ref[h]

    # ---- conv1 (1->32, 5x5, valid) + bias: 5 accumulated row-tap MXU matmuls
    # against a Toeplitz RHS.  Rows = (h, b); lanes = (w%2)*384 + (w//2)*32 + c.
    acc1 = jnp.zeros((24 * tb, 768), f32) + b1_ref[...]
    for i in range(5):
        lhs = xw_ref[i * tb:(i + 24) * tb, :].astype(bf16)
        acc1 = acc1 + jnp.dot(lhs, t1_ref[i], preferred_element_type=f32)
    c1 = jnp.maximum(acc1, 0.0)               # ReLU

    # ---- pool1 2x2/2: H-max over aligned row-pair slices, then W-max over the
    # 384-lane halves (even/odd w separated by the lane permutation -> no gather).
    for r in range(12):
        hm = jnp.maximum(c1[(2 * r) * tb:(2 * r + 1) * tb, :],
                         c1[(2 * r + 1) * tb:(2 * r + 2) * tb, :])
        p1_ref[r * tb:(r + 1) * tb, :] = jnp.maximum(hm[:, :384], hm[:, 384:])

    # ---- conv2 (32->32, 5x5, valid) + bias: 5 accumulated row-tap matmuls with
    # K = 12*32 = 384.  Output lanes = (w%2)*128 + (w//2)*32 + cout.
    acc2 = jnp.zeros((8 * tb, 256), f32) + b2_ref[...]
    for i in range(5):
        lhs = p1_ref[i * tb:(i + 8) * tb, :].astype(bf16)
        acc2 = acc2 + jnp.dot(lhs, t2_ref[i], preferred_element_type=f32)
    c2 = jnp.maximum(acc2, 0.0)               # ReLU

    # ---- pool2 fused with the NCHW flatten: build the lane-dense (tb, 512)
    # fc1 input directly (lane = h*128 + w*32 + c; permutation folded into w3).
    slabs = []
    for h in range(4):
        hm = jnp.maximum(c2[(2 * h) * tb:(2 * h + 1) * tb, :],
                         c2[(2 * h + 1) * tb:(2 * h + 2) * tb, :])
        slabs.append(jnp.maximum(hm[:, :128], hm[:, 128:]))
    fc_in = jnp.concatenate(slabs, axis=1)    # (tb, 512)

    # ---- fc1 + ReLU: single (tb,512)x(512,1024) MXU matmul.
    hid = jnp.dot(fc_in.astype(bf16), w3_ref[...],
                  preferred_element_type=f32) + b3_ref[...]
    hid = jnp.maximum(hid, 0.0)
    # TODO(synk): Dropout2d(0.4) is identity in eval mode; train-mode dropout not implemented.

    # ---- fc2 (kept f32: tiny weight, preserves final-logit accuracy).
    out = jnp.dot(hid, w4_ref[...], preferred_element_type=f32) + b4_ref[...]
    out_ref[...] = out.astype(out_ref.dtype)


# ------------------------------- wrapper ------------------------------------

def _batch_plan(B):
    """Pad batch to a multiple of 8 and pick a tile: prefer tb<=32 with >=2 steps."""
    Bp = ((B + 7) // 8) * 8
    for tb in (32, 16, 8):
        if Bp % tb == 0 and Bp // tb >= 2:
            return Bp, tb
    return Bp, min(Bp, 32)


def model_c_forward(x_nchw, kp):
    """x_nchw: (B, 1, 28, 28) float32; kp: kernel-layout params from prepare_params."""
    B = x_nchw.shape[0]
    Bp, tb = _batch_plan(B)
    x = x_nchw.reshape(B, 28, 28)             # Cin == 1: pure relabel
    if Bp != B:
        x = jnp.pad(x, ((0, Bp - B), (0, 0), (0, 0)))
    x_t = jnp.transpose(x, (1, 0, 2))         # (28, Bp, 28): H-major input

    const2 = lambda b: (0, 0)
    const3 = lambda b: (0, 0, 0)

    out = pl.pallas_call(
        _model_c_kernel,
        out_shape=jax.ShapeDtypeStruct((Bp, 10), jnp.float32),
        grid=(Bp // tb,),
        in_specs=[
            pl.BlockSpec((28, tb, 28), lambda b: (0, b, 0)),   # image tile (H, btile, W)
            pl.BlockSpec((5, 28, 768), const3),                # conv1 Toeplitz (bf16)
            pl.BlockSpec((1, 768), const2),                    # conv1 bias (lane-tiled)
            pl.BlockSpec((5, 384, 256), const3),               # conv2 Toeplitz (bf16)
            pl.BlockSpec((1, 256), const2),                    # conv2 bias (lane-tiled)
            pl.BlockSpec((512, 1024), const2),                 # fc1 weight (perm folded, bf16)
            pl.BlockSpec((1, 1024), const2),                   # fc1 bias
            pl.BlockSpec((1024, 10), const2),                  # fc2 weight (f32)
            pl.BlockSpec((1, 10), const2),                     # fc2 bias
        ],
        out_specs=pl.BlockSpec((tb, 10), lambda b: (b, 0)),
        scratch_shapes=[
            pltpu.VMEM((28 * tb, 28), jnp.float32),            # repacked image slab
            pltpu.VMEM((12 * tb, 384), jnp.float32),           # pooled conv1 activations
        ],
        compiler_params=pltpu.CompilerParams(
            dimension_semantics=("parallel",),                 # shard batch over v7x's 2 TCs
            vmem_limit_bytes=48 * 1024 * 1024),
    )(x_t, kp['t1'], kp['b1'], kp['t2'], kp['b2'],
      kp['fc1_w'], kp['fc1_b'], kp['fc2_w'], kp['fc2_b'])
    return out[:B]


# ------------------------ one-time parameter re-layout -----------------------

def prepare_params(p):
    """PyTorch-layout f32 params -> kernel-layout params (done ONCE, not per call)."""
    f32, bf16 = jnp.float32, jnp.bfloat16
    w1 = np.asarray(p['conv1_w'], np.float32)      # (32, 1, 5, 5)  [cout, cin, kh, kw]
    w2 = np.asarray(p['conv2_w'], np.float32)      # (32, 32, 5, 5)

    # conv1 Toeplitz: t1[i, w_in, lane] = w1[c, 0, i, w_in - w] for 0 <= w_in-w <= 4,
    # with lane = (w%2)*384 + (w//2)*32 + c  (even/odd w split -> free W-pooling).
    t1 = np.zeros((5, 28, 768), np.float32)
    for i in range(5):
        for w in range(24):
            lane0 = (w % 2) * 384 + (w // 2) * 32
            for j in range(5):
                t1[i, w + j, lane0:lane0 + 32] = w1[:, 0, i, j]

    # conv2 Toeplitz: t2[i, w_in*32 + cin, lane] = w2[cout, cin, i, w_in - w],
    # with lane = (w%2)*128 + (w//2)*32 + cout.
    t2 = np.zeros((5, 384, 256), np.float32)
    for i in range(5):
        for w in range(8):
            lane0 = (w % 2) * 128 + (w // 2) * 32
            for j in range(5):
                wi = w + j
                t2[i, wi * 32:(wi + 1) * 32, lane0:lane0 + 32] = w2[:, :, i, j].T

    b1 = np.tile(np.asarray(p['conv1_b'], np.float32), 24).reshape(1, 768)
    b2 = np.tile(np.asarray(p['conv2_b'], np.float32), 8).reshape(1, 256)

    # torch.flatten on NCHW => feature index c*16 + h*4 + w; our fc1 input lane
    # is h*128 + w*32 + c -> fold the permutation into the fc1 weight.
    fc1_w = (np.asarray(p['fc1_w'], np.float32)    # (1024, 512) [n, c*16+h*4+w]
             .reshape(1024, 32, 4, 4)              # [n, c, h, w]
             .transpose(2, 3, 1, 0)                # [h, w, c, n]
             .reshape(512, 1024))
    fc1_b = np.asarray(p['fc1_b'], np.float32).reshape(1, 1024)
    fc2_w = np.asarray(p['fc2_w'], np.float32).T   # (1024, 10)
    fc2_b = np.asarray(p['fc2_b'], np.float32).reshape(1, 10)

    return dict(t1=jnp.asarray(t1, bf16), b1=jnp.asarray(b1, f32),
                t2=jnp.asarray(t2, bf16), b2=jnp.asarray(b2, f32),
                fc1_w=jnp.asarray(fc1_w, bf16), fc1_b=jnp.asarray(fc1_b, f32),
                fc2_w=jnp.asarray(fc2_w, f32), fc2_b=jnp.asarray(fc2_b, f32))


def init_params(key):
    """Deterministic PyTorch-style (uniform +/- 1/sqrt(fan_in)) init, torch layouts."""
    ks = jax.random.split(key, 8)

    def u(k, shape, fan_in):
        bound = 1.0 / float(fan_in) ** 0.5
        return jax.random.uniform(k, shape, jnp.float32, -bound, bound)

    return {
        'conv1_w': u(ks[0], (32, 1, 5, 5), 1 * 5 * 5),
        'conv1_b': u(ks[1], (32,), 1 * 5 * 5),
        'conv2_w': u(ks[2], (32, 32, 5, 5), 32 * 5 * 5),
        'conv2_b': u(ks[3], (32,), 32 * 5 * 5),
        'fc1_w':   u(ks[4], (1024, 512), 512),
        'fc1_b':   u(ks[5], (1024,), 512),
        'fc2_w':   u(ks[6], (10, 1024), 1024),
        'fc2_b':   u(ks[7], (10,), 1024),
    }


# ------------------------- pure-JAX reference (f32) --------------------------

def reference_forward(x, p):
    dn = ('NCHW', 'OIHW', 'NCHW')
    y = lax.conv_general_dilated(x, p['conv1_w'], (1, 1), 'VALID', dimension_numbers=dn)
    y = jax.nn.relu(y + p['conv1_b'][None, :, None, None])
    y = lax.reduce_window(y, -jnp.inf, lax.max, (1, 1, 2, 2), (1, 1, 2, 2), 'VALID')
    y = lax.conv_general_dilated(y, p['conv2_w'], (1, 1), 'VALID', dimension_numbers=dn)
    y = jax.nn.relu(y + p['conv2_b'][None, :, None, None])
    y = lax.reduce_window(y, -jnp.inf, lax.max, (1, 1, 2, 2), (1, 1, 2, 2), 'VALID')
    y = y.reshape(y.shape[0], -1)                       # channel-major flatten (NCHW)
    y = jax.nn.relu(y @ p['fc1_w'].T + p['fc1_b'])
    y = y @ p['fc2_w'].T + p['fc2_b']
    return y


if __name__ == "__main__":
    key = jax.random.PRNGKey(0)
    k_x, k_p = jax.random.split(key)
    # fc1 expects 512 = 32*4*4 features => 1x28x28 MNIST-shaped inputs.
    x = jax.random.normal(k_x, (2, 1, 28, 28), dtype=jnp.float32)
    params = init_params(k_p)
    kparams = prepare_params(params)                    # one-time weight re-layout / bf16 cast

    fwd = jax.jit(model_c_forward)
    out = fwd(x, kparams)
    jax.block_until_ready(out)
    assert out.shape == (2, 10) and out.dtype == jnp.float32

    ref = reference_forward(x, params)
    err = jnp.max(jnp.abs(out - ref))
    assert jnp.allclose(out, ref, atol=3e-2, rtol=3e-2), (
        f"mismatch vs reference, max abs diff = {err}")
    print("KERNEL_OK")
</pallas_src>

<mosaic_0001>
module attributes {stable_mosaic.version = 11 : i64} {
  func.func @_model_c_kernel(%arg0: i32, %arg1: memref<28x8x28xf32, #tpu.memory_space<vmem>>, %arg2: memref<5x28x768xbf16, #tpu.memory_space<vmem>>, %arg3: memref<1x768xf32, #tpu.memory_space<vmem>>, %arg4: memref<5x384x256xbf16, #tpu.memory_space<vmem>>, %arg5: memref<1x256xf32, #tpu.memory_space<vmem>>, %arg6: memref<512x1024xbf16, #tpu.memory_space<vmem>>, %arg7: memref<1x1024xf32, #tpu.memory_space<vmem>>, %arg8: memref<1024x10xf32, #tpu.memory_space<vmem>>, %arg9: memref<1x10xf32, #tpu.memory_space<vmem>>, %arg10: memref<8x10xf32, #tpu.memory_space<vmem>>, %arg11: memref<224x28xf32, #tpu.memory_space<vmem>>, %arg12: memref<96x384xf32, #tpu.memory_space<vmem>>) attributes {dimension_semantics = [#tpu.dimension_semantics<parallel>], iteration_bounds = array<i64: 1>, scalar_prefetch = 0 : i64, scratch_operands = 2 : i64, tpu.core_type = #tpu.core_type<tc>, window_params = [{transform_indices = @transform_0, window_bounds = array<i64: 28, 8, 28>}, {pipeline_mode = #tpu.pipeline_mode<synchronous>, transform_indices = @transform_1, window_bounds = array<i64: 5, 28, 768>}, {pipeline_mode = #tpu.pipeline_mode<synchronous>, transform_indices = @transform_2, window_bounds = array<i64: 1, 768>}, {pipeline_mode = #tpu.pipeline_mode<synchronous>, transform_indices = @transform_3, window_bounds = array<i64: 5, 384, 256>}, {pipeline_mode = #tpu.pipeline_mode<synchronous>, transform_indices = @transform_4, window_bounds = array<i64: 1, 256>}, {pipeline_mode = #tpu.pipeline_mode<synchronous>, transform_indices = @transform_5, window_bounds = array<i64: 512, 1024>}, {pipeline_mode = #tpu.pipeline_mode<synchronous>, transform_indices = @transform_6, window_bounds = array<i64: 1, 1024>}, {pipeline_mode = #tpu.pipeline_mode<synchronous>, transform_indices = @transform_7, window_bounds = array<i64: 1024, 10>}, {pipeline_mode = #tpu.pipeline_mode<synchronous>, transform_indices = @transform_8, window_bounds = array<i64: 1, 10>}, {transform_indices = @transform_9, window_bounds = array<i64: 8, 10>}]} {
    %c0 = arith.constant 0 : index
    %c0_0 = arith.constant 0 : index
    %c0_1 = arith.constant 0 : index
    %0 = vector.load %arg1[%c0, %c0_0, %c0_1] : memref<28x8x28xf32, #tpu.memory_space<vmem>>, vector<1x8x28xf32>
    %1 = vector.shape_cast %0 : vector<1x8x28xf32> to vector<8x28xf32>
    %c0_2 = arith.constant 0 : index
    %c0_3 = arith.constant 0 : index
    %2 = vector.load %arg11[%c0_2, %c0_3] : memref<224x28xf32, #tpu.memory_space<vmem>>, vector<8x28xf32>
    tpu.vector_store %arg11[%c0_2, %c0_3], %1 {strides = array<i32>} : memref<224x28xf32, #tpu.memory_space<vmem>>, vector<8x28xf32>,
    %c1 = arith.constant 1 : index
    %c0_4 = arith.constant 0 : index
    %c0_5 = arith.constant 0 : index
    %3 = vector.load %arg1[%c1, %c0_4, %c0_5] : memref<28x8x28xf32, #tpu.memory_space<vmem>>, vector<1x8x28xf32>
    %4 = vector.shape_cast %3 : vector<1x8x28xf32> to vector<8x28xf32>
    %c8 = arith.constant 8 : index
    %c0_6 = arith.constant 0 : index
    %5 = vector.load %arg11[%c8, %c0_6] : memref<224x28xf32, #tpu.memory_space<vmem>>, vector<8x28xf32>
    tpu.vector_store %arg11[%c8, %c0_6], %4 {strides = array<i32>} : memref<224x28xf32, #tpu.memory_space<vmem>>, vector<8x28xf32>,
    %c2 = arith.constant 2 : index
    %c0_7 = arith.constant 0 : index
    %c0_8 = arith.constant 0 : index
    %6 = vector.load %arg1[%c2, %c0_7, %c0_8] : memref<28x8x28xf32, #tpu.memory_space<vmem>>, vector<1x8x28xf32>
    %7 = vector.shape_cast %6 : vector<1x8x28xf32> to vector<8x28xf32>
    %c16 = arith.constant 16 : index
    %c0_9 = arith.constant 0 : index
    %8 = vector.load %arg11[%c16, %c0_9] : memref<224x28xf32, #tpu.memory_space<vmem>>, vector<8x28xf32>
    tpu.vector_store %arg11[%c16, %c0_9], %7 {strides = array<i32>} : memref<224x28xf32, #tpu.memory_space<vmem>>, vector<8x28xf32>,
    %c3 = arith.constant 3 : index
    %c0_10 = arith.constant 0 : index
    %c0_11 = arith.constant 0 : index
    %9 = vector.load %arg1[%c3, %c0_10, %c0_11] : memref<28x8x28xf32, #tpu.memory_space<vmem>>, vector<1x8x28xf32>
    %10 = vector.shape_cast %9 : vector<1x8x28xf32> to vector<8x28xf32>
    %c24 = arith.constant 24 : index
    %c0_12 = arith.constant 0 : index
    %11 = vector.load %arg11[%c24, %c0_12] : memref<224x28xf32, #tpu.memory_space<vmem>>, vector<8x28xf32>
    tpu.vector_store %arg11[%c24, %c0_12], %10 {strides = array<i32>} : memref<224x28xf32, #tpu.memory_space<vmem>>, vector<8x28xf32>,
    %c4 = arith.constant 4 : index
    %c0_13 = arith.constant 0 : index
    %c0_14 = arith.constant 0 : index
    %12 = vector.load %arg1[%c4, %c0_13, %c0_14] : memref<28x8x28xf32, #tpu.memory_space<vmem>>, vector<1x8x28xf32>
    %13 = vector.shape_cast %12 : vector<1x8x28xf32> to vector<8x28xf32>
    %c32 = arith.constant 32 : index
    %c0_15 = arith.constant 0 : index
    %14 = vector.load %arg11[%c32, %c0_15] : memref<224x28xf32, #tpu.memory_space<vmem>>, vector<8x28xf32>
    tpu.vector_store %arg11[%c32, %c0_15], %13 {strides = array<i32>} : memref<224x28xf32, #tpu.memory_space<vmem>>, vector<8x28xf32>,
    %c5 = arith.constant 5 : index
    %c0_16 = arith.constant 0 : index
    %c0_17 = arith.constant 0 : index
    %15 = vector.load %arg1[%c5, %c0_16, %c0_17] : memref<28x8x28xf32, #tpu.memory_space<vmem>>, vector<1x8x28xf32>
    %16 = vector.shape_cast %15 : vector<1x8x28xf32> to vector<8x28xf32>
    %c40 = arith.constant 40 : index
    %c0_18 = arith.constant 0 : index
    %17 = vector.load %arg11[%c40, %c0_18] : memref<224x28xf32, #tpu.memory_space<vmem>>, vector<8x28xf32>
    tpu.vector_store %arg11[%c40, %c0_18], %16 {strides = array<i32>} : memref<224x28xf32, #tpu.memory_space<vmem>>, vector<8x28xf32>,
    %c6 = arith.constant 6 : index
    %c0_19 = arith.constant 0 : index
    %c0_20 = arith.constant 0 : index
    %18 = vector.load %arg1[%c6, %c0_19, %c0_20] : memref<28x8x28xf32, #tpu.memory_space<vmem>>, vector<1x8x28xf32>
    %19 = vector.shape_cast %18 : vector<1x8x28xf32> to vector<8x28xf32>
    %c48 = arith.constant 48 : index
    %c0_21 = arith.constant 0 : index
    %20 = vector.load %arg11[%c48, %c0_21] : memref<224x28xf32, #tpu.memory_space<vmem>>, vector<8x28xf32>
    tpu.vector_store %arg11[%c48, %c0_21], %19 {strides = array<i32>} : memref<224x28xf32, #tpu.memory_space<vmem>>, vector<8x28xf32>,
    %c7 = arith.constant 7 : index
    %c0_22 = arith.constant 0 : index
    %c0_23 = arith.constant 0 : index
    %21 = vector.load %arg1[%c7, %c0_22, %c0_23] : memref<28x8x28xf32, #tpu.memory_space<vmem>>, vector<1x8x28xf32>
    %22 = vector.shape_cast %21 : vector<1x8x28xf32> to vector<8x28xf32>
    %c56 = arith.constant 56 : index
    %c0_24 = arith.constant 0 : index
    %23 = vector.load %arg11[%c56, %c0_24] : memref<224x28xf32, #tpu.memory_space<vmem>>, vector<8x28xf32>
    tpu.vector_store %arg11[%c56, %c0_24], %22 {strides = array<i32>} : memref<224x28xf32, #tpu.memory_space<vmem>>, vector<8x28xf32>,
    %c8_25 = arith.constant 8 : index
    %c0_26 = arith.constant 0 : index
    %c0_27 = arith.constant 0 : index
    %24 = vector.load %arg1[%c8_25, %c0_26, %c0_27] : memref<28x8x28xf32, #tpu.memory_space<vmem>>, vector<1x8x28xf32>
    %25 = vector.shape_cast %24 : vector<1x8x28xf32> to vector<8x28xf32>
    %c64 = arith.constant 64 : index
    %c0_28 = arith.constant 0 : index
    %26 = vector.load %arg11[%c64, %c0_28] : memref<224x28xf32, #tpu.memory_space<vmem>>, vector<8x28xf32>
    tpu.vector_store %arg11[%c64, %c0_28], %25 {strides = array<i32>} : memref<224x28xf32, #tpu.memory_space<vmem>>, vector<8x28xf32>,
    %c9 = arith.constant 9 : index
    %c0_29 = arith.constant 0 : index
    %c0_30 = arith.constant 0 : index
    %27 = vector.load %arg1[%c9, %c0_29, %c0_30] : memref<28x8x28xf32, #tpu.memory_space<vmem>>, vector<1x8x28xf32>
    %28 = vector.shape_cast %27 : vector<1x8x28xf32> to vector<8x28xf32>
    %c72 = arith.constant 72 : index
    %c0_31 = arith.constant 0 : index
    %29 = vector.load %arg11[%c72, %c0_31] : memref<224x28xf32, #tpu.memory_space<vmem>>, vector<8x28xf32>
    tpu.vector_store %arg11[%c72, %c0_31], %28 {strides = array<i32>} : memref<224x28xf32, #tpu.memory_space<vmem>>, vector<8x28xf32>,
    %c10 = arith.constant 10 : index
    %c0_32 = arith.constant 0 : index
    %c0_33 = arith.constant 0 : index
    %30 = vector.load %arg1[%c10, %c0_32, %c0_33] : memref<28x8x28xf32, #tpu.memory_space<vmem>>, vector<1x8x28xf32>
    %31 = vector.shape_cast %30 : vector<1x8x28xf32> to vector<8x28xf32>
    %c80 = arith.constant 80 : index
    %c0_34 = arith.constant 0 : index
    %32 = vector.load %arg11[%c80, %c0_34] : memref<224x28xf32, #tpu.memory_space<vmem>>, vector<8x28xf32>
    tpu.vector_store %arg11[%c80, %c0_34], %31 {strides = array<i32>} : memref<224x28xf32, #tpu.memory_space<vmem>>, vector<8x28xf32>,
    %c11 = arith.constant 11 : index
    %c0_35 = arith.constant 0 : index
    %c0_36 = arith.constant 0 : index
    %33 = vector.load %arg1[%c11, %c0_35, %c0_36] : memref<28x8x28xf32, #tpu.memory_space<vmem>>, vector<1x8x28xf32>
    %34 = vector.shape_cast %33 : vector<1x8x28xf32> to vector<8x28xf32>
    %c88 = arith.constant 88 : index
    %c0_37 = arith.constant 0 : index
    %35 = vector.load %arg11[%c88, %c0_37] : memref<224x28xf32, #tpu.memory_space<vmem>>, vector<8x28xf32>
    tpu.vector_store %arg11[%c88, %c0_37], %34 {strides = array<i32>} : memref<224x28xf32, #tpu.memory_space<vmem>>, vector<8x28xf32>,
    %c12 = arith.constant 12 : index
    %c0_38 = arith.constant 0 : index
    %c0_39 = arith.constant 0 : index
    %36 = vector.load %arg1[%c12, %c0_38, %c0_39] : memref<28x8x28xf32, #tpu.memory_space<vmem>>, vector<1x8x28xf32>
    %37 = vector.shape_cast %36 : vector<1x8x28xf32> to vector<8x28xf32>
    %c96 = arith.constant 96 : index
    %c0_40 = arith.constant 0 : index
    %38 = vector.load %arg11[%c96, %c0_40] : memref<224x28xf32, #tpu.memory_space<vmem>>, vector<8x28xf32>
    tpu.vector_store %arg11[%c96, %c0_40], %37 {strides = array<i32>} : memref<224x28xf32, #tpu.memory_space<vmem>>, vector<8x28xf32>,
    %c13 = arith.constant 13 : index
    %c0_41 = arith.constant 0 : index
    %c0_42 = arith.constant 0 : index
    %39 = vector.load %arg1[%c13, %c0_41, %c0_42] : memref<28x8x28xf32, #tpu.memory_space<vmem>>, vector<1x8x28xf32>
    %40 = vector.shape_cast %39 : vector<1x8x28xf32> to vector<8x28xf32>
    %c104 = arith.constant 104 : index
    %c0_43 = arith.constant 0 : index
    %41 = vector.load %arg11[%c104, %c0_43] : memref<224x28xf32, #tpu.memory_space<vmem>>, vector<8x28xf32>
    tpu.vector_store %arg11[%c104, %c0_43], %40 {strides = array<i32>} : memref<224x28xf32, #tpu.memory_space<vmem>>, vector<8x28xf32>,
    %c14 = arith.constant 14 : index
    %c0_44 = arith.constant 0 : index
    %c0_45 = arith.constant 0 : index
    %42 = vector.load %arg1[%c14, %c0_44, %c0_45] : memref<28x8x28xf32, #tpu.memory_space<vmem>>, vector<1x8x28xf32>
    %43 = vector.shape_cast %42 : vector<1x8x28xf32> to vector<8x28xf32>
    %c112 = arith.constant 112 : index
    %c0_46 = arith.constant 0 : index
    %44 = vector.load %arg11[%c112, %c0_46] : memref<224x28xf32, #tpu.memory_space<vmem>>, vector<8x28xf32>
    tpu.vector_store %arg11[%c112, %c0_46], %43 {strides = array<i32>} : memref<224x28xf32, #tpu.memory_space<vmem>>, vector<8x28xf32>,
    %c15 = arith.constant 15 : index
    %c0_47 = arith.constant 0 : index
    %c0_48 = arith.constant 0 : index
    %45 = vector.load %arg1[%c15, %c0_47, %c0_48] : memref<28x8x28xf32, #tpu.memory_space<vmem>>, vector<1x8x28xf32>
    %46 = vector.shape_cast %45 : vector<1x8x28xf32> to vector<8x28xf32>
    %c120 = arith.constant 120 : index
    %c0_49 = arith.constant 0 : index
    %47 = vector.load %arg11[%c120, %c0_49] : memref<224x28xf32, #tpu.memory_space<vmem>>, vector<8x28xf32>
    tpu.vector_store %arg11[%c120, %c0_49], %46 {strides = array<i32>} : memref<224x28xf32, #tpu.memory_space<vmem>>, vector<8x28xf32>,
    %c16_50 = arith.constant 16 : index
    %c0_51 = arith.constant 0 : index
    %c0_52 = arith.constant 0 : index
    %48 = vector.load %arg1[%c16_50, %c0_51, %c0_52] : memref<28x8x28xf32, #tpu.memory_space<vmem>>, vector<1x8x28xf32>
    %49 = vector.shape_cast %48 : vector<1x8x28xf32> to vector<8x28xf32>
    %c128 = arith.constant 128 : index
    %c0_53 = arith.constant 0 : index
    %50 = vector.load %arg11[%c128, %c0_53] : memref<224x28xf32, #tpu.memory_space<vmem>>, vector<8x28xf32>
    tpu.vector_store %arg11[%c128, %c0_53], %49 {strides = array<i32>} : memref<224x28xf32, #tpu.memory_space<vmem>>, vector<8x28xf32>,
    %c17 = arith.constant 17 : index
    %c0_54 = arith.constant 0 : index
    %c0_55 = arith.constant 0 : index
    %51 = vector.load %arg1[%c17, %c0_54, %c0_55] : memref<28x8x28xf32, #tpu.memory_space<vmem>>, vector<1x8x28xf32>
    %52 = vector.shape_cast %51 : vector<1x8x28xf32> to vector<8x28xf32>
    %c136 = arith.constant 136 : index
    %c0_56 = arith.constant 0 : index
    %53 = vector.load %arg11[%c136, %c0_56] : memref<224x28xf32, #tpu.memory_space<vmem>>, vector<8x28xf32>
    tpu.vector_store %arg11[%c136, %c0_56], %52 {strides = array<i32>} : memref<224x28xf32, #tpu.memory_space<vmem>>, vector<8x28xf32>,
    %c18 = arith.constant 18 : index
    %c0_57 = arith.constant 0 : index
    %c0_58 = arith.constant 0 : index
    %54 = vector.load %arg1[%c18, %c0_57, %c0_58] : memref<28x8x28xf32, #tpu.memory_space<vmem>>, vector<1x8x28xf32>
    %55 = vector.shape_cast %54 : vector<1x8x28xf32> to vector<8x28xf32>
    %c144 = arith.constant 144 : index
    %c0_59 = arith.constant 0 : index
    %56 = vector.load %arg11[%c144, %c0_59] : memref<224x28xf32, #tpu.memory_space<vmem>>, vector<8x28xf32>
    tpu.vector_store %arg11[%c144, %c0_59], %55 {strides = array<i32>} : memref<224x28xf32, #tpu.memory_space<vmem>>, vector<8x28xf32>,
    %c19 = arith.constant 19 : index
    %c0_60 = arith.constant 0 : index
    %c0_61 = arith.constant 0 : index
    %57 = vector.load %arg1[%c19, %c0_60, %c0_61] : memref<28x8x28xf32, #tpu.memory_space<vmem>>, vector<1x8x28xf32>
    %58 = vector.shape_cast %57 : vector<1x8x28xf32> to vector<8x28xf32>
    %c152 = arith.constant 152 : index
    %c0_62 = arith.constant 0 : index
    %59 = vector.load %arg11[%c152, %c0_62] : memref<224x28xf32, #tpu.memory_space<vmem>>, vector<8x28xf32>
    tpu.vector_store %arg11[%c152, %c0_62], %58 {strides = array<i32>} : memref<224x28xf32, #tpu.memory_space<vmem>>, vector<8x28xf32>,
    %c20 = arith.constant 20 : index
    %c0_63 = arith.constant 0 : index
    %c0_64 = arith.constant 0 : index
    %60 = vector.load %arg1[%c20, %c0_63, %c0_64] : memref<28x8x28xf32, #tpu.memory_space<vmem>>, vector<1x8x28xf32>
    %61 = vector.shape_cast %60 : vector<1x8x28xf32> to vector<8x28xf32>
    %c160 = arith.constant 160 : index
    %c0_65 = arith.constant 0 : index
    %62 = vector.load %arg11[%c160, %c0_65] : memref<224x28xf32, #tpu.memory_space<vmem>>, vector<8x28xf32>
    tpu.vector_store %arg11[%c160, %c0_65], %61 {strides = array<i32>} : memref<224x28xf32, #tpu.memory_space<vmem>>, vector<8x28xf32>,
    %c21 = arith.constant 21 : index
    %c0_66 = arith.constant 0 : index
    %c0_67 = arith.constant 0 : index
    %63 = vector.load %arg1[%c21, %c0_66, %c0_67] : memref<28x8x28xf32, #tpu.memory_space<vmem>>, vector<1x8x28xf32>
    %64 = vector.shape_cast %63 : vector<1x8x28xf32> to vector<8x28xf32>
    %c168 = arith.constant 168 : index
    %c0_68 = arith.constant 0 : index
    %65 = vector.load %arg11[%c168, %c0_68] : memref<224x28xf32, #tpu.memory_space<vmem>>, vector<8x28xf32>
    tpu.vector_store %arg11[%c168, %c0_68], %64 {strides = array<i32>} : memref<224x28xf32, #tpu.memory_space<vmem>>, vector<8x28xf32>,
    %c22 = arith.constant 22 : index
    %c0_69 = arith.constant 0 : index
    %c0_70 = arith.constant 0 : index
    %66 = vector.load %arg1[%c22, %c0_69, %c0_70] : memref<28x8x28xf32, #tpu.memory_space<vmem>>, vector<1x8x28xf32>
    %67 = vector.shape_cast %66 : vector<1x8x28xf32> to vector<8x28xf32>
    %c176 = arith.constant 176 : index
    %c0_71 = arith.constant 0 : index
    %68 = vector.load %arg11[%c176, %c0_71] : memref<224x28xf32, #tpu.memory_space<vmem>>, vector<8x28xf32>
    tpu.vector_store %arg11[%c176, %c0_71], %67 {strides = array<i32>} : memref<224x28xf32, #tpu.memory_space<vmem>>, vector<8x28xf32>,
    %c23 = arith.constant 23 : index
    %c0_72 = arith.constant 0 : index
    %c0_73 = arith.constant 0 : index
    %69 = vector.load %arg1[%c23, %c0_72, %c0_73] : memref<28x8x28xf32, #tpu.memory_space<vmem>>, vector<1x8x28xf32>
    %70 = vector.shape_cast %69 : vector<1x8x28xf32> to vector<8x28xf32>
    %c184 = arith.constant 184 : index
    %c0_74 = arith.constant 0 : index
    %71 = vector.load %arg11[%c184, %c0_74] : memref<224x28xf32, #tpu.memory_space<vmem>>, vector<8x28xf32>
    tpu.vector_store %arg11[%c184, %c0_74], %70 {strides = array<i32>} : memref<224x28xf32, #tpu.memory_space<vmem>>, vector<8x28xf32>,
    %c24_75 = arith.constant 24 : index
    %c0_76 = arith.constant 0 : index
    %c0_77 = arith.constant 0 : index
    %72 = vector.load %arg1[%c24_75, %c0_76, %c0_77] : memref<28x8x28xf32, #tpu.memory_space<vmem>>, vector<1x8x28xf32>
    %73 = vector.shape_cast %72 : vector<1x8x28xf32> to vector<8x28xf32>
    %c192 = arith.constant 192 : index
    %c0_78 = arith.constant 0 : index
    %74 = vector.load %arg11[%c192, %c0_78] : memref<224x28xf32, #tpu.memory_space<vmem>>, vector<8x28xf32>
    tpu.vector_store %arg11[%c192, %c0_78], %73 {strides = array<i32>} : memref<224x28xf32, #tpu.memory_space<vmem>>, vector<8x28xf32>,
    %c25 = arith.constant 25 : index
    %c0_79 = arith.constant 0 : index
    %c0_80 = arith.constant 0 : index
    %75 = vector.load %arg1[%c25, %c0_79, %c0_80] : memref<28x8x28xf32, #tpu.memory_space<vmem>>, vector<1x8x28xf32>
    %76 = vector.shape_cast %75 : vector<1x8x28xf32> to vector<8x28xf32>
    %c200 = arith.constant 200 : index
    %c0_81 = arith.constant 0 : index
    %77 = vector.load %arg11[%c200, %c0_81] : memref<224x28xf32, #tpu.memory_space<vmem>>, vector<8x28xf32>
    tpu.vector_store %arg11[%c200, %c0_81], %76 {strides = array<i32>} : memref<224x28xf32, #tpu.memory_space<vmem>>, vector<8x28xf32>,
    %c26 = arith.constant 26 : index
    %c0_82 = arith.constant 0 : index
    %c0_83 = arith.constant 0 : index
    %78 = vector.load %arg1[%c26, %c0_82, %c0_83] : memref<28x8x28xf32, #tpu.memory_space<vmem>>, vector<1x8x28xf32>
    %79 = vector.shape_cast %78 : vector<1x8x28xf32> to vector<8x28xf32>
    %c208 = arith.constant 208 : index
    %c0_84 = arith.constant 0 : index
    %80 = vector.load %arg11[%c208, %c0_84] : memref<224x28xf32, #tpu.memory_space<vmem>>, vector<8x28xf32>
    tpu.vector_store %arg11[%c208, %c0_84], %79 {strides = array<i32>} : memref<224x28xf32, #tpu.memory_space<vmem>>, vector<8x28xf32>,
    %c27 = arith.constant 27 : index
    %c0_85 = arith.constant 0 : index
    %c0_86 = arith.constant 0 : index
    %81 = vector.load %arg1[%c27, %c0_85, %c0_86] : memref<28x8x28xf32, #tpu.memory_space<vmem>>, vector<1x8x28xf32>
    %82 = vector.shape_cast %81 : vector<1x8x28xf32> to vector<8x28xf32>
    %c216 = arith.constant 216 : index
    %c0_87 = arith.constant 0 : index
    %83 = vector.load %arg11[%c216, %c0_87] : memref<224x28xf32, #tpu.memory_space<vmem>>, vector<8x28xf32>
    tpu.vector_store %arg11[%c216, %c0_87], %82 {strides = array<i32>} : memref<224x28xf32, #tpu.memory_space<vmem>>, vector<8x28xf32>,
    %cst = arith.constant 0.000000e+00 : f32
    %84 = vector.broadcast %cst : f32 to vector<192x768xf32>
    %c0_88 = arith.constant 0 : index
    %c0_89 = arith.constant 0 : index
    %85 = vector.load %arg3[%c0_88, %c0_89] : memref<1x768xf32, #tpu.memory_space<vmem>>, vector<1x768xf32>
    %86 = vector.broadcast %85 : vector<1x768xf32> to vector<192x768xf32>
    %87 = arith.addf %84, %86 : vector<192x768xf32>
    %c0_90 = arith.constant 0 : index
    %c0_91 = arith.constant 0 : index
    %88 = vector.load %arg11[%c0_90, %c0_91] : memref<224x28xf32, #tpu.memory_space<vmem>>, vector<192x28xf32>
    %89 = arith.truncf %88 : vector<192x28xf32> to vector<192x28xbf16>
    %c0_92 = arith.constant 0 : index
    %c0_93 = arith.constant 0 : index
    %c0_94 = arith.constant 0 : index
    %90 = vector.load %arg2[%c0_92, %c0_93, %c0_94] : memref<5x28x768xbf16, #tpu.memory_space<vmem>>, vector<1x28x768xbf16>
    %91 = vector.shape_cast %90 : vector<1x28x768xbf16> to vector<28x768xbf16>
    %cst_95 = arith.constant dense<0.000000e+00> : vector<192x768xf32>
    %92 = tpu.matmul %89, %91, %cst_95 {dimension_numbers = #tpu.dot_dimension_numbers<[1], [0], [0], [1], [0, 0, 1, 1], [], []>} : vector<192x28xbf16>, vector<28x768xbf16>, vector<192x768xf32> -> vector<192x768xf32>
    %93 = arith.addf %87, %92 : vector<192x768xf32>
    %c8_96 = arith.constant 8 : index
    %c0_97 = arith.constant 0 : index
    %94 = vector.load %arg11[%c8_96, %c0_97] : memref<224x28xf32, #tpu.memory_space<vmem>>, vector<192x28xf32>
    %95 = arith.truncf %94 : vector<192x28xf32> to vector<192x28xbf16>
    %c1_98 = arith.constant 1 : index
    %c0_99 = arith.constant 0 : index
    %c0_100 = arith.constant 0 : index
    %96 = vector.load %arg2[%c1_98, %c0_99, %c0_100] : memref<5x28x768xbf16, #tpu.memory_space<vmem>>, vector<1x28x768xbf16>
    %97 = vector.shape_cast %96 : vector<1x28x768xbf16> to vector<28x768xbf16>
    %cst_101 = arith.constant dense<0.000000e+00> : vector<192x768xf32>
    %98 = tpu.matmul %95, %97, %cst_101 {dimension_numbers = #tpu.dot_dimension_numbers<[1], [0], [0], [1], [0, 0, 1, 1], [], []>} : vector<192x28xbf16>, vector<28x768xbf16>, vector<192x768xf32> -> vector<192x768xf32>
    %99 = arith.addf %93, %98 : vector<192x768xf32>
    %c16_102 = arith.constant 16 : index
    %c0_103 = arith.constant 0 : index
    %100 = vector.load %arg11[%c16_102, %c0_103] : memref<224x28xf32, #tpu.memory_space<vmem>>, vector<192x28xf32>
    %101 = arith.truncf %100 : vector<192x28xf32> to vector<192x28xbf16>
    %c2_104 = arith.constant 2 : index
    %c0_105 = arith.constant 0 : index
    %c0_106 = arith.constant 0 : index
    %102 = vector.load %arg2[%c2_104, %c0_105, %c0_106] : memref<5x28x768xbf16, #tpu.memory_space<vmem>>, vector<1x28x768xbf16>
    %103 = vector.shape_cast %102 : vector<1x28x768xbf16> to vector<28x768xbf16>
    %cst_107 = arith.constant dense<0.000000e+00> : vector<192x768xf32>
    %104 = tpu.matmul %101, %103, %cst_107 {dimension_numbers = #tpu.dot_dimension_numbers<[1], [0], [0], [1], [0, 0, 1, 1], [], []>} : vector<192x28xbf16>, vector<28x768xbf16>, vector<192x768xf32> -> vector<192x768xf32>
    %105 = arith.addf %99, %104 : vector<192x768xf32>
    %c24_108 = arith.constant 24 : index
    %c0_109 = arith.constant 0 : index
    %106 = vector.load %arg11[%c24_108, %c0_109] : memref<224x28xf32, #tpu.memory_space<vmem>>, vector<192x28xf32>
    %107 = arith.truncf %106 : vector<192x28xf32> to vector<192x28xbf16>
    %c3_110 = arith.constant 3 : index
    %c0_111 = arith.constant 0 : index
    %c0_112 = arith.constant 0 : index
    %108 = vector.load %arg2[%c3_110, %c0_111, %c0_112] : memref<5x28x768xbf16, #tpu.memory_space<vmem>>, vector<1x28x768xbf16>
    %109 = vector.shape_cast %108 : vector<1x28x768xbf16> to vector<28x768xbf16>
    %cst_113 = arith.constant dense<0.000000e+00> : vector<192x768xf32>
    %110 = tpu.matmul %107, %109, %cst_113 {dimension_numbers = #tpu.dot_dimension_numbers<[1], [0], [0], [1], [0, 0, 1, 1], [], []>} : vector<192x28xbf16>, vector<28x768xbf16>, vector<192x768xf32> -> vector<192x768xf32>
    %111 = arith.addf %105, %110 : vector<192x768xf32>
    %c32_114 = arith.constant 32 : index
    %c0_115 = arith.constant 0 : index
    %112 = vector.load %arg11[%c32_114, %c0_115] : memref<224x28xf32, #tpu.memory_space<vmem>>, vector<192x28xf32>
    %113 = arith.truncf %112 : vector<192x28xf32> to vector<192x28xbf16>
    %c4_116 = arith.constant 4 : index
    %c0_117 = arith.constant 0 : index
    %c0_118 = arith.constant 0 : index
    %114 = vector.load %arg2[%c4_116, %c0_117, %c0_118] : memref<5x28x768xbf16, #tpu.memory_space<vmem>>, vector<1x28x768xbf16>
    %115 = vector.shape_cast %114 : vector<1x28x768xbf16> to vector<28x768xbf16>
    %cst_119 = arith.constant dense<0.000000e+00> : vector<192x768xf32>
    %116 = tpu.matmul %113, %115, %cst_119 {dimension_numbers = #tpu.dot_dimension_numbers<[1], [0], [0], [1], [0, 0, 1, 1], [], []>} : vector<192x28xbf16>, vector<28x768xbf16>, vector<192x768xf32> -> vector<192x768xf32>
    %117 = arith.addf %111, %116 : vector<192x768xf32>
    %cst_120 = arith.constant 0.000000e+00 : f32
    %118 = vector.broadcast %cst_120 : f32 to vector<192x768xf32>
    %119 = arith.maximumf %117, %118 : vector<192x768xf32>
    %120 = vector.extract_strided_slice %119 {offsets = [0, 0], sizes = [8, 768], strides = [1, 1]} : vector<192x768xf32> to vector<8x768xf32>
    %121 = vector.extract_strided_slice %119 {offsets = [8, 0], sizes = [8, 768], strides = [1, 1]} : vector<192x768xf32> to vector<8x768xf32>
    %122 = arith.maximumf %120, %121 : vector<8x768xf32>
    %123 = vector.extract_strided_slice %122 {offsets = [0, 0], sizes = [8, 384], strides = [1, 1]} : vector<8x768xf32> to vector<8x384xf32>
    %124 = vector.extract_strided_slice %122 {offsets = [0, 384], sizes = [8, 384], strides = [1, 1]} : vector<8x768xf32> to vector<8x384xf32>
    %125 = arith.maximumf %123, %124 : vector<8x384xf32>
    %c0_121 = arith.constant 0 : index
    %c0_122 = arith.constant 0 : index
    %126 = vector.load %arg12[%c0_121, %c0_122] : memref<96x384xf32, #tpu.memory_space<vmem>>, vector<8x384xf32>
    tpu.vector_store %arg12[%c0_121, %c0_122], %125 {strides = array<i32>} : memref<96x384xf32, #tpu.memory_space<vmem>>, vector<8x384xf32>,
    %127 = vector.extract_strided_slice %119 {offsets = [16, 0], sizes = [8, 768], strides = [1, 1]} : vector<192x768xf32> to vector<8x768xf32>
    %128 = vector.extract_strided_slice %119 {offsets = [24, 0], sizes = [8, 768], strides = [1, 1]} : vector<192x768xf32> to vector<8x768xf32>
    %129 = arith.maximumf %127, %128 : vector<8x768xf32>
    %130 = vector.extract_strided_slice %129 {offsets = [0, 0], sizes = [8, 384], strides = [1, 1]} : vector<8x768xf32> to vector<8x384xf32>
    %131 = vector.extract_strided_slice %129 {offsets = [0, 384], sizes = [8, 384], strides = [1, 1]} : vector<8x768xf32> to vector<8x384xf32>
    %132 = arith.maximumf %130, %131 : vector<8x384xf32>
    %c8_123 = arith.constant 8 : index
    %c0_124 = arith.constant 0 : index
    %133 = vector.load %arg12[%c8_123, %c0_124] : memref<96x384xf32, #tpu.memory_space<vmem>>, vector<8x384xf32>
    tpu.vector_store %arg12[%c8_123, %c0_124], %132 {strides = array<i32>} : memref<96x384xf32, #tpu.memory_space<vmem>>, vector<8x384xf32>,
    %134 = vector.extract_strided_slice %119 {offsets = [32, 0], sizes = [8, 768], strides = [1, 1]} : vector<192x768xf32> to vector<8x768xf32>
    %135 = vector.extract_strided_slice %119 {offsets = [40, 0], sizes = [8, 768], strides = [1, 1]} : vector<192x768xf32> to vector<8x768xf32>
    %136 = arith.maximumf %134, %135 : vector<8x768xf32>
    %137 = vector.extract_strided_slice %136 {offsets = [0, 0], sizes = [8, 384], strides = [1, 1]} : vector<8x768xf32> to vector<8x384xf32>
    %138 = vector.extract_strided_slice %136 {offsets = [0, 384], sizes = [8, 384], strides = [1, 1]} : vector<8x768xf32> to vector<8x384xf32>
    %139 = arith.maximumf %137, %138 : vector<8x384xf32>
    %c16_125 = arith.constant 16 : index
    %c0_126 = arith.constant 0 : index
    %140 = vector.load %arg12[%c16_125, %c0_126] : memref<96x384xf32, #tpu.memory_space<vmem>>, vector<8x384xf32>
    tpu.vector_store %arg12[%c16_125, %c0_126], %139 {strides = array<i32>} : memref<96x384xf32, #tpu.memory_space<vmem>>, vector<8x384xf32>,
    %141 = vector.extract_strided_slice %119 {offsets = [48, 0], sizes = [8, 768], strides = [1, 1]} : vector<192x768xf32> to vector<8x768xf32>
    %142 = vector.extract_strided_slice %119 {offsets = [56, 0], sizes = [8, 768], strides = [1, 1]} : vector<192x768xf32> to vector<8x768xf32>
    %143 = arith.maximumf %141, %142 : vector<8x768xf32>
    %144 = vector.extract_strided_slice %143 {offsets = [0, 0], sizes = [8, 384], strides = [1, 1]} : vector<8x768xf32> to vector<8x384xf32>
    %145 = vector.extract_strided_slice %143 {offsets = [0, 384], sizes = [8, 384], strides = [1, 1]} : vector<8x768xf32> to vector<8x384xf32>
    %146 = arith.maximumf %144, %145 : vector<8x384xf32>
    %c24_127 = arith.constant 24 : index
    %c0_128 = arith.constant 0 : index
    %147 = vector.load %arg12[%c24_127, %c0_128] : memref<96x384xf32, #tpu.memory_space<vmem>>, vector<8x384xf32>
    tpu.vector_store %arg12[%c24_127, %c0_128], %146 {strides = array<i32>} : memref<96x384xf32, #tpu.memory_space<vmem>>, vector<8x384xf32>,
    %148 = vector.extract_strided_slice %119 {offsets = [64, 0], sizes = [8, 768], strides = [1, 1]} : vector<192x768xf32> to vector<8x768xf32>
    %149 = vector.extract_strided_slice %119 {offsets = [72, 0], sizes = [8, 768], strides = [1, 1]} : vector<192x768xf32> to vector<8x768xf32>
    %150 = arith.maximumf %148, %149 : vector<8x768xf32>
    %151 = vector.extract_strided_slice %150 {offsets = [0, 0], sizes = [8, 384], strides = [1, 1]} : vector<8x768xf32> to vector<8x384xf32>
    %152 = vector.extract_strided_slice %150 {offsets = [0, 384], sizes = [8, 384], strides = [1, 1]} : vector<8x768xf32> to vector<8x384xf32>
    %153 = arith.maximumf %151, %152 : vector<8x384xf32>
    %c32_129 = arith.constant 32 : index
    %c0_130 = arith.constant 0 : index
    %154 = vector.load %arg12[%c32_129, %c0_130] : memref<96x384xf32, #tpu.memory_space<vmem>>, vector<8x384xf32>
    tpu.vector_store %arg12[%c32_129, %c0_130], %153 {strides = array<i32>} : memref<96x384xf32, #tpu.memory_space<vmem>>, vector<8x384xf32>,
    %155 = vector.extract_strided_slice %119 {offsets = [80, 0], sizes = [8, 768], strides = [1, 1]} : vector<192x768xf32> to vector<8x768xf32>
    %156 = vector.extract_strided_slice %119 {offsets = [88, 0], sizes = [8, 768], strides = [1, 1]} : vector<192x768xf32> to vector<8x768xf32>
    %157 = arith.maximumf %155, %156 : vector<8x768xf32>
    %158 = vector.extract_strided_slice %157 {offsets = [0, 0], sizes = [8, 384], strides = [1, 1]} : vector<8x768xf32> to vector<8x384xf32>
    %159 = vector.extract_strided_slice %157 {offsets = [0, 384], sizes = [8, 384], strides = [1, 1]} : vector<8x768xf32> to vector<8x384xf32>
    %160 = arith.maximumf %158, %159 : vector<8x384xf32>
    %c40_131 = arith.constant 40 : index
    %c0_132 = arith.constant 0 : index
    %161 = vector.load %arg12[%c40_131, %c0_132] : memref<96x384xf32, #tpu.memory_space<vmem>>, vector<8x384xf32>
    tpu.vector_store %arg12[%c40_131, %c0_132], %160 {strides = array<i32>} : memref<96x384xf32, #tpu.memory_space<vmem>>, vector<8x384xf32>,
    %162 = vector.extract_strided_slice %119 {offsets = [96, 0], sizes = [8, 768], strides = [1, 1]} : vector<192x768xf32> to vector<8x768xf32>
    %163 = vector.extract_strided_slice %119 {offsets = [104, 0], sizes = [8, 768], strides = [1, 1]} : vector<192x768xf32> to vector<8x768xf32>
    %164 = arith.maximumf %162, %163 : vector<8x768xf32>
    %165 = vector.extract_strided_slice %164 {offsets = [0, 0], sizes = [8, 384], strides = [1, 1]} : vector<8x768xf32> to vector<8x384xf32>
    %166 = vector.extract_strided_slice %164 {offsets = [0, 384], sizes = [8, 384], strides = [1, 1]} : vector<8x768xf32> to vector<8x384xf32>
    %167 = arith.maximumf %165, %166 : vector<8x384xf32>
    %c48_133 = arith.constant 48 : index
    %c0_134 = arith.constant 0 : index
    %168 = vector.load %arg12[%c48_133, %c0_134] : memref<96x384xf32, #tpu.memory_space<vmem>>, vector<8x384xf32>
    tpu.vector_store %arg12[%c48_133, %c0_134], %167 {strides = array<i32>} : memref<96x384xf32, #tpu.memory_space<vmem>>, vector<8x384xf32>,
    %169 = vector.extract_strided_slice %119 {offsets = [112, 0], sizes = [8, 768], strides = [1, 1]} : vector<192x768xf32> to vector<8x768xf32>
    %170 = vector.extract_strided_slice %119 {offsets = [120, 0], sizes = [8, 768], strides = [1, 1]} : vector<192x768xf32> to vector<8x768xf32>
    %171 = arith.maximumf %169, %170 : vector<8x768xf32>
    %172 = vector.extract_strided_slice %171 {offsets = [0, 0], sizes = [8, 384], strides = [1, 1]} : vector<8x768xf32> to vector<8x384xf32>
    %173 = vector.extract_strided_slice %171 {offsets = [0, 384], sizes = [8, 384], strides = [1, 1]} : vector<8x768xf32> to vector<8x384xf32>
    %174 = arith.maximumf %172, %173 : vector<8x384xf32>
    %c56_135 = arith.constant 56 : index
    %c0_136 = arith.constant 0 : index
    %175 = vector.load %arg12[%c56_135, %c0_136] : memref<96x384xf32, #tpu.memory_space<vmem>>, vector<8x384xf32>
    tpu.vector_store %arg12[%c56_135, %c0_136], %174 {strides = array<i32>} : memref<96x384xf32, #tpu.memory_space<vmem>>, vector<8x384xf32>,
    %176 = vector.extract_strided_slice %119 {offsets = [128, 0], sizes = [8, 768], strides = [1, 1]} : vector<192x768xf32> to vector<8x768xf32>
    %177 = vector.extract_strided_slice %119 {offsets = [136, 0], sizes = [8, 768], strides = [1, 1]} : vector<192x768xf32> to vector<8x768xf32>
    %178 = arith.maximumf %176, %177 : vector<8x768xf32>
    %179 = vector.extract_strided_slice %178 {offsets = [0, 0], sizes = [8, 384], strides = [1, 1]} : vector<8x768xf32> to vector<8x384xf32>
    %180 = vector.extract_strided_slice %178 {offsets = [0, 384], sizes = [8, 384], strides = [1, 1]} : vector<8x768xf32> to vector<8x384xf32>
    %181 = arith.maximumf %179, %180 : vector<8x384xf32>
    %c64_137 = arith.constant 64 : index
    %c0_138 = arith.constant 0 : index
    %182 = vector.load %arg12[%c64_137, %c0_138] : memref<96x384xf32, #tpu.memory_space<vmem>>, vector<8x384xf32>
    tpu.vector_store %arg12[%c64_137, %c0_138], %181 {strides = array<i32>} : memref<96x384xf32, #tpu.memory_space<vmem>>, vector<8x384xf32>,
    %183 = vector.extract_strided_slice %119 {offsets = [144, 0], sizes = [8, 768], strides = [1, 1]} : vector<192x768xf32> to vector<8x768xf32>
    %184 = vector.extract_strided_slice %119 {offsets = [152, 0], sizes = [8, 768], strides = [1, 1]} : vector<192x768xf32> to vector<8x768xf32>
    %185 = arith.maximumf %183, %184 : vector<8x768xf32>
    %186 = vector.extract_strided_slice %185 {offsets = [0, 0], sizes = [8, 384], strides = [1, 1]} : vector<8x768xf32> to vector<8x384xf32>
    %187 = vector.extract_strided_slice %185 {offsets = [0, 384], sizes = [8, 384], strides = [1, 1]} : vector<8x768xf32> to vector<8x384xf32>
    %188 = arith.maximumf %186, %187 : vector<8x384xf32>
    %c72_139 = arith.constant 72 : index
    %c0_140 = arith.constant 0 : index
    %189 = vector.load %arg12[%c72_139, %c0_140] : memref<96x384xf32, #tpu.memory_space<vmem>>, vector<8x384xf32>
    tpu.vector_store %arg12[%c72_139, %c0_140], %188 {strides = array<i32>} : memref<96x384xf32, #tpu.memory_space<vmem>>, vector<8x384xf32>,
    %190 = vector.extract_strided_slice %119 {offsets = [160, 0], sizes = [8, 768], strides = [1, 1]} : vector<192x768xf32> to vector<8x768xf32>
    %191 = vector.extract_strided_slice %119 {offsets = [168, 0], sizes = [8, 768], strides = [1, 1]} : vector<192x768xf32> to vector<8x768xf32>
    %192 = arith.maximumf %190, %191 : vector<8x768xf32>
    %193 = vector.extract_strided_slice %192 {offsets = [0, 0], sizes = [8, 384], strides = [1, 1]} : vector<8x768xf32> to vector<8x384xf32>
    %194 = vector.extract_strided_slice %192 {offsets = [0, 384], sizes = [8, 384], strides = [1, 1]} : vector<8x768xf32> to vector<8x384xf32>
    %195 = arith.maximumf %193, %194 : vector<8x384xf32>
    %c80_141 = arith.constant 80 : index
    %c0_142 = arith.constant 0 : index
    %196 = vector.load %arg12[%c80_141, %c0_142] : memref<96x384xf32, #tpu.memory_space<vmem>>, vector<8x384xf32>
    tpu.vector_store %arg12[%c80_141, %c0_142], %195 {strides = array<i32>} : memref<96x384xf32, #tpu.memory_space<vmem>>, vector<8x384xf32>,
    %197 = vector.extract_strided_slice %119 {offsets = [176, 0], sizes = [8, 768], strides = [1, 1]} : vector<192x768xf32> to vector<8x768xf32>
    %198 = vector.extract_strided_slice %119 {offsets = [184, 0], sizes = [8, 768], strides = [1, 1]} : vector<192x768xf32> to vector<8x768xf32>
    %199 = arith.maximumf %197, %198 : vector<8x768xf32>
    %200 = vector.extract_strided_slice %199 {offsets = [0, 0], sizes = [8, 384], strides = [1, 1]} : vector<8x768xf32> to vector<8x384xf32>
    %201 = vector.extract_strided_slice %199 {offsets = [0, 384], sizes = [8, 384], strides = [1, 1]} : vector<8x768xf32> to vector<8x384xf32>
    %202 = arith.maximumf %200, %201 : vector<8x384xf32>
    %c88_143 = arith.constant 88 : index
    %c0_144 = arith.constant 0 : index
    %203 = vector.load %arg12[%c88_143, %c0_144] : memref<96x384xf32, #tpu.memory_space<vmem>>, vector<8x384xf32>
    tpu.vector_store %arg12[%c88_143, %c0_144], %202 {strides = array<i32>} : memref<96x384xf32, #tpu.memory_space<vmem>>, vector<8x384xf32>,
    %cst_145 = arith.constant 0.000000e+00 : f32
    %204 = vector.broadcast %cst_145 : f32 to vector<64x256xf32>
    %c0_146 = arith.constant 0 : index
    %c0_147 = arith.constant 0 : index
    %205 = vector.load %arg5[%c0_146, %c0_147] : memref<1x256xf32, #tpu.memory_space<vmem>>, vector<1x256xf32>
    %206 = vector.broadcast %205 : vector<1x256xf32> to vector<64x256xf32>
    %207 = arith.addf %204, %206 : vector<64x256xf32>
    %c0_148 = arith.constant 0 : index
    %c0_149 = arith.constant 0 : index
    %208 = vector.load %arg12[%c0_148, %c0_149] : memref<96x384xf32, #tpu.memory_space<vmem>>, vector<64x384xf32>
    %209 = arith.truncf %208 : vector<64x384xf32> to vector<64x384xbf16>
    %c0_150 = arith.constant 0 : index
    %c0_151 = arith.constant 0 : index
    %c0_152 = arith.constant 0 : index
    %210 = vector.load %arg4[%c0_150, %c0_151, %c0_152] : memref<5x384x256xbf16, #tpu.memory_space<vmem>>, vector<1x384x256xbf16>
    %211 = vector.shape_cast %210 : vector<1x384x256xbf16> to vector<384x256xbf16>
    %cst_153 = arith.constant dense<0.000000e+00> : vector<64x256xf32>
    %212 = tpu.matmul %209, %211, %cst_153 {dimension_numbers = #tpu.dot_dimension_numbers<[1], [0], [0], [1], [0, 0, 1, 1], [], []>} : vector<64x384xbf16>, vector<384x256xbf16>, vector<64x256xf32> -> vector<64x256xf32>
    %213 = arith.addf %207, %212 : vector<64x256xf32>
    %c8_154 = arith.constant 8 : index
    %c0_155 = arith.constant 0 : index
    %214 = vector.load %arg12[%c8_154, %c0_155] : memref<96x384xf32, #tpu.memory_space<vmem>>, vector<64x384xf32>
    %215 = arith.truncf %214 : vector<64x384xf32> to vector<64x384xbf16>
    %c1_156 = arith.constant 1 : index
    %c0_157 = arith.constant 0 : index
    %c0_158 = arith.constant 0 : index
    %216 = vector.load %arg4[%c1_156, %c0_157, %c0_158] : memref<5x384x256xbf16, #tpu.memory_space<vmem>>, vector<1x384x256xbf16>
    %217 = vector.shape_cast %216 : vector<1x384x256xbf16> to vector<384x256xbf16>
    %cst_159 = arith.constant dense<0.000000e+00> : vector<64x256xf32>
    %218 = tpu.matmul %215, %217, %cst_159 {dimension_numbers = #tpu.dot_dimension_numbers<[1], [0], [0], [1], [0, 0, 1, 1], [], []>} : vector<64x384xbf16>, vector<384x256xbf16>, vector<64x256xf32> -> vector<64x256xf32>
    %219 = arith.addf %213, %218 : vector<64x256xf32>
    %c16_160 = arith.constant 16 : index
    %c0_161 = arith.constant 0 : index
    %220 = vector.load %arg12[%c16_160, %c0_161] : memref<96x384xf32, #tpu.memory_space<vmem>>, vector<64x384xf32>
    %221 = arith.truncf %220 : vector<64x384xf32> to vector<64x384xbf16>
    %c2_162 = arith.constant 2 : index
    %c0_163 = arith.constant 0 : index
    %c0_164 = arith.constant 0 : index
    %222 = vector.load %arg4[%c2_162, %c0_163, %c0_164] : memref<5x384x256xbf16, #tpu.memory_space<vmem>>, vector<1x384x256xbf16>
    %223 = vector.shape_cast %222 : vector<1x384x256xbf16> to vector<384x256xbf16>
    %cst_165 = arith.constant dense<0.000000e+00> : vector<64x256xf32>
    %224 = tpu.matmul %221, %223, %cst_165 {dimension_numbers = #tpu.dot_dimension_numbers<[1], [0], [0], [1], [0, 0, 1, 1], [], []>} : vector<64x384xbf16>, vector<384x256xbf16>, vector<64x256xf32> -> vector<64x256xf32>
    %225 = arith.addf %219, %224 : vector<64x256xf32>
    %c24_166 = arith.constant 24 : index
    %c0_167 = arith.constant 0 : index
    %226 = vector.load %arg12[%c24_166, %c0_167] : memref<96x384xf32, #tpu.memory_space<vmem>>, vector<64x384xf32>
    %227 = arith.truncf %226 : vector<64x384xf32> to vector<64x384xbf16>
    %c3_168 = arith.constant 3 : index
    %c0_169 = arith.constant 0 : index
    %c0_170 = arith.constant 0 : index
    %228 = vector.load %arg4[%c3_168, %c0_169, %c0_170] : memref<5x384x256xbf16, #tpu.memory_space<vmem>>, vector<1x384x256xbf16>
    %229 = vector.shape_cast %228 : vector<1x384x256xbf16> to vector<384x256xbf16>
    %cst_171 = arith.constant dense<0.000000e+00> : vector<64x256xf32>
    %230 = tpu.matmul %227, %229, %cst_171 {dimension_numbers = #tpu.dot_dimension_numbers<[1], [0], [0], [1], [0, 0, 1, 1], [], []>} : vector<64x384xbf16>, vector<384x256xbf16>, vector<64x256xf32> -> vector<64x256xf32>
    %231 = arith.addf %225, %230 : vector<64x256xf32>
    %c32_172 = arith.constant 32 : index
    %c0_173 = arith.constant 0 : index
    %232 = vector.load %arg12[%c32_172, %c0_173] : memref<96x384xf32, #tpu.memory_space<vmem>>, vector<64x384xf32>
    %233 = arith.truncf %232 : vector<64x384xf32> to vector<64x384xbf16>
    %c4_174 = arith.constant 4 : index
    %c0_175 = arith.constant 0 : index
    %c0_176 = arith.constant 0 : index
    %234 = vector.load %arg4[%c4_174, %c0_175, %c0_176] : memref<5x384x256xbf16, #tpu.memory_space<vmem>>, vector<1x384x256xbf16>
    %235 = vector.shape_cast %234 : vector<1x384x256xbf16> to vector<384x256xbf16>
    %cst_177 = arith.constant dense<0.000000e+00> : vector<64x256xf32>
    %236 = tpu.matmul %233, %235, %cst_177 {dimension_numbers = #tpu.dot_dimension_numbers<[1], [0], [0], [1], [0, 0, 1, 1], [], []>} : vector<64x384xbf16>, vector<384x256xbf16>, vector<64x256xf32> -> vector<64x256xf32>
    %237 = arith.addf %231, %236 : vector<64x256xf32>
    %cst_178 = arith.constant 0.000000e+00 : f32
    %238 = vector.broadcast %cst_178 : f32 to vector<64x256xf32>
    %239 = arith.maximumf %237, %238 : vector<64x256xf32>
    %240 = vector.extract_strided_slice %239 {offsets = [0, 0], sizes = [8, 256], strides = [1, 1]} : vector<64x256xf32> to vector<8x256xf32>
    %241 = vector.extract_strided_slice %239 {offsets = [8, 0], sizes = [8, 256], strides = [1, 1]} : vector<64x256xf32> to vector<8x256xf32>
    %242 = arith.maximumf %240, %241 : vector<8x256xf32>
    %243 = vector.extract_strided_slice %242 {offsets = [0, 0], sizes = [8, 128], strides = [1, 1]} : vector<8x256xf32> to vector<8x128xf32>
    %244 = vector.extract_strided_slice %242 {offsets = [0, 128], sizes = [8, 128], strides = [1, 1]} : vector<8x256xf32> to vector<8x128xf32>
    %245 = arith.maximumf %243, %244 : vector<8x128xf32>
    %246 = vector.extract_strided_slice %239 {offsets = [16, 0], sizes = [8, 256], strides = [1, 1]} : vector<64x256xf32> to vector<8x256xf32>
    %247 = vector.extract_strided_slice %239 {offsets = [24, 0], sizes = [8, 256], strides = [1, 1]} : vector<64x256xf32> to vector<8x256xf32>
    %248 = arith.maximumf %246, %247 : vector<8x256xf32>
    %249 = vector.extract_strided_slice %248 {offsets = [0, 0], sizes = [8, 128], strides = [1, 1]} : vector<8x256xf32> to vector<8x128xf32>
    %250 = vector.extract_strided_slice %248 {offsets = [0, 128], sizes = [8, 128], strides = [1, 1]} : vector<8x256xf32> to vector<8x128xf32>
    %251 = arith.maximumf %249, %250 : vector<8x128xf32>
    %252 = vector.extract_strided_slice %239 {offsets = [32, 0], sizes = [8, 256], strides = [1, 1]} : vector<64x256xf32> to vector<8x256xf32>
    %253 = vector.extract_strided_slice %239 {offsets = [40, 0], sizes = [8, 256], strides = [1, 1]} : vector<64x256xf32> to vector<8x256xf32>
    %254 = arith.maximumf %252, %253 : vector<8x256xf32>
    %255 = vector.extract_strided_slice %254 {offsets = [0, 0], sizes = [8, 128], strides = [1, 1]} : vector<8x256xf32> to vector<8x128xf32>
    %256 = vector.extract_strided_slice %254 {offsets = [0, 128], sizes = [8, 128], strides = [1, 1]} : vector<8x256xf32> to vector<8x128xf32>
    %257 = arith.maximumf %255, %256 : vector<8x128xf32>
    %258 = vector.extract_strided_slice %239 {offsets = [48, 0], sizes = [8, 256], strides = [1, 1]} : vector<64x256xf32> to vector<8x256xf32>
    %259 = vector.extract_strided_slice %239 {offsets = [56, 0], sizes = [8, 256], strides = [1, 1]} : vector<64x256xf32> to vector<8x256xf32>
    %260 = arith.maximumf %258, %259 : vector<8x256xf32>
    %261 = vector.extract_strided_slice %260 {offsets = [0, 0], sizes = [8, 128], strides = [1, 1]} : vector<8x256xf32> to vector<8x128xf32>
    %262 = vector.extract_strided_slice %260 {offsets = [0, 128], sizes = [8, 128], strides = [1, 1]} : vector<8x256xf32> to vector<8x128xf32>
    %263 = arith.maximumf %261, %262 : vector<8x128xf32>
    %264 = tpu.concatenate %245, %251, %257, %263 in 1 : vector<8x128xf32>, vector<8x128xf32>, vector<8x128xf32>, vector<8x128xf32> -> vector<8x512xf32>
    %265 = arith.truncf %264 : vector<8x512xf32> to vector<8x512xbf16>
    %c0_179 = arith.constant 0 : index
    %c0_180 = arith.constant 0 : index
    %266 = vector.load %arg6[%c0_179, %c0_180] : memref<512x1024xbf16, #tpu.memory_space<vmem>>, vector<512x1024xbf16>
    %cst_181 = arith.constant dense<0.000000e+00> : vector<8x1024xf32>
    %267 = tpu.matmul %265, %266, %cst_181 {dimension_numbers = #tpu.dot_dimension_numbers<[1], [0], [0], [1], [0, 0, 1, 1], [], []>} : vector<8x512xbf16>, vector<512x1024xbf16>, vector<8x1024xf32> -> vector<8x1024xf32>
    %c0_182 = arith.constant 0 : index
    %c0_183 = arith.constant 0 : index
    %268 = vector.load %arg7[%c0_182, %c0_183] : memref<1x1024xf32, #tpu.memory_space<vmem>>, vector<1x1024xf32>
    %269 = vector.broadcast %268 : vector<1x1024xf32> to vector<8x1024xf32>
    %270 = arith.addf %267, %269 : vector<8x1024xf32>
    %cst_184 = arith.constant 0.000000e+00 : f32
    %271 = vector.broadcast %cst_184 : f32 to vector<8x1024xf32>
    %272 = arith.maximumf %270, %271 : vector<8x1024xf32>
    %c0_185 = arith.constant 0 : index
    %c0_186 = arith.constant 0 : index
    %273 = vector.load %arg8[%c0_185, %c0_186] : memref<1024x10xf32, #tpu.memory_space<vmem>>, vector<1024x10xf32>
    %cst_187 = arith.constant dense<0.000000e+00> : vector<8x10xf32>
    %274 = tpu.matmul %272, %273, %cst_187 {dimension_numbers = #tpu.dot_dimension_numbers<[1], [0], [0], [1], [0, 0, 1, 1], [], []>} : vector<8x1024xf32>, vector<1024x10xf32>, vector<8x10xf32> -> vector<8x10xf32>
    %c0_188 = arith.constant 0 : index
    %c0_189 = arith.constant 0 : index
    %275 = vector.load %arg9[%c0_188, %c0_189] : memref<1x10xf32, #tpu.memory_space<vmem>>, vector<1x10xf32>
    %276 = vector.broadcast %275 : vector<1x10xf32> to vector<8x10xf32>
    %277 = arith.addf %274, %276 : vector<8x10xf32>
    %c0_190 = arith.constant 0 : index
    %c0_191 = arith.constant 0 : index
    %278 = vector.load %arg10[%c0_190, %c0_191] : memref<8x10xf32, #tpu.memory_space<vmem>>, vector<8x10xf32>
    tpu.vector_store %arg10[%c0_190, %c0_191], %277 {strides = array<i32>} : memref<8x10xf32, #tpu.memory_space<vmem>>, vector<8x10xf32>,
    return
  }
  func.func @transform_0(%arg0: i32) -> (i32, i32, i32) {
    %c0_i32 = arith.constant 0 : i32
    %c0_i32_0 = arith.constant 0 : i32
    %c0_i32_1 = arith.constant 0 : i32
    return %c0_i32, %arg0, %c0_i32_0 : i32, i32, i32
  }
  func.func @transform_1(%arg0: i32) -> (i32, i32, i32) {
    %c0_i32 = arith.constant 0 : i32
    %c0_i32_0 = arith.constant 0 : i32
    %c0_i32_1 = arith.constant 0 : i32
    %c0_i32_2 = arith.constant 0 : i32
    return %c0_i32, %c0_i32_0, %c0_i32_1 : i32, i32, i32
  }
  func.func @transform_2(%arg0: i32) -> (i32, i32) {
    %c0_i32 = arith.constant 0 : i32
    %c0_i32_0 = arith.constant 0 : i32
    %c0_i32_1 = arith.constant 0 : i32
    return %c0_i32, %c0_i32_0 : i32, i32
  }
  func.func @transform_3(%arg0: i32) -> (i32, i32, i32) {
    %c0_i32 = arith.constant 0 : i32
    %c0_i32_0 = arith.constant 0 : i32
    %c0_i32_1 = arith.constant 0 : i32
    %c0_i32_2 = arith.constant 0 : i32
    return %c0_i32, %c0_i32_0, %c0_i32_1 : i32, i32, i32
  }
  func.func @transform_4(%arg0: i32) -> (i32, i32) {
    %c0_i32 = arith.constant 0 : i32
    %c0_i32_0 = arith.constant 0 : i32
    %c0_i32_1 = arith.constant 0 : i32
    return %c0_i32, %c0_i32_0 : i32, i32
  }
  func.func @transform_5(%arg0: i32) -> (i32, i32) {
    %c0_i32 = arith.constant 0 : i32
    %c0_i32_0 = arith.constant 0 : i32
    %c0_i32_1 = arith.constant 0 : i32
    return %c0_i32, %c0_i32_0 : i32, i32
  }
  func.func @transform_6(%arg0: i32) -> (i32, i32) {
    %c0_i32 = arith.constant 0 : i32
    %c0_i32_0 = arith.constant 0 : i32
    %c0_i32_1 = arith.constant 0 : i32
    return %c0_i32, %c0_i32_0 : i32, i32
  }
  func.func @transform_7(%arg0: i32) -> (i32, i32) {
    %c0_i32 = arith.constant 0 : i32
    %c0_i32_0 = arith.constant 0 : i32
    %c0_i32_1 = arith.constant 0 : i32
    return %c0_i32, %c0_i32_0 : i32, i32
  }
  func.func @transform_8(%arg0: i32) -> (i32, i32) {
    %c0_i32 = arith.constant 0 : i32
    %c0_i32_0 = arith.constant 0 : i32
    %c0_i32_1 = arith.constant 0 : i32
    return %c0_i32, %c0_i32_0 : i32, i32
  }
  func.func @transform_9(%arg0: i32) -> (i32, i32) {
    %c0_i32 = arith.constant 0 : i32
    %c0_i32_0 = arith.constant 0 : i32
    return %arg0, %c0_i32 : i32, i32
  }
}

</mosaic_0001>

<llo_original>
// kernel: model_c_forward.1
$region0: #{model_c_forward.1}
  #allocation0 [shape = 'u32[]', space=smem, size = 0x4, offset = 0x4, fixed_abs, tag = 'smem constant byte address 0x4 - core index']
  #allocation1 [shape = 'u32[72,128]{1,0:T(1,128)}', space=vmem, size = 0x9000, scoped, tag = 'internal scratch']
  #allocation2 [shape = 'f32[224,28]{1,0:T(8,128)}', space=vmem, size = 0x1c000, scoped, tag = 'scratch operand']
  #allocation3 [shape = 'f32[96,384]{1,0:T(8,128)}', space=vmem, size = 0x24000, scoped, tag = 'scratch operand']
  %s0 = inlined_call_operand.vmem [shape: f32[28,8,28], index: 0, kind: input, shape index: {}]
  %s1 = inlined_call_operand.vmem [shape: bf16[5,28,768], index: 1, kind: input, shape index: {}]
  %s2 = inlined_call_operand.vmem [shape: f32[1,768], index: 2, kind: input, shape index: {}]
  %s3 = inlined_call_operand.hbm [shape: bf16[5,384,256], index: 3, kind: input, shape index: {}]
  %s4 = inlined_call_operand.vmem [shape: f32[1,256], index: 4, kind: input, shape index: {}]
  %s5 = inlined_call_operand.hbm [shape: bf16[512,1024], index: 5, kind: input, shape index: {}]
  %s6 = inlined_call_operand.vmem [shape: f32[1,1024], index: 6, kind: input, shape index: {}]
  %s7 = inlined_call_operand.vmem [shape: f32[1024,10], index: 7, kind: input, shape index: {}]
  %s8 = inlined_call_operand.vmem [shape: f32[1,10], index: 8, kind: input, shape index: {}]
  %s9 = inlined_call_operand.vmem [shape: f32[8,10], index: 9, kind: output, shape index: {}]
  %s10 = sld [smem:[#allocation0]]
  $region54: #{model_c_forward.1} parent=0
    _
  %s12 = ssub.s32 1, %s10
  %s13 = scalar_select 0, %s12, %s10
  $region1: #{model_c_forward.1} parent=0
    #allocation4 [shape = 'u8[983040]{0}', space=vmem, size = 0xf0000, scoped, tag = 'input window, operand 3, single buffered']
    #allocation5 [shape = 's32[1]{0}', space=sflag, size = 0x4, scoped, tag = 'scoped memory for model_c_forward.1']
    #allocation6 [shape = 'u8[1048576]{0}', space=vmem, size = 0x100000, scoped, tag = 'input window, operand 5, single buffered']
    #allocation7 [shape = 's32[1]{0}', space=sflag, size = 0x4, scoped, tag = 'scoped memory for model_c_forward.1']
    %14 = vsyncpa [#allocation5], 0
    %15 = vsyncpa [#allocation7], 0
    // Predicated region
    $region2: #{model_c_forward.1} parent=1 // pred_check
      _
    $region3: #{model_c_forward.1} parent=1 // pred_check_branch
      %17 = sbr.rel (0) target = $region5
    $region4: #{model_c_forward.1} parent=1 // pred_region
      _
    $region5: #{model_c_forward.1} parent=1 // pred_fallthru
      _
    // Predicated region
    $region6: #{model_c_forward.1} parent=1 // pred_check
      _
    $region7: #{model_c_forward.1} parent=1 // pred_check_branch
      %19 = sbr.rel (0) target = $region9
    $region8: #{model_c_forward.1} parent=1 // pred_region
      _
    $region9: #{model_c_forward.1} parent=1 // pred_fallthru
      _
    // Predicated region
    $region10: #{model_c_forward.1} parent=1 // pred_check
      _
    $region11: #{model_c_forward.1} parent=1 // pred_check_branch
      %21 = sbr.rel (0) target = $region13
    $region12: #{model_c_forward.1} parent=1 // pred_region
      _
    $region13: #{model_c_forward.1} parent=1 // pred_fallthru
      _
    // Predicated region
    $region14: #{model_c_forward.1} parent=1 // pred_check
      _
    $region15: #{model_c_forward.1} parent=1 // pred_check_branch
      %23 = sbr.rel (0) target = $region17
    $region16: #{model_c_forward.1} parent=1 // pred_region
      %25 = vsyncadd [#allocation5], 0
      %s26 = sshll.u32 %s3, 4
      %s27 = int_to_ptr.hbm [resolvable:$true] %s26
      %s28 = sshll.u32 [#allocation4], 4
      %s29 = int_to_ptr.vmem [resolvable:$true] %s28
      %34 = dma.hbm_to_vmem [thread:$0]  %s27, 30720, %s29, [#allocation5], 128, 128, 8
    $region17: #{model_c_forward.1} parent=1 // pred_fallthru
      _
    // Predicated region
    $region18: #{model_c_forward.1} parent=1 // pred_check
      _
    $region19: #{model_c_forward.1} parent=1 // pred_check_branch
      %36 = sbr.rel (0) target = $region21
    $region20: #{model_c_forward.1} parent=1 // pred_region
      _
    $region21: #{model_c_forward.1} parent=1 // pred_fallthru
      _
    // Predicated region
    $region22: #{model_c_forward.1} parent=1 // pred_check
      _
    $region23: #{model_c_forward.1} parent=1 // pred_check_branch
      %38 = sbr.rel (0) target = $region25
    $region24: #{model_c_forward.1} parent=1 // pred_region
      %40 = vsyncadd [#allocation7], 0
      %s41 = sshll.u32 %s5, 4
      %s42 = int_to_ptr.hbm [resolvable:$true] %s41
      %s43 = sshll.u32 [#allocation6], 4
      %s44 = int_to_ptr.vmem [resolvable:$true] %s43
      %49 = dma.hbm_to_vmem [thread:$0]  %s42, 32768, %s44, [#allocation7], 512, 512, 32
    $region25: #{model_c_forward.1} parent=1 // pred_fallthru
      _
    // Predicated region
    $region26: #{model_c_forward.1} parent=1 // pred_check
      _
    $region27: #{model_c_forward.1} parent=1 // pred_check_branch
      %51 = sbr.rel (0) target = $region29
    $region28: #{model_c_forward.1} parent=1 // pred_region
      _
    $region29: #{model_c_forward.1} parent=1 // pred_fallthru
      _
    // Predicated region
    $region30: #{model_c_forward.1} parent=1 // pred_check
      _
    $region31: #{model_c_forward.1} parent=1 // pred_check_branch
      %53 = sbr.rel (0) target = $region33
    $region32: #{model_c_forward.1} parent=1 // pred_region
      _
    $region33: #{model_c_forward.1} parent=1 // pred_fallthru
      _
    // Predicated region
    $region34: #{model_c_forward.1} parent=1 // pred_check
      _
    $region35: #{model_c_forward.1} parent=1 // pred_check_branch
      %55 = sbr.rel (0) target = $region37
    $region36: #{model_c_forward.1} parent=1 // pred_region
      _
    $region37: #{model_c_forward.1} parent=1 // pred_fallthru
      _
    // Predicated region
    $region38: #{model_c_forward.1} parent=1 // pred_check
      _
    $region39: #{model_c_forward.1} parent=1 // pred_check_branch
      %57 = sbr.rel (0) target = $region41
    $region40: #{model_c_forward.1} parent=1 // pred_region
      %59 = dma.done [#allocation5], 30720
    $region41: #{model_c_forward.1} parent=1 // pred_fallthru
      _
    // Predicated region
    $region42: #{model_c_forward.1} parent=1 // pred_check
      _
    $region43: #{model_c_forward.1} parent=1 // pred_check_branch
      %61 = sbr.rel (0) target = $region45
    $region44: #{model_c_forward.1} parent=1 // pred_region
      %63 = dma.done [#allocation7], 32768
    $region45: #{model_c_forward.1} parent=1 // pred_fallthru
      _
    %v65 = vld [vmem:[%s0] sm:$0xff]
    %vm66 = vcmask 228352
    %67 = vst.msk [vmem:[#allocation2] sm:$0xff] %vm66, %v65
    %s68 = scalar_lea.vmem %s0, 8
    %v69 = vld [vmem:[%s68] sm:$0xff]
    %70 = vst.msk [vmem:[#allocation2 + $0x8] sm:$0xff] %vm66, %v69
    %s71 = scalar_lea.vmem %s0, 16
    %v72 = vld [vmem:[%s71] sm:$0xff]
    %73 = vst.msk [vmem:[#allocation2 + $0x10] sm:$0xff] %vm66, %v72
    %s74 = scalar_lea.vmem %s0, 24
    %v75 = vld [vmem:[%s74] sm:$0xff]
    %76 = vst.msk [vmem:[#allocation2 + $0x18] sm:$0xff] %vm66, %v75
    %s77 = scalar_lea.vmem %s0, 32
    %v78 = vld [vmem:[%s77] sm:$0xff]
    %79 = vst.msk [vmem:[#allocation2 + $0x20] sm:$0xff] %vm66, %v78
    %s80 = scalar_lea.vmem %s0, 40
    %v81 = vld [vmem:[%s80] sm:$0xff]
    %82 = vst.msk [vmem:[#allocation2 + $0x28] sm:$0xff] %vm66, %v81
    %s83 = scalar_lea.vmem %s0, 48
    %v84 = vld [vmem:[%s83] sm:$0xff]
    %85 = vst.msk [vmem:[#allocation2 + $0x30] sm:$0xff] %vm66, %v84
    %s86 = scalar_lea.vmem %s0, 56
    %v87 = vld [vmem:[%s86] sm:$0xff]
    %88 = vst.msk [vmem:[#allocation2 + $0x38] sm:$0xff] %vm66, %v87
    %s89 = scalar_lea.vmem %s0, 64
    %v90 = vld [vmem:[%s89] sm:$0xff]
    %91 = vst.msk [vmem:[#allocation2 + $0x40] sm:$0xff] %vm66, %v90
    %s92 = scalar_lea.vmem %s0, 72
    %v93 = vld [vmem:[%s92] sm:$0xff]
    %94 = vst.msk [vmem:[#allocation2 + $0x48] sm:$0xff] %vm66, %v93
    %s95 = scalar_lea.vmem %s0, 80
    %v96 = vld [vmem:[%s95] sm:$0xff]
    %97 = vst.msk [vmem:[#allocation2 + $0x50] sm:$0xff] %vm66, %v96
    %s98 = scalar_lea.vmem %s0, 88
    %v99 = vld [vmem:[%s98] sm:$0xff]
    %100 = vst.msk [vmem:[#allocation2 + $0x58] sm:$0xff] %vm66, %v99
    %s101 = scalar_lea.vmem %s0, 96
    %v102 = vld [vmem:[%s101] sm:$0xff]
    %103 = vst.msk [vmem:[#allocation2 + $0x60] sm:$0xff] %vm66, %v102
    %s104 = scalar_lea.vmem %s0, 104
    %v105 = vld [vmem:[%s104] sm:$0xff]
    %106 = vst.msk [vmem:[#allocation2 + $0x68] sm:$0xff] %vm66, %v105
    %s107 = scalar_lea.vmem %s0, 112
    %v108 = vld [vmem:[%s107] sm:$0xff]
    %109 = vst.msk [vmem:[#allocation2 + $0x70] sm:$0xff] %vm66, %v108
    %s110 = scalar_lea.vmem %s0, 120
    %v111 = vld [vmem:[%s110] sm:$0xff]
    %112 = vst.msk [vmem:[#allocation2 + $0x78] sm:$0xff] %vm66, %v111
    %s113 = scalar_lea.vmem %s0, 128
    %v114 = vld [vmem:[%s113] sm:$0xff]
    %115 = vst.msk [vmem:[#allocation2 + $0x80] sm:$0xff] %vm66, %v114
    %s116 = scalar_lea.vmem %s0, 136
    %v117 = vld [vmem:[%s116] sm:$0xff]
    %118 = vst.msk [vmem:[#allocation2 + $0x88] sm:$0xff] %vm66, %v117
    %s119 = scalar_lea.vmem %s0, 144
    %v120 = vld [vmem:[%s119] sm:$0xff]
    %121 = vst.msk [vmem:[#allocation2 + $0x90] sm:$0xff] %vm66, %v120
    %s122 = scalar_lea.vmem %s0, 152
    %v123 = vld [vmem:[%s122] sm:$0xff]
    %124 = vst.msk [vmem:[#allocation2 + $0x98] sm:$0xff] %vm66, %v123
    %s125 = scalar_lea.vmem %s0, 160
    %v126 = vld [vmem:[%s125] sm:$0xff]
    %127 = vst.msk [vmem:[#allocation2 + $0xa0] sm:$0xff] %vm66, %v126
    %s128 = scalar_lea.vmem %s0, 168
    %v129 = vld [vmem:[%s128] sm:$0xff]
    %130 = vst.msk [vmem:[#allocation2 + $0xa8] sm:$0xff] %vm66, %v129
    %s131 = scalar_lea.vmem %s0, 176
    %v132 = vld [vmem:[%s131] sm:$0xff]
    %133 = vst.msk [vmem:[#allocation2 + $0xb0] sm:$0xff] %vm66, %v132
    %s134 = scalar_lea.vmem %s0, 184
    %v135 = vld [vmem:[%s134] sm:$0xff]
    %136 = vst.msk [vmem:[#allocation2 + $0xb8] sm:$0xff] %vm66, %v135
    %s137 = scalar_lea.vmem %s0, 192
    %v138 = vld [vmem:[%s137] sm:$0xff]
    %139 = vst.msk [vmem:[#allocation2 + $0xc0] sm:$0xff] %vm66, %v138
    %s140 = scalar_lea.vmem %s0, 200
    %v141 = vld [vmem:[%s140] sm:$0xff]
    %142 = vst.msk [vmem:[#allocation2 + $0xc8] sm:$0xff] %vm66, %v141
    %s143 = scalar_lea.vmem %s0, 208
    %v144 = vld [vmem:[%s143] sm:$0xff]
    %145 = vst.msk [vmem:[#allocation2 + $0xd0] sm:$0xff] %vm66, %v144
    %s146 = scalar_lea.vmem %s0, 216
    %v147 = vld [vmem:[%s146] sm:$0xff]
    %148 = vst.msk [vmem:[#allocation2 + $0xd8] sm:$0xff] %vm66, %v147
    %v149 = vld [vmem:[%s2] sm:$0x3f]
    %v151 = vperm.slane %v149, 0
    %v152 = vperm.slane %v149, 1
    %v153 = vperm.slane %v149, 2
    %v154 = vperm.slane %v149, 3
    %v155 = vperm.slane %v149, 4
    %v156 = vperm.slane %v149, 5
    %v163 = vadd.f32 %v151, 0.0
    %v164 = vadd.f32 %v152, 0.0
    %v165 = vadd.f32 %v153, 0.0
    %v166 = vadd.f32 %v154, 0.0
    %v167 = vadd.f32 %v155, 0.0
    %v168 = vadd.f32 %v156, 0.0
    %v169 = vld [vmem:[#allocation2] sm:$0xff]
    %v170 = vld [vmem:[#allocation2 + $0x8] sm:$0xff]
    %v171 = vld [vmem:[#allocation2 + $0x10] sm:$0xff]
    %v172 = vld [vmem:[#allocation2 + $0x18] sm:$0xff]
    %v173 = vld [vmem:[#allocation2 + $0x20] sm:$0xff]
    %v174 = vld [vmem:[#allocation2 + $0x28] sm:$0xff]
    %v175 = vld [vmem:[#allocation2 + $0x30] sm:$0xff]
    %v176 = vld [vmem:[#allocation2 + $0x38] sm:$0xff]
    %v177 = vld [vmem:[#allocation2 + $0x40] sm:$0xff]
    %v178 = vld [vmem:[#allocation2 + $0x48] sm:$0xff]
    %v179 = vld [vmem:[#allocation2 + $0x50] sm:$0xff]
    %v180 = vld [vmem:[#allocation2 + $0x58] sm:$0xff]
    %v181 = vld [vmem:[#allocation2 + $0x60] sm:$0xff]
    %v182 = vld [vmem:[#allocation2 + $0x68] sm:$0xff]
    %v183 = vld [vmem:[#allocation2 + $0x70] sm:$0xff]
    %v184 = vld [vmem:[#allocation2 + $0x78] sm:$0xff]
    %v185 = vld [vmem:[#allocation2 + $0x80] sm:$0xff]
    %v186 = vld [vmem:[#allocation2 + $0x88] sm:$0xff]
    %v187 = vld [vmem:[#allocation2 + $0x90] sm:$0xff]
    %v188 = vld [vmem:[#allocation2 + $0x98] sm:$0xff]
    %v189 = vld [vmem:[#allocation2 + $0xa0] sm:$0xff]
    %v190 = vld [vmem:[#allocation2 + $0xa8] sm:$0xff]
    %v191 = vld [vmem:[#allocation2 + $0xb0] sm:$0xff]
    %v192 = vld [vmem:[#allocation2 + $0xb8] sm:$0xff]
    %v193 = vpack.c.bf16 %v170, %v169
    %v194 = vpack.c.bf16 %v172, %v171
    %v195 = vpack.c.bf16 %v174, %v173
    %v196 = vpack.c.bf16 %v176, %v175
    %v197 = vpack.c.bf16 %v178, %v177
    %v198 = vpack.c.bf16 %v180, %v179
    %v199 = vpack.c.bf16 %v182, %v181
    %v200 = vpack.c.bf16 %v184, %v183
    %v201 = vpack.c.bf16 %v186, %v185
    %v202 = vpack.c.bf16 %v188, %v187
    %v203 = vpack.c.bf16 %v190, %v189
    %v204 = vpack.c.bf16 %v192, %v191
    %v205 = vld [vmem:[%s1] sm:$0xff]
    %v206 = vld [vmem:[%s1 + $0x8] sm:$0xff]
    %v207 = vld [vmem:[%s1 + $0x10] sm:$0xff]
    %v208 = vld [vmem:[%s1 + $0x18] sm:$0xff]
    %v209 = vld [vmem:[%s1 + $0x20] sm:$0xff]
    %v210 = vld [vmem:[%s1 + $0x28] sm:$0xff]
    %v211 = vld [vmem:[%s1 + $0x30] sm:$0xff]
    %v212 = vld [vmem:[%s1 + $0x38] sm:$0xff]
    %v213 = vld [vmem:[%s1 + $0x40] sm:$0xff]
    %v214 = vld [vmem:[%s1 + $0x48] sm:$0x33]
    %v215 = vld [vmem:[%s1 + $0x50] sm:$0x33]
    %v216 = vld [vmem:[%s1 + $0x58] sm:$0x33]
    %v229 = vunpack.c.l.b16 %v205
    %v230 = vunpack.c.h.b16 %v205
    %v231 = vunpack.c.l.b16 %v206
    %v232 = vunpack.c.h.b16 %v206
    %v233 = vunpack.c.l.b16 %v207
    %v234 = vunpack.c.h.b16 %v207
    %v235 = vunpack.c.l.b16 %v208
    %v236 = vunpack.c.h.b16 %v208
    %v237 = vunpack.c.l.b16 %v209
    %v238 = vunpack.c.h.b16 %v209
    %v239 = vunpack.c.l.b16 %v210
    %v240 = vunpack.c.h.b16 %v210
    %v241 = vunpack.c.l.b16 %v211
    %v242 = vunpack.c.h.b16 %v211
    %v243 = vunpack.c.l.b16 %v212
    %v244 = vunpack.c.h.b16 %v212
    %v245 = vunpack.c.l.b16 %v213
    %v246 = vunpack.c.h.b16 %v213
    %v247 = vunpack.c.l.b16 %v214
    %v248 = vunpack.c.h.b16 %v214
    %v249 = vunpack.c.l.b16 %v215
    %v250 = vunpack.c.h.b16 %v215
    %v251 = vunpack.c.l.b16 %v216
    %v252 = vunpack.c.h.b16 %v216
    %v253 = vpack.c.b16 %v235, %v229
    %v254 = vpack.c.b16 %v236, %v230
    %v255 = vpack.c.b16 %v237, %v231
    %v256 = vpack.c.b16 %v238, %v232
    %v257 = vpack.c.b16 %v239, %v233
    %v258 = vpack.c.b16 %v240, %v234
    %v259 = vpack.c.b16 %v247, %v241
    %v260 = vpack.c.b16 %v248, %v242
    %v261 = vpack.c.b16 %v249, %v243
    %v262 = vpack.c.b16 %v250, %v244
    %v263 = vpack.c.b16 %v251, %v245
    %v264 = vpack.c.b16 %v252, %v246
    %v272 = vsel %vm66, %v193, 0
    %v275 = vsel %vm66, %v194, 0
    %v278 = vsel %vm66, %v195, 0
    %v281 = vsel %vm66, %v196, 0
    %v284 = vsel %vm66, %v197, 0
    %v287 = vsel %vm66, %v198, 0
    %v290 = vsel %vm66, %v199, 0
    %v293 = vsel %vm66, %v200, 0
    %v296 = vsel %vm66, %v201, 0
    %v299 = vsel %vm66, %v202, 0
    %v302 = vsel %vm66, %v203, 0
    %v305 = vsel %vm66, %v204, 0
    %vm307 = vcmask 1045504
    %v309 = vsel %vm307, %v259, 0
    %v312 = vsel %vm307, %v260, 0
    %v315 = vsel %vm307, %v261, 0
    %v318 = vsel %vm307, %v262, 0
    %v321 = vsel %vm307, %v263, 0
    %v324 = vsel %vm307, %v264, 0
    %326 = vmatpush.bf16.msra.mxu0 0
    %327 = vmatpush.bf16.msra.mxu0 0
    %328 = vmatpush.bf16.msra.mxu0 0
    %329 = vmatpush.bf16.msra.mxu0 0
    %330 = vmatpush.bf16.msra.mxu0 0
    %331 = vmatpush.bf16.msra.mxu0 0
    %332 = vmatpush.bf16.msra.mxu0 %v309
    %333 = vmatpush.bf16.msra.mxu0 %v253
    %334 = vmatmul.bf16.gmra.mxu0 %v272
    %v335 = vpop.f32.mrf.mxu0
    %v336 = vadd.f32 0.0, %v335
    %v337 = vpop.f32.mrf.mxu0
    %v338 = vadd.f32 0.0, %v337
    %339 = vmatmul.bf16.gmra.mxu0 %v275
    %v340 = vpop.f32.mrf.mxu0
    %v341 = vadd.f32 0.0, %v340
    %v342 = vpop.f32.mrf.mxu0
    %v343 = vadd.f32 0.0, %v342
    %344 = vmatmul.bf16.gmra.mxu0 %v278
    %v345 = vpop.f32.mrf.mxu0
    %v346 = vadd.f32 0.0, %v345
    %v347 = vpop.f32.mrf.mxu0
    %v348 = vadd.f32 0.0, %v347
    %349 = vmatmul.bf16.gmra.mxu0 %v281
    %v350 = vpop.f32.mrf.mxu0
    %v351 = vadd.f32 0.0, %v350
    %v352 = vpop.f32.mrf.mxu0
    %v353 = vadd.f32 0.0, %v352
    %354 = vmatmul.bf16.gmra.mxu0 %v284
    %v355 = vpop.f32.mrf.mxu0
    %v356 = vadd.f32 0.0, %v355
    %v357 = vpop.f32.mrf.mxu0
    %v358 = vadd.f32 0.0, %v357
    %359 = vmatmul.bf16.gmra.mxu0 %v287
    %v360 = vpop.f32.mrf.mxu0
    %v361 = vadd.f32 0.0, %v360
    %v362 = vpop.f32.mrf.mxu0
    %v363 = vadd.f32 0.0, %v362
    %364 = vmatmul.bf16.gmra.mxu0 %v290
    %v365 = vpop.f32.mrf.mxu0
    %v366 = vadd.f32 0.0, %v365
    %v367 = vpop.f32.mrf.mxu0
    %v368 = vadd.f32 0.0, %v367
    %369 = vmatmul.bf16.gmra.mxu0 %v293
    %v370 = vpop.f32.mrf.mxu0
    %v371 = vadd.f32 0.0, %v370
    %v372 = vpop.f32.mrf.mxu0
    %v373 = vadd.f32 0.0, %v372
    %374 = vmatmul.bf16.gmra.mxu0 %v296
    %v375 = vpop.f32.mrf.mxu0
    %v376 = vadd.f32 0.0, %v375
    %v377 = vpop.f32.mrf.mxu0
    %v378 = vadd.f32 0.0, %v377
    %379 = vmatmul.bf16.gmra.mxu0 %v299
    %v380 = vpop.f32.mrf.mxu0
    %v381 = vadd.f32 0.0, %v380
    %v382 = vpop.f32.mrf.mxu0
    %v383 = vadd.f32 0.0, %v382
    %384 = vmatmul.bf16.gmra.mxu0 %v302
    %v385 = vpop.f32.mrf.mxu0
    %v386 = vadd.f32 0.0, %v385
    %v387 = vpop.f32.mrf.mxu0
    %v388 = vadd.f32 0.0, %v387
    %389 = vmatmul.bf16.gmra.mxu0 %v305
    %v390 = vpop.f32.mrf.mxu0
    %v391 = vadd.f32 0.0, %v390
    %v392 = vpop.f32.mrf.mxu0
    %v393 = vadd.f32 0.0, %v392
    %394 = vdwg.mxu0
    %395 = vmatpush.bf16.msra.mxu0 0
    %396 = vmatpush.bf16.msra.mxu0 0
    %397 = vmatpush.bf16.msra.mxu0 0
    %398 = vmatpush.bf16.msra.mxu0 0
    %399 = vmatpush.bf16.msra.mxu0 0
    %400 = vmatpush.bf16.msra.mxu0 0
    %401 = vmatpush.bf16.msra.mxu0 %v312
    %402 = vmatpush.bf16.msra.mxu0 %v254
    %403 = vmatmul.bf16.gmra.mxu0 %v272
    %v404 = vpop.f32.mrf.mxu0
    %v405 = vadd.f32 0.0, %v404
    %v406 = vpop.f32.mrf.mxu0
    %v407 = vadd.f32 0.0, %v406
    %408 = vmatmul.bf16.gmra.mxu0 %v275
    %v409 = vpop.f32.mrf.mxu0
    %v410 = vadd.f32 0.0, %v409
    %v411 = vpop.f32.mrf.mxu0
    %v412 = vadd.f32 0.0, %v411
    %413 = vmatmul.bf16.gmra.mxu0 %v278
    %v414 = vpop.f32.mrf.mxu0
    %v415 = vadd.f32 0.0, %v414
    %v416 = vpop.f32.mrf.mxu0
    %v417 = vadd.f32 0.0, %v416
    %418 = vmatmul.bf16.gmra.mxu0 %v281
    %v419 = vpop.f32.mrf.mxu0
    %v420 = vadd.f32 0.0, %v419
    %v421 = vpop.f32.mrf.mxu0
    %v422 = vadd.f32 0.0, %v421
    %423 = vmatmul.bf16.gmra.mxu0 %v284
    %v424 = vpop.f32.mrf.mxu0
    %v425 = vadd.f32 0.0, %v424
    %v426 = vpop.f32.mrf.mxu0
    %v427 = vadd.f32 0.0, %v426
    %428 = vmatmul.bf16.gmra.mxu0 %v287
    %v429 = vpop.f32.mrf.mxu0
    %v430 = vadd.f32 0.0, %v429
    %v431 = vpop.f32.mrf.mxu0
    %v432 = vadd.f32 0.0, %v431
    %433 = vmatmul.bf16.gmra.mxu0 %v290
    %v434 = vpop.f32.mrf.mxu0
    %v435 = vadd.f32 0.0, %v434
    %v436 = vpop.f32.mrf.mxu0
    %v437 = vadd.f32 0.0, %v436
    %438 = vmatmul.bf16.gmra.mxu0 %v293
    %v439 = vpop.f32.mrf.mxu0
    %v440 = vadd.f32 0.0, %v439
    %v441 = vpop.f32.mrf.mxu0
    %v442 = vadd.f32 0.0, %v441
    %443 = vmatmul.bf16.gmra.mxu0 %v296
    %v444 = vpop.f32.mrf.mxu0
    %v445 = vadd.f32 0.0, %v444
    %v446 = vpop.f32.mrf.mxu0
    %v447 = vadd.f32 0.0, %v446
    %448 = vmatmul.bf16.gmra.mxu0 %v299
    %v449 = vpop.f32.mrf.mxu0
    %v450 = vadd.f32 0.0, %v449
    %v451 = vpop.f32.mrf.mxu0
    %v452 = vadd.f32 0.0, %v451
    %453 = vmatmul.bf16.gmra.mxu0 %v302
    %v454 = vpop.f32.mrf.mxu0
    %v455 = vadd.f32 0.0, %v454
    %v456 = vpop.f32.mrf.mxu0
    %v457 = vadd.f32 0.0, %v456
    %458 = vmatmul.bf16.gmra.mxu0 %v305
    %v459 = vpop.f32.mrf.mxu0
    %v460 = vadd.f32 0.0, %v459
    %v461 = vpop.f32.mrf.mxu0
    %v462 = vadd.f32 0.0, %v461
    %463 = vdwg.mxu0
    %464 = vmatpush.bf16.msra.mxu0 0
    %465 = vmatpush.bf16.msra.mxu0 0
    %466 = vmatpush.bf16.msra.mxu0 0
    %467 = vmatpush.bf16.msra.mxu0 0
    %468 = vmatpush.bf16.msra.mxu0 0
    %469 = vmatpush.bf16.msra.mxu0 0
    %470 = vmatpush.bf16.msra.mxu0 %v315
    %471 = vmatpush.bf16.msra.mxu0 %v255
    %472 = vmatmul.bf16.gmra.mxu0 %v272
    %v473 = vpop.f32.mrf.mxu0
    %v474 = vadd.f32 0.0, %v473
    %v475 = vpop.f32.mrf.mxu0
    %v476 = vadd.f32 0.0, %v475
    %477 = vmatmul.bf16.gmra.mxu0 %v275
    %v478 = vpop.f32.mrf.mxu0
    %v479 = vadd.f32 0.0, %v478
    %v480 = vpop.f32.mrf.mxu0
    %v481 = vadd.f32 0.0, %v480
    %482 = vmatmul.bf16.gmra.mxu0 %v278
    %v483 = vpop.f32.mrf.mxu0
    %v484 = vadd.f32 0.0, %v483
    %v485 = vpop.f32.mrf.mxu0
    %v486 = vadd.f32 0.0, %v485
    %487 = vmatmul.bf16.gmra.mxu0 %v281
    %v488 = vpop.f32.mrf.mxu0
    %v489 = vadd.f32 0.0, %v488
    %v490 = vpop.f32.mrf.mxu0
    %v491 = vadd.f32 0.0, %v490
    %492 = vmatmul.bf16.gmra.mxu0 %v284
    %v493 = vpop.f32.mrf.mxu0
    %v494 = vadd.f32 0.0, %v493
    %v495 = vpop.f32.mrf.mxu0
    %v496 = vadd.f32 0.0, %v495
    %497 = vmatmul.bf16.gmra.mxu0 %v287
    %v498 = vpop.f32.mrf.mxu0
    %v499 = vadd.f32 0.0, %v498
    %v500 = vpop.f32.mrf.mxu0
    %v501 = vadd.f32 0.0, %v500
    %502 = vmatmul.bf16.gmra.mxu0 %v290
    %v503 = vpop.f32.mrf.mxu0
    %v504 = vadd.f32 0.0, %v503
    %v505 = vpop.f32.mrf.mxu0
    %v506 = vadd.f32 0.0, %v505
    %507 = vmatmul.bf16.gmra.mxu0 %v293
    %v508 = vpop.f32.mrf.mxu0
    %v509 = vadd.f32 0.0, %v508
    %v510 = vpop.f32.mrf.mxu0
    %v511 = vadd.f32 0.0, %v510
    %512 = vmatmul.bf16.gmra.mxu0 %v296
    %v513 = vpop.f32.mrf.mxu0
    %v514 = vadd.f32 0.0, %v513
    %v515 = vpop.f32.mrf.mxu0
    %v516 = vadd.f32 0.0, %v515
    %517 = vmatmul.bf16.gmra.mxu0 %v299
    %v518 = vpop.f32.mrf.mxu0
    %v519 = vadd.f32 0.0, %v518
    %v520 = vpop.f32.mrf.mxu0
    %v521 = vadd.f32 0.0, %v520
    %522 = vmatmul.bf16.gmra.mxu0 %v302
    %v523 = vpop.f32.mrf.mxu0
    %v524 = vadd.f32 0.0, %v523
    %v525 = vpop.f32.mrf.mxu0
    %v526 = vadd.f32 0.0, %v525
    %527 = vmatmul.bf16.gmra.mxu0 %v305
    %v528 = vpop.f32.mrf.mxu0
    %v529 = vadd.f32 0.0, %v528
    %v530 = vpop.f32.mrf.mxu0
    %v531 = vadd.f32 0.0, %v530
    %532 = vdwg.mxu0
    %533 = vmatpush.bf16.msra.mxu0 0
    %534 = vmatpush.bf16.msra.mxu0 0
    %535 = vmatpush.bf16.msra.mxu0 0
    %536 = vmatpush.bf16.msra.mxu0 0
    %537 = vmatpush.bf16.msra.mxu0 0
    %538 = vmatpush.bf16.msra.mxu0 0
    %539 = vmatpush.bf16.msra.mxu0 %v318
    %540 = vmatpush.bf16.msra.mxu0 %v256
    %541 = vmatmul.bf16.gmra.mxu0 %v272
    %v542 = vpop.f32.mrf.mxu0
    %v543 = vadd.f32 0.0, %v542
    %v544 = vpop.f32.mrf.mxu0
    %v545 = vadd.f32 0.0, %v544
    %546 = vmatmul.bf16.gmra.mxu0 %v275
    %v547 = vpop.f32.mrf.mxu0
    %v548 = vadd.f32 0.0, %v547
    %v549 = vpop.f32.mrf.mxu0
    %v550 = vadd.f32 0.0, %v549
    %551 = vmatmul.bf16.gmra.mxu0 %v278
    %v552 = vpop.f32.mrf.mxu0
    %v553 = vadd.f32 0.0, %v552
    %v554 = vpop.f32.mrf.mxu0
    %v555 = vadd.f32 0.0, %v554
    %556 = vmatmul.bf16.gmra.mxu0 %v281
    %v557 = vpop.f32.mrf.mxu0
    %v558 = vadd.f32 0.0, %v557
    %v559 = vpop.f32.mrf.mxu0
    %v560 = vadd.f32 0.0, %v559
    %561 = vmatmul.bf16.gmra.mxu0 %v284
    %v562 = vpop.f32.mrf.mxu0
    %v563 = vadd.f32 0.0, %v562
    %v564 = vpop.f32.mrf.mxu0
    %v565 = vadd.f32 0.0, %v564
    %566 = vmatmul.bf16.gmra.mxu0 %v287
    %v567 = vpop.f32.mrf.mxu0
    %v568 = vadd.f32 0.0, %v567
    %v569 = vpop.f32.mrf.mxu0
    %v570 = vadd.f32 0.0, %v569
    %571 = vmatmul.bf16.gmra.mxu0 %v290
    %v572 = vpop.f32.mrf.mxu0
    %v573 = vadd.f32 0.0, %v572
    %v574 = vpop.f32.mrf.mxu0
    %v575 = vadd.f32 0.0, %v574
    %576 = vmatmul.bf16.gmra.mxu0 %v293
    %v577 = vpop.f32.mrf.mxu0
    %v578 = vadd.f32 0.0, %v577
    %v579 = vpop.f32.mrf.mxu0
    %v580 = vadd.f32 0.0, %v579
    %581 = vmatmul.bf16.gmra.mxu0 %v296
    %v582 = vpop.f32.mrf.mxu0
    %v583 = vadd.f32 0.0, %v582
    %v584 = vpop.f32.mrf.mxu0
    %v585 = vadd.f32 0.0, %v584
    %586 = vmatmul.bf16.gmra.mxu0 %v299
    %v587 = vpop.f32.mrf.mxu0
    %v588 = vadd.f32 0.0, %v587
    %v589 = vpop.f32.mrf.mxu0
    %v590 = vadd.f32 0.0, %v589
    %591 = vmatmul.bf16.gmra.mxu0 %v302
    %v592 = vpop.f32.mrf.mxu0
    %v593 = vadd.f32 0.0, %v592
    %v594 = vpop.f32.mrf.mxu0
    %v595 = vadd.f32 0.0, %v594
    %596 = vmatmul.bf16.gmra.mxu0 %v305
    %v597 = vpop.f32.mrf.mxu0
    %v598 = vadd.f32 0.0, %v597
    %v599 = vpop.f32.mrf.mxu0
    %v600 = vadd.f32 0.0, %v599
    %601 = vdwg.mxu0
    %602 = vmatpush.bf16.msra.mxu0 0
    %603 = vmatpush.bf16.msra.mxu0 0
    %604 = vmatpush.bf16.msra.mxu0 0
    %605 = vmatpush.bf16.msra.mxu0 0
    %606 = vmatpush.bf16.msra.mxu0 0
    %607 = vmatpush.bf16.msra.mxu0 0
    %608 = vmatpush.bf16.msra.mxu0 %v321
    %609 = vmatpush.bf16.msra.mxu0 %v257
    %610 = vmatmul.bf16.gmra.mxu0 %v272
    %v611 = vpop.f32.mrf.mxu0
    %v612 = vadd.f32 0.0, %v611
    %v613 = vpop.f32.mrf.mxu0
    %v614 = vadd.f32 0.0, %v613
    %615 = vmatmul.bf16.gmra.mxu0 %v275
    %v616 = vpop.f32.mrf.mxu0
    %v617 = vadd.f32 0.0, %v616
    %v618 = vpop.f32.mrf.mxu0
    %v619 = vadd.f32 0.0, %v618
    %620 = vmatmul.bf16.gmra.mxu0 %v278
    %v621 = vpop.f32.mrf.mxu0
    %v622 = vadd.f32 0.0, %v621
    %v623 = vpop.f32.mrf.mxu0
    %v624 = vadd.f32 0.0, %v623
    %625 = vmatmul.bf16.gmra.mxu0 %v281
    %v626 = vpop.f32.mrf.mxu0
    %v627 = vadd.f32 0.0, %v626
    %v628 = vpop.f32.mrf.mxu0
    %v629 = vadd.f32 0.0, %v628
    %630 = vmatmul.bf16.gmra.mxu0 %v284
    %v631 = vpop.f32.mrf.mxu0
    %v632 = vadd.f32 0.0, %v631
    %v633 = vpop.f32.mrf.mxu0
    %v634 = vadd.f32 0.0, %v633
    %635 = vmatmul.bf16.gmra.mxu0 %v287
    %v636 = vpop.f32.mrf.mxu0
    %v637 = vadd.f32 0.0, %v636
    %v638 = vpop.f32.mrf.mxu0
    %v639 = vadd.f32 0.0, %v638
    %640 = vmatmul.bf16.gmra.mxu0 %v290
    %v641 = vpop.f32.mrf.mxu0
    %v642 = vadd.f32 0.0, %v641
    %v643 = vpop.f32.mrf.mxu0
    %v644 = vadd.f32 0.0, %v643
    %645 = vmatmul.bf16.gmra.mxu0 %v293
    %v646 = vpop.f32.mrf.mxu0
    %v647 = vadd.f32 0.0, %v646
    %v648 = vpop.f32.mrf.mxu0
    %v649 = vadd.f32 0.0, %v648
    %650 = vmatmul.bf16.gmra.mxu0 %v296
    %v651 = vpop.f32.mrf.mxu0
    %v652 = vadd.f32 0.0, %v651
    %v653 = vpop.f32.mrf.mxu0
    %v654 = vadd.f32 0.0, %v653
    %655 = vmatmul.bf16.gmra.mxu0 %v299
    %v656 = vpop.f32.mrf.mxu0
    %v657 = vadd.f32 0.0, %v656
    %v658 = vpop.f32.mrf.mxu0
    %v659 = vadd.f32 0.0, %v658
    %660 = vmatmul.bf16.gmra.mxu0 %v302
    %v661 = vpop.f32.mrf.mxu0
    %v662 = vadd.f32 0.0, %v661
    %v663 = vpop.f32.mrf.mxu0
    %v664 = vadd.f32 0.0, %v663
    %665 = vmatmul.bf16.gmra.mxu0 %v305
    %v666 = vpop.f32.mrf.mxu0
    %v667 = vadd.f32 0.0, %v666
    %v668 = vpop.f32.mrf.mxu0
    %v669 = vadd.f32 0.0, %v668
    %670 = vdwg.mxu0
    %671 = vmatpush.bf16.msra.mxu0 0
    %672 = vmatpush.bf16.msra.mxu0 0
    %673 = vmatpush.bf16.msra.mxu0 0
    %674 = vmatpush.bf16.msra.mxu0 0
    %675 = vmatpush.bf16.msra.mxu0 0
    %676 = vmatpush.bf16.msra.mxu0 0
    %677 = vmatpush.bf16.msra.mxu0 %v324
    %678 = vmatpush.bf16.msra.mxu0 %v258
    %679 = vmatmul.bf16.gmra.mxu0 %v272
    %v680 = vpop.f32.mrf.mxu0
    %v681 = vadd.f32 0.0, %v680
    %v682 = vpop.f32.mrf.mxu0
    %v683 = vadd.f32 0.0, %v682
    %684 = vmatmul.bf16.gmra.mxu0 %v275
    %v685 = vpop.f32.mrf.mxu0
    %v686 = vadd.f32 0.0, %v685
    %v687 = vpop.f32.mrf.mxu0
    %v688 = vadd.f32 0.0, %v687
    %689 = vmatmul.bf16.gmra.mxu0 %v278
    %v690 = vpop.f32.mrf.mxu0
    %v691 = vadd.f32 0.0, %v690
    %v692 = vpop.f32.mrf.mxu0
    %v693 = vadd.f32 0.0, %v692
    %694 = vmatmul.bf16.gmra.mxu0 %v281
    %v695 = vpop.f32.mrf.mxu0
    %v696 = vadd.f32 0.0, %v695
    %v697 = vpop.f32.mrf.mxu0
    %v698 = vadd.f32 0.0, %v697
    %699 = vmatmul.bf16.gmra.mxu0 %v284
    %v700 = vpop.f32.mrf.mxu0
    %v701 = vadd.f32 0.0, %v700
    %v702 = vpop.f32.mrf.mxu0
    %v703 = vadd.f32 0.0, %v702
    %704 = vmatmul.bf16.gmra.mxu0 %v287
    %v705 = vpop.f32.mrf.mxu0
    %v706 = vadd.f32 0.0, %v705
    %v707 = vpop.f32.mrf.mxu0
    %v708 = vadd.f32 0.0, %v707
    %709 = vmatmul.bf16.gmra.mxu0 %v290
    %v710 = vpop.f32.mrf.mxu0
    %v711 = vadd.f32 0.0, %v710
    %v712 = vpop.f32.mrf.mxu0
    %v713 = vadd.f32 0.0, %v712
    %714 = vmatmul.bf16.gmra.mxu0 %v293
    %v715 = vpop.f32.mrf.mxu0
    %v716 = vadd.f32 0.0, %v715
    %v717 = vpop.f32.mrf.mxu0
    %v718 = vadd.f32 0.0, %v717
    %719 = vmatmul.bf16.gmra.mxu0 %v296
    %v720 = vpop.f32.mrf.mxu0
    %v721 = vadd.f32 0.0, %v720
    %v722 = vpop.f32.mrf.mxu0
    %v723 = vadd.f32 0.0, %v722
    %724 = vmatmul.bf16.gmra.mxu0 %v299
    %v725 = vpop.f32.mrf.mxu0
    %v726 = vadd.f32 0.0, %v725
    %v727 = vpop.f32.mrf.mxu0
    %v728 = vadd.f32 0.0, %v727
    %729 = vmatmul.bf16.gmra.mxu0 %v302
    %v730 = vpop.f32.mrf.mxu0
    %v731 = vadd.f32 0.0, %v730
    %v732 = vpop.f32.mrf.mxu0
    %v733 = vadd.f32 0.0, %v732
    %734 = vmatmul.bf16.gmra.mxu0 %v305
    %v735 = vpop.f32.mrf.mxu0
    %v736 = vadd.f32 0.0, %v735
    %v737 = vpop.f32.mrf.mxu0
    %v738 = vadd.f32 0.0, %v737
    %739 = vdwg.mxu0
    %v740 = vadd.f32 %v163, %v336
    %v741 = vadd.f32 %v164, %v405
    %v742 = vadd.f32 %v165, %v474
    %v743 = vadd.f32 %v166, %v543
    %v744 = vadd.f32 %v167, %v612
    %v745 = vadd.f32 %v168, %v681
    %v746 = vadd.f32 %v163, %v338
    %v747 = vadd.f32 %v164, %v407
    %v748 = vadd.f32 %v165, %v476
    %v749 = vadd.f32 %v166, %v545
    %v750 = vadd.f32 %v167, %v614
    %v751 = vadd.f32 %v168, %v683
    %v752 = vadd.f32 %v163, %v341
    %v753 = vadd.f32 %v164, %v410
    %v754 = vadd.f32 %v165, %v479
    %v755 = vadd.f32 %v166, %v548
    %v756 = vadd.f32 %v167, %v617
    %v757 = vadd.f32 %v168, %v686
    %v758 = vadd.f32 %v163, %v343
    %v759 = vadd.f32 %v164, %v412
    %v760 = vadd.f32 %v165, %v481
    %v761 = vadd.f32 %v166, %v550
    %v762 = vadd.f32 %v167, %v619
    %v763 = vadd.f32 %v168, %v688
    %v764 = vadd.f32 %v163, %v346
    %v765 = vadd.f32 %v164, %v415
    %v766 = vadd.f32 %v165, %v484
    %v767 = vadd.f32 %v166, %v553
    %v768 = vadd.f32 %v167, %v622
    %v769 = vadd.f32 %v168, %v691
    %v770 = vadd.f32 %v163, %v348
    %v771 = vadd.f32 %v164, %v417
    %v772 = vadd.f32 %v165, %v486
    %v773 = vadd.f32 %v166, %v555
    %v774 = vadd.f32 %v167, %v624
    %v775 = vadd.f32 %v168, %v693
    %v776 = vadd.f32 %v163, %v351
    %v777 = vadd.f32 %v164, %v420
    %v778 = vadd.f32 %v165, %v489
    %v779 = vadd.f32 %v166, %v558
    %v780 = vadd.f32 %v167, %v627
    %v781 = vadd.f32 %v168, %v696
    %v782 = vadd.f32 %v163, %v353
    %v783 = vadd.f32 %v164, %v422
    %v784 = vadd.f32 %v165, %v491
    %v785 = vadd.f32 %v166, %v560
    %v786 = vadd.f32 %v167, %v629
    %v787 = vadd.f32 %v168, %v698
    %v788 = vadd.f32 %v163, %v356
    %v789 = vadd.f32 %v164, %v425
    %v790 = vadd.f32 %v165, %v494
    %v791 = vadd.f32 %v166, %v563
    %v792 = vadd.f32 %v167, %v632
    %v793 = vadd.f32 %v168, %v701
    %v794 = vadd.f32 %v163, %v358
    %v795 = vadd.f32 %v164, %v427
    %v796 = vadd.f32 %v165, %v496
    %v797 = vadd.f32 %v166, %v565
    %v798 = vadd.f32 %v167, %v634
    %v799 = vadd.f32 %v168, %v703
    %v800 = vadd.f32 %v163, %v361
    %v801 = vadd.f32 %v164, %v430
    %v802 = vadd.f32 %v165, %v499
    %v803 = vadd.f32 %v166, %v568
    %v804 = vadd.f32 %v167, %v637
    %v805 = vadd.f32 %v168, %v706
    %v806 = vadd.f32 %v163, %v363
    %v807 = vadd.f32 %v164, %v432
    %v808 = vadd.f32 %v165, %v501
    %v809 = vadd.f32 %v166, %v570
    %v810 = vadd.f32 %v167, %v639
    %v811 = vadd.f32 %v168, %v708
    %v812 = vadd.f32 %v163, %v366
    %v813 = vadd.f32 %v164, %v435
    %v814 = vadd.f32 %v165, %v504
    %v815 = vadd.f32 %v166, %v573
    %v816 = vadd.f32 %v167, %v642
    %v817 = vadd.f32 %v168, %v711
    %v818 = vadd.f32 %v163, %v368
    %v819 = vadd.f32 %v164, %v437
    %v820 = vadd.f32 %v165, %v506
    %v821 = vadd.f32 %v166, %v575
    %v822 = vadd.f32 %v167, %v644
    %v823 = vadd.f32 %v168, %v713
    %v824 = vadd.f32 %v163, %v371
    %v825 = vadd.f32 %v164, %v440
    %v826 = vadd.f32 %v165, %v509
    %v827 = vadd.f32 %v166, %v578
    %v828 = vadd.f32 %v167, %v647
    %v829 = vadd.f32 %v168, %v716
    %v830 = vadd.f32 %v163, %v373
    %v831 = vadd.f32 %v164, %v442
    %v832 = vadd.f32 %v165, %v511
    %v833 = vadd.f32 %v166, %v580
    %v834 = vadd.f32 %v167, %v649
    %v835 = vadd.f32 %v168, %v718
    %v836 = vadd.f32 %v163, %v376
    %v837 = vadd.f32 %v164, %v445
    %v838 = vadd.f32 %v165, %v514
    %v839 = vadd.f32 %v166, %v583
    %v840 = vadd.f32 %v167, %v652
    %v841 = vadd.f32 %v168, %v721
    %v842 = vadd.f32 %v163, %v378
    %v843 = vadd.f32 %v164, %v447
    %v844 = vadd.f32 %v165, %v516
    %v845 = vadd.f32 %v166, %v585
    %v846 = vadd.f32 %v167, %v654
    %v847 = vadd.f32 %v168, %v723
    %v848 = vadd.f32 %v163, %v381
    %v849 = vadd.f32 %v164, %v450
    %v850 = vadd.f32 %v165, %v519
    %v851 = vadd.f32 %v166, %v588
    %v852 = vadd.f32 %v167, %v657
    %v853 = vadd.f32 %v168, %v726
    %v854 = vadd.f32 %v163, %v383
    %v855 = vadd.f32 %v164, %v452
    %v856 = vadd.f32 %v165, %v521
    %v857 = vadd.f32 %v166, %v590
    %v858 = vadd.f32 %v167, %v659
    %v859 = vadd.f32 %v168, %v728
    %v860 = vadd.f32 %v163, %v386
    %v861 = vadd.f32 %v164, %v455
    %v862 = vadd.f32 %v165, %v524
    %v863 = vadd.f32 %v166, %v593
    %v864 = vadd.f32 %v167, %v662
    %v865 = vadd.f32 %v168, %v731
    %v866 = vadd.f32 %v163, %v388
    %v867 = vadd.f32 %v164, %v457
    %v868 = vadd.f32 %v165, %v526
    %v869 = vadd.f32 %v166, %v595
    %v870 = vadd.f32 %v167, %v664
    %v871 = vadd.f32 %v168, %v733
    %v872 = vadd.f32 %v163, %v391
    %v873 = vadd.f32 %v164, %v460
    %v874 = vadd.f32 %v165, %v529
    %v875 = vadd.f32 %v166, %v598
    %v876 = vadd.f32 %v167, %v667
    %v877 = vadd.f32 %v168, %v736
    %v878 = vadd.f32 %v163, %v393
    %v879 = vadd.f32 %v164, %v462
    %v880 = vadd.f32 %v165, %v531
    %v881 = vadd.f32 %v166, %v600
    %v882 = vadd.f32 %v167, %v669
    %v883 = vadd.f32 %v168, %v738
    %v884 = vld [vmem:[#allocation2 + $0x8] sm:$0xff]
    %v885 = vld [vmem:[#allocation2 + $0x10] sm:$0xff]
    %v886 = vld [vmem:[#allocation2 + $0x18] sm:$0xff]
    %v887 = vld [vmem:[#allocation2 + $0x20] sm:$0xff]
    %v888 = vld [vmem:[#allocation2 + $0x28] sm:$0xff]
    %v889 = vld [vmem:[#allocation2 + $0x30] sm:$0xff]
    %v890 = vld [vmem:[#allocation2 + $0x38] sm:$0xff]
    %v891 = vld [vmem:[#allocation2 + $0x40] sm:$0xff]
    %v892 = vld [vmem:[#allocation2 + $0x48] sm:$0xff]
    %v893 = vld [vmem:[#allocation2 + $0x50] sm:$0xff]
    %v894 = vld [vmem:[#allocation2 + $0x58] sm:$0xff]
    %v895 = vld [vmem:[#allocation2 + $0x60] sm:$0xff]
    %v896 = vld [vmem:[#allocation2 + $0x68] sm:$0xff]
    %v897 = vld [vmem:[#allocation2 + $0x70] sm:$0xff]
    %v898 = vld [vmem:[#allocation2 + $0x78] sm:$0xff]
    %v899 = vld [vmem:[#allocation2 + $0x80] sm:$0xff]
    %v900 = vld [vmem:[#allocation2 + $0x88] sm:$0xff]
    %v901 = vld [vmem:[#allocation2 + $0x90] sm:$0xff]
    %v902 = vld [vmem:[#allocation2 + $0x98] sm:$0xff]
    %v903 = vld [vmem:[#allocation2 + $0xa0] sm:$0xff]
    %v904 = vld [vmem:[#allocation2 + $0xa8] sm:$0xff]
    %v905 = vld [vmem:[#allocation2 + $0xb0] sm:$0xff]
    %v906 = vld [vmem:[#allocation2 + $0xb8] sm:$0xff]
    %v907 = vld [vmem:[#allocation2 + $0xc0] sm:$0xff]
    %v908 = vpack.c.bf16 %v885, %v884
    %v909 = vpack.c.bf16 %v887, %v886
    %v910 = vpack.c.bf16 %v889, %v888
    %v911 = vpack.c.bf16 %v891, %v890
    %v912 = vpack.c.bf16 %v893, %v892
    %v913 = vpack.c.bf16 %v895, %v894
    %v914 = vpack.c.bf16 %v897, %v896
    %v915 = vpack.c.bf16 %v899, %v898
    %v916 = vpack.c.bf16 %v901, %v900
    %v917 = vpack.c.bf16 %v903, %v902
    %v918 = vpack.c.bf16 %v905, %v904
    %v919 = vpack.c.bf16 %v907, %v906
    %s920 = scalar_lea.vmem %s1, 96
    %v921 = vld [vmem:[%s920] sm:$0xff]
    %v922 = vld [vmem:[%s920 + $0x8] sm:$0xff]
    %v923 = vld [vmem:[%s920 + $0x10] sm:$0xff]
    %v924 = vld [vmem:[%s920 + $0x18] sm:$0xff]
    %v925 = vld [vmem:[%s920 + $0x20] sm:$0xff]
    %v926 = vld [vmem:[%s920 + $0x28] sm:$0xff]
    %v927 = vld [vmem:[%s920 + $0x30] sm:$0xff]
    %v928 = vld [vmem:[%s920 + $0x38] sm:$0xff]
    %v929 = vld [vmem:[%s920 + $0x40] sm:$0xff]
    %v930 = vld [vmem:[%s920 + $0x48] sm:$0x33]
    %v931 = vld [vmem:[%s920 + $0x50] sm:$0x33]
    %v932 = vld [vmem:[%s920 + $0x58] sm:$0x33]
    %v945 = vunpack.c.l.b16 %v921
    %v946 = vunpack.c.h.b16 %v921
    %v947 = vunpack.c.l.b16 %v922
    %v948 = vunpack.c.h.b16 %v922
    %v949 = vunpack.c.l.b16 %v923
    %v950 = vunpack.c.h.b16 %v923
    %v951 = vunpack.c.l.b16 %v924
    %v952 = vunpack.c.h.b16 %v924
    %v953 = vunpack.c.l.b16 %v925
    %v954 = vunpack.c.h.b16 %v925
    %v955 = vunpack.c.l.b16 %v926
    %v956 = vunpack.c.h.b16 %v926
    %v957 = vunpack.c.l.b16 %v927
    %v958 = vunpack.c.h.b16 %v927
    %v959 = vunpack.c.l.b16 %v928
    %v960 = vunpack.c.h.b16 %v928
    %v961 = vunpack.c.l.b16 %v929
    %v962 = vunpack.c.h.b16 %v929
    %v963 = vunpack.c.l.b16 %v930
    %v964 = vunpack.c.h.b16 %v930
    %v965 = vunpack.c.l.b16 %v931
    %v966 = vunpack.c.h.b16 %v931
    %v967 = vunpack.c.l.b16 %v932
    %v968 = vunpack.c.h.b16 %v932
    %v969 = vpack.c.b16 %v951, %v945
    %v970 = vpack.c.b16 %v952, %v946
    %v971 = vpack.c.b16 %v953, %v947
    %v972 = vpack.c.b16 %v954, %v948
    %v973 = vpack.c.b16 %v955, %v949
    %v974 = vpack.c.b16 %v956, %v950
    %v975 = vpack.c.b16 %v963, %v957
    %v976 = vpack.c.b16 %v964, %v958
    %v977 = vpack.c.b16 %v965, %v959
    %v978 = vpack.c.b16 %v966, %v960
    %v979 = vpack.c.b16 %v967, %v961
    %v980 = vpack.c.b16 %v968, %v962
    %v988 = vsel %vm66, %v908, 0
    %v991 = vsel %vm66, %v909, 0
    %v994 = vsel %vm66, %v910, 0
    %v997 = vsel %vm66, %v911, 0
    %v1000 = vsel %vm66, %v912, 0
    %v1003 = vsel %vm66, %v913, 0
    %v1006 = vsel %vm66, %v914, 0
    %v1009 = vsel %vm66, %v915, 0
    %v1012 = vsel %vm66, %v916, 0
    %v1015 = vsel %vm66, %v917, 0
    %v1018 = vsel %vm66, %v918, 0
    %v1021 = vsel %vm66, %v919, 0
    %v1024 = vsel %vm307, %v975, 0
    %v1027 = vsel %vm307, %v976, 0
    %v1030 = vsel %vm307, %v977, 0
    %v1033 = vsel %vm307, %v978, 0
    %v1036 = vsel %vm307, %v979, 0
    %v1039 = vsel %vm307, %v980, 0
    %1041 = vmatpush.bf16.msra.mxu0 0
    %1042 = vmatpush.bf16.msra.mxu0 0
    %1043 = vmatpush.bf16.msra.mxu0 0
    %1044 = vmatpush.bf16.msra.mxu0 0
    %1045 = vmatpush.bf16.msra.mxu0 0
    %1046 = vmatpush.bf16.msra.mxu0 0
    %1047 = vmatpush.bf16.msra.mxu0 %v1024
    %1048 = vmatpush.bf16.msra.mxu0 %v969
    %1049 = vmatmul.bf16.gmra.mxu0 %v988
    %v1050 = vpop.f32.mrf.mxu0
    %v1051 = vadd.f32 0.0, %v1050
    %v1052 = vpop.f32.mrf.mxu0
    %v1053 = vadd.f32 0.0, %v1052
    %1054 = vmatmul.bf16.gmra.mxu0 %v991
    %v1055 = vpop.f32.mrf.mxu0
    %v1056 = vadd.f32 0.0, %v1055
    %v1057 = vpop.f32.mrf.mxu0
    %v1058 = vadd.f32 0.0, %v1057
    %1059 = vmatmul.bf16.gmra.mxu0 %v994
    %v1060 = vpop.f32.mrf.mxu0
    %v1061 = vadd.f32 0.0, %v1060
    %v1062 = vpop.f32.mrf.mxu0
    %v1063 = vadd.f32 0.0, %v1062
    %1064 = vmatmul.bf16.gmra.mxu0 %v997
    %v1065 = vpop.f32.mrf.mxu0
    %v1066 = vadd.f32 0.0, %v1065
    %v1067 = vpop.f32.mrf.mxu0
    %v1068 = vadd.f32 0.0, %v1067
    %1069 = vmatmul.bf16.gmra.mxu0 %v1000
    %v1070 = vpop.f32.mrf.mxu0
    %v1071 = vadd.f32 0.0, %v1070
    %v1072 = vpop.f32.mrf.mxu0
    %v1073 = vadd.f32 0.0, %v1072
    %1074 = vmatmul.bf16.gmra.mxu0 %v1003
    %v1075 = vpop.f32.mrf.mxu0
    %v1076 = vadd.f32 0.0, %v1075
    %v1077 = vpop.f32.mrf.mxu0
    %v1078 = vadd.f32 0.0, %v1077
    %1079 = vmatmul.bf16.gmra.mxu0 %v1006
    %v1080 = vpop.f32.mrf.mxu0
    %v1081 = vadd.f32 0.0, %v1080
    %v1082 = vpop.f32.mrf.mxu0
    %v1083 = vadd.f32 0.0, %v1082
    %1084 = vmatmul.bf16.gmra.mxu0 %v1009
    %v1085 = vpop.f32.mrf.mxu0
    %v1086 = vadd.f32 0.0, %v1085
    %v1087 = vpop.f32.mrf.mxu0
    %v1088 = vadd.f32 0.0, %v1087
    %1089 = vmatmul.bf16.gmra.mxu0 %v1012
    %v1090 = vpop.f32.mrf.mxu0
    %v1091 = vadd.f32 0.0, %v1090
    %v1092 = vpop.f32.mrf.mxu0
    %v1093 = vadd.f32 0.0, %v1092
    %1094 = vmatmul.bf16.gmra.mxu0 %v1015
    %v1095 = vpop.f32.mrf.mxu0
    %v1096 = vadd.f32 0.0, %v1095
    %v1097 = vpop.f32.mrf.mxu0
    %v1098 = vadd.f32 0.0, %v1097
    %1099 = vmatmul.bf16.gmra.mxu0 %v1018
    %v1100 = vpop.f32.mrf.mxu0
    %v1101 = vadd.f32 0.0, %v1100
    %v1102 = vpop.f32.mrf.mxu0
    %v1103 = vadd.f32 0.0, %v1102
    %1104 = vmatmul.bf16.gmra.mxu0 %v1021
    %v1105 = vpop.f32.mrf.mxu0
    %v1106 = vadd.f32 0.0, %v1105
    %v1107 = vpop.f32.mrf.mxu0
    %v1108 = vadd.f32 0.0, %v1107
    %1109 = vdwg.mxu0
    %1110 = vmatpush.bf16.msra.mxu0 0
    %1111 = vmatpush.bf16.msra.mxu0 0
    %1112 = vmatpush.bf16.msra.mxu0 0
    %1113 = vmatpush.bf16.msra.mxu0 0
    %1114 = vmatpush.bf16.msra.mxu0 0
    %1115 = vmatpush.bf16.msra.mxu0 0
    %1116 = vmatpush.bf16.msra.mxu0 %v1027
    %1117 = vmatpush.bf16.msra.mxu0 %v970
    %1118 = vmatmul.bf16.gmra.mxu0 %v988
    %v1119 = vpop.f32.mrf.mxu0
    %v1120 = vadd.f32 0.0, %v1119
    %v1121 = vpop.f32.mrf.mxu0
    %v1122 = vadd.f32 0.0, %v1121
    %1123 = vmatmul.bf16.gmra.mxu0 %v991
    %v1124 = vpop.f32.mrf.mxu0
    %v1125 = vadd.f32 0.0, %v1124
    %v1126 = vpop.f32.mrf.mxu0
    %v1127 = vadd.f32 0.0, %v1126
    %1128 = vmatmul.bf16.gmra.mxu0 %v994
    %v1129 = vpop.f32.mrf.mxu0
    %v1130 = vadd.f32 0.0, %v1129
    %v1131 = vpop.f32.mrf.mxu0
    %v1132 = vadd.f32 0.0, %v1131
    %1133 = vmatmul.bf16.gmra.mxu0 %v997
    %v1134 = vpop.f32.mrf.mxu0
    %v1135 = vadd.f32 0.0, %v1134
    %v1136 = vpop.f32.mrf.mxu0
    %v1137 = vadd.f32 0.0, %v1136
    %1138 = vmatmul.bf16.gmra.mxu0 %v1000
    %v1139 = vpop.f32.mrf.mxu0
    %v1140 = vadd.f32 0.0, %v1139
    %v1141 = vpop.f32.mrf.mxu0
    %v1142 = vadd.f32 0.0, %v1141
    %1143 = vmatmul.bf16.gmra.mxu0 %v1003
    %v1144 = vpop.f32.mrf.mxu0
    %v1145 = vadd.f32 0.0, %v1144
    %v1146 = vpop.f32.mrf.mxu0
    %v1147 = vadd.f32 0.0, %v1146
    %1148 = vmatmul.bf16.gmra.mxu0 %v1006
    %v1149 = vpop.f32.mrf.mxu0
    %v1150 = vadd.f32 0.0, %v1149
    %v1151 = vpop.f32.mrf.mxu0
    %v1152 = vadd.f32 0.0, %v1151
    %1153 = vmatmul.bf16.gmra.mxu0 %v1009
    %v1154 = vpop.f32.mrf.mxu0
    %v1155 = vadd.f32 0.0, %v1154
    %v1156 = vpop.f32.mrf.mxu0
    %v1157 = vadd.f32 0.0, %v1156
    %1158 = vmatmul.bf16.gmra.mxu0 %v1012
    %v1159 = vpop.f32.mrf.mxu0
    %v1160 = vadd.f32 0.0, %v1159
    %v1161 = vpop.f32.mrf.mxu0
    %v1162 = vadd.f32 0.0, %v1161
    %1163 = vmatmul.bf16.gmra.mxu0 %v1015
    %v1164 = vpop.f32.mrf.mxu0
    %v1165 = vadd.f32 0.0, %v1164
    %v1166 = vpop.f32.mrf.mxu0
    %v1167 = vadd.f32 0.0, %v1166
    %1168 = vmatmul.bf16.gmra.mxu0 %v1018
    %v1169 = vpop.f32.mrf.mxu0
    %v1170 = vadd.f32 0.0, %v1169
    %v1171 = vpop.f32.mrf.mxu0
    %v1172 = vadd.f32 0.0, %v1171
    %1173 = vmatmul.bf16.gmra.mxu0 %v1021
    %v1174 = vpop.f32.mrf.mxu0
    %v1175 = vadd.f32 0.0, %v1174
    %v1176 = vpop.f32.mrf.mxu0
    %v1177 = vadd.f32 0.0, %v1176
    %1178 = vdwg.mxu0
    %1179 = vmatpush.bf16.msra.mxu0 0
    %1180 = vmatpush.bf16.msra.mxu0 0
    %1181 = vmatpush.bf16.msra.mxu0 0
    %1182 = vmatpush.bf16.msra.mxu0 0
    %1183 = vmatpush.bf16.msra.mxu0 0
    %1184 = vmatpush.bf16.msra.mxu0 0
    %1185 = vmatpush.bf16.msra.mxu0 %v1030
    %1186 = vmatpush.bf16.msra.mxu0 %v971
    %1187 = vmatmul.bf16.gmra.mxu0 %v988
    %v1188 = vpop.f32.mrf.mxu0
    %v1189 = vadd.f32 0.0, %v1188
    %v1190 = vpop.f32.mrf.mxu0
    %v1191 = vadd.f32 0.0, %v1190
    %1192 = vmatmul.bf16.gmra.mxu0 %v991
    %v1193 = vpop.f32.mrf.mxu0
    %v1194 = vadd.f32 0.0, %v1193
    %v1195 = vpop.f32.mrf.mxu0
    %v1196 = vadd.f32 0.0, %v1195
    %1197 = vmatmul.bf16.gmra.mxu0 %v994
    %v1198 = vpop.f32.mrf.mxu0
    %v1199 = vadd.f32 0.0, %v1198
    %v1200 = vpop.f32.mrf.mxu0
    %v1201 = vadd.f32 0.0, %v1200
    %1202 = vmatmul.bf16.gmra.mxu0 %v997
    %v1203 = vpop.f32.mrf.mxu0
    %v1204 = vadd.f32 0.0, %v1203
    %v1205 = vpop.f32.mrf.mxu0
    %v1206 = vadd.f32 0.0, %v1205
    %1207 = vmatmul.bf16.gmra.mxu0 %v1000
    %v1208 = vpop.f32.mrf.mxu0
    %v1209 = vadd.f32 0.0, %v1208
    %v1210 = vpop.f32.mrf.mxu0
    %v1211 = vadd.f32 0.0, %v1210
    %1212 = vmatmul.bf16.gmra.mxu0 %v1003
    %v1213 = vpop.f32.mrf.mxu0
    %v1214 = vadd.f32 0.0, %v1213
    %v1215 = vpop.f32.mrf.mxu0
    %v1216 = vadd.f32 0.0, %v1215
    %1217 = vmatmul.bf16.gmra.mxu0 %v1006
    %v1218 = vpop.f32.mrf.mxu0
    %v1219 = vadd.f32 0.0, %v1218
    %v1220 = vpop.f32.mrf.mxu0
    %v1221 = vadd.f32 0.0, %v1220
    %1222 = vmatmul.bf16.gmra.mxu0 %v1009
    %v1223 = vpop.f32.mrf.mxu0
    %v1224 = vadd.f32 0.0, %v1223
    %v1225 = vpop.f32.mrf.mxu0
    %v1226 = vadd.f32 0.0, %v1225
    %1227 = vmatmul.bf16.gmra.mxu0 %v1012
    %v1228 = vpop.f32.mrf.mxu0
    %v1229 = vadd.f32 0.0, %v1228
    %v1230 = vpop.f32.mrf.mxu0
    %v1231 = vadd.f32 0.0, %v1230
    %1232 = vmatmul.bf16.gmra.mxu0 %v1015
    %v1233 = vpop.f32.mrf.mxu0
    %v1234 = vadd.f32 0.0, %v1233
    %v1235 = vpop.f32.mrf.mxu0
    %v1236 = vadd.f32 0.0, %v1235
    %1237 = vmatmul.bf16.gmra.mxu0 %v1018
    %v1238 = vpop.f32.mrf.mxu0
    %v1239 = vadd.f32 0.0, %v1238
    %v1240 = vpop.f32.mrf.mxu0
    %v1241 = vadd.f32 0.0, %v1240
    %1242 = vmatmul.bf16.gmra.mxu0 %v1021
    %v1243 = vpop.f32.mrf.mxu0
    %v1244 = vadd.f32 0.0, %v1243
    %v1245 = vpop.f32.mrf.mxu0
    %v1246 = vadd.f32 0.0, %v1245
    %1247 = vdwg.mxu0
    %1248 = vmatpush.bf16.msra.mxu0 0
    %1249 = vmatpush.bf16.msra.mxu0 0
    %1250 = vmatpush.bf16.msra.mxu0 0
    %1251 = vmatpush.bf16.msra.mxu0 0
    %1252 = vmatpush.bf16.msra.mxu0 0
    %1253 = vmatpush.bf16.msra.mxu0 0
    %1254 = vmatpush.bf16.msra.mxu0 %v1033
    %1255 = vmatpush.bf16.msra.mxu0 %v972
    %1256 = vmatmul.bf16.gmra.mxu0 %v988
    %v1257 = vpop.f32.mrf.mxu0
    %v1258 = vadd.f32 0.0, %v1257
    %v1259 = vpop.f32.mrf.mxu0
    %v1260 = vadd.f32 0.0, %v1259
    %1261 = vmatmul.bf16.gmra.mxu0 %v991
    %v1262 = vpop.f32.mrf.mxu0
    %v1263 = vadd.f32 0.0, %v1262
    %v1264 = vpop.f32.mrf.mxu0
    %v1265 = vadd.f32 0.0, %v1264
    %1266 = vmatmul.bf16.gmra.mxu0 %v994
    %v1267 = vpop.f32.mrf.mxu0
    %v1268 = vadd.f32 0.0, %v1267
    %v1269 = vpop.f32.mrf.mxu0
    %v1270 = vadd.f32 0.0, %v1269
    %1271 = vmatmul.bf16.gmra.mxu0 %v997
    %v1272 = vpop.f32.mrf.mxu0
    %v1273 = vadd.f32 0.0, %v1272
    %v1274 = vpop.f32.mrf.mxu0
    %v1275 = vadd.f32 0.0, %v1274
    %1276 = vmatmul.bf16.gmra.mxu0 %v1000
    %v1277 = vpop.f32.mrf.mxu0
    %v1278 = vadd.f32 0.0, %v1277
    %v1279 = vpop.f32.mrf.mxu0
    %v1280 = vadd.f32 0.0, %v1279
    %1281 = vmatmul.bf16.gmra.mxu0 %v1003
    %v1282 = vpop.f32.mrf.mxu0
    %v1283 = vadd.f32 0.0, %v1282
    %v1284 = vpop.f32.mrf.mxu0
    %v1285 = vadd.f32 0.0, %v1284
    %1286 = vmatmul.bf16.gmra.mxu0 %v1006
    %v1287 = vpop.f32.mrf.mxu0
    %v1288 = vadd.f32 0.0, %v1287
    %v1289 = vpop.f32.mrf.mxu0
    %v1290 = vadd.f32 0.0, %v1289
    %1291 = vmatmul.bf16.gmra.mxu0 %v1009
    %v1292 = vpop.f32.mrf.mxu0
    %v1293 = vadd.f32 0.0, %v1292
    %v1294 = vpop.f32.mrf.mxu0
    %v1295 = vadd.f32 0.0, %v1294
    %1296 = vmatmul.bf16.gmra.mxu0 %v1012
    %v1297 = vpop.f32.mrf.mxu0
    %v1298 = vadd.f32 0.0, %v1297
    %v1299 = vpop.f32.mrf.mxu0
    %v1300 = vadd.f32 0.0, %v1299
    %1301 = vmatmul.bf16.gmra.mxu0 %v1015
    %v1302 = vpop.f32.mrf.mxu0
    %v1303 = vadd.f32 0.0, %v1302
    %v1304 = vpop.f32.mrf.mxu0
    %v1305 = vadd.f32 0.0, %v1304
    %1306 = vmatmul.bf16.gmra.mxu0 %v1018
    %v1307 = vpop.f32.mrf.mxu0
    %v1308 = vadd.f32 0.0, %v1307
    %v1309 = vpop.f32.mrf.mxu0
    %v1310 = vadd.f32 0.0, %v1309
    %1311 = vmatmul.bf16.gmra.mxu0 %v1021
    %v1312 = vpop.f32.mrf.mxu0
    %v1313 = vadd.f32 0.0, %v1312
    %v1314 = vpop.f32.mrf.mxu0
    %v1315 = vadd.f32 0.0, %v1314
    %1316 = vdwg.mxu0
    %1317 = vmatpush.bf16.msra.mxu0 0
    %1318 = vmatpush.bf16.msra.mxu0 0
    %1319 = vmatpush.bf16.msra.mxu0 0
    %1320 = vmatpush.bf16.msra.mxu0 0
    %1321 = vmatpush.bf16.msra.mxu0 0
    %1322 = vmatpush.bf16.msra.mxu0 0
    %1323 = vmatpush.bf16.msra.mxu0 %v1036
    %1324 = vmatpush.bf16.msra.mxu0 %v973
    %1325 = vmatmul.bf16.gmra.mxu0 %v988
    %v1326 = vpop.f32.mrf.mxu0
    %v1327 = vadd.f32 0.0, %v1326
    %v1328 = vpop.f32.mrf.mxu0
    %v1329 = vadd.f32 0.0, %v1328
    %1330 = vmatmul.bf16.gmra.mxu0 %v991
    %v1331 = vpop.f32.mrf.mxu0
    %v1332 = vadd.f32 0.0, %v1331
    %v1333 = vpop.f32.mrf.mxu0
    %v1334 = vadd.f32 0.0, %v1333
    %1335 = vmatmul.bf16.gmra.mxu0 %v994
    %v1336 = vpop.f32.mrf.mxu0
    %v1337 = vadd.f32 0.0, %v1336
    %v1338 = vpop.f32.mrf.mxu0
    %v1339 = vadd.f32 0.0, %v1338
    %1340 = vmatmul.bf16.gmra.mxu0 %v997
    %v1341 = vpop.f32.mrf.mxu0
    %v1342 = vadd.f32 0.0, %v1341
    %v1343 = vpop.f32.mrf.mxu0
    %v1344 = vadd.f32 0.0, %v1343
    %1345 = vmatmul.bf16.gmra.mxu0 %v1000
    %v1346 = vpop.f32.mrf.mxu0
    %v1347 = vadd.f32 0.0, %v1346
    %v1348 = vpop.f32.mrf.mxu0
    %v1349 = vadd.f32 0.0, %v1348
    %1350 = vmatmul.bf16.gmra.mxu0 %v1003
    %v1351 = vpop.f32.mrf.mxu0
    %v1352 = vadd.f32 0.0, %v1351
    %v1353 = vpop.f32.mrf.mxu0
    %v1354 = vadd.f32 0.0, %v1353
    %1355 = vmatmul.bf16.gmra.mxu0 %v1006
    %v1356 = vpop.f32.mrf.mxu0
    %v1357 = vadd.f32 0.0, %v1356
    %v1358 = vpop.f32.mrf.mxu0
    %v1359 = vadd.f32 0.0, %v1358
    %1360 = vmatmul.bf16.gmra.mxu0 %v1009
    %v1361 = vpop.f32.mrf.mxu0
    %v1362 = vadd.f32 0.0, %v1361
    %v1363 = vpop.f32.mrf.mxu0
    %v1364 = vadd.f32 0.0, %v1363
    %1365 = vmatmul.bf16.gmra.mxu0 %v1012
    %v1366 = vpop.f32.mrf.mxu0
    %v1367 = vadd.f32 0.0, %v1366
    %v1368 = vpop.f32.mrf.mxu0
    %v1369 = vadd.f32 0.0, %v1368
    %1370 = vmatmul.bf16.gmra.mxu0 %v1015
    %v1371 = vpop.f32.mrf.mxu0
    %v1372 = vadd.f32 0.0, %v1371
    %v1373 = vpop.f32.mrf.mxu0
    %v1374 = vadd.f32 0.0, %v1373
    %1375 = vmatmul.bf16.gmra.mxu0 %v1018
    %v1376 = vpop.f32.mrf.mxu0
    %v1377 = vadd.f32 0.0, %v1376
    %v1378 = vpop.f32.mrf.mxu0
    %v1379 = vadd.f32 0.0, %v1378
    %1380 = vmatmul.bf16.gmra.mxu0 %v1021
    %v1381 = vpop.f32.mrf.mxu0
    %v1382 = vadd.f32 0.0, %v1381
    %v1383 = vpop.f32.mrf.mxu0
    %v1384 = vadd.f32 0.0, %v1383
    %1385 = vdwg.mxu0
    %1386 = vmatpush.bf16.msra.mxu0 0
    %1387 = vmatpush.bf16.msra.mxu0 0
    %1388 = vmatpush.bf16.msra.mxu0 0
    %1389 = vmatpush.bf16.msra.mxu0 0
    %1390 = vmatpush.bf16.msra.mxu0 0
    %1391 = vmatpush.bf16.msra.mxu0 0
    %1392 = vmatpush.bf16.msra.mxu0 %v1039
    %1393 = vmatpush.bf16.msra.mxu0 %v974
    %1394 = vmatmul.bf16.gmra.mxu0 %v988
    %v1395 = vpop.f32.mrf.mxu0
    %v1396 = vadd.f32 0.0, %v1395
    %v1397 = vpop.f32.mrf.mxu0
    %v1398 = vadd.f32 0.0, %v1397
    %1399 = vmatmul.bf16.gmra.mxu0 %v991
    %v1400 = vpop.f32.mrf.mxu0
    %v1401 = vadd.f32 0.0, %v1400
    %v1402 = vpop.f32.mrf.mxu0
    %v1403 = vadd.f32 0.0, %v1402
    %1404 = vmatmul.bf16.gmra.mxu0 %v994
    %v1405 = vpop.f32.mrf.mxu0
    %v1406 = vadd.f32 0.0, %v1405
    %v1407 = vpop.f32.mrf.mxu0
    %v1408 = vadd.f32 0.0, %v1407
    %1409 = vmatmul.bf16.gmra.mxu0 %v997
    %v1410 = vpop.f32.mrf.mxu0
    %v1411 = vadd.f32 0.0, %v1410
    %v1412 = vpop.f32.mrf.mxu0
    %v1413 = vadd.f32 0.0, %v1412
    %1414 = vmatmul.bf16.gmra.mxu0 %v1000
    %v1415 = vpop.f32.mrf.mxu0
    %v1416 = vadd.f32 0.0, %v1415
    %v1417 = vpop.f32.mrf.mxu0
    %v1418 = vadd.f32 0.0, %v1417
    %1419 = vmatmul.bf16.gmra.mxu0 %v1003
    %v1420 = vpop.f32.mrf.mxu0
    %v1421 = vadd.f32 0.0, %v1420
    %v1422 = vpop.f32.mrf.mxu0
    %v1423 = vadd.f32 0.0, %v1422
    %1424 = vmatmul.bf16.gmra.mxu0 %v1006
    %v1425 = vpop.f32.mrf.mxu0
    %v1426 = vadd.f32 0.0, %v1425
    %v1427 = vpop.f32.mrf.mxu0
    %v1428 = vadd.f32 0.0, %v1427
    %1429 = vmatmul.bf16.gmra.mxu0 %v1009
    %v1430 = vpop.f32.mrf.mxu0
    %v1431 = vadd.f32 0.0, %v1430
    %v1432 = vpop.f32.mrf.mxu0
    %v1433 = vadd.f32 0.0, %v1432
    %1434 = vmatmul.bf16.gmra.mxu0 %v1012
    %v1435 = vpop.f32.mrf.mxu0
    %v1436 = vadd.f32 0.0, %v1435
    %v1437 = vpop.f32.mrf.mxu0
    %v1438 = vadd.f32 0.0, %v1437
    %1439 = vmatmul.bf16.gmra.mxu0 %v1015
    %v1440 = vpop.f32.mrf.mxu0
    %v1441 = vadd.f32 0.0, %v1440
    %v1442 = vpop.f32.mrf.mxu0
    %v1443 = vadd.f32 0.0, %v1442
    %1444 = vmatmul.bf16.gmra.mxu0 %v1018
    %v1445 = vpop.f32.mrf.mxu0
    %v1446 = vadd.f32 0.0, %v1445
    %v1447 = vpop.f32.mrf.mxu0
    %v1448 = vadd.f32 0.0, %v1447
    %1449 = vmatmul.bf16.gmra.mxu0 %v1021
    %v1450 = vpop.f32.mrf.mxu0
    %v1451 = vadd.f32 0.0, %v1450
    %v1452 = vpop.f32.mrf.mxu0
    %v1453 = vadd.f32 0.0, %v1452
    %1454 = vdwg.mxu0
    %v1455 = vadd.f32 %v740, %v1051
    %v1456 = vadd.f32 %v741, %v1120
    %v1457 = vadd.f32 %v742, %v1189
    %v1458 = vadd.f32 %v743, %v1258
    %v1459 = vadd.f32 %v744, %v1327
    %v1460 = vadd.f32 %v745, %v1396
    %v1461 = vadd.f32 %v746, %v1053
    %v1462 = vadd.f32 %v747, %v1122
    %v1463 = vadd.f32 %v748, %v1191
    %v1464 = vadd.f32 %v749, %v1260
    %v1465 = vadd.f32 %v750, %v1329
    %v1466 = vadd.f32 %v751, %v1398
    %v1467 = vadd.f32 %v752, %v1056
    %v1468 = vadd.f32 %v753, %v1125
    %v1469 = vadd.f32 %v754, %v1194
    %v1470 = vadd.f32 %v755, %v1263
    %v1471 = vadd.f32 %v756, %v1332
    %v1472 = vadd.f32 %v757, %v1401
    %v1473 = vadd.f32 %v758, %v1058
    %v1474 = vadd.f32 %v759, %v1127
    %v1475 = vadd.f32 %v760, %v1196
    %v1476 = vadd.f32 %v761, %v1265
    %v1477 = vadd.f32 %v762, %v1334
    %v1478 = vadd.f32 %v763, %v1403
    %v1479 = vadd.f32 %v764, %v1061
    %v1480 = vadd.f32 %v765, %v1130
    %v1481 = vadd.f32 %v766, %v1199
    %v1482 = vadd.f32 %v767, %v1268
    %v1483 = vadd.f32 %v768, %v1337
    %v1484 = vadd.f32 %v769, %v1406
    %v1485 = vadd.f32 %v770, %v1063
    %v1486 = vadd.f32 %v771, %v1132
    %v1487 = vadd.f32 %v772, %v1201
    %v1488 = vadd.f32 %v773, %v1270
    %v1489 = vadd.f32 %v774, %v1339
    %v1490 = vadd.f32 %v775, %v1408
    %v1491 = vadd.f32 %v776, %v1066
    %v1492 = vadd.f32 %v777, %v1135
    %v1493 = vadd.f32 %v778, %v1204
    %v1494 = vadd.f32 %v779, %v1273
    %v1495 = vadd.f32 %v780, %v1342
    %v1496 = vadd.f32 %v781, %v1411
    %v1497 = vadd.f32 %v782, %v1068
    %v1498 = vadd.f32 %v783, %v1137
    %v1499 = vadd.f32 %v784, %v1206
    %v1500 = vadd.f32 %v785, %v1275
    %v1501 = vadd.f32 %v786, %v1344
    %v1502 = vadd.f32 %v787, %v1413
    %v1503 = vadd.f32 %v788, %v1071
    %v1504 = vadd.f32 %v789, %v1140
    %v1505 = vadd.f32 %v790, %v1209
    %v1506 = vadd.f32 %v791, %v1278
    %v1507 = vadd.f32 %v792, %v1347
    %v1508 = vadd.f32 %v793, %v1416
    %v1509 = vadd.f32 %v794, %v1073
    %v1510 = vadd.f32 %v795, %v1142
    %v1511 = vadd.f32 %v796, %v1211
    %v1512 = vadd.f32 %v797, %v1280
    %v1513 = vadd.f32 %v798, %v1349
    %v1514 = vadd.f32 %v799, %v1418
    %v1515 = vadd.f32 %v800, %v1076
    %v1516 = vadd.f32 %v801, %v1145
    %v1517 = vadd.f32 %v802, %v1214
    %v1518 = vadd.f32 %v803, %v1283
    %v1519 = vadd.f32 %v804, %v1352
    %v1520 = vadd.f32 %v805, %v1421
    %v1521 = vadd.f32 %v806, %v1078
    %v1522 = vadd.f32 %v807, %v1147
    %v1523 = vadd.f32 %v808, %v1216
    %v1524 = vadd.f32 %v809, %v1285
    %v1525 = vadd.f32 %v810, %v1354
    %v1526 = vadd.f32 %v811, %v1423
    %v1527 = vadd.f32 %v812, %v1081
    %v1528 = vadd.f32 %v813, %v1150
    %v1529 = vadd.f32 %v814, %v1219
    %v1530 = vadd.f32 %v815, %v1288
    %v1531 = vadd.f32 %v816, %v1357
    %v1532 = vadd.f32 %v817, %v1426
    %v1533 = vadd.f32 %v818, %v1083
    %v1534 = vadd.f32 %v819, %v1152
    %v1535 = vadd.f32 %v820, %v1221
    %v1536 = vadd.f32 %v821, %v1290
    %v1537 = vadd.f32 %v822, %v1359
    %v1538 = vadd.f32 %v823, %v1428
    %v1539 = vadd.f32 %v824, %v1086
    %v1540 = vadd.f32 %v825, %v1155
    %v1541 = vadd.f32 %v826, %v1224
    %v1542 = vadd.f32 %v827, %v1293
    %v1543 = vadd.f32 %v828, %v1362
    %v1544 = vadd.f32 %v829, %v1431
    %v1545 = vadd.f32 %v830, %v1088
    %v1546 = vadd.f32 %v831, %v1157
    %v1547 = vadd.f32 %v832, %v1226
    %v1548 = vadd.f32 %v833, %v1295
    %v1549 = vadd.f32 %v834, %v1364
    %v1550 = vadd.f32 %v835, %v1433
    %v1551 = vadd.f32 %v836, %v1091
    %v1552 = vadd.f32 %v837, %v1160
    %v1553 = vadd.f32 %v838, %v1229
    %v1554 = vadd.f32 %v839, %v1298
    %v1555 = vadd.f32 %v840, %v1367
    %v1556 = vadd.f32 %v841, %v1436
    %v1557 = vadd.f32 %v842, %v1093
    %v1558 = vadd.f32 %v843, %v1162
    %v1559 = vadd.f32 %v844, %v1231
    %v1560 = vadd.f32 %v845, %v1300
    %v1561 = vadd.f32 %v846, %v1369
    %v1562 = vadd.f32 %v847, %v1438
    %v1563 = vadd.f32 %v848, %v1096
    %v1564 = vadd.f32 %v849, %v1165
    %v1565 = vadd.f32 %v850, %v1234
    %v1566 = vadd.f32 %v851, %v1303
    %v1567 = vadd.f32 %v852, %v1372
    %v1568 = vadd.f32 %v853, %v1441
    %v1569 = vadd.f32 %v854, %v1098
    %v1570 = vadd.f32 %v855, %v1167
    %v1571 = vadd.f32 %v856, %v1236
    %v1572 = vadd.f32 %v857, %v1305
    %v1573 = vadd.f32 %v858, %v1374
    %v1574 = vadd.f32 %v859, %v1443
    %v1575 = vadd.f32 %v860, %v1101
    %v1576 = vadd.f32 %v861, %v1170
    %v1577 = vadd.f32 %v862, %v1239
    %v1578 = vadd.f32 %v863, %v1308
    %v1579 = vadd.f32 %v864, %v1377
    %v1580 = vadd.f32 %v865, %v1446
    %v1581 = vadd.f32 %v866, %v1103
    %v1582 = vadd.f32 %v867, %v1172
    %v1583 = vadd.f32 %v868, %v1241
    %v1584 = vadd.f32 %v869, %v1310
    %v1585 = vadd.f32 %v870, %v1379
    %v1586 = vadd.f32 %v871, %v1448
    %v1587 = vadd.f32 %v872, %v1106
    %v1588 = vadd.f32 %v873, %v1175
    %v1589 = vadd.f32 %v874, %v1244
    %v1590 = vadd.f32 %v875, %v1313
    %v1591 = vadd.f32 %v876, %v1382
    %v1592 = vadd.f32 %v877, %v1451
    %v1593 = vadd.f32 %v878, %v1108
    %v1594 = vadd.f32 %v879, %v1177
    %v1595 = vadd.f32 %v880, %v1246
    %v1596 = vadd.f32 %v881, %v1315
    %v1597 = vadd.f32 %v882, %v1384
    %v1598 = vadd.f32 %v883, %v1453
    %v1599 = vld [vmem:[#allocation2 + $0x10] sm:$0xff]
    %v1600 = vld [vmem:[#allocation2 + $0x18] sm:$0xff]
    %v1601 = vld [vmem:[#allocation2 + $0x20] sm:$0xff]
    %v1602 = vld [vmem:[#allocation2 + $0x28] sm:$0xff]
    %v1603 = vld [vmem:[#allocation2 + $0x30] sm:$0xff]
    %v1604 = vld [vmem:[#allocation2 + $0x38] sm:$0xff]
    %v1605 = vld [vmem:[#allocation2 + $0x40] sm:$0xff]
    %v1606 = vld [vmem:[#allocation2 + $0x48] sm:$0xff]
    %v1607 = vld [vmem:[#allocation2 + $0x50] sm:$0xff]
    %v1608 = vld [vmem:[#allocation2 + $0x58] sm:$0xff]
    %v1609 = vld [vmem:[#allocation2 + $0x60] sm:$0xff]
    %v1610 = vld [vmem:[#allocation2 + $0x68] sm:$0xff]
    %v1611 = vld [vmem:[#allocation2 + $0x70] sm:$0xff]
    %v1612 = vld [vmem:[#allocation2 + $0x78] sm:$0xff]
    %v1613 = vld [vmem:[#allocation2 + $0x80] sm:$0xff]
    %v1614 = vld [vmem:[#allocation2 + $0x88] sm:$0xff]
    %v1615 = vld [vmem:[#allocation2 + $0x90] sm:$0xff]
    %v1616 = vld [vmem:[#allocation2 + $0x98] sm:$0xff]
    %v1617 = vld [vmem:[#allocation2 + $0xa0] sm:$0xff]
    %v1618 = vld [vmem:[#allocation2 + $0xa8] sm:$0xff]
    %v1619 = vld [vmem:[#allocation2 + $0xb0] sm:$0xff]
    %v1620 = vld [vmem:[#allocation2 + $0xb8] sm:$0xff]
    %v1621 = vld [vmem:[#allocation2 + $0xc0] sm:$0xff]
    %v1622 = vld [vmem:[#allocation2 + $0xc8] sm:$0xff]
    %v1623 = vpack.c.bf16 %v1600, %v1599
    %v1624 = vpack.c.bf16 %v1602, %v1601
    %v1625 = vpack.c.bf16 %v1604, %v1603
    %v1626 = vpack.c.bf16 %v1606, %v1605
    %v1627 = vpack.c.bf16 %v1608, %v1607
    %v1628 = vpack.c.bf16 %v1610, %v1609
    %v1629 = vpack.c.bf16 %v1612, %v1611
    %v1630 = vpack.c.bf16 %v1614, %v1613
    %v1631 = vpack.c.bf16 %v1616, %v1615
    %v1632 = vpack.c.bf16 %v1618, %v1617
    %v1633 = vpack.c.bf16 %v1620, %v1619
    %v1634 = vpack.c.bf16 %v1622, %v1621
    %s1635 = scalar_lea.vmem %s1, 192
    %v1636 = vld [vmem:[%s1635] sm:$0xff]
    %v1637 = vld [vmem:[%s1635 + $0x8] sm:$0xff]
    %v1638 = vld [vmem:[%s1635 + $0x10] sm:$0xff]
    %v1639 = vld [vmem:[%s1635 + $0x18] sm:$0xff]
    %v1640 = vld [vmem:[%s1635 + $0x20] sm:$0xff]
    %v1641 = vld [vmem:[%s1635 + $0x28] sm:$0xff]
    %v1642 = vld [vmem:[%s1635 + $0x30] sm:$0xff]
    %v1643 = vld [vmem:[%s1635 + $0x38] sm:$0xff]
    %v1644 = vld [vmem:[%s1635 + $0x40] sm:$0xff]
    %v1645 = vld [vmem:[%s1635 + $0x48] sm:$0x33]
    %v1646 = vld [vmem:[%s1635 + $0x50] sm:$0x33]
    %v1647 = vld [vmem:[%s1635 + $0x58] sm:$0x33]
    %v1660 = vunpack.c.l.b16 %v1636
    %v1661 = vunpack.c.h.b16 %v1636
    %v1662 = vunpack.c.l.b16 %v1637
    %v1663 = vunpack.c.h.b16 %v1637
    %v1664 = vunpack.c.l.b16 %v1638
    %v1665 = vunpack.c.h.b16 %v1638
    %v1666 = vunpack.c.l.b16 %v1639
    %v1667 = vunpack.c.h.b16 %v1639
    %v1668 = vunpack.c.l.b16 %v1640
    %v1669 = vunpack.c.h.b16 %v1640
    %v1670 = vunpack.c.l.b16 %v1641
    %v1671 = vunpack.c.h.b16 %v1641
    %v1672 = vunpack.c.l.b16 %v1642
    %v1673 = vunpack.c.h.b16 %v1642
    %v1674 = vunpack.c.l.b16 %v1643
    %v1675 = vunpack.c.h.b16 %v1643
    %v1676 = vunpack.c.l.b16 %v1644
    %v1677 = vunpack.c.h.b16 %v1644
    %v1678 = vunpack.c.l.b16 %v1645
    %v1679 = vunpack.c.h.b16 %v1645
    %v1680 = vunpack.c.l.b16 %v1646
    %v1681 = vunpack.c.h.b16 %v1646
    %v1682 = vunpack.c.l.b16 %v1647
    %v1683 = vunpack.c.h.b16 %v1647
    %v1684 = vpack.c.b16 %v1666, %v1660
    %v1685 = vpack.c.b16 %v1667, %v1661
    %v1686 = vpack.c.b16 %v1668, %v1662
    %v1687 = vpack.c.b16 %v1669, %v1663
    %v1688 = vpack.c.b16 %v1670, %v1664
    %v1689 = vpack.c.b16 %v1671, %v1665
    %v1690 = vpack.c.b16 %v1678, %v1672
    %v1691 = vpack.c.b16 %v1679, %v1673
    %v1692 = vpack.c.b16 %v1680, %v1674
    %v1693 = vpack.c.b16 %v1681, %v1675
    %v1694 = vpack.c.b16 %v1682, %v1676
    %v1695 = vpack.c.b16 %v1683, %v1677
    %v1703 = vsel %vm66, %v1623, 0
    %v1706 = vsel %vm66, %v1624, 0
    %v1709 = vsel %vm66, %v1625, 0
    %v1712 = vsel %vm66, %v1626, 0
    %v1715 = vsel %vm66, %v1627, 0
    %v1718 = vsel %vm66, %v1628, 0
    %v1721 = vsel %vm66, %v1629, 0
    %v1724 = vsel %vm66, %v1630, 0
    %v1727 = vsel %vm66, %v1631, 0
    %v1730 = vsel %vm66, %v1632, 0
    %v1733 = vsel %vm66, %v1633, 0
    %v1736 = vsel %vm66, %v1634, 0
    %v1739 = vsel %vm307, %v1690, 0
    %v1742 = vsel %vm307, %v1691, 0
    %v1745 = vsel %vm307, %v1692, 0
    %v1748 = vsel %vm307, %v1693, 0
    %v1751 = vsel %vm307, %v1694, 0
    %v1754 = vsel %vm307, %v1695, 0
    %1756 = vmatpush.bf16.msra.mxu0 0
    %1757 = vmatpush.bf16.msra.mxu0 0
    %1758 = vmatpush.bf16.msra.mxu0 0
    %1759 = vmatpush.bf16.msra.mxu0 0
    %1760 = vmatpush.bf16.msra.mxu0 0
    %1761 = vmatpush.bf16.msra.mxu0 0
    %1762 = vmatpush.bf16.msra.mxu0 %v1739
    %1763 = vmatpush.bf16.msra.mxu0 %v1684
    %1764 = vmatmul.bf16.gmra.mxu0 %v1703
    %v1765 = vpop.f32.mrf.mxu0
    %v1766 = vadd.f32 0.0, %v1765
    %v1767 = vpop.f32.mrf.mxu0
    %v1768 = vadd.f32 0.0, %v1767
    %1769 = vmatmul.bf16.gmra.mxu0 %v1706
    %v1770 = vpop.f32.mrf.mxu0
    %v1771 = vadd.f32 0.0, %v1770
    %v1772 = vpop.f32.mrf.mxu0
    %v1773 = vadd.f32 0.0, %v1772
    %1774 = vmatmul.bf16.gmra.mxu0 %v1709
    %v1775 = vpop.f32.mrf.mxu0
    %v1776 = vadd.f32 0.0, %v1775
    %v1777 = vpop.f32.mrf.mxu0
    %v1778 = vadd.f32 0.0, %v1777
    %1779 = vmatmul.bf16.gmra.mxu0 %v1712
    %v1780 = vpop.f32.mrf.mxu0
    %v1781 = vadd.f32 0.0, %v1780
    %v1782 = vpop.f32.mrf.mxu0
    %v1783 = vadd.f32 0.0, %v1782
    %1784 = vmatmul.bf16.gmra.mxu0 %v1715
    %v1785 = vpop.f32.mrf.mxu0
    %v1786 = vadd.f32 0.0, %v1785
    %v1787 = vpop.f32.mrf.mxu0
    %v1788 = vadd.f32 0.0, %v1787
    %1789 = vmatmul.bf16.gmra.mxu0 %v1718
    %v1790 = vpop.f32.mrf.mxu0
    %v1791 = vadd.f32 0.0, %v1790
    %v1792 = vpop.f32.mrf.mxu0
    %v1793 = vadd.f32 0.0, %v1792
    %1794 = vmatmul.bf16.gmra.mxu0 %v1721
    %v1795 = vpop.f32.mrf.mxu0
    %v1796 = vadd.f32 0.0, %v1795
    %v1797 = vpop.f32.mrf.mxu0
    %v1798 = vadd.f32 0.0, %v1797
    %1799 = vmatmul.bf16.gmra.mxu0 %v1724
    %v1800 = vpop.f32.mrf.mxu0
    %v1801 = vadd.f32 0.0, %v1800
    %v1802 = vpop.f32.mrf.mxu0
    %v1803 = vadd.f32 0.0, %v1802
    %1804 = vmatmul.bf16.gmra.mxu0 %v1727
    %v1805 = vpop.f32.mrf.mxu0
    %v1806 = vadd.f32 0.0, %v1805
    %v1807 = vpop.f32.mrf.mxu0
    %v1808 = vadd.f32 0.0, %v1807
    %1809 = vmatmul.bf16.gmra.mxu0 %v1730
    %v1810 = vpop.f32.mrf.mxu0
    %v1811 = vadd.f32 0.0, %v1810
    %v1812 = vpop.f32.mrf.mxu0
    %v1813 = vadd.f32 0.0, %v1812
    %1814 = vmatmul.bf16.gmra.mxu0 %v1733
    %v1815 = vpop.f32.mrf.mxu0
    %v1816 = vadd.f32 0.0, %v1815
    %v1817 = vpop.f32.mrf.mxu0
    %v1818 = vadd.f32 0.0, %v1817
    %1819 = vmatmul.bf16.gmra.mxu0 %v1736
    %v1820 = vpop.f32.mrf.mxu0
    %v1821 = vadd.f32 0.0, %v1820
    %v1822 = vpop.f32.mrf.mxu0
    %v1823 = vadd.f32 0.0, %v1822
    %1824 = vdwg.mxu0
    %1825 = vmatpush.bf16.msra.mxu0 0
    %1826 = vmatpush.bf16.msra.mxu0 0
    %1827 = vmatpush.bf16.msra.mxu0 0
    %1828 = vmatpush.bf16.msra.mxu0 0
    %1829 = vmatpush.bf16.msra.mxu0 0
    %1830 = vmatpush.bf16.msra.mxu0 0
    %1831 = vmatpush.bf16.msra.mxu0 %v1742
    %1832 = vmatpush.bf16.msra.mxu0 %v1685
    %1833 = vmatmul.bf16.gmra.mxu0 %v1703
    %v1834 = vpop.f32.mrf.mxu0
    %v1835 = vadd.f32 0.0, %v1834
    %v1836 = vpop.f32.mrf.mxu0
    %v1837 = vadd.f32 0.0, %v1836
    %1838 = vmatmul.bf16.gmra.mxu0 %v1706
    %v1839 = vpop.f32.mrf.mxu0
    %v1840 = vadd.f32 0.0, %v1839
    %v1841 = vpop.f32.mrf.mxu0
    %v1842 = vadd.f32 0.0, %v1841
    %1843 = vmatmul.bf16.gmra.mxu0 %v1709
    %v1844 = vpop.f32.mrf.mxu0
    %v1845 = vadd.f32 0.0, %v1844
    %v1846 = vpop.f32.mrf.mxu0
    %v1847 = vadd.f32 0.0, %v1846
    %1848 = vmatmul.bf16.gmra.mxu0 %v1712
    %v1849 = vpop.f32.mrf.mxu0
    %v1850 = vadd.f32 0.0, %v1849
    %v1851 = vpop.f32.mrf.mxu0
    %v1852 = vadd.f32 0.0, %v1851
    %1853 = vmatmul.bf16.gmra.mxu0 %v1715
    %v1854 = vpop.f32.mrf.mxu0
    %v1855 = vadd.f32 0.0, %v1854
    %v1856 = vpop.f32.mrf.mxu0
    %v1857 = vadd.f32 0.0, %v1856
    %1858 = vmatmul.bf16.gmra.mxu0 %v1718
    %v1859 = vpop.f32.mrf.mxu0
    %v1860 = vadd.f32 0.0, %v1859
    %v1861 = vpop.f32.mrf.mxu0
    %v1862 = vadd.f32 0.0, %v1861
    %1863 = vmatmul.bf16.gmra.mxu0 %v1721
    %v1864 = vpop.f32.mrf.mxu0
    %v1865 = vadd.f32 0.0, %v1864
    %v1866 = vpop.f32.mrf.mxu0
    %v1867 = vadd.f32 0.0, %v1866
    %1868 = vmatmul.bf16.gmra.mxu0 %v1724
    %v1869 = vpop.f32.mrf.mxu0
    %v1870 = vadd.f32 0.0, %v1869
    %v1871 = vpop.f32.mrf.mxu0
    %v1872 = vadd.f32 0.0, %v1871
    %1873 = vmatmul.bf16.gmra.mxu0 %v1727
    %v1874 = vpop.f32.mrf.mxu0
    %v1875 = vadd.f32 0.0, %v1874
    %v1876 = vpop.f32.mrf.mxu0
    %v1877 = vadd.f32 0.0, %v1876
    %1878 = vmatmul.bf16.gmra.mxu0 %v1730
    %v1879 = vpop.f32.mrf.mxu0
    %v1880 = vadd.f32 0.0, %v1879
    %v1881 = vpop.f32.mrf.mxu0
    %v1882 = vadd.f32 0.0, %v1881
    %1883 = vmatmul.bf16.gmra.mxu0 %v1733
    %v1884 = vpop.f32.mrf.mxu0
    %v1885 = vadd.f32 0.0, %v1884
    %v1886 = vpop.f32.mrf.mxu0
    %v1887 = vadd.f32 0.0, %v1886
    %1888 = vmatmul.bf16.gmra.mxu0 %v1736
    %v1889 = vpop.f32.mrf.mxu0
    %v1890 = vadd.f32 0.0, %v1889
    %v1891 = vpop.f32.mrf.mxu0
    %v1892 = vadd.f32 0.0, %v1891
    %1893 = vdwg.mxu0
    %1894 = vmatpush.bf16.msra.mxu0 0
    %1895 = vmatpush.bf16.msra.mxu0 0
    %1896 = vmatpush.bf16.msra.mxu0 0
    %1897 = vmatpush.bf16.msra.mxu0 0
    %1898 = vmatpush.bf16.msra.mxu0 0
    %1899 = vmatpush.bf16.msra.mxu0 0
    %1900 = vmatpush.bf16.msra.mxu0 %v1745
    %1901 = vmatpush.bf16.msra.mxu0 %v1686
    %1902 = vmatmul.bf16.gmra.mxu0 %v1703
    %v1903 = vpop.f32.mrf.mxu0
    %v1904 = vadd.f32 0.0, %v1903
    %v1905 = vpop.f32.mrf.mxu0
    %v1906 = vadd.f32 0.0, %v1905
    %1907 = vmatmul.bf16.gmra.mxu0 %v1706
    %v1908 = vpop.f32.mrf.mxu0
    %v1909 = vadd.f32 0.0, %v1908
    %v1910 = vpop.f32.mrf.mxu0
    %v1911 = vadd.f32 0.0, %v1910
    %1912 = vmatmul.bf16.gmra.mxu0 %v1709
    %v1913 = vpop.f32.mrf.mxu0
    %v1914 = vadd.f32 0.0, %v1913
    %v1915 = vpop.f32.mrf.mxu0
    %v1916 = vadd.f32 0.0, %v1915
    %1917 = vmatmul.bf16.gmra.mxu0 %v1712
    %v1918 = vpop.f32.mrf.mxu0
    %v1919 = vadd.f32 0.0, %v1918
    %v1920 = vpop.f32.mrf.mxu0
    %v1921 = vadd.f32 0.0, %v1920
    %1922 = vmatmul.bf16.gmra.mxu0 %v1715
    %v1923 = vpop.f32.mrf.mxu0
    %v1924 = vadd.f32 0.0, %v1923
    %v1925 = vpop.f32.mrf.mxu0
    %v1926 = vadd.f32 0.0, %v1925
    %1927 = vmatmul.bf16.gmra.mxu0 %v1718
    %v1928 = vpop.f32.mrf.mxu0
    %v1929 = vadd.f32 0.0, %v1928
    %v1930 = vpop.f32.mrf.mxu0
    %v1931 = vadd.f32 0.0, %v1930
    %1932 = vmatmul.bf16.gmra.mxu0 %v1721
    %v1933 = vpop.f32.mrf.mxu0
    %v1934 = vadd.f32 0.0, %v1933
    %v1935 = vpop.f32.mrf.mxu0
    %v1936 = vadd.f32 0.0, %v1935
    %1937 = vmatmul.bf16.gmra.mxu0 %v1724
    %v1938 = vpop.f32.mrf.mxu0
    %v1939 = vadd.f32 0.0, %v1938
    %v1940 = vpop.f32.mrf.mxu0
    %v1941 = vadd.f32 0.0, %v1940
    %1942 = vmatmul.bf16.gmra.mxu0 %v1727
    %v1943 = vpop.f32.mrf.mxu0
    %v1944 = vadd.f32 0.0, %v1943
    %v1945 = vpop.f32.mrf.mxu0
    %v1946 = vadd.f32 0.0, %v1945
    %1947 = vmatmul.bf16.gmra.mxu0 %v1730
    %v1948 = vpop.f32.mrf.mxu0
    %v1949 = vadd.f32 0.0, %v1948
    %v1950 = vpop.f32.mrf.mxu0
    %v1951 = vadd.f32 0.0, %v1950
    %1952 = vmatmul.bf16.gmra.mxu0 %v1733
    %v1953 = vpop.f32.mrf.mxu0
    %v1954 = vadd.f32 0.0, %v1953
    %v1955 = vpop.f32.mrf.mxu0
    %v1956 = vadd.f32 0.0, %v1955
    %1957 = vmatmul.bf16.gmra.mxu0 %v1736
    %v1958 = vpop.f32.mrf.mxu0
    %v1959 = vadd.f32 0.0, %v1958
    %v1960 = vpop.f32.mrf.mxu0
    %v1961 = vadd.f32 0.0, %v1960
    %1962 = vdwg.mxu0
    %1963 = vmatpush.bf16.msra.mxu0 0
    %1964 = vmatpush.bf16.msra.mxu0 0
    %1965 = vmatpush.bf16.msra.mxu0 0
    %1966 = vmatpush.bf16.msra.mxu0 0
    %1967 = vmatpush.bf16.msra.mxu0 0
    %1968 = vmatpush.bf16.msra.mxu0 0
    %1969 = vmatpush.bf16.msra.mxu0 %v1748
    %1970 = vmatpush.bf16.msra.mxu0 %v1687
    %1971 = vmatmul.bf16.gmra.mxu0 %v1703
    %v1972 = vpop.f32.mrf.mxu0
    %v1973 = vadd.f32 0.0, %v1972
    %v1974 = vpop.f32.mrf.mxu0
    %v1975 = vadd.f32 0.0, %v1974
    %1976 = vmatmul.bf16.gmra.mxu0 %v1706
    %v1977 = vpop.f32.mrf.mxu0
    %v1978 = vadd.f32 0.0, %v1977
    %v1979 = vpop.f32.mrf.mxu0
    %v1980 = vadd.f32 0.0, %v1979
    %1981 = vmatmul.bf16.gmra.mxu0 %v1709
    %v1982 = vpop.f32.mrf.mxu0
    %v1983 = vadd.f32 0.0, %v1982
    %v1984 = vpop.f32.mrf.mxu0
    %v1985 = vadd.f32 0.0, %v1984
    %1986 = vmatmul.bf16.gmra.mxu0 %v1712
    %v1987 = vpop.f32.mrf.mxu0
    %v1988 = vadd.f32 0.0, %v1987
    %v1989 = vpop.f32.mrf.mxu0
    %v1990 = vadd.f32 0.0, %v1989
    %1991 = vmatmul.bf16.gmra.mxu0 %v1715
    %v1992 = vpop.f32.mrf.mxu0
    %v1993 = vadd.f32 0.0, %v1992
    %v1994 = vpop.f32.mrf.mxu0
    %v1995 = vadd.f32 0.0, %v1994
    %1996 = vmatmul.bf16.gmra.mxu0 %v1718
    %v1997 = vpop.f32.mrf.mxu0
    %v1998 = vadd.f32 0.0, %v1997
    %v1999 = vpop.f32.mrf.mxu0
    %v2000 = vadd.f32 0.0, %v1999
    %2001 = vmatmul.bf16.gmra.mxu0 %v1721
    %v2002 = vpop.f32.mrf.mxu0
    %v2003 = vadd.f32 0.0, %v2002
    %v2004 = vpop.f32.mrf.mxu0
    %v2005 = vadd.f32 0.0, %v2004
    %2006 = vmatmul.bf16.gmra.mxu0 %v1724
    %v2007 = vpop.f32.mrf.mxu0
    %v2008 = vadd.f32 0.0, %v2007
    %v2009 = vpop.f32.mrf.mxu0
    %v2010 = vadd.f32 0.0, %v2009
    %2011 = vmatmul.bf16.gmra.mxu0 %v1727
    %v2012 = vpop.f32.mrf.mxu0
    %v2013 = vadd.f32 0.0, %v2012
    %v2014 = vpop.f32.mrf.mxu0
    %v2015 = vadd.f32 0.0, %v2014
    %2016 = vmatmul.bf16.gmra.mxu0 %v1730
    %v2017 = vpop.f32.mrf.mxu0
    %v2018 = vadd.f32 0.0, %v2017
    %v2019 = vpop.f32.mrf.mxu0
    %v2020 = vadd.f32 0.0, %v2019
    %2021 = vmatmul.bf16.gmra.mxu0 %v1733
    %v2022 = vpop.f32.mrf.mxu0
    %v2023 = vadd.f32 0.0, %v2022
    %v2024 = vpop.f32.mrf.mxu0
    %v2025 = vadd.f32 0.0, %v2024
    %2026 = vmatmul.bf16.gmra.mxu0 %v1736
    %v2027 = vpop.f32.mrf.mxu0
    %v2028 = vadd.f32 0.0, %v2027
    %v2029 = vpop.f32.mrf.mxu0
    %v2030 = vadd.f32 0.0, %v2029
    %2031 = vdwg.mxu0
    %2032 = vmatpush.bf16.msra.mxu0 0
    %2033 = vmatpush.bf16.msra.mxu0 0
    %2034 = vmatpush.bf16.msra.mxu0 0
    %2035 = vmatpush.bf16.msra.mxu0 0
    %2036 = vmatpush.bf16.msra.mxu0 0
    %2037 = vmatpush.bf16.msra.mxu0 0
    %2038 = vmatpush.bf16.msra.mxu0 %v1751
    %2039 = vmatpush.bf16.msra.mxu0 %v1688
    %2040 = vmatmul.bf16.gmra.mxu0 %v1703
    %v2041 = vpop.f32.mrf.mxu0
    %v2042 = vadd.f32 0.0, %v2041
    %v2043 = vpop.f32.mrf.mxu0
    %v2044 = vadd.f32 0.0, %v2043
    %2045 = vmatmul.bf16.gmra.mxu0 %v1706
    %v2046 = vpop.f32.mrf.mxu0
    %v2047 = vadd.f32 0.0, %v2046
    %v2048 = vpop.f32.mrf.mxu0
    %v2049 = vadd.f32 0.0, %v2048
    %2050 = vmatmul.bf16.gmra.mxu0 %v1709
    %v2051 = vpop.f32.mrf.mxu0
    %v2052 = vadd.f32 0.0, %v2051
    %v2053 = vpop.f32.mrf.mxu0
    %v2054 = vadd.f32 0.0, %v2053
    %2055 = vmatmul.bf16.gmra.mxu0 %v1712
    %v2056 = vpop.f32.mrf.mxu0
    %v2057 = vadd.f32 0.0, %v2056
    %v2058 = vpop.f32.mrf.mxu0
    %v2059 = vadd.f32 0.0, %v2058
    %2060 = vmatmul.bf16.gmra.mxu0 %v1715
    %v2061 = vpop.f32.mrf.mxu0
    %v2062 = vadd.f32 0.0, %v2061
    %v2063 = vpop.f32.mrf.mxu0
    %v2064 = vadd.f32 0.0, %v2063
    %2065 = vmatmul.bf16.gmra.mxu0 %v1718
    %v2066 = vpop.f32.mrf.mxu0
    %v2067 = vadd.f32 0.0, %v2066
    %v2068 = vpop.f32.mrf.mxu0
    %v2069 = vadd.f32 0.0, %v2068
    %2070 = vmatmul.bf16.gmra.mxu0 %v1721
    %v2071 = vpop.f32.mrf.mxu0
    %v2072 = vadd.f32 0.0, %v2071
    %v2073 = vpop.f32.mrf.mxu0
    %v2074 = vadd.f32 0.0, %v2073
    %2075 = vmatmul.bf16.gmra.mxu0 %v1724
    %v2076 = vpop.f32.mrf.mxu0
    %v2077 = vadd.f32 0.0, %v2076
    %v2078 = vpop.f32.mrf.mxu0
    %v2079 = vadd.f32 0.0, %v2078
    %2080 = vmatmul.bf16.gmra.mxu0 %v1727
    %v2081 = vpop.f32.mrf.mxu0
    %v2082 = vadd.f32 0.0, %v2081
    %v2083 = vpop.f32.mrf.mxu0
    %v2084 = vadd.f32 0.0, %v2083
    %2085 = vmatmul.bf16.gmra.mxu0 %v1730
    %v2086 = vpop.f32.mrf.mxu0
    %v2087 = vadd.f32 0.0, %v2086
    %v2088 = vpop.f32.mrf.mxu0
    %v2089 = vadd.f32 0.0, %v2088
    %2090 = vmatmul.bf16.gmra.mxu0 %v1733
    %v2091 = vpop.f32.mrf.mxu0
    %v2092 = vadd.f32 0.0, %v2091
    %v2093 = vpop.f32.mrf.mxu0
    %v2094 = vadd.f32 0.0, %v2093
    %2095 = vmatmul.bf16.gmra.mxu0 %v1736
    %v2096 = vpop.f32.mrf.mxu0
    %v2097 = vadd.f32 0.0, %v2096
    %v2098 = vpop.f32.mrf.mxu0
    %v2099 = vadd.f32 0.0, %v2098
    %2100 = vdwg.mxu0
    %2101 = vmatpush.bf16.msra.mxu0 0
    %2102 = vmatpush.bf16.msra.mxu0 0
    %2103 = vmatpush.bf16.msra.mxu0 0
    %2104 = vmatpush.bf16.msra.mxu0 0
    %2105 = vmatpush.bf16.msra.mxu0 0
    %2106 = vmatpush.bf16.msra.mxu0 0
    %2107 = vmatpush.bf16.msra.mxu0 %v1754
    %2108 = vmatpush.bf16.msra.mxu0 %v1689
    %2109 = vmatmul.bf16.gmra.mxu0 %v1703
    %v2110 = vpop.f32.mrf.mxu0
    %v2111 = vadd.f32 0.0, %v2110
    %v2112 = vpop.f32.mrf.mxu0
    %v2113 = vadd.f32 0.0, %v2112
    %2114 = vmatmul.bf16.gmra.mxu0 %v1706
    %v2115 = vpop.f32.mrf.mxu0
    %v2116 = vadd.f32 0.0, %v2115
    %v2117 = vpop.f32.mrf.mxu0
    %v2118 = vadd.f32 0.0, %v2117
    %2119 = vmatmul.bf16.gmra.mxu0 %v1709
    %v2120 = vpop.f32.mrf.mxu0
    %v2121 = vadd.f32 0.0, %v2120
    %v2122 = vpop.f32.mrf.mxu0
    %v2123 = vadd.f32 0.0, %v2122
    %2124 = vmatmul.bf16.gmra.mxu0 %v1712
    %v2125 = vpop.f32.mrf.mxu0
    %v2126 = vadd.f32 0.0, %v2125
    %v2127 = vpop.f32.mrf.mxu0
    %v2128 = vadd.f32 0.0, %v2127
    %2129 = vmatmul.bf16.gmra.mxu0 %v1715
    %v2130 = vpop.f32.mrf.mxu0
    %v2131 = vadd.f32 0.0, %v2130
    %v2132 = vpop.f32.mrf.mxu0
    %v2133 = vadd.f32 0.0, %v2132
    %2134 = vmatmul.bf16.gmra.mxu0 %v1718
    %v2135 = vpop.f32.mrf.mxu0
    %v2136 = vadd.f32 0.0, %v2135
    %v2137 = vpop.f32.mrf.mxu0
    %v2138 = vadd.f32 0.0, %v2137
    %2139 = vmatmul.bf16.gmra.mxu0 %v1721
    %v2140 = vpop.f32.mrf.mxu0
    %v2141 = vadd.f32 0.0, %v2140
    %v2142 = vpop.f32.mrf.mxu0
    %v2143 = vadd.f32 0.0, %v2142
    %2144 = vmatmul.bf16.gmra.mxu0 %v1724
    %v2145 = vpop.f32.mrf.mxu0
    %v2146 = vadd.f32 0.0, %v2145
    %v2147 = vpop.f32.mrf.mxu0
    %v2148 = vadd.f32 0.0, %v2147
    %2149 = vmatmul.bf16.gmra.mxu0 %v1727
    %v2150 = vpop.f32.mrf.mxu0
    %v2151 = vadd.f32 0.0, %v2150
    %v2152 = vpop.f32.mrf.mxu0
    %v2153 = vadd.f32 0.0, %v2152
    %2154 = vmatmul.bf16.gmra.mxu0 %v1730
    %v2155 = vpop.f32.mrf.mxu0
    %v2156 = vadd.f32 0.0, %v2155
    %v2157 = vpop.f32.mrf.mxu0
    %v2158 = vadd.f32 0.0, %v2157
    %2159 = vmatmul.bf16.gmra.mxu0 %v1733
    %v2160 = vpop.f32.mrf.mxu0
    %v2161 = vadd.f32 0.0, %v2160
    %v2162 = vpop.f32.mrf.mxu0
    %v2163 = vadd.f32 0.0, %v2162
    %2164 = vmatmul.bf16.gmra.mxu0 %v1736
    %v2165 = vpop.f32.mrf.mxu0
    %v2166 = vadd.f32 0.0, %v2165
    %v2167 = vpop.f32.mrf.mxu0
    %v2168 = vadd.f32 0.0, %v2167
    %2169 = vdwg.mxu0
    %v2170 = vadd.f32 %v1455, %v1766
    %v2171 = vadd.f32 %v1456, %v1835
    %v2172 = vadd.f32 %v1457, %v1904
    %v2173 = vadd.f32 %v1458, %v1973
    %v2174 = vadd.f32 %v1459, %v2042
    %v2175 = vadd.f32 %v1460, %v2111
    %v2176 = vadd.f32 %v1461, %v1768
    %v2177 = vadd.f32 %v1462, %v1837
    %v2178 = vadd.f32 %v1463, %v1906
    %v2179 = vadd.f32 %v1464, %v1975
    %v2180 = vadd.f32 %v1465, %v2044
    %v2181 = vadd.f32 %v1466, %v2113
    %v2182 = vadd.f32 %v1467, %v1771
    %v2183 = vadd.f32 %v1468, %v1840
    %v2184 = vadd.f32 %v1469, %v1909
    %v2185 = vadd.f32 %v1470, %v1978
    %v2186 = vadd.f32 %v1471, %v2047
    %v2187 = vadd.f32 %v1472, %v2116
    %v2188 = vadd.f32 %v1473, %v1773
    %v2189 = vadd.f32 %v1474, %v1842
    %v2190 = vadd.f32 %v1475, %v1911
    %v2191 = vadd.f32 %v1476, %v1980
    %v2192 = vadd.f32 %v1477, %v2049
    %v2193 = vadd.f32 %v1478, %v2118
    %v2194 = vadd.f32 %v1479, %v1776
    %v2195 = vadd.f32 %v1480, %v1845
    %v2196 = vadd.f32 %v1481, %v1914
    %v2197 = vadd.f32 %v1482, %v1983
    %v2198 = vadd.f32 %v1483, %v2052
    %v2199 = vadd.f32 %v1484, %v2121
    %v2200 = vadd.f32 %v1485, %v1778
    %v2201 = vadd.f32 %v1486, %v1847
    %v2202 = vadd.f32 %v1487, %v1916
    %v2203 = vadd.f32 %v1488, %v1985
    %v2204 = vadd.f32 %v1489, %v2054
    %v2205 = vadd.f32 %v1490, %v2123
    %v2206 = vadd.f32 %v1491, %v1781
    %v2207 = vadd.f32 %v1492, %v1850
    %v2208 = vadd.f32 %v1493, %v1919
    %v2209 = vadd.f32 %v1494, %v1988
    %v2210 = vadd.f32 %v1495, %v2057
    %v2211 = vadd.f32 %v1496, %v2126
    %v2212 = vadd.f32 %v1497, %v1783
    %v2213 = vadd.f32 %v1498, %v1852
    %v2214 = vadd.f32 %v1499, %v1921
    %v2215 = vadd.f32 %v1500, %v1990
    %v2216 = vadd.f32 %v1501, %v2059
    %v2217 = vadd.f32 %v1502, %v2128
    %v2218 = vadd.f32 %v1503, %v1786
    %v2219 = vadd.f32 %v1504, %v1855
    %v2220 = vadd.f32 %v1505, %v1924
    %v2221 = vadd.f32 %v1506, %v1993
    %v2222 = vadd.f32 %v1507, %v2062
    %v2223 = vadd.f32 %v1508, %v2131
    %v2224 = vadd.f32 %v1509, %v1788
    %v2225 = vadd.f32 %v1510, %v1857
    %v2226 = vadd.f32 %v1511, %v1926
    %v2227 = vadd.f32 %v1512, %v1995
    %v2228 = vadd.f32 %v1513, %v2064
    %v2229 = vadd.f32 %v1514, %v2133
    %v2230 = vadd.f32 %v1515, %v1791
    %v2231 = vadd.f32 %v1516, %v1860
    %v2232 = vadd.f32 %v1517, %v1929
    %v2233 = vadd.f32 %v1518, %v1998
    %v2234 = vadd.f32 %v1519, %v2067
    %v2235 = vadd.f32 %v1520, %v2136
    %v2236 = vadd.f32 %v1521, %v1793
    %v2237 = vadd.f32 %v1522, %v1862
    %v2238 = vadd.f32 %v1523, %v1931
    %v2239 = vadd.f32 %v1524, %v2000
    %v2240 = vadd.f32 %v1525, %v2069
    %v2241 = vadd.f32 %v1526, %v2138
    %v2242 = vadd.f32 %v1527, %v1796
    %v2243 = vadd.f32 %v1528, %v1865
    %v2244 = vadd.f32 %v1529, %v1934
    %v2245 = vadd.f32 %v1530, %v2003
    %v2246 = vadd.f32 %v1531, %v2072
    %v2247 = vadd.f32 %v1532, %v2141
    %v2248 = vadd.f32 %v1533, %v1798
    %v2249 = vadd.f32 %v1534, %v1867
    %v2250 = vadd.f32 %v1535, %v1936
    %v2251 = vadd.f32 %v1536, %v2005
    %v2252 = vadd.f32 %v1537, %v2074
    %v2253 = vadd.f32 %v1538, %v2143
    %v2254 = vadd.f32 %v1539, %v1801
    %v2255 = vadd.f32 %v1540, %v1870
    %v2256 = vadd.f32 %v1541, %v1939
    %v2257 = vadd.f32 %v1542, %v2008
    %v2258 = vadd.f32 %v1543, %v2077
    %v2259 = vadd.f32 %v1544, %v2146
    %v2260 = vadd.f32 %v1545, %v1803
    %v2261 = vadd.f32 %v1546, %v1872
    %v2262 = vadd.f32 %v1547, %v1941
    %v2263 = vadd.f32 %v1548, %v2010
    %v2264 = vadd.f32 %v1549, %v2079
    %v2265 = vadd.f32 %v1550, %v2148
    %v2266 = vadd.f32 %v1551, %v1806
    %v2267 = vadd.f32 %v1552, %v1875
    %v2268 = vadd.f32 %v1553, %v1944
    %v2269 = vadd.f32 %v1554, %v2013
    %v2270 = vadd.f32 %v1555, %v2082
    %v2271 = vadd.f32 %v1556, %v2151
    %v2272 = vadd.f32 %v1557, %v1808
    %v2273 = vadd.f32 %v1558, %v1877
    %v2274 = vadd.f32 %v1559, %v1946
    %v2275 = vadd.f32 %v1560, %v2015
    %v2276 = vadd.f32 %v1561, %v2084
    %v2277 = vadd.f32 %v1562, %v2153
    %v2278 = vadd.f32 %v1563, %v1811
    %v2279 = vadd.f32 %v1564, %v1880
    %v2280 = vadd.f32 %v1565, %v1949
    %v2281 = vadd.f32 %v1566, %v2018
    %v2282 = vadd.f32 %v1567, %v2087
    %v2283 = vadd.f32 %v1568, %v2156
    %v2284 = vadd.f32 %v1569, %v1813
    %v2285 = vadd.f32 %v1570, %v1882
    %v2286 = vadd.f32 %v1571, %v1951
    %v2287 = vadd.f32 %v1572, %v2020
    %v2288 = vadd.f32 %v1573, %v2089
    %v2289 = vadd.f32 %v1574, %v2158
    %v2290 = vadd.f32 %v1575, %v1816
    %v2291 = vadd.f32 %v1576, %v1885
    %v2292 = vadd.f32 %v1577, %v1954
    %v2293 = vadd.f32 %v1578, %v2023
    %v2294 = vadd.f32 %v1579, %v2092
    %v2295 = vadd.f32 %v1580, %v2161
    %v2296 = vadd.f32 %v1581, %v1818
    %v2297 = vadd.f32 %v1582, %v1887
    %v2298 = vadd.f32 %v1583, %v1956
    %v2299 = vadd.f32 %v1584, %v2025
    %v2300 = vadd.f32 %v1585, %v2094
    %v2301 = vadd.f32 %v1586, %v2163
    %v2302 = vadd.f32 %v1587, %v1821
    %v2303 = vadd.f32 %v1588, %v1890
    %v2304 = vadd.f32 %v1589, %v1959
    %v2305 = vadd.f32 %v1590, %v2028
    %v2306 = vadd.f32 %v1591, %v2097
    %v2307 = vadd.f32 %v1592, %v2166
    %v2308 = vadd.f32 %v1593, %v1823
    %v2309 = vadd.f32 %v1594, %v1892
    %v2310 = vadd.f32 %v1595, %v1961
    %v2311 = vadd.f32 %v1596, %v2030
    %v2312 = vadd.f32 %v1597, %v2099
    %v2313 = vadd.f32 %v1598, %v2168
    %v2314 = vld [vmem:[#allocation2 + $0x18] sm:$0xff]
    %v2315 = vld [vmem:[#allocation2 + $0x20] sm:$0xff]
    %v2316 = vld [vmem:[#allocation2 + $0x28] sm:$0xff]
    %v2317 = vld [vmem:[#allocation2 + $0x30] sm:$0xff]
    %v2318 = vld [vmem:[#allocation2 + $0x38] sm:$0xff]
    %v2319 = vld [vmem:[#allocation2 + $0x40] sm:$0xff]
    %v2320 = vld [vmem:[#allocation2 + $0x48] sm:$0xff]
    %v2321 = vld [vmem:[#allocation2 + $0x50] sm:$0xff]
    %v2322 = vld [vmem:[#allocation2 + $0x58] sm:$0xff]
    %v2323 = vld [vmem:[#allocation2 + $0x60] sm:$0xff]
    %v2324 = vld [vmem:[#allocation2 + $0x68] sm:$0xff]
    %v2325 = vld [vmem:[#allocation2 + $0x70] sm:$0xff]
    %v2326 = vld [vmem:[#allocation2 + $0x78] sm:$0xff]
    %v2327 = vld [vmem:[#allocation2 + $0x80] sm:$0xff]
    %v2328 = vld [vmem:[#allocation2 + $0x88] sm:$0xff]
    %v2329 = vld [vmem:[#allocation2 + $0x90] sm:$0xff]
    %v2330 = vld [vmem:[#allocation2 + $0x98] sm:$0xff]
    %v2331 = vld [vmem:[#allocation2 + $0xa0] sm:$0xff]
    %v2332 = vld [vmem:[#allocation2 + $0xa8] sm:$0xff]
    %v2333 = vld [vmem:[#allocation2 + $0xb0] sm:$0xff]
    %v2334 = vld [vmem:[#allocation2 + $0xb8] sm:$0xff]
    %v2335 = vld [vmem:[#allocation2 + $0xc0] sm:$0xff]
    %v2336 = vld [vmem:[#allocation2 + $0xc8] sm:$0xff]
    %v2337 = vld [vmem:[#allocation2 + $0xd0] sm:$0xff]
    %v2338 = vpack.c.bf16 %v2315, %v2314
    %v2339 = vpack.c.bf16 %v2317, %v2316
    %v2340 = vpack.c.bf16 %v2319, %v2318
    %v2341 = vpack.c.bf16 %v2321, %v2320
    %v2342 = vpack.c.bf16 %v2323, %v2322
    %v2343 = vpack.c.bf16 %v2325, %v2324
    %v2344 = vpack.c.bf16 %v2327, %v2326
    %v2345 = vpack.c.bf16 %v2329, %v2328
    %v2346 = vpack.c.bf16 %v2331, %v2330
    %v2347 = vpack.c.bf16 %v2333, %v2332
    %v2348 = vpack.c.bf16 %v2335, %v2334
    %v2349 = vpack.c.bf16 %v2337, %v2336
    %s2350 = scalar_lea.vmem %s1, 288
    %v2351 = vld [vmem:[%s2350] sm:$0xff]
    %v2352 = vld [vmem:[%s2350 + $0x8] sm:$0xff]
    %v2353 = vld [vmem:[%s2350 + $0x10] sm:$0xff]
    %v2354 = vld [vmem:[%s2350 + $0x18] sm:$0xff]
    %v2355 = vld [vmem:[%s2350 + $0x20] sm:$0xff]
    %v2356 = vld [vmem:[%s2350 + $0x28] sm:$0xff]
    %v2357 = vld [vmem:[%s2350 + $0x30] sm:$0xff]
    %v2358 = vld [vmem:[%s2350 + $0x38] sm:$0xff]
    %v2359 = vld [vmem:[%s2350 + $0x40] sm:$0xff]
    %v2360 = vld [vmem:[%s2350 + $0x48] sm:$0x33]
    %v2361 = vld [vmem:[%s2350 + $0x50] sm:$0x33]
    %v2362 = vld [vmem:[%s2350 + $0x58] sm:$0x33]
    %v2375 = vunpack.c.l.b16 %v2351
    %v2376 = vunpack.c.h.b16 %v2351
    %v2377 = vunpack.c.l.b16 %v2352
    %v2378 = vunpack.c.h.b16 %v2352
    %v2379 = vunpack.c.l.b16 %v2353
    %v2380 = vunpack.c.h.b16 %v2353
    %v2381 = vunpack.c.l.b16 %v2354
    %v2382 = vunpack.c.h.b16 %v2354
    %v2383 = vunpack.c.l.b16 %v2355
    %v2384 = vunpack.c.h.b16 %v2355
    %v2385 = vunpack.c.l.b16 %v2356
    %v2386 = vunpack.c.h.b16 %v2356
    %v2387 = vunpack.c.l.b16 %v2357
    %v2388 = vunpack.c.h.b16 %v2357
    %v2389 = vunpack.c.l.b16 %v2358
    %v2390 = vunpack.c.h.b16 %v2358
    %v2391 = vunpack.c.l.b16 %v2359
    %v2392 = vunpack.c.h.b16 %v2359
    %v2393 = vunpack.c.l.b16 %v2360
    %v2394 = vunpack.c.h.b16 %v2360
    %v2395 = vunpack.c.l.b16 %v2361
    %v2396 = vunpack.c.h.b16 %v2361
    %v2397 = vunpack.c.l.b16 %v2362
    %v2398 = vunpack.c.h.b16 %v2362
    %v2399 = vpack.c.b16 %v2381, %v2375
    %v2400 = vpack.c.b16 %v2382, %v2376
    %v2401 = vpack.c.b16 %v2383, %v2377
    %v2402 = vpack.c.b16 %v2384, %v2378
    %v2403 = vpack.c.b16 %v2385, %v2379
    %v2404 = vpack.c.b16 %v2386, %v2380
    %v2405 = vpack.c.b16 %v2393, %v2387
    %v2406 = vpack.c.b16 %v2394, %v2388
    %v2407 = vpack.c.b16 %v2395, %v2389
    %v2408 = vpack.c.b16 %v2396, %v2390
    %v2409 = vpack.c.b16 %v2397, %v2391
    %v2410 = vpack.c.b16 %v2398, %v2392
    %v2418 = vsel %vm66, %v2338, 0
    %v2421 = vsel %vm66, %v2339, 0
    %v2424 = vsel %vm66, %v2340, 0
    %v2427 = vsel %vm66, %v2341, 0
    %v2430 = vsel %vm66, %v2342, 0
    %v2433 = vsel %vm66, %v2343, 0
    %v2436 = vsel %vm66, %v2344, 0
    %v2439 = vsel %vm66, %v2345, 0
    %v2442 = vsel %vm66, %v2346, 0
    %v2445 = vsel %vm66, %v2347, 0
    %v2448 = vsel %vm66, %v2348, 0
    %v2451 = vsel %vm66, %v2349, 0
    %v2454 = vsel %vm307, %v2405, 0
    %v2457 = vsel %vm307, %v2406, 0
    %v2460 = vsel %vm307, %v2407, 0
    %v2463 = vsel %vm307, %v2408, 0
    %v2466 = vsel %vm307, %v2409, 0
    %v2469 = vsel %vm307, %v2410, 0
    %2471 = vmatpush.bf16.msra.mxu0 0
    %2472 = vmatpush.bf16.msra.mxu0 0
    %2473 = vmatpush.bf16.msra.mxu0 0
    %2474 = vmatpush.bf16.msra.mxu0 0
    %2475 = vmatpush.bf16.msra.mxu0 0
    %2476 = vmatpush.bf16.msra.mxu0 0
    %2477 = vmatpush.bf16.msra.mxu0 %v2454
    %2478 = vmatpush.bf16.msra.mxu0 %v2399
    %2479 = vmatmul.bf16.gmra.mxu0 %v2418
    %v2480 = vpop.f32.mrf.mxu0
    %v2481 = vadd.f32 0.0, %v2480
    %v2482 = vpop.f32.mrf.mxu0
    %v2483 = vadd.f32 0.0, %v2482
    %2484 = vmatmul.bf16.gmra.mxu0 %v2421
    %v2485 = vpop.f32.mrf.mxu0
    %v2486 = vadd.f32 0.0, %v2485
    %v2487 = vpop.f32.mrf.mxu0
    %v2488 = vadd.f32 0.0, %v2487
    %2489 = vmatmul.bf16.gmra.mxu0 %v2424
    %v2490 = vpop.f32.mrf.mxu0
    %v2491 = vadd.f32 0.0, %v2490
    %v2492 = vpop.f32.mrf.mxu0
    %v2493 = vadd.f32 0.0, %v2492
    %2494 = vmatmul.bf16.gmra.mxu0 %v2427
    %v2495 = vpop.f32.mrf.mxu0
    %v2496 = vadd.f32 0.0, %v2495
    %v2497 = vpop.f32.mrf.mxu0
    %v2498 = vadd.f32 0.0, %v2497
    %2499 = vmatmul.bf16.gmra.mxu0 %v2430
    %v2500 = vpop.f32.mrf.mxu0
    %v2501 = vadd.f32 0.0, %v2500
    %v2502 = vpop.f32.mrf.mxu0
    %v2503 = vadd.f32 0.0, %v2502
    %2504 = vmatmul.bf16.gmra.mxu0 %v2433
    %v2505 = vpop.f32.mrf.mxu0
    %v2506 = vadd.f32 0.0, %v2505
    %v2507 = vpop.f32.mrf.mxu0
    %v2508 = vadd.f32 0.0, %v2507
    %2509 = vmatmul.bf16.gmra.mxu0 %v2436
    %v2510 = vpop.f32.mrf.mxu0
    %v2511 = vadd.f32 0.0, %v2510
    %v2512 = vpop.f32.mrf.mxu0
    %v2513 = vadd.f32 0.0, %v2512
    %2514 = vmatmul.bf16.gmra.mxu0 %v2439
    %v2515 = vpop.f32.mrf.mxu0
    %v2516 = vadd.f32 0.0, %v2515
    %v2517 = vpop.f32.mrf.mxu0
    %v2518 = vadd.f32 0.0, %v2517
    %2519 = vmatmul.bf16.gmra.mxu0 %v2442
    %v2520 = vpop.f32.mrf.mxu0
    %v2521 = vadd.f32 0.0, %v2520
    %v2522 = vpop.f32.mrf.mxu0
    %v2523 = vadd.f32 0.0, %v2522
    %2524 = vmatmul.bf16.gmra.mxu0 %v2445
    %v2525 = vpop.f32.mrf.mxu0
    %v2526 = vadd.f32 0.0, %v2525
    %v2527 = vpop.f32.mrf.mxu0
    %v2528 = vadd.f32 0.0, %v2527
    %2529 = vmatmul.bf16.gmra.mxu0 %v2448
    %v2530 = vpop.f32.mrf.mxu0
    %v2531 = vadd.f32 0.0, %v2530
    %v2532 = vpop.f32.mrf.mxu0
    %v2533 = vadd.f32 0.0, %v2532
    %2534 = vmatmul.bf16.gmra.mxu0 %v2451
    %v2535 = vpop.f32.mrf.mxu0
    %v2536 = vadd.f32 0.0, %v2535
    %v2537 = vpop.f32.mrf.mxu0
    %v2538 = vadd.f32 0.0, %v2537
    %2539 = vdwg.mxu0
    %2540 = vmatpush.bf16.msra.mxu0 0
    %2541 = vmatpush.bf16.msra.mxu0 0
    %2542 = vmatpush.bf16.msra.mxu0 0
    %2543 = vmatpush.bf16.msra.mxu0 0
    %2544 = vmatpush.bf16.msra.mxu0 0
    %2545 = vmatpush.bf16.msra.mxu0 0
    %2546 = vmatpush.bf16.msra.mxu0 %v2457
    %2547 = vmatpush.bf16.msra.mxu0 %v2400
    %2548 = vmatmul.bf16.gmra.mxu0 %v2418
    %v2549 = vpop.f32.mrf.mxu0
    %v2550 = vadd.f32 0.0, %v2549
    %v2551 = vpop.f32.mrf.mxu0
    %v2552 = vadd.f32 0.0, %v2551
    %2553 = vmatmul.bf16.gmra.mxu0 %v2421
    %v2554 = vpop.f32.mrf.mxu0
    %v2555 = vadd.f32 0.0, %v2554
    %v2556 = vpop.f32.mrf.mxu0
    %v2557 = vadd.f32 0.0, %v2556
    %2558 = vmatmul.bf16.gmra.mxu0 %v2424
    %v2559 = vpop.f32.mrf.mxu0
    %v2560 = vadd.f32 0.0, %v2559
    %v2561 = vpop.f32.mrf.mxu0
    %v2562 = vadd.f32 0.0, %v2561
    %2563 = vmatmul.bf16.gmra.mxu0 %v2427
    %v2564 = vpop.f32.mrf.mxu0
    %v2565 = vadd.f32 0.0, %v2564
    %v2566 = vpop.f32.mrf.mxu0
    %v2567 = vadd.f32 0.0, %v2566
    %2568 = vmatmul.bf16.gmra.mxu0 %v2430
    %v2569 = vpop.f32.mrf.mxu0
    %v2570 = vadd.f32 0.0, %v2569
    %v2571 = vpop.f32.mrf.mxu0
    %v2572 = vadd.f32 0.0, %v2571
    %2573 = vmatmul.bf16.gmra.mxu0 %v2433
    %v2574 = vpop.f32.mrf.mxu0
    %v2575 = vadd.f32 0.0, %v2574
    %v2576 = vpop.f32.mrf.mxu0
    %v2577 = vadd.f32 0.0, %v2576
    %2578 = vmatmul.bf16.gmra.mxu0 %v2436
    %v2579 = vpop.f32.mrf.mxu0
    %v2580 = vadd.f32 0.0, %v2579
    %v2581 = vpop.f32.mrf.mxu0
    %v2582 = vadd.f32 0.0, %v2581
    %2583 = vmatmul.bf16.gmra.mxu0 %v2439
    %v2584 = vpop.f32.mrf.mxu0
    %v2585 = vadd.f32 0.0, %v2584
    %v2586 = vpop.f32.mrf.mxu0
    %v2587 = vadd.f32 0.0, %v2586
    %2588 = vmatmul.bf16.gmra.mxu0 %v2442
    %v2589 = vpop.f32.mrf.mxu0
    %v2590 = vadd.f32 0.0, %v2589
    %v2591 = vpop.f32.mrf.mxu0
    %v2592 = vadd.f32 0.0, %v2591
    %2593 = vmatmul.bf16.gmra.mxu0 %v2445
    %v2594 = vpop.f32.mrf.mxu0
    %v2595 = vadd.f32 0.0, %v2594
    %v2596 = vpop.f32.mrf.mxu0
    %v2597 = vadd.f32 0.0, %v2596
    %2598 = vmatmul.bf16.gmra.mxu0 %v2448
    %v2599 = vpop.f32.mrf.mxu0
    %v2600 = vadd.f32 0.0, %v2599
    %v2601 = vpop.f32.mrf.mxu0
    %v2602 = vadd.f32 0.0, %v2601
    %2603 = vmatmul.bf16.gmra.mxu0 %v2451
    %v2604 = vpop.f32.mrf.mxu0
    %v2605 = vadd.f32 0.0, %v2604
    %v2606 = vpop.f32.mrf.mxu0
    %v2607 = vadd.f32 0.0, %v2606
    %2608 = vdwg.mxu0
    %2609 = vmatpush.bf16.msra.mxu0 0
    %2610 = vmatpush.bf16.msra.mxu0 0
    %2611 = vmatpush.bf16.msra.mxu0 0
    %2612 = vmatpush.bf16.msra.mxu0 0
    %2613 = vmatpush.bf16.msra.mxu0 0
    %2614 = vmatpush.bf16.msra.mxu0 0
    %2615 = vmatpush.bf16.msra.mxu0 %v2460
    %2616 = vmatpush.bf16.msra.mxu0 %v2401
    %2617 = vmatmul.bf16.gmra.mxu0 %v2418
    %v2618 = vpop.f32.mrf.mxu0
    %v2619 = vadd.f32 0.0, %v2618
    %v2620 = vpop.f32.mrf.mxu0
    %v2621 = vadd.f32 0.0, %v2620
    %2622 = vmatmul.bf16.gmra.mxu0 %v2421
    %v2623 = vpop.f32.mrf.mxu0
    %v2624 = vadd.f32 0.0, %v2623
    %v2625 = vpop.f32.mrf.mxu0
    %v2626 = vadd.f32 0.0, %v2625
    %2627 = vmatmul.bf16.gmra.mxu0 %v2424
    %v2628 = vpop.f32.mrf.mxu0
    %v2629 = vadd.f32 0.0, %v2628
    %v2630 = vpop.f32.mrf.mxu0
    %v2631 = vadd.f32 0.0, %v2630
    %2632 = vmatmul.bf16.gmra.mxu0 %v2427
    %v2633 = vpop.f32.mrf.mxu0
    %v2634 = vadd.f32 0.0, %v2633
    %v2635 = vpop.f32.mrf.mxu0
    %v2636 = vadd.f32 0.0, %v2635
    %2637 = vmatmul.bf16.gmra.mxu0 %v2430
    %v2638 = vpop.f32.mrf.mxu0
    %v2639 = vadd.f32 0.0, %v2638
    %v2640 = vpop.f32.mrf.mxu0
    %v2641 = vadd.f32 0.0, %v2640
    %2642 = vmatmul.bf16.gmra.mxu0 %v2433
    %v2643 = vpop.f32.mrf.mxu0
    %v2644 = vadd.f32 0.0, %v2643
    %v2645 = vpop.f32.mrf.mxu0
    %v2646 = vadd.f32 0.0, %v2645
    %2647 = vmatmul.bf16.gmra.mxu0 %v2436
    %v2648 = vpop.f32.mrf.mxu0
    %v2649 = vadd.f32 0.0, %v2648
    %v2650 = vpop.f32.mrf.mxu0
    %v2651 = vadd.f32 0.0, %v2650
    %2652 = vmatmul.bf16.gmra.mxu0 %v2439
    %v2653 = vpop.f32.mrf.mxu0
    %v2654 = vadd.f32 0.0, %v2653
    %v2655 = vpop.f32.mrf.mxu0
    %v2656 = vadd.f32 0.0, %v2655
    %2657 = vmatmul.bf16.gmra.mxu0 %v2442
    %v2658 = vpop.f32.mrf.mxu0
    %v2659 = vadd.f32 0.0, %v2658
    %v2660 = vpop.f32.mrf.mxu0
    %v2661 = vadd.f32 0.0, %v2660
    %2662 = vmatmul.bf16.gmra.mxu0 %v2445
    %v2663 = vpop.f32.mrf.mxu0
    %v2664 = vadd.f32 0.0, %v2663
    %v2665 = vpop.f32.mrf.mxu0
    %v2666 = vadd.f32 0.0, %v2665
    %2667 = vmatmul.bf16.gmra.mxu0 %v2448
    %v2668 = vpop.f32.mrf.mxu0
    %v2669 = vadd.f32 0.0, %v2668
    %v2670 = vpop.f32.mrf.mxu0
    %v2671 = vadd.f32 0.0, %v2670
    %2672 = vmatmul.bf16.gmra.mxu0 %v2451
    %v2673 = vpop.f32.mrf.mxu0
    %v2674 = vadd.f32 0.0, %v2673
    %v2675 = vpop.f32.mrf.mxu0
    %v2676 = vadd.f32 0.0, %v2675
    %2677 = vdwg.mxu0
    %2678 = vmatpush.bf16.msra.mxu0 0
    %2679 = vmatpush.bf16.msra.mxu0 0
    %2680 = vmatpush.bf16.msra.mxu0 0
    %2681 = vmatpush.bf16.msra.mxu0 0
    %2682 = vmatpush.bf16.msra.mxu0 0
    %2683 = vmatpush.bf16.msra.mxu0 0
    %2684 = vmatpush.bf16.msra.mxu0 %v2463
    %2685 = vmatpush.bf16.msra.mxu0 %v2402
    %2686 = vmatmul.bf16.gmra.mxu0 %v2418
    %v2687 = vpop.f32.mrf.mxu0
    %v2688 = vadd.f32 0.0, %v2687
    %v2689 = vpop.f32.mrf.mxu0
    %v2690 = vadd.f32 0.0, %v2689
    %2691 = vmatmul.bf16.gmra.mxu0 %v2421
    %v2692 = vpop.f32.mrf.mxu0
    %v2693 = vadd.f32 0.0, %v2692
    %v2694 = vpop.f32.mrf.mxu0
    %v2695 = vadd.f32 0.0, %v2694
    %2696 = vmatmul.bf16.gmra.mxu0 %v2424
    %v2697 = vpop.f32.mrf.mxu0
    %v2698 = vadd.f32 0.0, %v2697
    %v2699 = vpop.f32.mrf.mxu0
    %v2700 = vadd.f32 0.0, %v2699
    %2701 = vmatmul.bf16.gmra.mxu0 %v2427
    %v2702 = vpop.f32.mrf.mxu0
    %v2703 = vadd.f32 0.0, %v2702
    %v2704 = vpop.f32.mrf.mxu0
    %v2705 = vadd.f32 0.0, %v2704
    %2706 = vmatmul.bf16.gmra.mxu0 %v2430
    %v2707 = vpop.f32.mrf.mxu0
    %v2708 = vadd.f32 0.0, %v2707
    %v2709 = vpop.f32.mrf.mxu0
    %v2710 = vadd.f32 0.0, %v2709
    %2711 = vmatmul.bf16.gmra.mxu0 %v2433
    %v2712 = vpop.f32.mrf.mxu0
    %v2713 = vadd.f32 0.0, %v2712
    %v2714 = vpop.f32.mrf.mxu0
    %v2715 = vadd.f32 0.0, %v2714
    %2716 = vmatmul.bf16.gmra.mxu0 %v2436
    %v2717 = vpop.f32.mrf.mxu0
    %v2718 = vadd.f32 0.0, %v2717
    %v2719 = vpop.f32.mrf.mxu0
    %v2720 = vadd.f32 0.0, %v2719
    %2721 = vmatmul.bf16.gmra.mxu0 %v2439
    %v2722 = vpop.f32.mrf.mxu0
    %v2723 = vadd.f32 0.0, %v2722
    %v2724 = vpop.f32.mrf.mxu0
    %v2725 = vadd.f32 0.0, %v2724
    %2726 = vmatmul.bf16.gmra.mxu0 %v2442
    %v2727 = vpop.f32.mrf.mxu0
    %v2728 = vadd.f32 0.0, %v2727
    %v2729 = vpop.f32.mrf.mxu0
    %v2730 = vadd.f32 0.0, %v2729
    %2731 = vmatmul.bf16.gmra.mxu0 %v2445
    %v2732 = vpop.f32.mrf.mxu0
    %v2733 = vadd.f32 0.0, %v2732
    %v2734 = vpop.f32.mrf.mxu0
    %v2735 = vadd.f32 0.0, %v2734
    %2736 = vmatmul.bf16.gmra.mxu0 %v2448
    %v2737 = vpop.f32.mrf.mxu0
    %v2738 = vadd.f32 0.0, %v2737
    %v2739 = vpop.f32.mrf.mxu0
    %v2740 = vadd.f32 0.0, %v2739
    %2741 = vmatmul.bf16.gmra.mxu0 %v2451
    %v2742 = vpop.f32.mrf.mxu0
    %v2743 = vadd.f32 0.0, %v2742
    %v2744 = vpop.f32.mrf.mxu0
    %v2745 = vadd.f32 0.0, %v2744
    %2746 = vdwg.mxu0
    %2747 = vmatpush.bf16.msra.mxu0 0
    %2748 = vmatpush.bf16.msra.mxu0 0
    %2749 = vmatpush.bf16.msra.mxu0 0
    %2750 = vmatpush.bf16.msra.mxu0 0
    %2751 = vmatpush.bf16.msra.mxu0 0
    %2752 = vmatpush.bf16.msra.mxu0 0
    %2753 = vmatpush.bf16.msra.mxu0 %v2466
    %2754 = vmatpush.bf16.msra.mxu0 %v2403
    %2755 = vmatmul.bf16.gmra.mxu0 %v2418
    %v2756 = vpop.f32.mrf.mxu0
    %v2757 = vadd.f32 0.0, %v2756
    %v2758 = vpop.f32.mrf.mxu0
    %v2759 = vadd.f32 0.0, %v2758
    %2760 = vmatmul.bf16.gmra.mxu0 %v2421
    %v2761 = vpop.f32.mrf.mxu0
    %v2762 = vadd.f32 0.0, %v2761
    %v2763 = vpop.f32.mrf.mxu0
    %v2764 = vadd.f32 0.0, %v2763
    %2765 = vmatmul.bf16.gmra.mxu0 %v2424
    %v2766 = vpop.f32.mrf.mxu0
    %v2767 = vadd.f32 0.0, %v2766
    %v2768 = vpop.f32.mrf.mxu0
    %v2769 = vadd.f32 0.0, %v2768
    %2770 = vmatmul.bf16.gmra.mxu0 %v2427
    %v2771 = vpop.f32.mrf.mxu0
    %v2772 = vadd.f32 0.0, %v2771
    %v2773 = vpop.f32.mrf.mxu0
    %v2774 = vadd.f32 0.0, %v2773
    %2775 = vmatmul.bf16.gmra.mxu0 %v2430
    %v2776 = vpop.f32.mrf.mxu0
    %v2777 = vadd.f32 0.0, %v2776
    %v2778 = vpop.f32.mrf.mxu0
    %v2779 = vadd.f32 0.0, %v2778
    %2780 = vmatmul.bf16.gmra.mxu0 %v2433
    %v2781 = vpop.f32.mrf.mxu0
    %v2782 = vadd.f32 0.0, %v2781
    %v2783 = vpop.f32.mrf.mxu0
    %v2784 = vadd.f32 0.0, %v2783
    %2785 = vmatmul.bf16.gmra.mxu0 %v2436
    %v2786 = vpop.f32.mrf.mxu0
    %v2787 = vadd.f32 0.0, %v2786
    %v2788 = vpop.f32.mrf.mxu0
    %v2789 = vadd.f32 0.0, %v2788
    %2790 = vmatmul.bf16.gmra.mxu0 %v2439
    %v2791 = vpop.f32.mrf.mxu0
    %v2792 = vadd.f32 0.0, %v2791
    %v2793 = vpop.f32.mrf.mxu0
    %v2794 = vadd.f32 0.0, %v2793
    %2795 = vmatmul.bf16.gmra.mxu0 %v2442
    %v2796 = vpop.f32.mrf.mxu0
    %v2797 = vadd.f32 0.0, %v2796
    %v2798 = vpop.f32.mrf.mxu0
    %v2799 = vadd.f32 0.0, %v2798
    %2800 = vmatmul.bf16.gmra.mxu0 %v2445
    %v2801 = vpop.f32.mrf.mxu0
    %v2802 = vadd.f32 0.0, %v2801
    %v2803 = vpop.f32.mrf.mxu0
    %v2804 = vadd.f32 0.0, %v2803
    %2805 = vmatmul.bf16.gmra.mxu0 %v2448
    %v2806 = vpop.f32.mrf.mxu0
    %v2807 = vadd.f32 0.0, %v2806
    %v2808 = vpop.f32.mrf.mxu0
    %v2809 = vadd.f32 0.0, %v2808
    %2810 = vmatmul.bf16.gmra.mxu0 %v2451
    %v2811 = vpop.f32.mrf.mxu0
    %v2812 = vadd.f32 0.0, %v2811
    %v2813 = vpop.f32.mrf.mxu0
    %v2814 = vadd.f32 0.0, %v2813
    %2815 = vdwg.mxu0
    %2816 = vmatpush.bf16.msra.mxu0 0
    %2817 = vmatpush.bf16.msra.mxu0 0
    %2818 = vmatpush.bf16.msra.mxu0 0
    %2819 = vmatpush.bf16.msra.mxu0 0
    %2820 = vmatpush.bf16.msra.mxu0 0
    %2821 = vmatpush.bf16.msra.mxu0 0
    %2822 = vmatpush.bf16.msra.mxu0 %v2469
    %2823 = vmatpush.bf16.msra.mxu0 %v2404
    %2824 = vmatmul.bf16.gmra.mxu0 %v2418
    %v2825 = vpop.f32.mrf.mxu0
    %v2826 = vadd.f32 0.0, %v2825
    %v2827 = vpop.f32.mrf.mxu0
    %v2828 = vadd.f32 0.0, %v2827
    %2829 = vmatmul.bf16.gmra.mxu0 %v2421
    %v2830 = vpop.f32.mrf.mxu0
    %v2831 = vadd.f32 0.0, %v2830
    %v2832 = vpop.f32.mrf.mxu0
    %v2833 = vadd.f32 0.0, %v2832
    %2834 = vmatmul.bf16.gmra.mxu0 %v2424
    %v2835 = vpop.f32.mrf.mxu0
    %v2836 = vadd.f32 0.0, %v2835
    %v2837 = vpop.f32.mrf.mxu0
    %v2838 = vadd.f32 0.0, %v2837
    %2839 = vmatmul.bf16.gmra.mxu0 %v2427
    %v2840 = vpop.f32.mrf.mxu0
    %v2841 = vadd.f32 0.0, %v2840
    %v2842 = vpop.f32.mrf.mxu0
    %v2843 = vadd.f32 0.0, %v2842
    %2844 = vmatmul.bf16.gmra.mxu0 %v2430
    %v2845 = vpop.f32.mrf.mxu0
    %v2846 = vadd.f32 0.0, %v2845
    %v2847 = vpop.f32.mrf.mxu0
    %v2848 = vadd.f32 0.0, %v2847
    %2849 = vmatmul.bf16.gmra.mxu0 %v2433
    %v2850 = vpop.f32.mrf.mxu0
    %v2851 = vadd.f32 0.0, %v2850
    %v2852 = vpop.f32.mrf.mxu0
    %v2853 = vadd.f32 0.0, %v2852
    %2854 = vmatmul.bf16.gmra.mxu0 %v2436
    %v2855 = vpop.f32.mrf.mxu0
    %v2856 = vadd.f32 0.0, %v2855
    %v2857 = vpop.f32.mrf.mxu0
    %v2858 = vadd.f32 0.0, %v2857
    %2859 = vmatmul.bf16.gmra.mxu0 %v2439
    %v2860 = vpop.f32.mrf.mxu0
    %v2861 = vadd.f32 0.0, %v2860
    %v2862 = vpop.f32.mrf.mxu0
    %v2863 = vadd.f32 0.0, %v2862
    %2864 = vmatmul.bf16.gmra.mxu0 %v2442
    %v2865 = vpop.f32.mrf.mxu0
    %v2866 = vadd.f32 0.0, %v2865
    %v2867 = vpop.f32.mrf.mxu0
    %v2868 = vadd.f32 0.0, %v2867
    %2869 = vmatmul.bf16.gmra.mxu0 %v2445
    %v2870 = vpop.f32.mrf.mxu0
    %v2871 = vadd.f32 0.0, %v2870
    %v2872 = vpop.f32.mrf.mxu0
    %v2873 = vadd.f32 0.0, %v2872
    %2874 = vmatmul.bf16.gmra.mxu0 %v2448
    %v2875 = vpop.f32.mrf.mxu0
    %v2876 = vadd.f32 0.0, %v2875
    %v2877 = vpop.f32.mrf.mxu0
    %v2878 = vadd.f32 0.0, %v2877
    %2879 = vmatmul.bf16.gmra.mxu0 %v2451
    %v2880 = vpop.f32.mrf.mxu0
    %v2881 = vadd.f32 0.0, %v2880
    %v2882 = vpop.f32.mrf.mxu0
    %v2883 = vadd.f32 0.0, %v2882
    %2884 = vdwg.mxu0
    %v2885 = vadd.f32 %v2170, %v2481
    %v2886 = vadd.f32 %v2171, %v2550
    %v2887 = vadd.f32 %v2172, %v2619
    %v2888 = vadd.f32 %v2173, %v2688
    %v2889 = vadd.f32 %v2174, %v2757
    %v2890 = vadd.f32 %v2175, %v2826
    %v2891 = vadd.f32 %v2176, %v2483
    %v2892 = vadd.f32 %v2177, %v2552
    %v2893 = vadd.f32 %v2178, %v2621
    %v2894 = vadd.f32 %v2179, %v2690
    %v2895 = vadd.f32 %v2180, %v2759
    %v2896 = vadd.f32 %v2181, %v2828
    %v2897 = vadd.f32 %v2182, %v2486
    %v2898 = vadd.f32 %v2183, %v2555
    %v2899 = vadd.f32 %v2184, %v2624
    %v2900 = vadd.f32 %v2185, %v2693
    %v2901 = vadd.f32 %v2186, %v2762
    %v2902 = vadd.f32 %v2187, %v2831
    %v2903 = vadd.f32 %v2188, %v2488
    %v2904 = vadd.f32 %v2189, %v2557
    %v2905 = vadd.f32 %v2190, %v2626
    %v2906 = vadd.f32 %v2191, %v2695
    %v2907 = vadd.f32 %v2192, %v2764
    %v2908 = vadd.f32 %v2193, %v2833
    %v2909 = vadd.f32 %v2194, %v2491
    %v2910 = vadd.f32 %v2195, %v2560
    %v2911 = vadd.f32 %v2196, %v2629
    %v2912 = vadd.f32 %v2197, %v2698
    %v2913 = vadd.f32 %v2198, %v2767
    %v2914 = vadd.f32 %v2199, %v2836
    %v2915 = vadd.f32 %v2200, %v2493
    %v2916 = vadd.f32 %v2201, %v2562
    %v2917 = vadd.f32 %v2202, %v2631
    %v2918 = vadd.f32 %v2203, %v2700
    %v2919 = vadd.f32 %v2204, %v2769
    %v2920 = vadd.f32 %v2205, %v2838
    %v2921 = vadd.f32 %v2206, %v2496
    %v2922 = vadd.f32 %v2207, %v2565
    %v2923 = vadd.f32 %v2208, %v2634
    %v2924 = vadd.f32 %v2209, %v2703
    %v2925 = vadd.f32 %v2210, %v2772
    %v2926 = vadd.f32 %v2211, %v2841
    %v2927 = vadd.f32 %v2212, %v2498
    %v2928 = vadd.f32 %v2213, %v2567
    %v2929 = vadd.f32 %v2214, %v2636
    %v2930 = vadd.f32 %v2215, %v2705
    %v2931 = vadd.f32 %v2216, %v2774
    %v2932 = vadd.f32 %v2217, %v2843
    %v2933 = vadd.f32 %v2218, %v2501
    %v2934 = vadd.f32 %v2219, %v2570
    %v2935 = vadd.f32 %v2220, %v2639
    %v2936 = vadd.f32 %v2221, %v2708
    %v2937 = vadd.f32 %v2222, %v2777
    %v2938 = vadd.f32 %v2223, %v2846
    %v2939 = vadd.f32 %v2224, %v2503
    %v2940 = vadd.f32 %v2225, %v2572
    %v2941 = vadd.f32 %v2226, %v2641
    %v2942 = vadd.f32 %v2227, %v2710
    %v2943 = vadd.f32 %v2228, %v2779
    %v2944 = vadd.f32 %v2229, %v2848
    %v2945 = vadd.f32 %v2230, %v2506
    %v2946 = vadd.f32 %v2231, %v2575
    %v2947 = vadd.f32 %v2232, %v2644
    %v2948 = vadd.f32 %v2233, %v2713
    %v2949 = vadd.f32 %v2234, %v2782
    %v2950 = vadd.f32 %v2235, %v2851
    %v2951 = vadd.f32 %v2236, %v2508
    %v2952 = vadd.f32 %v2237, %v2577
    %v2953 = vadd.f32 %v2238, %v2646
    %v2954 = vadd.f32 %v2239, %v2715
    %v2955 = vadd.f32 %v2240, %v2784
    %v2956 = vadd.f32 %v2241, %v2853
    %v2957 = vadd.f32 %v2242, %v2511
    %v2958 = vadd.f32 %v2243, %v2580
    %v2959 = vadd.f32 %v2244, %v2649
    %v2960 = vadd.f32 %v2245, %v2718
    %v2961 = vadd.f32 %v2246, %v2787
    %v2962 = vadd.f32 %v2247, %v2856
    %v2963 = vadd.f32 %v2248, %v2513
    %v2964 = vadd.f32 %v2249, %v2582
    %v2965 = vadd.f32 %v2250, %v2651
    %v2966 = vadd.f32 %v2251, %v2720
    %v2967 = vadd.f32 %v2252, %v2789
    %v2968 = vadd.f32 %v2253, %v2858
    %v2969 = vadd.f32 %v2254, %v2516
    %v2970 = vadd.f32 %v2255, %v2585
    %v2971 = vadd.f32 %v2256, %v2654
    %v2972 = vadd.f32 %v2257, %v2723
    %v2973 = vadd.f32 %v2258, %v2792
    %v2974 = vadd.f32 %v2259, %v2861
    %v2975 = vadd.f32 %v2260, %v2518
    %v2976 = vadd.f32 %v2261, %v2587
    %v2977 = vadd.f32 %v2262, %v2656
    %v2978 = vadd.f32 %v2263, %v2725
    %v2979 = vadd.f32 %v2264, %v2794
    %v2980 = vadd.f32 %v2265, %v2863
    %v2981 = vadd.f32 %v2266, %v2521
    %v2982 = vadd.f32 %v2267, %v2590
    %v2983 = vadd.f32 %v2268, %v2659
    %v2984 = vadd.f32 %v2269, %v2728
    %v2985 = vadd.f32 %v2270, %v2797
    %v2986 = vadd.f32 %v2271, %v2866
    %v2987 = vadd.f32 %v2272, %v2523
    %v2988 = vadd.f32 %v2273, %v2592
    %v2989 = vadd.f32 %v2274, %v2661
    %v2990 = vadd.f32 %v2275, %v2730
    %v2991 = vadd.f32 %v2276, %v2799
    %v2992 = vadd.f32 %v2277, %v2868
    %v2993 = vadd.f32 %v2278, %v2526
    %v2994 = vadd.f32 %v2279, %v2595
    %v2995 = vadd.f32 %v2280, %v2664
    %v2996 = vadd.f32 %v2281, %v2733
    %v2997 = vadd.f32 %v2282, %v2802
    %v2998 = vadd.f32 %v2283, %v2871
    %v2999 = vadd.f32 %v2284, %v2528
    %v3000 = vadd.f32 %v2285, %v2597
    %v3001 = vadd.f32 %v2286, %v2666
    %v3002 = vadd.f32 %v2287, %v2735
    %v3003 = vadd.f32 %v2288, %v2804
    %v3004 = vadd.f32 %v2289, %v2873
    %v3005 = vadd.f32 %v2290, %v2531
    %v3006 = vadd.f32 %v2291, %v2600
    %v3007 = vadd.f32 %v2292, %v2669
    %v3008 = vadd.f32 %v2293, %v2738
    %v3009 = vadd.f32 %v2294, %v2807
    %v3010 = vadd.f32 %v2295, %v2876
    %v3011 = vadd.f32 %v2296, %v2533
    %v3012 = vadd.f32 %v2297, %v2602
    %v3013 = vadd.f32 %v2298, %v2671
    %v3014 = vadd.f32 %v2299, %v2740
    %v3015 = vadd.f32 %v2300, %v2809
    %v3016 = vadd.f32 %v2301, %v2878
    %v3017 = vadd.f32 %v2302, %v2536
    %v3018 = vadd.f32 %v2303, %v2605
    %v3019 = vadd.f32 %v2304, %v2674
    %v3020 = vadd.f32 %v2305, %v2743
    %v3021 = vadd.f32 %v2306, %v2812
    %v3022 = vadd.f32 %v2307, %v2881
    %v3023 = vadd.f32 %v2308, %v2538
    %v3024 = vadd.f32 %v2309, %v2607
    %v3025 = vadd.f32 %v2310, %v2676
    %v3026 = vadd.f32 %v2311, %v2745
    %v3027 = vadd.f32 %v2312, %v2814
    %v3028 = vadd.f32 %v2313, %v2883
    %v3029 = vld [vmem:[#allocation2 + $0x20] sm:$0xff]
    %v3030 = vld [vmem:[#allocation2 + $0x28] sm:$0xff]
    %v3031 = vld [vmem:[#allocation2 + $0x30] sm:$0xff]
    %v3032 = vld [vmem:[#allocation2 + $0x38] sm:$0xff]
    %v3033 = vld [vmem:[#allocation2 + $0x40] sm:$0xff]
    %v3034 = vld [vmem:[#allocation2 + $0x48] sm:$0xff]
    %v3035 = vld [vmem:[#allocation2 + $0x50] sm:$0xff]
    %v3036 = vld [vmem:[#allocation2 + $0x58] sm:$0xff]
    %v3037 = vld [vmem:[#allocation2 + $0x60] sm:$0xff]
    %v3038 = vld [vmem:[#allocation2 + $0x68] sm:$0xff]
    %v3039 = vld [vmem:[#allocation2 + $0x70] sm:$0xff]
    %v3040 = vld [vmem:[#allocation2 + $0x78] sm:$0xff]
    %v3041 = vld [vmem:[#allocation2 + $0x80] sm:$0xff]
    %v3042 = vld [vmem:[#allocation2 + $0x88] sm:$0xff]
    %v3043 = vld [vmem:[#allocation2 + $0x90] sm:$0xff]
    %v3044 = vld [vmem:[#allocation2 + $0x98] sm:$0xff]
    %v3045 = vld [vmem:[#allocation2 + $0xa0] sm:$0xff]
    %v3046 = vld [vmem:[#allocation2 + $0xa8] sm:$0xff]
    %v3047 = vld [vmem:[#allocation2 + $0xb0] sm:$0xff]
    %v3048 = vld [vmem:[#allocation2 + $0xb8] sm:$0xff]
    %v3049 = vld [vmem:[#allocation2 + $0xc0] sm:$0xff]
    %v3050 = vld [vmem:[#allocation2 + $0xc8] sm:$0xff]
    %v3051 = vld [vmem:[#allocation2 + $0xd0] sm:$0xff]
    %v3052 = vld [vmem:[#allocation2 + $0xd8] sm:$0xff]
    %v3053 = vpack.c.bf16 %v3030, %v3029
    %v3054 = vpack.c.bf16 %v3032, %v3031
    %v3055 = vpack.c.bf16 %v3034, %v3033
    %v3056 = vpack.c.bf16 %v3036, %v3035
    %v3057 = vpack.c.bf16 %v3038, %v3037
    %v3058 = vpack.c.bf16 %v3040, %v3039
    %v3059 = vpack.c.bf16 %v3042, %v3041
    %v3060 = vpack.c.bf16 %v3044, %v3043
    %v3061 = vpack.c.bf16 %v3046, %v3045
    %v3062 = vpack.c.bf16 %v3048, %v3047
    %v3063 = vpack.c.bf16 %v3050, %v3049
    %v3064 = vpack.c.bf16 %v3052, %v3051
    %s3065 = scalar_lea.vmem %s1, 384
    %v3066 = vld [vmem:[%s3065] sm:$0xff]
    %v3067 = vld [vmem:[%s3065 + $0x8] sm:$0xff]
    %v3068 = vld [vmem:[%s3065 + $0x10] sm:$0xff]
    %v3069 = vld [vmem:[%s3065 + $0x18] sm:$0xff]
    %v3070 = vld [vmem:[%s3065 + $0x20] sm:$0xff]
    %v3071 = vld [vmem:[%s3065 + $0x28] sm:$0xff]
    %v3072 = vld [vmem:[%s3065 + $0x30] sm:$0xff]
    %v3073 = vld [vmem:[%s3065 + $0x38] sm:$0xff]
    %v3074 = vld [vmem:[%s3065 + $0x40] sm:$0xff]
    %v3075 = vld [vmem:[%s3065 + $0x48] sm:$0x33]
    %v3076 = vld [vmem:[%s3065 + $0x50] sm:$0x33]
    %v3077 = vld [vmem:[%s3065 + $0x58] sm:$0x33]
    %v3090 = vunpack.c.l.b16 %v3066
    %v3091 = vunpack.c.h.b16 %v3066
    %v3092 = vunpack.c.l.b16 %v3067
    %v3093 = vunpack.c.h.b16 %v3067
    %v3094 = vunpack.c.l.b16 %v3068
    %v3095 = vunpack.c.h.b16 %v3068
    %v3096 = vunpack.c.l.b16 %v3069
    %v3097 = vunpack.c.h.b16 %v3069
    %v3098 = vunpack.c.l.b16 %v3070
    %v3099 = vunpack.c.h.b16 %v3070
    %v3100 = vunpack.c.l.b16 %v3071
    %v3101 = vunpack.c.h.b16 %v3071
    %v3102 = vunpack.c.l.b16 %v3072
    %v3103 = vunpack.c.h.b16 %v3072
    %v3104 = vunpack.c.l.b16 %v3073
    %v3105 = vunpack.c.h.b16 %v3073
    %v3106 = vunpack.c.l.b16 %v3074
    %v3107 = vunpack.c.h.b16 %v3074
    %v3108 = vunpack.c.l.b16 %v3075
    %v3109 = vunpack.c.h.b16 %v3075
    %v3110 = vunpack.c.l.b16 %v3076
    %v3111 = vunpack.c.h.b16 %v3076
    %v3112 = vunpack.c.l.b16 %v3077
    %v3113 = vunpack.c.h.b16 %v3077
    %v3114 = vpack.c.b16 %v3096, %v3090
    %v3115 = vpack.c.b16 %v3097, %v3091
    %v3116 = vpack.c.b16 %v3098, %v3092
    %v3117 = vpack.c.b16 %v3099, %v3093
    %v3118 = vpack.c.b16 %v3100, %v3094
    %v3119 = vpack.c.b16 %v3101, %v3095
    %v3120 = vpack.c.b16 %v3108, %v3102
    %v3121 = vpack.c.b16 %v3109, %v3103
    %v3122 = vpack.c.b16 %v3110, %v3104
    %v3123 = vpack.c.b16 %v3111, %v3105
    %v3124 = vpack.c.b16 %v3112, %v3106
    %v3125 = vpack.c.b16 %v3113, %v3107
    %v3133 = vsel %vm66, %v3053, 0
    %v3136 = vsel %vm66, %v3054, 0
    %v3139 = vsel %vm66, %v3055, 0
    %v3142 = vsel %vm66, %v3056, 0
    %v3145 = vsel %vm66, %v3057, 0
    %v3148 = vsel %vm66, %v3058, 0
    %v3151 = vsel %vm66, %v3059, 0
    %v3154 = vsel %vm66, %v3060, 0
    %v3157 = vsel %vm66, %v3061, 0
    %v3160 = vsel %vm66, %v3062, 0
    %v3163 = vsel %vm66, %v3063, 0
    %v3166 = vsel %vm66, %v3064, 0
    %v3169 = vsel %vm307, %v3120, 0
    %v3172 = vsel %vm307, %v3121, 0
    %v3175 = vsel %vm307, %v3122, 0
    %v3178 = vsel %vm307, %v3123, 0
    %v3181 = vsel %vm307, %v3124, 0
    %v3184 = vsel %vm307, %v3125, 0
    %3186 = vmatpush.bf16.msra.mxu0 0
    %3187 = vmatpush.bf16.msra.mxu0 0
    %3188 = vmatpush.bf16.msra.mxu0 0
    %3189 = vmatpush.bf16.msra.mxu0 0
    %3190 = vmatpush.bf16.msra.mxu0 0
    %3191 = vmatpush.bf16.msra.mxu0 0
    %3192 = vmatpush.bf16.msra.mxu0 %v3169
    %3193 = vmatpush.bf16.msra.mxu0 %v3114
    %3194 = vmatmul.bf16.gmra.mxu0 %v3133
    %v3195 = vpop.f32.mrf.mxu0
    %v3196 = vadd.f32 0.0, %v3195
    %v3197 = vpop.f32.mrf.mxu0
    %v3198 = vadd.f32 0.0, %v3197
    %3199 = vmatmul.bf16.gmra.mxu0 %v3136
    %v3200 = vpop.f32.mrf.mxu0
    %v3201 = vadd.f32 0.0, %v3200
    %v3202 = vpop.f32.mrf.mxu0
    %v3203 = vadd.f32 0.0, %v3202
    %3204 = vmatmul.bf16.gmra.mxu0 %v3139
    %v3205 = vpop.f32.mrf.mxu0
    %v3206 = vadd.f32 0.0, %v3205
    %v3207 = vpop.f32.mrf.mxu0
    %v3208 = vadd.f32 0.0, %v3207
    %3209 = vmatmul.bf16.gmra.mxu0 %v3142
    %v3210 = vpop.f32.mrf.mxu0
    %v3211 = vadd.f32 0.0, %v3210
    %v3212 = vpop.f32.mrf.mxu0
    %v3213 = vadd.f32 0.0, %v3212
    %3214 = vmatmul.bf16.gmra.mxu0 %v3145
    %v3215 = vpop.f32.mrf.mxu0
    %v3216 = vadd.f32 0.0, %v3215
    %v3217 = vpop.f32.mrf.mxu0
    %v3218 = vadd.f32 0.0, %v3217
    %3219 = vmatmul.bf16.gmra.mxu0 %v3148
    %v3220 = vpop.f32.mrf.mxu0
    %v3221 = vadd.f32 0.0, %v3220
    %v3222 = vpop.f32.mrf.mxu0
    %v3223 = vadd.f32 0.0, %v3222
    %3224 = vmatmul.bf16.gmra.mxu0 %v3151
    %v3225 = vpop.f32.mrf.mxu0
    %v3226 = vadd.f32 0.0, %v3225
    %v3227 = vpop.f32.mrf.mxu0
    %v3228 = vadd.f32 0.0, %v3227
    %3229 = vmatmul.bf16.gmra.mxu0 %v3154
    %v3230 = vpop.f32.mrf.mxu0
    %v3231 = vadd.f32 0.0, %v3230
    %v3232 = vpop.f32.mrf.mxu0
    %v3233 = vadd.f32 0.0, %v3232
    %3234 = vmatmul.bf16.gmra.mxu0 %v3157
    %v3235 = vpop.f32.mrf.mxu0
    %v3236 = vadd.f32 0.0, %v3235
    %v3237 = vpop.f32.mrf.mxu0
    %v3238 = vadd.f32 0.0, %v3237
    %3239 = vmatmul.bf16.gmra.mxu0 %v3160
    %v3240 = vpop.f32.mrf.mxu0
    %v3241 = vadd.f32 0.0, %v3240
    %v3242 = vpop.f32.mrf.mxu0
    %v3243 = vadd.f32 0.0, %v3242
    %3244 = vmatmul.bf16.gmra.mxu0 %v3163
    %v3245 = vpop.f32.mrf.mxu0
    %v3246 = vadd.f32 0.0, %v3245
    %v3247 = vpop.f32.mrf.mxu0
    %v3248 = vadd.f32 0.0, %v3247
    %3249 = vmatmul.bf16.gmra.mxu0 %v3166
    %v3250 = vpop.f32.mrf.mxu0
    %v3251 = vadd.f32 0.0, %v3250
    %v3252 = vpop.f32.mrf.mxu0
    %v3253 = vadd.f32 0.0, %v3252
    %3254 = vdwg.mxu0
    %3255 = vmatpush.bf16.msra.mxu0 0
    %3256 = vmatpush.bf16.msra.mxu0 0
    %3257 = vmatpush.bf16.msra.mxu0 0
    %3258 = vmatpush.bf16.msra.mxu0 0
    %3259 = vmatpush.bf16.msra.mxu0 0
    %3260 = vmatpush.bf16.msra.mxu0 0
    %3261 = vmatpush.bf16.msra.mxu0 %v3172
    %3262 = vmatpush.bf16.msra.mxu0 %v3115
    %3263 = vmatmul.bf16.gmra.mxu0 %v3133
    %v3264 = vpop.f32.mrf.mxu0
    %v3265 = vadd.f32 0.0, %v3264
    %v3266 = vpop.f32.mrf.mxu0
    %v3267 = vadd.f32 0.0, %v3266
    %3268 = vmatmul.bf16.gmra.mxu0 %v3136
    %v3269 = vpop.f32.mrf.mxu0
    %v3270 = vadd.f32 0.0, %v3269
    %v3271 = vpop.f32.mrf.mxu0
    %v3272 = vadd.f32 0.0, %v3271
    %3273 = vmatmul.bf16.gmra.mxu0 %v3139
    %v3274 = vpop.f32.mrf.mxu0
    %v3275 = vadd.f32 0.0, %v3274
    %v3276 = vpop.f32.mrf.mxu0
    %v3277 = vadd.f32 0.0, %v3276
    %3278 = vmatmul.bf16.gmra.mxu0 %v3142
    %v3279 = vpop.f32.mrf.mxu0
    %v3280 = vadd.f32 0.0, %v3279
    %v3281 = vpop.f32.mrf.mxu0
    %v3282 = vadd.f32 0.0, %v3281
    %3283 = vmatmul.bf16.gmra.mxu0 %v3145
    %v3284 = vpop.f32.mrf.mxu0
    %v3285 = vadd.f32 0.0, %v3284
    %v3286 = vpop.f32.mrf.mxu0
    %v3287 = vadd.f32 0.0, %v3286
    %3288 = vmatmul.bf16.gmra.mxu0 %v3148
    %v3289 = vpop.f32.mrf.mxu0
    %v3290 = vadd.f32 0.0, %v3289
    %v3291 = vpop.f32.mrf.mxu0
    %v3292 = vadd.f32 0.0, %v3291
    %3293 = vmatmul.bf16.gmra.mxu0 %v3151
    %v3294 = vpop.f32.mrf.mxu0
    %v3295 = vadd.f32 0.0, %v3294
    %v3296 = vpop.f32.mrf.mxu0
    %v3297 = vadd.f32 0.0, %v3296
    %3298 = vmatmul.bf16.gmra.mxu0 %v3154
    %v3299 = vpop.f32.mrf.mxu0
    %v3300 = vadd.f32 0.0, %v3299
    %v3301 = vpop.f32.mrf.mxu0
    %v3302 = vadd.f32 0.0, %v3301
    %3303 = vmatmul.bf16.gmra.mxu0 %v3157
    %v3304 = vpop.f32.mrf.mxu0
    %v3305 = vadd.f32 0.0, %v3304
    %v3306 = vpop.f32.mrf.mxu0
    %v3307 = vadd.f32 0.0, %v3306
    %3308 = vmatmul.bf16.gmra.mxu0 %v3160
    %v3309 = vpop.f32.mrf.mxu0
    %v3310 = vadd.f32 0.0, %v3309
    %v3311 = vpop.f32.mrf.mxu0
    %v3312 = vadd.f32 0.0, %v3311
    %3313 = vmatmul.bf16.gmra.mxu0 %v3163
    %v3314 = vpop.f32.mrf.mxu0
    %v3315 = vadd.f32 0.0, %v3314
    %v3316 = vpop.f32.mrf.mxu0
    %v3317 = vadd.f32 0.0, %v3316
    %3318 = vmatmul.bf16.gmra.mxu0 %v3166
    %v3319 = vpop.f32.mrf.mxu0
    %v3320 = vadd.f32 0.0, %v3319
    %v3321 = vpop.f32.mrf.mxu0
    %v3322 = vadd.f32 0.0, %v3321
    %3323 = vdwg.mxu0
    %3324 = vmatpush.bf16.msra.mxu0 0
    %3325 = vmatpush.bf16.msra.mxu0 0
    %3326 = vmatpush.bf16.msra.mxu0 0
    %3327 = vmatpush.bf16.msra.mxu0 0
    %3328 = vmatpush.bf16.msra.mxu0 0
    %3329 = vmatpush.bf16.msra.mxu0 0
    %3330 = vmatpush.bf16.msra.mxu0 %v3175
    %3331 = vmatpush.bf16.msra.mxu0 %v3116
    %3332 = vmatmul.bf16.gmra.mxu0 %v3133
    %v3333 = vpop.f32.mrf.mxu0
    %v3334 = vadd.f32 0.0, %v3333
    %v3335 = vpop.f32.mrf.mxu0
    %v3336 = vadd.f32 0.0, %v3335
    %3337 = vmatmul.bf16.gmra.mxu0 %v3136
    %v3338 = vpop.f32.mrf.mxu0
    %v3339 = vadd.f32 0.0, %v3338
    %v3340 = vpop.f32.mrf.mxu0
    %v3341 = vadd.f32 0.0, %v3340
    %3342 = vmatmul.bf16.gmra.mxu0 %v3139
    %v3343 = vpop.f32.mrf.mxu0
    %v3344 = vadd.f32 0.0, %v3343
    %v3345 = vpop.f32.mrf.mxu0
    %v3346 = vadd.f32 0.0, %v3345
    %3347 = vmatmul.bf16.gmra.mxu0 %v3142
    %v3348 = vpop.f32.mrf.mxu0
    %v3349 = vadd.f32 0.0, %v3348
    %v3350 = vpop.f32.mrf.mxu0
    %v3351 = vadd.f32 0.0, %v3350
    %3352 = vmatmul.bf16.gmra.mxu0 %v3145
    %v3353 = vpop.f32.mrf.mxu0
    %v3354 = vadd.f32 0.0, %v3353
    %v3355 = vpop.f32.mrf.mxu0
    %v3356 = vadd.f32 0.0, %v3355
    %3357 = vmatmul.bf16.gmra.mxu0 %v3148
    %v3358 = vpop.f32.mrf.mxu0
    %v3359 = vadd.f32 0.0, %v3358
    %v3360 = vpop.f32.mrf.mxu0
    %v3361 = vadd.f32 0.0, %v3360
    %3362 = vmatmul.bf16.gmra.mxu0 %v3151
    %v3363 = vpop.f32.mrf.mxu0
    %v3364 = vadd.f32 0.0, %v3363
    %v3365 = vpop.f32.mrf.mxu0
    %v3366 = vadd.f32 0.0, %v3365
    %3367 = vmatmul.bf16.gmra.mxu0 %v3154
    %v3368 = vpop.f32.mrf.mxu0
    %v3369 = vadd.f32 0.0, %v3368
    %v3370 = vpop.f32.mrf.mxu0
    %v3371 = vadd.f32 0.0, %v3370
    %3372 = vmatmul.bf16.gmra.mxu0 %v3157
    %v3373 = vpop.f32.mrf.mxu0
    %v3374 = vadd.f32 0.0, %v3373
    %v3375 = vpop.f32.mrf.mxu0
    %v3376 = vadd.f32 0.0, %v3375
    %3377 = vmatmul.bf16.gmra.mxu0 %v3160
    %v3378 = vpop.f32.mrf.mxu0
    %v3379 = vadd.f32 0.0, %v3378
    %v3380 = vpop.f32.mrf.mxu0
    %v3381 = vadd.f32 0.0, %v3380
    %3382 = vmatmul.bf16.gmra.mxu0 %v3163
    %v3383 = vpop.f32.mrf.mxu0
    %v3384 = vadd.f32 0.0, %v3383
    %v3385 = vpop.f32.mrf.mxu0
    %v3386 = vadd.f32 0.0, %v3385
    %3387 = vmatmul.bf16.gmra.mxu0 %v3166
    %v3388 = vpop.f32.mrf.mxu0
    %v3389 = vadd.f32 0.0, %v3388
    %v3390 = vpop.f32.mrf.mxu0
    %v3391 = vadd.f32 0.0, %v3390
    %3392 = vdwg.mxu0
    %3393 = vmatpush.bf16.msra.mxu0 0
    %3394 = vmatpush.bf16.msra.mxu0 0
    %3395 = vmatpush.bf16.msra.mxu0 0
    %3396 = vmatpush.bf16.msra.mxu0 0
    %3397 = vmatpush.bf16.msra.mxu0 0
    %3398 = vmatpush.bf16.msra.mxu0 0
    %3399 = vmatpush.bf16.msra.mxu0 %v3178
    %3400 = vmatpush.bf16.msra.mxu0 %v3117
    %3401 = vmatmul.bf16.gmra.mxu0 %v3133
    %v3402 = vpop.f32.mrf.mxu0
    %v3403 = vadd.f32 0.0, %v3402
    %v3404 = vpop.f32.mrf.mxu0
    %v3405 = vadd.f32 0.0, %v3404
    %3406 = vmatmul.bf16.gmra.mxu0 %v3136
    %v3407 = vpop.f32.mrf.mxu0
    %v3408 = vadd.f32 0.0, %v3407
    %v3409 = vpop.f32.mrf.mxu0
    %v3410 = vadd.f32 0.0, %v3409
    %3411 = vmatmul.bf16.gmra.mxu0 %v3139
    %v3412 = vpop.f32.mrf.mxu0
    %v3413 = vadd.f32 0.0, %v3412
    %v3414 = vpop.f32.mrf.mxu0
    %v3415 = vadd.f32 0.0, %v3414
    %3416 = vmatmul.bf16.gmra.mxu0 %v3142
    %v3417 = vpop.f32.mrf.mxu0
    %v3418 = vadd.f32 0.0, %v3417
    %v3419 = vpop.f32.mrf.mxu0
    %v3420 = vadd.f32 0.0, %v3419
    %3421 = vmatmul.bf16.gmra.mxu0 %v3145
    %v3422 = vpop.f32.mrf.mxu0
    %v3423 = vadd.f32 0.0, %v3422
    %v3424 = vpop.f32.mrf.mxu0
    %v3425 = vadd.f32 0.0, %v3424
    %3426 = vmatmul.bf16.gmra.mxu0 %v3148
    %v3427 = vpop.f32.mrf.mxu0
    %v3428 = vadd.f32 0.0, %v3427
    %v3429 = vpop.f32.mrf.mxu0
    %v3430 = vadd.f32 0.0, %v3429
    %3431 = vmatmul.bf16.gmra.mxu0 %v3151
    %v3432 = vpop.f32.mrf.mxu0
    %v3433 = vadd.f32 0.0, %v3432
    %v3434 = vpop.f32.mrf.mxu0
    %v3435 = vadd.f32 0.0, %v3434
    %3436 = vmatmul.bf16.gmra.mxu0 %v3154
    %v3437 = vpop.f32.mrf.mxu0
    %v3438 = vadd.f32 0.0, %v3437
    %v3439 = vpop.f32.mrf.mxu0
    %v3440 = vadd.f32 0.0, %v3439
    %3441 = vmatmul.bf16.gmra.mxu0 %v3157
    %v3442 = vpop.f32.mrf.mxu0
    %v3443 = vadd.f32 0.0, %v3442
    %v3444 = vpop.f32.mrf.mxu0
    %v3445 = vadd.f32 0.0, %v3444
    %3446 = vmatmul.bf16.gmra.mxu0 %v3160
    %v3447 = vpop.f32.mrf.mxu0
    %v3448 = vadd.f32 0.0, %v3447
    %v3449 = vpop.f32.mrf.mxu0
    %v3450 = vadd.f32 0.0, %v3449
    %3451 = vmatmul.bf16.gmra.mxu0 %v3163
    %v3452 = vpop.f32.mrf.mxu0
    %v3453 = vadd.f32 0.0, %v3452
    %v3454 = vpop.f32.mrf.mxu0
    %v3455 = vadd.f32 0.0, %v3454
    %3456 = vmatmul.bf16.gmra.mxu0 %v3166
    %v3457 = vpop.f32.mrf.mxu0
    %v3458 = vadd.f32 0.0, %v3457
    %v3459 = vpop.f32.mrf.mxu0
    %v3460 = vadd.f32 0.0, %v3459
    %3461 = vdwg.mxu0
    %3462 = vmatpush.bf16.msra.mxu0 0
    %3463 = vmatpush.bf16.msra.mxu0 0
    %3464 = vmatpush.bf16.msra.mxu0 0
    %3465 = vmatpush.bf16.msra.mxu0 0
    %3466 = vmatpush.bf16.msra.mxu0 0
    %3467 = vmatpush.bf16.msra.mxu0 0
    %3468 = vmatpush.bf16.msra.mxu0 %v3181
    %3469 = vmatpush.bf16.msra.mxu0 %v3118
    %3470 = vmatmul.bf16.gmra.mxu0 %v3133
    %v3471 = vpop.f32.mrf.mxu0
    %v3472 = vadd.f32 0.0, %v3471
    %v3473 = vpop.f32.mrf.mxu0
    %v3474 = vadd.f32 0.0, %v3473
    %3475 = vmatmul.bf16.gmra.mxu0 %v3136
    %v3476 = vpop.f32.mrf.mxu0
    %v3477 = vadd.f32 0.0, %v3476
    %v3478 = vpop.f32.mrf.mxu0
    %v3479 = vadd.f32 0.0, %v3478
    %3480 = vmatmul.bf16.gmra.mxu0 %v3139
    %v3481 = vpop.f32.mrf.mxu0
    %v3482 = vadd.f32 0.0, %v3481
    %v3483 = vpop.f32.mrf.mxu0
    %v3484 = vadd.f32 0.0, %v3483
    %3485 = vmatmul.bf16.gmra.mxu0 %v3142
    %v3486 = vpop.f32.mrf.mxu0
    %v3487 = vadd.f32 0.0, %v3486
    %v3488 = vpop.f32.mrf.mxu0
    %v3489 = vadd.f32 0.0, %v3488
    %3490 = vmatmul.bf16.gmra.mxu0 %v3145
    %v3491 = vpop.f32.mrf.mxu0
    %v3492 = vadd.f32 0.0, %v3491
    %v3493 = vpop.f32.mrf.mxu0
    %v3494 = vadd.f32 0.0, %v3493
    %3495 = vmatmul.bf16.gmra.mxu0 %v3148
    %v3496 = vpop.f32.mrf.mxu0
    %v3497 = vadd.f32 0.0, %v3496
    %v3498 = vpop.f32.mrf.mxu0
    %v3499 = vadd.f32 0.0, %v3498
    %3500 = vmatmul.bf16.gmra.mxu0 %v3151
    %v3501 = vpop.f32.mrf.mxu0
    %v3502 = vadd.f32 0.0, %v3501
    %v3503 = vpop.f32.mrf.mxu0
    %v3504 = vadd.f32 0.0, %v3503
    %3505 = vmatmul.bf16.gmra.mxu0 %v3154
    %v3506 = vpop.f32.mrf.mxu0
    %v3507 = vadd.f32 0.0, %v3506
    %v3508 = vpop.f32.mrf.mxu0
    %v3509 = vadd.f32 0.0, %v3508
    %3510 = vmatmul.bf16.gmra.mxu0 %v3157
    %v3511 = vpop.f32.mrf.mxu0
    %v3512 = vadd.f32 0.0, %v3511
    %v3513 = vpop.f32.mrf.mxu0
    %v3514 = vadd.f32 0.0, %v3513
    %3515 = vmatmul.bf16.gmra.mxu0 %v3160
    %v3516 = vpop.f32.mrf.mxu0
    %v3517 = vadd.f32 0.0, %v3516
    %v3518 = vpop.f32.mrf.mxu0
    %v3519 = vadd.f32 0.0, %v3518
    %3520 = vmatmul.bf16.gmra.mxu0 %v3163
    %v3521 = vpop.f32.mrf.mxu0
    %v3522 = vadd.f32 0.0, %v3521
    %v3523 = vpop.f32.mrf.mxu0
    %v3524 = vadd.f32 0.0, %v3523
    %3525 = vmatmul.bf16.gmra.mxu0 %v3166
    %v3526 = vpop.f32.mrf.mxu0
    %v3527 = vadd.f32 0.0, %v3526
    %v3528 = vpop.f32.mrf.mxu0
    %v3529 = vadd.f32 0.0, %v3528
    %3530 = vdwg.mxu0
    %3531 = vmatpush.bf16.msra.mxu0 0
    %3532 = vmatpush.bf16.msra.mxu0 0
    %3533 = vmatpush.bf16.msra.mxu0 0
    %3534 = vmatpush.bf16.msra.mxu0 0
    %3535 = vmatpush.bf16.msra.mxu0 0
    %3536 = vmatpush.bf16.msra.mxu0 0
    %3537 = vmatpush.bf16.msra.mxu0 %v3184
    %3538 = vmatpush.bf16.msra.mxu0 %v3119
    %3539 = vmatmul.bf16.gmra.mxu0 %v3133
    %v3540 = vpop.f32.mrf.mxu0
    %v3541 = vadd.f32 0.0, %v3540
    %v3542 = vpop.f32.mrf.mxu0
    %v3543 = vadd.f32 0.0, %v3542
    %3544 = vmatmul.bf16.gmra.mxu0 %v3136
    %v3545 = vpop.f32.mrf.mxu0
    %v3546 = vadd.f32 0.0, %v3545
    %v3547 = vpop.f32.mrf.mxu0
    %v3548 = vadd.f32 0.0, %v3547
    %3549 = vmatmul.bf16.gmra.mxu0 %v3139
    %v3550 = vpop.f32.mrf.mxu0
    %v3551 = vadd.f32 0.0, %v3550
    %v3552 = vpop.f32.mrf.mxu0
    %v3553 = vadd.f32 0.0, %v3552
    %3554 = vmatmul.bf16.gmra.mxu0 %v3142
    %v3555 = vpop.f32.mrf.mxu0
    %v3556 = vadd.f32 0.0, %v3555
    %v3557 = vpop.f32.mrf.mxu0
    %v3558 = vadd.f32 0.0, %v3557
    %3559 = vmatmul.bf16.gmra.mxu0 %v3145
    %v3560 = vpop.f32.mrf.mxu0
    %v3561 = vadd.f32 0.0, %v3560
    %v3562 = vpop.f32.mrf.mxu0
    %v3563 = vadd.f32 0.0, %v3562
    %3564 = vmatmul.bf16.gmra.mxu0 %v3148
    %v3565 = vpop.f32.mrf.mxu0
    %v3566 = vadd.f32 0.0, %v3565
    %v3567 = vpop.f32.mrf.mxu0
    %v3568 = vadd.f32 0.0, %v3567
    %3569 = vmatmul.bf16.gmra.mxu0 %v3151
    %v3570 = vpop.f32.mrf.mxu0
    %v3571 = vadd.f32 0.0, %v3570
    %v3572 = vpop.f32.mrf.mxu0
    %v3573 = vadd.f32 0.0, %v3572
    %3574 = vmatmul.bf16.gmra.mxu0 %v3154
    %v3575 = vpop.f32.mrf.mxu0
    %v3576 = vadd.f32 0.0, %v3575
    %v3577 = vpop.f32.mrf.mxu0
    %v3578 = vadd.f32 0.0, %v3577
    %3579 = vmatmul.bf16.gmra.mxu0 %v3157
    %v3580 = vpop.f32.mrf.mxu0
    %v3581 = vadd.f32 0.0, %v3580
    %v3582 = vpop.f32.mrf.mxu0
    %v3583 = vadd.f32 0.0, %v3582
    %3584 = vmatmul.bf16.gmra.mxu0 %v3160
    %v3585 = vpop.f32.mrf.mxu0
    %v3586 = vadd.f32 0.0, %v3585
    %v3587 = vpop.f32.mrf.mxu0
    %v3588 = vadd.f32 0.0, %v3587
    %3589 = vmatmul.bf16.gmra.mxu0 %v3163
    %v3590 = vpop.f32.mrf.mxu0
    %v3591 = vadd.f32 0.0, %v3590
    %v3592 = vpop.f32.mrf.mxu0
    %v3593 = vadd.f32 0.0, %v3592
    %3594 = vmatmul.bf16.gmra.mxu0 %v3166
    %v3595 = vpop.f32.mrf.mxu0
    %v3596 = vadd.f32 0.0, %v3595
    %v3597 = vpop.f32.mrf.mxu0
    %v3598 = vadd.f32 0.0, %v3597
    %3599 = vdwg.mxu0
    %v3600 = vadd.f32 %v2885, %v3196
    %v3601 = vadd.f32 %v2886, %v3265
    %v3602 = vadd.f32 %v2887, %v3334
    %v3603 = vadd.f32 %v2888, %v3403
    %v3604 = vadd.f32 %v2889, %v3472
    %v3605 = vadd.f32 %v2890, %v3541
    %v3606 = vadd.f32 %v2891, %v3198
    %v3607 = vadd.f32 %v2892, %v3267
    %v3608 = vadd.f32 %v2893, %v3336
    %v3609 = vadd.f32 %v2894, %v3405
    %v3610 = vadd.f32 %v2895, %v3474
    %v3611 = vadd.f32 %v2896, %v3543
    %v3612 = vadd.f32 %v2897, %v3201
    %v3613 = vadd.f32 %v2898, %v3270
    %v3614 = vadd.f32 %v2899, %v3339
    %v3615 = vadd.f32 %v2900, %v3408
    %v3616 = vadd.f32 %v2901, %v3477
    %v3617 = vadd.f32 %v2902, %v3546
    %v3618 = vadd.f32 %v2903, %v3203
    %v3619 = vadd.f32 %v2904, %v3272
    %v3620 = vadd.f32 %v2905, %v3341
    %v3621 = vadd.f32 %v2906, %v3410
    %v3622 = vadd.f32 %v2907, %v3479
    %v3623 = vadd.f32 %v2908, %v3548
    %v3624 = vadd.f32 %v2909, %v3206
    %v3625 = vadd.f32 %v2910, %v3275
    %v3626 = vadd.f32 %v2911, %v3344
    %v3627 = vadd.f32 %v2912, %v3413
    %v3628 = vadd.f32 %v2913, %v3482
    %v3629 = vadd.f32 %v2914, %v3551
    %v3630 = vadd.f32 %v2915, %v3208
    %v3631 = vadd.f32 %v2916, %v3277
    %v3632 = vadd.f32 %v2917, %v3346
    %v3633 = vadd.f32 %v2918, %v3415
    %v3634 = vadd.f32 %v2919, %v3484
    %v3635 = vadd.f32 %v2920, %v3553
    %v3636 = vadd.f32 %v2921, %v3211
    %v3637 = vadd.f32 %v2922, %v3280
    %v3638 = vadd.f32 %v2923, %v3349
    %v3639 = vadd.f32 %v2924, %v3418
    %v3640 = vadd.f32 %v2925, %v3487
    %v3641 = vadd.f32 %v2926, %v3556
    %v3642 = vadd.f32 %v2927, %v3213
    %v3643 = vadd.f32 %v2928, %v3282
    %v3644 = vadd.f32 %v2929, %v3351
    %v3645 = vadd.f32 %v2930, %v3420
    %v3646 = vadd.f32 %v2931, %v3489
    %v3647 = vadd.f32 %v2932, %v3558
    %v3648 = vadd.f32 %v2933, %v3216
    %v3649 = vadd.f32 %v2934, %v3285
    %v3650 = vadd.f32 %v2935, %v3354
    %v3651 = vadd.f32 %v2936, %v3423
    %v3652 = vadd.f32 %v2937, %v3492
    %v3653 = vadd.f32 %v2938, %v3561
    %v3654 = vadd.f32 %v2939, %v3218
    %v3655 = vadd.f32 %v2940, %v3287
    %v3656 = vadd.f32 %v2941, %v3356
    %v3657 = vadd.f32 %v2942, %v3425
    %v3658 = vadd.f32 %v2943, %v3494
    %v3659 = vadd.f32 %v2944, %v3563
    %v3660 = vadd.f32 %v2945, %v3221
    %v3661 = vadd.f32 %v2946, %v3290
    %v3662 = vadd.f32 %v2947, %v3359
    %v3663 = vadd.f32 %v2948, %v3428
    %v3664 = vadd.f32 %v2949, %v3497
    %v3665 = vadd.f32 %v2950, %v3566
    %v3666 = vadd.f32 %v2951, %v3223
    %v3667 = vadd.f32 %v2952, %v3292
    %v3668 = vadd.f32 %v2953, %v3361
    %v3669 = vadd.f32 %v2954, %v3430
    %v3670 = vadd.f32 %v2955, %v3499
    %v3671 = vadd.f32 %v2956, %v3568
    %v3672 = vadd.f32 %v2957, %v3226
    %v3673 = vadd.f32 %v2958, %v3295
    %v3674 = vadd.f32 %v2959, %v3364
    %v3675 = vadd.f32 %v2960, %v3433
    %v3676 = vadd.f32 %v2961, %v3502
    %v3677 = vadd.f32 %v2962, %v3571
    %v3678 = vadd.f32 %v2963, %v3228
    %v3679 = vadd.f32 %v2964, %v3297
    %v3680 = vadd.f32 %v2965, %v3366
    %v3681 = vadd.f32 %v2966, %v3435
    %v3682 = vadd.f32 %v2967, %v3504
    %v3683 = vadd.f32 %v2968, %v3573
    %v3684 = vadd.f32 %v2969, %v3231
    %v3685 = vadd.f32 %v2970, %v3300
    %v3686 = vadd.f32 %v2971, %v3369
    %v3687 = vadd.f32 %v2972, %v3438
    %v3688 = vadd.f32 %v2973, %v3507
    %v3689 = vadd.f32 %v2974, %v3576
    %v3690 = vadd.f32 %v2975, %v3233
    %v3691 = vadd.f32 %v2976, %v3302
    %v3692 = vadd.f32 %v2977, %v3371
    %v3693 = vadd.f32 %v2978, %v3440
    %v3694 = vadd.f32 %v2979, %v3509
    %v3695 = vadd.f32 %v2980, %v3578
    %v3696 = vadd.f32 %v2981, %v3236
    %v3697 = vadd.f32 %v2982, %v3305
    %v3698 = vadd.f32 %v2983, %v3374
    %v3699 = vadd.f32 %v2984, %v3443
    %v3700 = vadd.f32 %v2985, %v3512
    %v3701 = vadd.f32 %v2986, %v3581
    %v3702 = vadd.f32 %v2987, %v3238
    %v3703 = vadd.f32 %v2988, %v3307
    %v3704 = vadd.f32 %v2989, %v3376
    %v3705 = vadd.f32 %v2990, %v3445
    %v3706 = vadd.f32 %v2991, %v3514
    %v3707 = vadd.f32 %v2992, %v3583
    %v3708 = vadd.f32 %v2993, %v3241
    %v3709 = vadd.f32 %v2994, %v3310
    %v3710 = vadd.f32 %v2995, %v3379
    %v3711 = vadd.f32 %v2996, %v3448
    %v3712 = vadd.f32 %v2997, %v3517
    %v3713 = vadd.f32 %v2998, %v3586
    %v3714 = vadd.f32 %v2999, %v3243
    %v3715 = vadd.f32 %v3000, %v3312
    %v3716 = vadd.f32 %v3001, %v3381
    %v3717 = vadd.f32 %v3002, %v3450
    %v3718 = vadd.f32 %v3003, %v3519
    %v3719 = vadd.f32 %v3004, %v3588
    %v3720 = vadd.f32 %v3005, %v3246
    %v3721 = vadd.f32 %v3006, %v3315
    %v3722 = vadd.f32 %v3007, %v3384
    %v3723 = vadd.f32 %v3008, %v3453
    %v3724 = vadd.f32 %v3009, %v3522
    %v3725 = vadd.f32 %v3010, %v3591
    %v3726 = vadd.f32 %v3011, %v3248
    %v3727 = vadd.f32 %v3012, %v3317
    %v3728 = vadd.f32 %v3013, %v3386
    %v3729 = vadd.f32 %v3014, %v3455
    %v3730 = vadd.f32 %v3015, %v3524
    %v3731 = vadd.f32 %v3016, %v3593
    %v3732 = vadd.f32 %v3017, %v3251
    %v3733 = vadd.f32 %v3018, %v3320
    %v3734 = vadd.f32 %v3019, %v3389
    %v3735 = vadd.f32 %v3020, %v3458
    %v3736 = vadd.f32 %v3021, %v3527
    %v3737 = vadd.f32 %v3022, %v3596
    %v3738 = vadd.f32 %v3023, %v3253
    %v3739 = vadd.f32 %v3024, %v3322
    %v3740 = vadd.f32 %v3025, %v3391
    %v3741 = vadd.f32 %v3026, %v3460
    %v3742 = vadd.f32 %v3027, %v3529
    %v3743 = vadd.f32 %v3028, %v3598
    %v3744 = vmax.f32 %v3600, 0.0
    %v3745 = vmax.f32 %v3601, 0.0
    %v3746 = vmax.f32 %v3602, 0.0
    %v3747 = vmax.f32 %v3603, 0.0
    %v3748 = vmax.f32 %v3604, 0.0
    %v3749 = vmax.f32 %v3605, 0.0
    %v3750 = vmax.f32 %v3606, 0.0
    %v3751 = vmax.f32 %v3607, 0.0
    %v3752 = vmax.f32 %v3608, 0.0
    %v3753 = vmax.f32 %v3609, 0.0
    %v3754 = vmax.f32 %v3610, 0.0
    %v3755 = vmax.f32 %v3611, 0.0
    %v3756 = vmax.f32 %v3612, 0.0
    %v3757 = vmax.f32 %v3613, 0.0
    %v3758 = vmax.f32 %v3614, 0.0
    %v3759 = vmax.f32 %v3615, 0.0
    %v3760 = vmax.f32 %v3616, 0.0
    %v3761 = vmax.f32 %v3617, 0.0
    %v3762 = vmax.f32 %v3618, 0.0
    %v3763 = vmax.f32 %v3619, 0.0
    %v3764 = vmax.f32 %v3620, 0.0
    %v3765 = vmax.f32 %v3621, 0.0
    %v3766 = vmax.f32 %v3622, 0.0
    %v3767 = vmax.f32 %v3623, 0.0
    %v3768 = vmax.f32 %v3624, 0.0
    %v3769 = vmax.f32 %v3625, 0.0
    %v3770 = vmax.f32 %v3626, 0.0
    %v3771 = vmax.f32 %v3627, 0.0
    %v3772 = vmax.f32 %v3628, 0.0
    %v3773 = vmax.f32 %v3629, 0.0
    %v3774 = vmax.f32 %v3630, 0.0
    %v3775 = vmax.f32 %v3631, 0.0
    %v3776 = vmax.f32 %v3632, 0.0
    %v3777 = vmax.f32 %v3633, 0.0
    %v3778 = vmax.f32 %v3634, 0.0
    %v3779 = vmax.f32 %v3635, 0.0
    %v3780 = vmax.f32 %v3636, 0.0
    %v3781 = vmax.f32 %v3637, 0.0
    %v3782 = vmax.f32 %v3638, 0.0
    %v3783 = vmax.f32 %v3639, 0.0
    %v3784 = vmax.f32 %v3640, 0.0
    %v3785 = vmax.f32 %v3641, 0.0
    %v3786 = vmax.f32 %v3642, 0.0
    %v3787 = vmax.f32 %v3643, 0.0
    %v3788 = vmax.f32 %v3644, 0.0
    %v3789 = vmax.f32 %v3645, 0.0
    %v3790 = vmax.f32 %v3646, 0.0
    %v3791 = vmax.f32 %v3647, 0.0
    %v3792 = vmax.f32 %v3648, 0.0
    %v3793 = vmax.f32 %v3649, 0.0
    %v3794 = vmax.f32 %v3650, 0.0
    %v3795 = vmax.f32 %v3651, 0.0
    %v3796 = vmax.f32 %v3652, 0.0
    %v3797 = vmax.f32 %v3653, 0.0
    %v3798 = vmax.f32 %v3654, 0.0
    %v3799 = vmax.f32 %v3655, 0.0
    %v3800 = vmax.f32 %v3656, 0.0
    %v3801 = vmax.f32 %v3657, 0.0
    %v3802 = vmax.f32 %v3658, 0.0
    %v3803 = vmax.f32 %v3659, 0.0
    %v3804 = vmax.f32 %v3660, 0.0
    %v3805 = vmax.f32 %v3661, 0.0
    %v3806 = vmax.f32 %v3662, 0.0
    %v3807 = vmax.f32 %v3663, 0.0
    %v3808 = vmax.f32 %v3664, 0.0
    %v3809 = vmax.f32 %v3665, 0.0
    %v3810 = vmax.f32 %v3666, 0.0
    %v3811 = vmax.f32 %v3667, 0.0
    %v3812 = vmax.f32 %v3668, 0.0
    %v3813 = vmax.f32 %v3669, 0.0
    %v3814 = vmax.f32 %v3670, 0.0
    %v3815 = vmax.f32 %v3671, 0.0
    %v3816 = vmax.f32 %v3672, 0.0
    %v3817 = vmax.f32 %v3673, 0.0
    %v3818 = vmax.f32 %v3674, 0.0
    %v3819 = vmax.f32 %v3675, 0.0
    %v3820 = vmax.f32 %v3676, 0.0
    %v3821 = vmax.f32 %v3677, 0.0
    %v3822 = vmax.f32 %v3678, 0.0
    %v3823 = vmax.f32 %v3679, 0.0
    %v3824 = vmax.f32 %v3680, 0.0
    %v3825 = vmax.f32 %v3681, 0.0
    %v3826 = vmax.f32 %v3682, 0.0
    %v3827 = vmax.f32 %v3683, 0.0
    %v3828 = vmax.f32 %v3684, 0.0
    %v3829 = vmax.f32 %v3685, 0.0
    %v3830 = vmax.f32 %v3686, 0.0
    %v3831 = vmax.f32 %v3687, 0.0
    %v3832 = vmax.f32 %v3688, 0.0
    %v3833 = vmax.f32 %v3689, 0.0
    %v3834 = vmax.f32 %v3690, 0.0
    %v3835 = vmax.f32 %v3691, 0.0
    %v3836 = vmax.f32 %v3692, 0.0
    %v3837 = vmax.f32 %v3693, 0.0
    %v3838 = vmax.f32 %v3694, 0.0
    %v3839 = vmax.f32 %v3695, 0.0
    %v3840 = vmax.f32 %v3696, 0.0
    %v3841 = vmax.f32 %v3697, 0.0
    %v3842 = vmax.f32 %v3698, 0.0
    %v3843 = vmax.f32 %v3699, 0.0
    %v3844 = vmax.f32 %v3700, 0.0
    %v3845 = vmax.f32 %v3701, 0.0
    %v3846 = vmax.f32 %v3702, 0.0
    %v3847 = vmax.f32 %v3703, 0.0
    %v3848 = vmax.f32 %v3704, 0.0
    %v3849 = vmax.f32 %v3705, 0.0
    %v3850 = vmax.f32 %v3706, 0.0
    %v3851 = vmax.f32 %v3707, 0.0
    %v3852 = vmax.f32 %v3708, 0.0
    %v3853 = vmax.f32 %v3709, 0.0
    %v3854 = vmax.f32 %v3710, 0.0
    %v3855 = vmax.f32 %v3711, 0.0
    %v3856 = vmax.f32 %v3712, 0.0
    %v3857 = vmax.f32 %v3713, 0.0
    %v3858 = vmax.f32 %v3714, 0.0
    %v3859 = vmax.f32 %v3715, 0.0
    %v3860 = vmax.f32 %v3716, 0.0
    %v3861 = vmax.f32 %v3717, 0.0
    %v3862 = vmax.f32 %v3718, 0.0
    %v3863 = vmax.f32 %v3719, 0.0
    %v3864 = vmax.f32 %v3720, 0.0
    %v3865 = vmax.f32 %v3721, 0.0
    %v3866 = vmax.f32 %v3722, 0.0
    %v3867 = vmax.f32 %v3723, 0.0
    %v3868 = vmax.f32 %v3724, 0.0
    %v3869 = vmax.f32 %v3725, 0.0
    %v3870 = vmax.f32 %v3726, 0.0
    %v3871 = vmax.f32 %v3727, 0.0
    %v3872 = vmax.f32 %v3728, 0.0
    %v3873 = vmax.f32 %v3729, 0.0
    %v3874 = vmax.f32 %v3730, 0.0
    %v3875 = vmax.f32 %v3731, 0.0
    %v3876 = vmax.f32 %v3732, 0.0
    %v3877 = vmax.f32 %v3733, 0.0
    %v3878 = vmax.f32 %v3734, 0.0
    %v3879 = vmax.f32 %v3735, 0.0
    %v3880 = vmax.f32 %v3736, 0.0
    %v3881 = vmax.f32 %v3737, 0.0
    %v3882 = vmax.f32 %v3738, 0.0
    %v3883 = vmax.f32 %v3739, 0.0
    %v3884 = vmax.f32 %v3740, 0.0
    %v3885 = vmax.f32 %v3741, 0.0
    %v3886 = vmax.f32 %v3742, 0.0
    %v3887 = vmax.f32 %v3743, 0.0
    %v3888 = vmax.f32 %v3744, %v3750
    %v3889 = vmax.f32 %v3745, %v3751
    %v3890 = vmax.f32 %v3746, %v3752
    %v3891 = vmax.f32 %v3747, %v3753
    %v3892 = vmax.f32 %v3748, %v3754
    %v3893 = vmax.f32 %v3749, %v3755
    %v3894 = vmax.f32 %v3888, %v3891
    %v3895 = vmax.f32 %v3889, %v3892
    %v3896 = vmax.f32 %v3890, %v3893
    %3897 = vst [vmem:[#allocation3] sm:$0xff] %v3894
    %3898 = vst [vmem:[#allocation3 + $0x8] sm:$0xff] %v3895
    %3899 = vst [vmem:[#allocation3 + $0x10] sm:$0xff] %v3896
    %v3900 = vmax.f32 %v3756, %v3762
    %v3901 = vmax.f32 %v3757, %v3763
    %v3902 = vmax.f32 %v3758, %v3764
    %v3903 = vmax.f32 %v3759, %v3765
    %v3904 = vmax.f32 %v3760, %v3766
    %v3905 = vmax.f32 %v3761, %v3767
    %v3906 = vmax.f32 %v3900, %v3903
    %v3907 = vmax.f32 %v3901, %v3904
    %v3908 = vmax.f32 %v3902, %v3905
    %3909 = vst [vmem:[#allocation3 + $0x18] sm:$0xff] %v3906
    %3910 = vst [vmem:[#allocation3 + $0x20] sm:$0xff] %v3907
    %3911 = vst [vmem:[#allocation3 + $0x28] sm:$0xff] %v3908
    %v3912 = vmax.f32 %v3768, %v3774
    %v3913 = vmax.f32 %v3769, %v3775
    %v3914 = vmax.f32 %v3770, %v3776
    %v3915 = vmax.f32 %v3771, %v3777
    %v3916 = vmax.f32 %v3772, %v3778
    %v3917 = vmax.f32 %v3773, %v3779
    %v3918 = vmax.f32 %v3912, %v3915
    %v3919 = vmax.f32 %v3913, %v3916
    %v3920 = vmax.f32 %v3914, %v3917
    %3921 = vst [vmem:[#allocation3 + $0x30] sm:$0xff] %v3918
    %3922 = vst [vmem:[#allocation3 + $0x38] sm:$0xff] %v3919
    %3923 = vst [vmem:[#allocation3 + $0x40] sm:$0xff] %v3920
    %v3924 = vmax.f32 %v3780, %v3786
    %v3925 = vmax.f32 %v3781, %v3787
    %v3926 = vmax.f32 %v3782, %v3788
    %v3927 = vmax.f32 %v3783, %v3789
    %v3928 = vmax.f32 %v3784, %v3790
    %v3929 = vmax.f32 %v3785, %v3791
    %v3930 = vmax.f32 %v3924, %v3927
    %v3931 = vmax.f32 %v3925, %v3928
    %v3932 = vmax.f32 %v3926, %v3929
    %3933 = vst [vmem:[#allocation3 + $0x48] sm:$0xff] %v3930
    %3934 = vst [vmem:[#allocation3 + $0x50] sm:$0xff] %v3931
    %3935 = vst [vmem:[#allocation3 + $0x58] sm:$0xff] %v3932
    %v3936 = vmax.f32 %v3792, %v3798
    %v3937 = vmax.f32 %v3793, %v3799
    %v3938 = vmax.f32 %v3794, %v3800
    %v3939 = vmax.f32 %v3795, %v3801
    %v3940 = vmax.f32 %v3796, %v3802
    %v3941 = vmax.f32 %v3797, %v3803
    %v3942 = vmax.f32 %v3936, %v3939
    %v3943 = vmax.f32 %v3937, %v3940
    %v3944 = vmax.f32 %v3938, %v3941
    %3945 = vst [vmem:[#allocation3 + $0x60] sm:$0xff] %v3942
    %3946 = vst [vmem:[#allocation3 + $0x68] sm:$0xff] %v3943
    %3947 = vst [vmem:[#allocation3 + $0x70] sm:$0xff] %v3944
    %v3948 = vmax.f32 %v3804, %v3810
    %v3949 = vmax.f32 %v3805, %v3811
    %v3950 = vmax.f32 %v3806, %v3812
    %v3951 = vmax.f32 %v3807, %v3813
    %v3952 = vmax.f32 %v3808, %v3814
    %v3953 = vmax.f32 %v3809, %v3815
    %v3954 = vmax.f32 %v3948, %v3951
    %v3955 = vmax.f32 %v3949, %v3952
    %v3956 = vmax.f32 %v3950, %v3953
    %3957 = vst [vmem:[#allocation3 + $0x78] sm:$0xff] %v3954
    %3958 = vst [vmem:[#allocation3 + $0x80] sm:$0xff] %v3955
    %3959 = vst [vmem:[#allocation3 + $0x88] sm:$0xff] %v3956
    %v3960 = vmax.f32 %v3816, %v3822
    %v3961 = vmax.f32 %v3817, %v3823
    %v3962 = vmax.f32 %v3818, %v3824
    %v3963 = vmax.f32 %v3819, %v3825
    %v3964 = vmax.f32 %v3820, %v3826
    %v3965 = vmax.f32 %v3821, %v3827
    %v3966 = vmax.f32 %v3960, %v3963
    %v3967 = vmax.f32 %v3961, %v3964
    %v3968 = vmax.f32 %v3962, %v3965
    %3969 = vst [vmem:[#allocation3 + $0x90] sm:$0xff] %v3966
    %3970 = vst [vmem:[#allocation3 + $0x98] sm:$0xff] %v3967
    %3971 = vst [vmem:[#allocation3 + $0xa0] sm:$0xff] %v3968
    %v3972 = vmax.f32 %v3828, %v3834
    %v3973 = vmax.f32 %v3829, %v3835
    %v3974 = vmax.f32 %v3830, %v3836
    %v3975 = vmax.f32 %v3831, %v3837
    %v3976 = vmax.f32 %v3832, %v3838
    %v3977 = vmax.f32 %v3833, %v3839
    %v3978 = vmax.f32 %v3972, %v3975
    %v3979 = vmax.f32 %v3973, %v3976
    %v3980 = vmax.f32 %v3974, %v3977
    %3981 = vst [vmem:[#allocation3 + $0xa8] sm:$0xff] %v3978
    %3982 = vst [vmem:[#allocation3 + $0xb0] sm:$0xff] %v3979
    %3983 = vst [vmem:[#allocation3 + $0xb8] sm:$0xff] %v3980
    %v3984 = vmax.f32 %v3840, %v3846
    %v3985 = vmax.f32 %v3841, %v3847
    %v3986 = vmax.f32 %v3842, %v3848
    %v3987 = vmax.f32 %v3843, %v3849
    %v3988 = vmax.f32 %v3844, %v3850
    %v3989 = vmax.f32 %v3845, %v3851
    %v3990 = vmax.f32 %v3984, %v3987
    %v3991 = vmax.f32 %v3985, %v3988
    %v3992 = vmax.f32 %v3986, %v3989
    %3993 = vst [vmem:[#allocation3 + $0xc0] sm:$0xff] %v3990
    %3994 = vst [vmem:[#allocation3 + $0xc8] sm:$0xff] %v3991
    %3995 = vst [vmem:[#allocation3 + $0xd0] sm:$0xff] %v3992
    %v3996 = vmax.f32 %v3852, %v3858
    %v3997 = vmax.f32 %v3853, %v3859
    %v3998 = vmax.f32 %v3854, %v3860
    %v3999 = vmax.f32 %v3855, %v3861
    %v4000 = vmax.f32 %v3856, %v3862
    %v4001 = vmax.f32 %v3857, %v3863
    %v4002 = vmax.f32 %v3996, %v3999
    %v4003 = vmax.f32 %v3997, %v4000
    %v4004 = vmax.f32 %v3998, %v4001
    %4005 = vst [vmem:[#allocation3 + $0xd8] sm:$0xff] %v4002
    %4006 = vst [vmem:[#allocation3 + $0xe0] sm:$0xff] %v4003
    %4007 = vst [vmem:[#allocation3 + $0xe8] sm:$0xff] %v4004
    %v4008 = vmax.f32 %v3864, %v3870
    %v4009 = vmax.f32 %v3865, %v3871
    %v4010 = vmax.f32 %v3866, %v3872
    %v4011 = vmax.f32 %v3867, %v3873
    %v4012 = vmax.f32 %v3868, %v3874
    %v4013 = vmax.f32 %v3869, %v3875
    %v4014 = vmax.f32 %v4008, %v4011
    %v4015 = vmax.f32 %v4009, %v4012
    %v4016 = vmax.f32 %v4010, %v4013
    %4017 = vst [vmem:[#allocation3 + $0xf0] sm:$0xff] %v4014
    %4018 = vst [vmem:[#allocation3 + $0xf8] sm:$0xff] %v4015
    %4019 = vst [vmem:[#allocation3 + $0x100] sm:$0xff] %v4016
    %v4020 = vmax.f32 %v3876, %v3882
    %v4021 = vmax.f32 %v3877, %v3883
    %v4022 = vmax.f32 %v3878, %v3884
    %v4023 = vmax.f32 %v3879, %v3885
    %v4024 = vmax.f32 %v3880, %v3886
    %v4025 = vmax.f32 %v3881, %v3887
    %v4026 = vmax.f32 %v4020, %v4023
    %v4027 = vmax.f32 %v4021, %v4024
    %v4028 = vmax.f32 %v4022, %v4025
    %4029 = vst [vmem:[#allocation3 + $0x108] sm:$0xff] %v4026
    %4030 = vst [vmem:[#allocation3 + $0x110] sm:$0xff] %v4027
    %4031 = vst [vmem:[#allocation3 + $0x118] sm:$0xff] %v4028
    %v4032 = vld [vmem:[%s4] sm:$0x3]
    %v4034 = vperm.slane %v4032, 0
    %v4035 = vperm.slane %v4032, 1
    %v4038 = vadd.f32 %v4034, 0.0
    %v4039 = vadd.f32 %v4035, 0.0
    %v4040 = vld [vmem:[#allocation3] sm:$0xff]
    %v4041 = vld [vmem:[#allocation3 + $0x8] sm:$0xff]
    %v4042 = vld [vmem:[#allocation3 + $0x10] sm:$0xff]
    %v4043 = vld [vmem:[#allocation3 + $0x18] sm:$0xff]
    %v4044 = vld [vmem:[#allocation3 + $0x20] sm:$0xff]
    %v4045 = vld [vmem:[#allocation3 + $0x28] sm:$0xff]
    %v4046 = vld [vmem:[#allocation3 + $0x30] sm:$0xff]
    %v4047 = vld [vmem:[#allocation3 + $0x38] sm:$0xff]
    %v4048 = vld [vmem:[#allocation3 + $0x40] sm:$0xff]
    %v4049 = vld [vmem:[#allocation3 + $0x48] sm:$0xff]
    %v4050 = vld [vmem:[#allocation3 + $0x50] sm:$0xff]
    %v4051 = vld [vmem:[#allocation3 + $0x58] sm:$0xff]
    %v4052 = vld [vmem:[#allocation3 + $0x60] sm:$0xff]
    %v4053 = vld [vmem:[#allocation3 + $0x68] sm:$0xff]
    %v4054 = vld [vmem:[#allocation3 + $0x70] sm:$0xff]
    %v4055 = vld [vmem:[#allocation3 + $0x78] sm:$0xff]
    %v4056 = vld [vmem:[#allocation3 + $0x80] sm:$0xff]
    %v4057 = vld [vmem:[#allocation3 + $0x88] sm:$0xff]
    %v4058 = vld [vmem:[#allocation3 + $0x90] sm:$0xff]
    %v4059 = vld [vmem:[#allocation3 + $0x98] sm:$0xff]
    %v4060 = vld [vmem:[#allocation3 + $0xa0] sm:$0xff]
    %v4061 = vld [vmem:[#allocation3 + $0xa8] sm:$0xff]
    %v4062 = vld [vmem:[#allocation3 + $0xb0] sm:$0xff]
    %v4063 = vld [vmem:[#allocation3 + $0xb8] sm:$0xff]
    %v4064 = vpack.c.bf16 %v4043, %v4040
    %v4065 = vpack.c.bf16 %v4044, %v4041
    %v4066 = vpack.c.bf16 %v4045, %v4042
    %v4067 = vpack.c.bf16 %v4049, %v4046
    %v4068 = vpack.c.bf16 %v4050, %v4047
    %v4069 = vpack.c.bf16 %v4051, %v4048
    %v4070 = vpack.c.bf16 %v4055, %v4052
    %v4071 = vpack.c.bf16 %v4056, %v4053
    %v4072 = vpack.c.bf16 %v4057, %v4054
    %v4073 = vpack.c.bf16 %v4061, %v4058
    %v4074 = vpack.c.bf16 %v4062, %v4059
    %v4075 = vpack.c.bf16 %v4063, %v4060
    %v4076 = vld [vmem:[#allocation4] sm:$0xff]
    %v4077 = vld [vmem:[#allocation4 + $0x8] sm:$0xff]
    %v4078 = vld [vmem:[#allocation4 + $0x10] sm:$0xff]
    %v4079 = vld [vmem:[#allocation4 + $0x18] sm:$0xff]
    %v4080 = vld [vmem:[#allocation4 + $0x20] sm:$0xff]
    %v4081 = vld [vmem:[#allocation4 + $0x28] sm:$0xff]
    %v4082 = vld [vmem:[#allocation4 + $0x30] sm:$0xff]
    %v4083 = vld [vmem:[#allocation4 + $0x38] sm:$0xff]
    %v4084 = vld [vmem:[#allocation4 + $0x40] sm:$0xff]
    %v4085 = vld [vmem:[#allocation4 + $0x48] sm:$0xff]
    %v4086 = vld [vmem:[#allocation4 + $0x50] sm:$0xff]
    %v4087 = vld [vmem:[#allocation4 + $0x58] sm:$0xff]
    %v4088 = vld [vmem:[#allocation4 + $0x60] sm:$0xff]
    %v4089 = vld [vmem:[#allocation4 + $0x68] sm:$0xff]
    %v4090 = vld [vmem:[#allocation4 + $0x70] sm:$0xff]
    %v4091 = vld [vmem:[#allocation4 + $0x78] sm:$0xff]
    %v4092 = vld [vmem:[#allocation4 + $0x80] sm:$0xff]
    %v4093 = vld [vmem:[#allocation4 + $0x88] sm:$0xff]
    %v4094 = vld [vmem:[#allocation4 + $0x90] sm:$0xff]
    %v4095 = vld [vmem:[#allocation4 + $0x98] sm:$0xff]
    %v4096 = vld [vmem:[#allocation4 + $0xa0] sm:$0xff]
    %v4097 = vld [vmem:[#allocation4 + $0xa8] sm:$0xff]
    %v4098 = vld [vmem:[#allocation4 + $0xb0] sm:$0xff]
    %v4099 = vld [vmem:[#allocation4 + $0xb8] sm:$0xff]
    %v4100 = vld [vmem:[#allocation4 + $0xc0] sm:$0xff]
    %v4101 = vld [vmem:[#allocation4 + $0xc8] sm:$0xff]
    %v4102 = vld [vmem:[#allocation4 + $0xd0] sm:$0xff]
    %v4103 = vld [vmem:[#allocation4 + $0xd8] sm:$0xff]
    %v4104 = vld [vmem:[#allocation4 + $0xe0] sm:$0xff]
    %v4105 = vld [vmem:[#allocation4 + $0xe8] sm:$0xff]
    %v4106 = vld [vmem:[#allocation4 + $0xf0] sm:$0xff]
    %v4107 = vld [vmem:[#allocation4 + $0xf8] sm:$0xff]
    %v4108 = vld [vmem:[#allocation4 + $0x100] sm:$0xff]
    %v4109 = vld [vmem:[#allocation4 + $0x108] sm:$0xff]
    %v4110 = vld [vmem:[#allocation4 + $0x110] sm:$0xff]
    %v4111 = vld [vmem:[#allocation4 + $0x118] sm:$0xff]
    %v4112 = vld [vmem:[#allocation4 + $0x120] sm:$0xff]
    %v4113 = vld [vmem:[#allocation4 + $0x128] sm:$0xff]
    %v4114 = vld [vmem:[#allocation4 + $0x130] sm:$0xff]
    %v4115 = vld [vmem:[#allocation4 + $0x138] sm:$0xff]
    %v4116 = vld [vmem:[#allocation4 + $0x140] sm:$0xff]
    %v4117 = vld [vmem:[#allocation4 + $0x148] sm:$0xff]
    %v4118 = vld [vmem:[#allocation4 + $0x150] sm:$0xff]
    %v4119 = vld [vmem:[#allocation4 + $0x158] sm:$0xff]
    %v4120 = vld [vmem:[#allocation4 + $0x160] sm:$0xff]
    %v4121 = vld [vmem:[#allocation4 + $0x168] sm:$0xff]
    %v4122 = vld [vmem:[#allocation4 + $0x170] sm:$0xff]
    %v4123 = vld [vmem:[#allocation4 + $0x178] sm:$0xff]
    %v4172 = vunpack.c.l.b16 %v4076
    %v4173 = vunpack.c.h.b16 %v4076
    %v4174 = vunpack.c.l.b16 %v4077
    %v4175 = vunpack.c.h.b16 %v4077
    %v4176 = vunpack.c.l.b16 %v4078
    %v4177 = vunpack.c.h.b16 %v4078
    %v4178 = vunpack.c.l.b16 %v4079
    %v4179 = vunpack.c.h.b16 %v4079
    %v4180 = vunpack.c.l.b16 %v4080
    %v4181 = vunpack.c.h.b16 %v4080
    %v4182 = vunpack.c.l.b16 %v4081
    %v4183 = vunpack.c.h.b16 %v4081
    %v4184 = vunpack.c.l.b16 %v4082
    %v4185 = vunpack.c.h.b16 %v4082
    %v4186 = vunpack.c.l.b16 %v4083
    %v4187 = vunpack.c.h.b16 %v4083
    %v4188 = vunpack.c.l.b16 %v4084
    %v4189 = vunpack.c.h.b16 %v4084
    %v4190 = vunpack.c.l.b16 %v4085
    %v4191 = vunpack.c.h.b16 %v4085
    %v4192 = vunpack.c.l.b16 %v4086
    %v4193 = vunpack.c.h.b16 %v4086
    %v4194 = vunpack.c.l.b16 %v4087
    %v4195 = vunpack.c.h.b16 %v4087
    %v4196 = vunpack.c.l.b16 %v4088
    %v4197 = vunpack.c.h.b16 %v4088
    %v4198 = vunpack.c.l.b16 %v4089
    %v4199 = vunpack.c.h.b16 %v4089
    %v4200 = vunpack.c.l.b16 %v4090
    %v4201 = vunpack.c.h.b16 %v4090
    %v4202 = vunpack.c.l.b16 %v4091
    %v4203 = vunpack.c.h.b16 %v4091
    %v4204 = vunpack.c.l.b16 %v4092
    %v4205 = vunpack.c.h.b16 %v4092
    %v4206 = vunpack.c.l.b16 %v4093
    %v4207 = vunpack.c.h.b16 %v4093
    %v4208 = vunpack.c.l.b16 %v4094
    %v4209 = vunpack.c.h.b16 %v4094
    %v4210 = vunpack.c.l.b16 %v4095
    %v4211 = vunpack.c.h.b16 %v4095
    %v4212 = vunpack.c.l.b16 %v4096
    %v4213 = vunpack.c.h.b16 %v4096
    %v4214 = vunpack.c.l.b16 %v4097
    %v4215 = vunpack.c.h.b16 %v4097
    %v4216 = vunpack.c.l.b16 %v4098
    %v4217 = vunpack.c.h.b16 %v4098
    %v4218 = vunpack.c.l.b16 %v4099
    %v4219 = vunpack.c.h.b16 %v4099
    %v4220 = vunpack.c.l.b16 %v4100
    %v4221 = vunpack.c.h.b16 %v4100
    %v4222 = vunpack.c.l.b16 %v4101
    %v4223 = vunpack.c.h.b16 %v4101
    %v4224 = vunpack.c.l.b16 %v4102
    %v4225 = vunpack.c.h.b16 %v4102
    %v4226 = vunpack.c.l.b16 %v4103
    %v4227 = vunpack.c.h.b16 %v4103
    %v4228 = vunpack.c.l.b16 %v4104
    %v4229 = vunpack.c.h.b16 %v4104
    %v4230 = vunpack.c.l.b16 %v4105
    %v4231 = vunpack.c.h.b16 %v4105
    %v4232 = vunpack.c.l.b16 %v4106
    %v4233 = vunpack.c.h.b16 %v4106
    %v4234 = vunpack.c.l.b16 %v4107
    %v4235 = vunpack.c.h.b16 %v4107
    %v4236 = vunpack.c.l.b16 %v4108
    %v4237 = vunpack.c.h.b16 %v4108
    %v4238 = vunpack.c.l.b16 %v4109
    %v4239 = vunpack.c.h.b16 %v4109
    %v4240 = vunpack.c.l.b16 %v4110
    %v4241 = vunpack.c.h.b16 %v4110
    %v4242 = vunpack.c.l.b16 %v4111
    %v4243 = vunpack.c.h.b16 %v4111
    %v4244 = vunpack.c.l.b16 %v4112
    %v4245 = vunpack.c.h.b16 %v4112
    %v4246 = vunpack.c.l.b16 %v4113
    %v4247 = vunpack.c.h.b16 %v4113
    %v4248 = vunpack.c.l.b16 %v4114
    %v4249 = vunpack.c.h.b16 %v4114
    %v4250 = vunpack.c.l.b16 %v4115
    %v4251 = vunpack.c.h.b16 %v4115
    %v4252 = vunpack.c.l.b16 %v4116
    %v4253 = vunpack.c.h.b16 %v4116
    %v4254 = vunpack.c.l.b16 %v4117
    %v4255 = vunpack.c.h.b16 %v4117
    %v4256 = vunpack.c.l.b16 %v4118
    %v4257 = vunpack.c.h.b16 %v4118
    %v4258 = vunpack.c.l.b16 %v4119
    %v4259 = vunpack.c.h.b16 %v4119
    %v4260 = vunpack.c.l.b16 %v4120
    %v4261 = vunpack.c.h.b16 %v4120
    %v4262 = vunpack.c.l.b16 %v4121
    %v4263 = vunpack.c.h.b16 %v4121
    %v4264 = vunpack.c.l.b16 %v4122
    %v4265 = vunpack.c.h.b16 %v4122
    %v4266 = vunpack.c.l.b16 %v4123
    %v4267 = vunpack.c.h.b16 %v4123
    %v4268 = vpack.c.b16 %v4174, %v4172
    %v4269 = vpack.c.b16 %v4175, %v4173
    %v4270 = vpack.c.b16 %v4178, %v4176
    %v4271 = vpack.c.b16 %v4179, %v4177
    %v4272 = vpack.c.b16 %v4182, %v4180
    %v4273 = vpack.c.b16 %v4183, %v4181
    %v4274 = vpack.c.b16 %v4186, %v4184
    %v4275 = vpack.c.b16 %v4187, %v4185
    %v4276 = vpack.c.b16 %v4190, %v4188
    %v4277 = vpack.c.b16 %v4191, %v4189
    %v4278 = vpack.c.b16 %v4194, %v4192
    %v4279 = vpack.c.b16 %v4195, %v4193
    %v4280 = vpack.c.b16 %v4198, %v4196
    %v4281 = vpack.c.b16 %v4199, %v4197
    %v4282 = vpack.c.b16 %v4202, %v4200
    %v4283 = vpack.c.b16 %v4203, %v4201
    %v4284 = vpack.c.b16 %v4206, %v4204
    %v4285 = vpack.c.b16 %v4207, %v4205
    %v4286 = vpack.c.b16 %v4210, %v4208
    %v4287 = vpack.c.b16 %v4211, %v4209
    %v4288 = vpack.c.b16 %v4214, %v4212
    %v4289 = vpack.c.b16 %v4215, %v4213
    %v4290 = vpack.c.b16 %v4218, %v4216
    %v4291 = vpack.c.b16 %v4219, %v4217
    %v4292 = vpack.c.b16 %v4222, %v4220
    %v4293 = vpack.c.b16 %v4223, %v4221
    %v4294 = vpack.c.b16 %v4226, %v4224
    %v4295 = vpack.c.b16 %v4227, %v4225
    %v4296 = vpack.c.b16 %v4230, %v4228
    %v4297 = vpack.c.b16 %v4231, %v4229
    %v4298 = vpack.c.b16 %v4234, %v4232
    %v4299 = vpack.c.b16 %v4235, %v4233
    %v4300 = vpack.c.b16 %v4238, %v4236
    %v4301 = vpack.c.b16 %v4239, %v4237
    %v4302 = vpack.c.b16 %v4242, %v4240
    %v4303 = vpack.c.b16 %v4243, %v4241
    %v4304 = vpack.c.b16 %v4246, %v4244
    %v4305 = vpack.c.b16 %v4247, %v4245
    %v4306 = vpack.c.b16 %v4250, %v4248
    %v4307 = vpack.c.b16 %v4251, %v4249
    %v4308 = vpack.c.b16 %v4254, %v4252
    %v4309 = vpack.c.b16 %v4255, %v4253
    %v4310 = vpack.c.b16 %v4258, %v4256
    %v4311 = vpack.c.b16 %v4259, %v4257
    %v4312 = vpack.c.b16 %v4262, %v4260
    %v4313 = vpack.c.b16 %v4263, %v4261
    %v4314 = vpack.c.b16 %v4266, %v4264
    %v4315 = vpack.c.b16 %v4267, %v4265
    %4364 = vmatpush.bf16.msra.mxu0 %v4282
    %4365 = vmatpush.bf16.msra.mxu0 %v4280
    %4366 = vmatpush.bf16.msra.mxu0 %v4278
    %4367 = vmatpush.bf16.msra.mxu0 %v4276
    %4368 = vmatpush.bf16.msra.mxu0 %v4274
    %4369 = vmatpush.bf16.msra.mxu0 %v4272
    %4370 = vmatpush.bf16.msra.mxu0 %v4270
    %4371 = vmatpush.bf16.msra.mxu0 %v4268
    %4372 = vmatmul.bf16.gmra.mxu0 %v4064
    %v4373 = vpop.f32.mrf.mxu0
    %v4374 = vadd.f32 0.0, %v4373
    %v4375 = vpop.f32.mrf.mxu0
    %v4376 = vadd.f32 0.0, %v4375
    %4377 = vmatmul.bf16.gmra.mxu0 %v4067
    %v4378 = vpop.f32.mrf.mxu0
    %v4379 = vadd.f32 0.0, %v4378
    %v4380 = vpop.f32.mrf.mxu0
    %v4381 = vadd.f32 0.0, %v4380
    %4382 = vmatmul.bf16.gmra.mxu0 %v4070
    %v4383 = vpop.f32.mrf.mxu0
    %v4384 = vadd.f32 0.0, %v4383
    %v4385 = vpop.f32.mrf.mxu0
    %v4386 = vadd.f32 0.0, %v4385
    %4387 = vmatmul.bf16.gmra.mxu0 %v4073
    %v4388 = vpop.f32.mrf.mxu0
    %v4389 = vadd.f32 0.0, %v4388
    %v4390 = vpop.f32.mrf.mxu0
    %v4391 = vadd.f32 0.0, %v4390
    %4392 = vdwg.mxu0
    %4393 = vmatpush.bf16.msra.mxu0 %v4298
    %4394 = vmatpush.bf16.msra.mxu0 %v4296
    %4395 = vmatpush.bf16.msra.mxu0 %v4294
    %4396 = vmatpush.bf16.msra.mxu0 %v4292
    %4397 = vmatpush.bf16.msra.mxu0 %v4290
    %4398 = vmatpush.bf16.msra.mxu0 %v4288
    %4399 = vmatpush.bf16.msra.mxu0 %v4286
    %4400 = vmatpush.bf16.msra.mxu0 %v4284
    %4401 = vmatmul.bf16.gmra.mxu0 %v4065
    %v4402 = vpop.f32.mrf.mxu0
    %v4403 = vadd.f32 %v4374, %v4402
    %v4404 = vpop.f32.mrf.mxu0
    %v4405 = vadd.f32 %v4376, %v4404
    %4406 = vmatmul.bf16.gmra.mxu0 %v4068
    %v4407 = vpop.f32.mrf.mxu0
    %v4408 = vadd.f32 %v4379, %v4407
    %v4409 = vpop.f32.mrf.mxu0
    %v4410 = vadd.f32 %v4381, %v4409
    %4411 = vmatmul.bf16.gmra.mxu0 %v4071
    %v4412 = vpop.f32.mrf.mxu0
    %v4413 = vadd.f32 %v4384, %v4412
    %v4414 = vpop.f32.mrf.mxu0
    %v4415 = vadd.f32 %v4386, %v4414
    %4416 = vmatmul.bf16.gmra.mxu0 %v4074
    %v4417 = vpop.f32.mrf.mxu0
    %v4418 = vadd.f32 %v4389, %v4417
    %v4419 = vpop.f32.mrf.mxu0
    %v4420 = vadd.f32 %v4391, %v4419
    %4421 = vdwg.mxu0
    %4422 = vmatpush.bf16.msra.mxu0 %v4314
    %4423 = vmatpush.bf16.msra.mxu0 %v4312
    %4424 = vmatpush.bf16.msra.mxu0 %v4310
    %4425 = vmatpush.bf16.msra.mxu0 %v4308
    %4426 = vmatpush.bf16.msra.mxu0 %v4306
    %4427 = vmatpush.bf16.msra.mxu0 %v4304
    %4428 = vmatpush.bf16.msra.mxu0 %v4302
    %4429 = vmatpush.bf16.msra.mxu0 %v4300
    %4430 = vmatmul.bf16.gmra.mxu0 %v4066
    %v4431 = vpop.f32.mrf.mxu0
    %v4432 = vadd.f32 %v4403, %v4431
    %v4433 = vpop.f32.mrf.mxu0
    %v4434 = vadd.f32 %v4405, %v4433
    %4435 = vmatmul.bf16.gmra.mxu0 %v4069
    %v4436 = vpop.f32.mrf.mxu0
    %v4437 = vadd.f32 %v4408, %v4436
    %v4438 = vpop.f32.mrf.mxu0
    %v4439 = vadd.f32 %v4410, %v4438
    %4440 = vmatmul.bf16.gmra.mxu0 %v4072
    %v4441 = vpop.f32.mrf.mxu0
    %v4442 = vadd.f32 %v4413, %v4441
    %v4443 = vpop.f32.mrf.mxu0
    %v4444 = vadd.f32 %v4415, %v4443
    %4445 = vmatmul.bf16.gmra.mxu0 %v4075
    %v4446 = vpop.f32.mrf.mxu0
    %v4447 = vadd.f32 %v4418, %v4446
    %v4448 = vpop.f32.mrf.mxu0
    %v4449 = vadd.f32 %v4420, %v4448
    %4450 = vdwg.mxu0
    %4451 = vmatpush.bf16.msra.mxu0 %v4283
    %4452 = vmatpush.bf16.msra.mxu0 %v4281
    %4453 = vmatpush.bf16.msra.mxu0 %v4279
    %4454 = vmatpush.bf16.msra.mxu0 %v4277
    %4455 = vmatpush.bf16.msra.mxu0 %v4275
    %4456 = vmatpush.bf16.msra.mxu0 %v4273
    %4457 = vmatpush.bf16.msra.mxu0 %v4271
    %4458 = vmatpush.bf16.msra.mxu0 %v4269
    %4459 = vmatmul.bf16.gmra.mxu0 %v4064
    %v4460 = vpop.f32.mrf.mxu0
    %v4461 = vadd.f32 0.0, %v4460
    %v4462 = vpop.f32.mrf.mxu0
    %v4463 = vadd.f32 0.0, %v4462
    %4464 = vmatmul.bf16.gmra.mxu0 %v4067
    %v4465 = vpop.f32.mrf.mxu0
    %v4466 = vadd.f32 0.0, %v4465
    %v4467 = vpop.f32.mrf.mxu0
    %v4468 = vadd.f32 0.0, %v4467
    %4469 = vmatmul.bf16.gmra.mxu0 %v4070
    %v4470 = vpop.f32.mrf.mxu0
    %v4471 = vadd.f32 0.0, %v4470
    %v4472 = vpop.f32.mrf.mxu0
    %v4473 = vadd.f32 0.0, %v4472
    %4474 = vmatmul.bf16.gmra.mxu0 %v4073
    %v4475 = vpop.f32.mrf.mxu0
    %v4476 = vadd.f32 0.0, %v4475
    %v4477 = vpop.f32.mrf.mxu0
    %v4478 = vadd.f32 0.0, %v4477
    %4479 = vdwg.mxu0
    %4480 = vmatpush.bf16.msra.mxu0 %v4299
    %4481 = vmatpush.bf16.msra.mxu0 %v4297
    %4482 = vmatpush.bf16.msra.mxu0 %v4295
    %4483 = vmatpush.bf16.msra.mxu0 %v4293
    %4484 = vmatpush.bf16.msra.mxu0 %v4291
    %4485 = vmatpush.bf16.msra.mxu0 %v4289
    %4486 = vmatpush.bf16.msra.mxu0 %v4287
    %4487 = vmatpush.bf16.msra.mxu0 %v4285
    %4488 = vmatmul.bf16.gmra.mxu0 %v4065
    %v4489 = vpop.f32.mrf.mxu0
    %v4490 = vadd.f32 %v4461, %v4489
    %v4491 = vpop.f32.mrf.mxu0
    %v4492 = vadd.f32 %v4463, %v4491
    %4493 = vmatmul.bf16.gmra.mxu0 %v4068
    %v4494 = vpop.f32.mrf.mxu0
    %v4495 = vadd.f32 %v4466, %v4494
    %v4496 = vpop.f32.mrf.mxu0
    %v4497 = vadd.f32 %v4468, %v4496
    %4498 = vmatmul.bf16.gmra.mxu0 %v4071
    %v4499 = vpop.f32.mrf.mxu0
    %v4500 = vadd.f32 %v4471, %v4499
    %v4501 = vpop.f32.mrf.mxu0
    %v4502 = vadd.f32 %v4473, %v4501
    %4503 = vmatmul.bf16.gmra.mxu0 %v4074
    %v4504 = vpop.f32.mrf.mxu0
    %v4505 = vadd.f32 %v4476, %v4504
    %v4506 = vpop.f32.mrf.mxu0
    %v4507 = vadd.f32 %v4478, %v4506
    %4508 = vdwg.mxu0
    %4509 = vmatpush.bf16.msra.mxu0 %v4315
    %4510 = vmatpush.bf16.msra.mxu0 %v4313
    %4511 = vmatpush.bf16.msra.mxu0 %v4311
    %4512 = vmatpush.bf16.msra.mxu0 %v4309
    %4513 = vmatpush.bf16.msra.mxu0 %v4307
    %4514 = vmatpush.bf16.msra.mxu0 %v4305
    %4515 = vmatpush.bf16.msra.mxu0 %v4303
    %4516 = vmatpush.bf16.msra.mxu0 %v4301
    %4517 = vmatmul.bf16.gmra.mxu0 %v4066
    %v4518 = vpop.f32.mrf.mxu0
    %v4519 = vadd.f32 %v4490, %v4518
    %v4520 = vpop.f32.mrf.mxu0
    %v4521 = vadd.f32 %v4492, %v4520
    %4522 = vmatmul.bf16.gmra.mxu0 %v4069
    %v4523 = vpop.f32.mrf.mxu0
    %v4524 = vadd.f32 %v4495, %v4523
    %v4525 = vpop.f32.mrf.mxu0
    %v4526 = vadd.f32 %v4497, %v4525
    %4527 = vmatmul.bf16.gmra.mxu0 %v4072
    %v4528 = vpop.f32.mrf.mxu0
    %v4529 = vadd.f32 %v4500, %v4528
    %v4530 = vpop.f32.mrf.mxu0
    %v4531 = vadd.f32 %v4502, %v4530
    %4532 = vmatmul.bf16.gmra.mxu0 %v4075
    %v4533 = vpop.f32.mrf.mxu0
    %v4534 = vadd.f32 %v4505, %v4533
    %v4535 = vpop.f32.mrf.mxu0
    %v4536 = vadd.f32 %v4507, %v4535
    %4537 = vdwg.mxu0
    %v4538 = vadd.f32 %v4038, %v4432
    %v4539 = vadd.f32 %v4039, %v4519
    %v4540 = vadd.f32 %v4038, %v4434
    %v4541 = vadd.f32 %v4039, %v4521
    %v4542 = vadd.f32 %v4038, %v4437
    %v4543 = vadd.f32 %v4039, %v4524
    %v4544 = vadd.f32 %v4038, %v4439
    %v4545 = vadd.f32 %v4039, %v4526
    %v4546 = vadd.f32 %v4038, %v4442
    %v4547 = vadd.f32 %v4039, %v4529
    %v4548 = vadd.f32 %v4038, %v4444
    %v4549 = vadd.f32 %v4039, %v4531
    %v4550 = vadd.f32 %v4038, %v4447
    %v4551 = vadd.f32 %v4039, %v4534
    %v4552 = vadd.f32 %v4038, %v4449
    %v4553 = vadd.f32 %v4039, %v4536
    %v4554 = vld [vmem:[#allocation3 + $0x18] sm:$0xff]
    %v4555 = vld [vmem:[#allocation3 + $0x20] sm:$0xff]
    %v4556 = vld [vmem:[#allocation3 + $0x28] sm:$0xff]
    %v4557 = vld [vmem:[#allocation3 + $0x30] sm:$0xff]
    %v4558 = vld [vmem:[#allocation3 + $0x38] sm:$0xff]
    %v4559 = vld [vmem:[#allocation3 + $0x40] sm:$0xff]
    %v4560 = vld [vmem:[#allocation3 + $0x48] sm:$0xff]
    %v4561 = vld [vmem:[#allocation3 + $0x50] sm:$0xff]
    %v4562 = vld [vmem:[#allocation3 + $0x58] sm:$0xff]
    %v4563 = vld [vmem:[#allocation3 + $0x60] sm:$0xff]
    %v4564 = vld [vmem:[#allocation3 + $0x68] sm:$0xff]
    %v4565 = vld [vmem:[#allocation3 + $0x70] sm:$0xff]
    %v4566 = vld [vmem:[#allocation3 + $0x78] sm:$0xff]
    %v4567 = vld [vmem:[#allocation3 + $0x80] sm:$0xff]
    %v4568 = vld [vmem:[#allocation3 + $0x88] sm:$0xff]
    %v4569 = vld [vmem:[#allocation3 + $0x90] sm:$0xff]
    %v4570 = vld [vmem:[#allocation3 + $0x98] sm:$0xff]
    %v4571 = vld [vmem:[#allocation3 + $0xa0] sm:$0xff]
    %v4572 = vld [vmem:[#allocation3 + $0xa8] sm:$0xff]
    %v4573 = vld [vmem:[#allocation3 + $0xb0] sm:$0xff]
    %v4574 = vld [vmem:[#allocation3 + $0xb8] sm:$0xff]
    %v4575 = vld [vmem:[#allocation3 + $0xc0] sm:$0xff]
    %v4576 = vld [vmem:[#allocation3 + $0xc8] sm:$0xff]
    %v4577 = vld [vmem:[#allocation3 + $0xd0] sm:$0xff]
    %v4578 = vpack.c.bf16 %v4557, %v4554
    %v4579 = vpack.c.bf16 %v4558, %v4555
    %v4580 = vpack.c.bf16 %v4559, %v4556
    %v4581 = vpack.c.bf16 %v4563, %v4560
    %v4582 = vpack.c.bf16 %v4564, %v4561
    %v4583 = vpack.c.bf16 %v4565, %v4562
    %v4584 = vpack.c.bf16 %v4569, %v4566
    %v4585 = vpack.c.bf16 %v4570, %v4567
    %v4586 = vpack.c.bf16 %v4571, %v4568
    %v4587 = vpack.c.bf16 %v4575, %v4572
    %v4588 = vpack.c.bf16 %v4576, %v4573
    %v4589 = vpack.c.bf16 %v4577, %v4574
    %s4590 = scalar_lea.vmem [#allocation4], 384
    %v4591 = vld [vmem:[%s4590] sm:$0xff]
    %v4592 = vld [vmem:[%s4590 + $0x8] sm:$0xff]
    %v4593 = vld [vmem:[%s4590 + $0x10] sm:$0xff]
    %v4594 = vld [vmem:[%s4590 + $0x18] sm:$0xff]
    %v4595 = vld [vmem:[%s4590 + $0x20] sm:$0xff]
    %v4596 = vld [vmem:[%s4590 + $0x28] sm:$0xff]
    %v4597 = vld [vmem:[%s4590 + $0x30] sm:$0xff]
    %v4598 = vld [vmem:[%s4590 + $0x38] sm:$0xff]
    %v4599 = vld [vmem:[%s4590 + $0x40] sm:$0xff]
    %v4600 = vld [vmem:[%s4590 + $0x48] sm:$0xff]
    %v4601 = vld [vmem:[%s4590 + $0x50] sm:$0xff]
    %v4602 = vld [vmem:[%s4590 + $0x58] sm:$0xff]
    %v4603 = vld [vmem:[%s4590 + $0x60] sm:$0xff]
    %v4604 = vld [vmem:[%s4590 + $0x68] sm:$0xff]
    %v4605 = vld [vmem:[%s4590 + $0x70] sm:$0xff]
    %v4606 = vld [vmem:[%s4590 + $0x78] sm:$0xff]
    %v4607 = vld [vmem:[%s4590 + $0x80] sm:$0xff]
    %v4608 = vld [vmem:[%s4590 + $0x88] sm:$0xff]
    %v4609 = vld [vmem:[%s4590 + $0x90] sm:$0xff]
    %v4610 = vld [vmem:[%s4590 + $0x98] sm:$0xff]
    %v4611 = vld [vmem:[%s4590 + $0xa0] sm:$0xff]
    %v4612 = vld [vmem:[%s4590 + $0xa8] sm:$0xff]
    %v4613 = vld [vmem:[%s4590 + $0xb0] sm:$0xff]
    %v4614 = vld [vmem:[%s4590 + $0xb8] sm:$0xff]
    %v4615 = vld [vmem:[%s4590 + $0xc0] sm:$0xff]
    %v4616 = vld [vmem:[%s4590 + $0xc8] sm:$0xff]
    %v4617 = vld [vmem:[%s4590 + $0xd0] sm:$0xff]
    %v4618 = vld [vmem:[%s4590 + $0xd8] sm:$0xff]
    %v4619 = vld [vmem:[%s4590 + $0xe0] sm:$0xff]
    %v4620 = vld [vmem:[%s4590 + $0xe8] sm:$0xff]
    %v4621 = vld [vmem:[%s4590 + $0xf0] sm:$0xff]
    %v4622 = vld [vmem:[%s4590 + $0xf8] sm:$0xff]
    %v4623 = vld [vmem:[%s4590 + $0x100] sm:$0xff]
    %v4624 = vld [vmem:[%s4590 + $0x108] sm:$0xff]
    %v4625 = vld [vmem:[%s4590 + $0x110] sm:$0xff]
    %v4626 = vld [vmem:[%s4590 + $0x118] sm:$0xff]
    %v4627 = vld [vmem:[%s4590 + $0x120] sm:$0xff]
    %v4628 = vld [vmem:[%s4590 + $0x128] sm:$0xff]
    %v4629 = vld [vmem:[%s4590 + $0x130] sm:$0xff]
    %v4630 = vld [vmem:[%s4590 + $0x138] sm:$0xff]
    %v4631 = vld [vmem:[%s4590 + $0x140] sm:$0xff]
    %v4632 = vld [vmem:[%s4590 + $0x148] sm:$0xff]
    %v4633 = vld [vmem:[%s4590 + $0x150] sm:$0xff]
    %v4634 = vld [vmem:[%s4590 + $0x158] sm:$0xff]
    %v4635 = vld [vmem:[%s4590 + $0x160] sm:$0xff]
    %v4636 = vld [vmem:[%s4590 + $0x168] sm:$0xff]
    %v4637 = vld [vmem:[%s4590 + $0x170] sm:$0xff]
    %v4638 = vld [vmem:[%s4590 + $0x178] sm:$0xff]
    %v4687 = vunpack.c.l.b16 %v4591
    %v4688 = vunpack.c.h.b16 %v4591
    %v4689 = vunpack.c.l.b16 %v4592
    %v4690 = vunpack.c.h.b16 %v4592
    %v4691 = vunpack.c.l.b16 %v4593
    %v4692 = vunpack.c.h.b16 %v4593
    %v4693 = vunpack.c.l.b16 %v4594
    %v4694 = vunpack.c.h.b16 %v4594
    %v4695 = vunpack.c.l.b16 %v4595
    %v4696 = vunpack.c.h.b16 %v4595
    %v4697 = vunpack.c.l.b16 %v4596
    %v4698 = vunpack.c.h.b16 %v4596
    %v4699 = vunpack.c.l.b16 %v4597
    %v4700 = vunpack.c.h.b16 %v4597
    %v4701 = vunpack.c.l.b16 %v4598
    %v4702 = vunpack.c.h.b16 %v4598
    %v4703 = vunpack.c.l.b16 %v4599
    %v4704 = vunpack.c.h.b16 %v4599
    %v4705 = vunpack.c.l.b16 %v4600
    %v4706 = vunpack.c.h.b16 %v4600
    %v4707 = vunpack.c.l.b16 %v4601
    %v4708 = vunpack.c.h.b16 %v4601
    %v4709 = vunpack.c.l.b16 %v4602
    %v4710 = vunpack.c.h.b16 %v4602
    %v4711 = vunpack.c.l.b16 %v4603
    %v4712 = vunpack.c.h.b16 %v4603
    %v4713 = vunpack.c.l.b16 %v4604
    %v4714 = vunpack.c.h.b16 %v4604
    %v4715 = vunpack.c.l.b16 %v4605
    %v4716 = vunpack.c.h.b16 %v4605
    %v4717 = vunpack.c.l.b16 %v4606
    %v4718 = vunpack.c.h.b16 %v4606
    %v4719 = vunpack.c.l.b16 %v4607
    %v4720 = vunpack.c.h.b16 %v4607
    %v4721 = vunpack.c.l.b16 %v4608
    %v4722 = vunpack.c.h.b16 %v4608
    %v4723 = vunpack.c.l.b16 %v4609
    %v4724 = vunpack.c.h.b16 %v4609
    %v4725 = vunpack.c.l.b16 %v4610
    %v4726 = vunpack.c.h.b16 %v4610
    %v4727 = vunpack.c.l.b16 %v4611
    %v4728 = vunpack.c.h.b16 %v4611
    %v4729 = vunpack.c.l.b16 %v4612
    %v4730 = vunpack.c.h.b16 %v4612
    %v4731 = vunpack.c.l.b16 %v4613
    %v4732 = vunpack.c.h.b16 %v4613
    %v4733 = vunpack.c.l.b16 %v4614
    %v4734 = vunpack.c.h.b16 %v4614
    %v4735 = vunpack.c.l.b16 %v4615
    %v4736 = vunpack.c.h.b16 %v4615
    %v4737 = vunpack.c.l.b16 %v4616
    %v4738 = vunpack.c.h.b16 %v4616
    %v4739 = vunpack.c.l.b16 %v4617
    %v4740 = vunpack.c.h.b16 %v4617
    %v4741 = vunpack.c.l.b16 %v4618
    %v4742 = vunpack.c.h.b16 %v4618
    %v4743 = vunpack.c.l.b16 %v4619
    %v4744 = vunpack.c.h.b16 %v4619
    %v4745 = vunpack.c.l.b16 %v4620
    %v4746 = vunpack.c.h.b16 %v4620
    %v4747 = vunpack.c.l.b16 %v4621
    %v4748 = vunpack.c.h.b16 %v4621
    %v4749 = vunpack.c.l.b16 %v4622
    %v4750 = vunpack.c.h.b16 %v4622
    %v4751 = vunpack.c.l.b16 %v4623
    %v4752 = vunpack.c.h.b16 %v4623
    %v4753 = vunpack.c.l.b16 %v4624
    %v4754 = vunpack.c.h.b16 %v4624
    %v4755 = vunpack.c.l.b16 %v4625
    %v4756 = vunpack.c.h.b16 %v4625
    %v4757 = vunpack.c.l.b16 %v4626
    %v4758 = vunpack.c.h.b16 %v4626
    %v4759 = vunpack.c.l.b16 %v4627
    %v4760 = vunpack.c.h.b16 %v4627
    %v4761 = vunpack.c.l.b16 %v4628
    %v4762 = vunpack.c.h.b16 %v4628
    %v4763 = vunpack.c.l.b16 %v4629
    %v4764 = vunpack.c.h.b16 %v4629
    %v4765 = vunpack.c.l.b16 %v4630
    %v4766 = vunpack.c.h.b16 %v4630
    %v4767 = vunpack.c.l.b16 %v4631
    %v4768 = vunpack.c.h.b16 %v4631
    %v4769 = vunpack.c.l.b16 %v4632
    %v4770 = vunpack.c.h.b16 %v4632
    %v4771 = vunpack.c.l.b16 %v4633
    %v4772 = vunpack.c.h.b16 %v4633
    %v4773 = vunpack.c.l.b16 %v4634
    %v4774 = vunpack.c.h.b16 %v4634
    %v4775 = vunpack.c.l.b16 %v4635
    %v4776 = vunpack.c.h.b16 %v4635
    %v4777 = vunpack.c.l.b16 %v4636
    %v4778 = vunpack.c.h.b16 %v4636
    %v4779 = vunpack.c.l.b16 %v4637
    %v4780 = vunpack.c.h.b16 %v4637
    %v4781 = vunpack.c.l.b16 %v4638
    %v4782 = vunpack.c.h.b16 %v4638
    %v4783 = vpack.c.b16 %v4689, %v4687
    %v4784 = vpack.c.b16 %v4690, %v4688
    %v4785 = vpack.c.b16 %v4693, %v4691
    %v4786 = vpack.c.b16 %v4694, %v4692
    %v4787 = vpack.c.b16 %v4697, %v4695
    %v4788 = vpack.c.b16 %v4698, %v4696
    %v4789 = vpack.c.b16 %v4701, %v4699
    %v4790 = vpack.c.b16 %v4702, %v4700
    %v4791 = vpack.c.b16 %v4705, %v4703
    %v4792 = vpack.c.b16 %v4706, %v4704
    %v4793 = vpack.c.b16 %v4709, %v4707
    %v4794 = vpack.c.b16 %v4710, %v4708
    %v4795 = vpack.c.b16 %v4713, %v4711
    %v4796 = vpack.c.b16 %v4714, %v4712
    %v4797 = vpack.c.b16 %v4717, %v4715
    %v4798 = vpack.c.b16 %v4718, %v4716
    %v4799 = vpack.c.b16 %v4721, %v4719
    %v4800 = vpack.c.b16 %v4722, %v4720
    %v4801 = vpack.c.b16 %v4725, %v4723
    %v4802 = vpack.c.b16 %v4726, %v4724
    %v4803 = vpack.c.b16 %v4729, %v4727
    %v4804 = vpack.c.b16 %v4730, %v4728
    %v4805 = vpack.c.b16 %v4733, %v4731
    %v4806 = vpack.c.b16 %v4734, %v4732
    %v4807 = vpack.c.b16 %v4737, %v4735
    %v4808 = vpack.c.b16 %v4738, %v4736
    %v4809 = vpack.c.b16 %v4741, %v4739
    %v4810 = vpack.c.b16 %v4742, %v4740
    %v4811 = vpack.c.b16 %v4745, %v4743
    %v4812 = vpack.c.b16 %v4746, %v4744
    %v4813 = vpack.c.b16 %v4749, %v4747
    %v4814 = vpack.c.b16 %v4750, %v4748
    %v4815 = vpack.c.b16 %v4753, %v4751
    %v4816 = vpack.c.b16 %v4754, %v4752
    %v4817 = vpack.c.b16 %v4757, %v4755
    %v4818 = vpack.c.b16 %v4758, %v4756
    %v4819 = vpack.c.b16 %v4761, %v4759
    %v4820 = vpack.c.b16 %v4762, %v4760
    %v4821 = vpack.c.b16 %v4765, %v4763
    %v4822 = vpack.c.b16 %v4766, %v4764
    %v4823 = vpack.c.b16 %v4769, %v4767
    %v4824 = vpack.c.b16 %v4770, %v4768
    %v4825 = vpack.c.b16 %v4773, %v4771
    %v4826 = vpack.c.b16 %v4774, %v4772
    %v4827 = vpack.c.b16 %v4777, %v4775
    %v4828 = vpack.c.b16 %v4778, %v4776
    %v4829 = vpack.c.b16 %v4781, %v4779
    %v4830 = vpack.c.b16 %v4782, %v4780
    %4879 = vmatpush.bf16.msra.mxu0 %v4797
    %4880 = vmatpush.bf16.msra.mxu0 %v4795
    %4881 = vmatpush.bf16.msra.mxu0 %v4793
    %4882 = vmatpush.bf16.msra.mxu0 %v4791
    %4883 = vmatpush.bf16.msra.mxu0 %v4789
    %4884 = vmatpush.bf16.msra.mxu0 %v4787
    %4885 = vmatpush.bf16.msra.mxu0 %v4785
    %4886 = vmatpush.bf16.msra.mxu0 %v4783
    %4887 = vmatmul.bf16.gmra.mxu0 %v4578
    %v4888 = vpop.f32.mrf.mxu0
    %v4889 = vadd.f32 0.0, %v4888
    %v4890 = vpop.f32.mrf.mxu0
    %v4891 = vadd.f32 0.0, %v4890
    %4892 = vmatmul.bf16.gmra.mxu0 %v4581
    %v4893 = vpop.f32.mrf.mxu0
    %v4894 = vadd.f32 0.0, %v4893
    %v4895 = vpop.f32.mrf.mxu0
    %v4896 = vadd.f32 0.0, %v4895
    %4897 = vmatmul.bf16.gmra.mxu0 %v4584
    %v4898 = vpop.f32.mrf.mxu0
    %v4899 = vadd.f32 0.0, %v4898
    %v4900 = vpop.f32.mrf.mxu0
    %v4901 = vadd.f32 0.0, %v4900
    %4902 = vmatmul.bf16.gmra.mxu0 %v4587
    %v4903 = vpop.f32.mrf.mxu0
    %v4904 = vadd.f32 0.0, %v4903
    %v4905 = vpop.f32.mrf.mxu0
    %v4906 = vadd.f32 0.0, %v4905
    %4907 = vdwg.mxu0
    %4908 = vmatpush.bf16.msra.mxu0 %v4813
    %4909 = vmatpush.bf16.msra.mxu0 %v4811
    %4910 = vmatpush.bf16.msra.mxu0 %v4809
    %4911 = vmatpush.bf16.msra.mxu0 %v4807
    %4912 = vmatpush.bf16.msra.mxu0 %v4805
    %4913 = vmatpush.bf16.msra.mxu0 %v4803
    %4914 = vmatpush.bf16.msra.mxu0 %v4801
    %4915 = vmatpush.bf16.msra.mxu0 %v4799
    %4916 = vmatmul.bf16.gmra.mxu0 %v4579
    %v4917 = vpop.f32.mrf.mxu0
    %v4918 = vadd.f32 %v4889, %v4917
    %v4919 = vpop.f32.mrf.mxu0
    %v4920 = vadd.f32 %v4891, %v4919
    %4921 = vmatmul.bf16.gmra.mxu0 %v4582
    %v4922 = vpop.f32.mrf.mxu0
    %v4923 = vadd.f32 %v4894, %v4922
    %v4924 = vpop.f32.mrf.mxu0
    %v4925 = vadd.f32 %v4896, %v4924
    %4926 = vmatmul.bf16.gmra.mxu0 %v4585
    %v4927 = vpop.f32.mrf.mxu0
    %v4928 = vadd.f32 %v4899, %v4927
    %v4929 = vpop.f32.mrf.mxu0
    %v4930 = vadd.f32 %v4901, %v4929
    %4931 = vmatmul.bf16.gmra.mxu0 %v4588
    %v4932 = vpop.f32.mrf.mxu0
    %v4933 = vadd.f32 %v4904, %v4932
    %v4934 = vpop.f32.mrf.mxu0
    %v4935 = vadd.f32 %v4906, %v4934
    %4936 = vdwg.mxu0
    %4937 = vmatpush.bf16.msra.mxu0 %v4829
    %4938 = vmatpush.bf16.msra.mxu0 %v4827
    %4939 = vmatpush.bf16.msra.mxu0 %v4825
    %4940 = vmatpush.bf16.msra.mxu0 %v4823
    %4941 = vmatpush.bf16.msra.mxu0 %v4821
    %4942 = vmatpush.bf16.msra.mxu0 %v4819
    %4943 = vmatpush.bf16.msra.mxu0 %v4817
    %4944 = vmatpush.bf16.msra.mxu0 %v4815
    %4945 = vmatmul.bf16.gmra.mxu0 %v4580
    %v4946 = vpop.f32.mrf.mxu0
    %v4947 = vadd.f32 %v4918, %v4946
    %v4948 = vpop.f32.mrf.mxu0
    %v4949 = vadd.f32 %v4920, %v4948
    %4950 = vmatmul.bf16.gmra.mxu0 %v4583
    %v4951 = vpop.f32.mrf.mxu0
    %v4952 = vadd.f32 %v4923, %v4951
    %v4953 = vpop.f32.mrf.mxu0
    %v4954 = vadd.f32 %v4925, %v4953
    %4955 = vmatmul.bf16.gmra.mxu0 %v4586
    %v4956 = vpop.f32.mrf.mxu0
    %v4957 = vadd.f32 %v4928, %v4956
    %v4958 = vpop.f32.mrf.mxu0
    %v4959 = vadd.f32 %v4930, %v4958
    %4960 = vmatmul.bf16.gmra.mxu0 %v4589
    %v4961 = vpop.f32.mrf.mxu0
    %v4962 = vadd.f32 %v4933, %v4961
    %v4963 = vpop.f32.mrf.mxu0
    %v4964 = vadd.f32 %v4935, %v4963
    %4965 = vdwg.mxu0
    %4966 = vmatpush.bf16.msra.mxu0 %v4798
    %4967 = vmatpush.bf16.msra.mxu0 %v4796
    %4968 = vmatpush.bf16.msra.mxu0 %v4794
    %4969 = vmatpush.bf16.msra.mxu0 %v4792
    %4970 = vmatpush.bf16.msra.mxu0 %v4790
    %4971 = vmatpush.bf16.msra.mxu0 %v4788
    %4972 = vmatpush.bf16.msra.mxu0 %v4786
    %4973 = vmatpush.bf16.msra.mxu0 %v4784
    %4974 = vmatmul.bf16.gmra.mxu0 %v4578
    %v4975 = vpop.f32.mrf.mxu0
    %v4976 = vadd.f32 0.0, %v4975
    %v4977 = vpop.f32.mrf.mxu0
    %v4978 = vadd.f32 0.0, %v4977
    %4979 = vmatmul.bf16.gmra.mxu0 %v4581
    %v4980 = vpop.f32.mrf.mxu0
    %v4981 = vadd.f32 0.0, %v4980
    %v4982 = vpop.f32.mrf.mxu0
    %v4983 = vadd.f32 0.0, %v4982
    %4984 = vmatmul.bf16.gmra.mxu0 %v4584
    %v4985 = vpop.f32.mrf.mxu0
    %v4986 = vadd.f32 0.0, %v4985
    %v4987 = vpop.f32.mrf.mxu0
    %v4988 = vadd.f32 0.0, %v4987
    %4989 = vmatmul.bf16.gmra.mxu0 %v4587
    %v4990 = vpop.f32.mrf.mxu0
    %v4991 = vadd.f32 0.0, %v4990
    %v4992 = vpop.f32.mrf.mxu0
    %v4993 = vadd.f32 0.0, %v4992
    %4994 = vdwg.mxu0
    %4995 = vmatpush.bf16.msra.mxu0 %v4814
    %4996 = vmatpush.bf16.msra.mxu0 %v4812
    %4997 = vmatpush.bf16.msra.mxu0 %v4810
    %4998 = vmatpush.bf16.msra.mxu0 %v4808
    %4999 = vmatpush.bf16.msra.mxu0 %v4806
    %5000 = vmatpush.bf16.msra.mxu0 %v4804
    %5001 = vmatpush.bf16.msra.mxu0 %v4802
    %5002 = vmatpush.bf16.msra.mxu0 %v4800
    %5003 = vmatmul.bf16.gmra.mxu0 %v4579
    %v5004 = vpop.f32.mrf.mxu0
    %v5005 = vadd.f32 %v4976, %v5004
    %v5006 = vpop.f32.mrf.mxu0
    %v5007 = vadd.f32 %v4978, %v5006
    %5008 = vmatmul.bf16.gmra.mxu0 %v4582
    %v5009 = vpop.f32.mrf.mxu0
    %v5010 = vadd.f32 %v4981, %v5009
    %v5011 = vpop.f32.mrf.mxu0
    %v5012 = vadd.f32 %v4983, %v5011
    %5013 = vmatmul.bf16.gmra.mxu0 %v4585
    %v5014 = vpop.f32.mrf.mxu0
    %v5015 = vadd.f32 %v4986, %v5014
    %v5016 = vpop.f32.mrf.mxu0
    %v5017 = vadd.f32 %v4988, %v5016
    %5018 = vmatmul.bf16.gmra.mxu0 %v4588
    %v5019 = vpop.f32.mrf.mxu0
    %v5020 = vadd.f32 %v4991, %v5019
    %v5021 = vpop.f32.mrf.mxu0
    %v5022 = vadd.f32 %v4993, %v5021
    %5023 = vdwg.mxu0
    %5024 = vmatpush.bf16.msra.mxu0 %v4830
    %5025 = vmatpush.bf16.msra.mxu0 %v4828
    %5026 = vmatpush.bf16.msra.mxu0 %v4826
    %5027 = vmatpush.bf16.msra.mxu0 %v4824
    %5028 = vmatpush.bf16.msra.mxu0 %v4822
    %5029 = vmatpush.bf16.msra.mxu0 %v4820
    %5030 = vmatpush.bf16.msra.mxu0 %v4818
    %5031 = vmatpush.bf16.msra.mxu0 %v4816
    %5032 = vmatmul.bf16.gmra.mxu0 %v4580
    %v5033 = vpop.f32.mrf.mxu0
    %v5034 = vadd.f32 %v5005, %v5033
    %v5035 = vpop.f32.mrf.mxu0
    %v5036 = vadd.f32 %v5007, %v5035
    %5037 = vmatmul.bf16.gmra.mxu0 %v4583
    %v5038 = vpop.f32.mrf.mxu0
    %v5039 = vadd.f32 %v5010, %v5038
    %v5040 = vpop.f32.mrf.mxu0
    %v5041 = vadd.f32 %v5012, %v5040
    %5042 = vmatmul.bf16.gmra.mxu0 %v4586
    %v5043 = vpop.f32.mrf.mxu0
    %v5044 = vadd.f32 %v5015, %v5043
    %v5045 = vpop.f32.mrf.mxu0
    %v5046 = vadd.f32 %v5017, %v5045
    %5047 = vmatmul.bf16.gmra.mxu0 %v4589
    %v5048 = vpop.f32.mrf.mxu0
    %v5049 = vadd.f32 %v5020, %v5048
    %v5050 = vpop.f32.mrf.mxu0
    %v5051 = vadd.f32 %v5022, %v5050
    %5052 = vdwg.mxu0
    %v5053 = vadd.f32 %v4538, %v4947
    %v5054 = vadd.f32 %v4539, %v5034
    %v5055 = vadd.f32 %v4540, %v4949
    %v5056 = vadd.f32 %v4541, %v5036
    %v5057 = vadd.f32 %v4542, %v4952
    %v5058 = vadd.f32 %v4543, %v5039
    %v5059 = vadd.f32 %v4544, %v4954
    %v5060 = vadd.f32 %v4545, %v5041
    %v5061 = vadd.f32 %v4546, %v4957
    %v5062 = vadd.f32 %v4547, %v5044
    %v5063 = vadd.f32 %v4548, %v4959
    %v5064 = vadd.f32 %v4549, %v5046
    %v5065 = vadd.f32 %v4550, %v4962
    %v5066 = vadd.f32 %v4551, %v5049
    %v5067 = vadd.f32 %v4552, %v4964
    %v5068 = vadd.f32 %v4553, %v5051
    %v5069 = vld [vmem:[#allocation3 + $0x30] sm:$0xff]
    %v5070 = vld [vmem:[#allocation3 + $0x38] sm:$0xff]
    %v5071 = vld [vmem:[#allocation3 + $0x40] sm:$0xff]
    %v5072 = vld [vmem:[#allocation3 + $0x48] sm:$0xff]
    %v5073 = vld [vmem:[#allocation3 + $0x50] sm:$0xff]
    %v5074 = vld [vmem:[#allocation3 + $0x58] sm:$0xff]
    %v5075 = vld [vmem:[#allocation3 + $0x60] sm:$0xff]
    %v5076 = vld [vmem:[#allocation3 + $0x68] sm:$0xff]
    %v5077 = vld [vmem:[#allocation3 + $0x70] sm:$0xff]
    %v5078 = vld [vmem:[#allocation3 + $0x78] sm:$0xff]
    %v5079 = vld [vmem:[#allocation3 + $0x80] sm:$0xff]
    %v5080 = vld [vmem:[#allocation3 + $0x88] sm:$0xff]
    %v5081 = vld [vmem:[#allocation3 + $0x90] sm:$0xff]
    %v5082 = vld [vmem:[#allocation3 + $0x98] sm:$0xff]
    %v5083 = vld [vmem:[#allocation3 + $0xa0] sm:$0xff]
    %v5084 = vld [vmem:[#allocation3 + $0xa8] sm:$0xff]
    %v5085 = vld [vmem:[#allocation3 + $0xb0] sm:$0xff]
    %v5086 = vld [vmem:[#allocation3 + $0xb8] sm:$0xff]
    %v5087 = vld [vmem:[#allocation3 + $0xc0] sm:$0xff]
    %v5088 = vld [vmem:[#allocation3 + $0xc8] sm:$0xff]
    %v5089 = vld [vmem:[#allocation3 + $0xd0] sm:$0xff]
    %v5090 = vld [vmem:[#allocation3 + $0xd8] sm:$0xff]
    %v5091 = vld [vmem:[#allocation3 + $0xe0] sm:$0xff]
    %v5092 = vld [vmem:[#allocation3 + $0xe8] sm:$0xff]
    %v5093 = vpack.c.bf16 %v5072, %v5069
    %v5094 = vpack.c.bf16 %v5073, %v5070
    %v5095 = vpack.c.bf16 %v5074, %v5071
    %v5096 = vpack.c.bf16 %v5078, %v5075
    %v5097 = vpack.c.bf16 %v5079, %v5076
    %v5098 = vpack.c.bf16 %v5080, %v5077
    %v5099 = vpack.c.bf16 %v5084, %v5081
    %v5100 = vpack.c.bf16 %v5085, %v5082
    %v5101 = vpack.c.bf16 %v5086, %v5083
    %v5102 = vpack.c.bf16 %v5090, %v5087
    %v5103 = vpack.c.bf16 %v5091, %v5088
    %v5104 = vpack.c.bf16 %v5092, %v5089
    %s5105 = scalar_lea.vmem [#allocation4], 768
    %v5106 = vld [vmem:[%s5105] sm:$0xff]
    %v5107 = vld [vmem:[%s5105 + $0x8] sm:$0xff]
    %v5108 = vld [vmem:[%s5105 + $0x10] sm:$0xff]
    %v5109 = vld [vmem:[%s5105 + $0x18] sm:$0xff]
    %v5110 = vld [vmem:[%s5105 + $0x20] sm:$0xff]
    %v5111 = vld [vmem:[%s5105 + $0x28] sm:$0xff]
    %v5112 = vld [vmem:[%s5105 + $0x30] sm:$0xff]
    %v5113 = vld [vmem:[%s5105 + $0x38] sm:$0xff]
    %v5114 = vld [vmem:[%s5105 + $0x40] sm:$0xff]
    %v5115 = vld [vmem:[%s5105 + $0x48] sm:$0xff]
    %v5116 = vld [vmem:[%s5105 + $0x50] sm:$0xff]
    %v5117 = vld [vmem:[%s5105 + $0x58] sm:$0xff]
    %v5118 = vld [vmem:[%s5105 + $0x60] sm:$0xff]
    %v5119 = vld [vmem:[%s5105 + $0x68] sm:$0xff]
    %v5120 = vld [vmem:[%s5105 + $0x70] sm:$0xff]
    %v5121 = vld [vmem:[%s5105 + $0x78] sm:$0xff]
    %v5122 = vld [vmem:[%s5105 + $0x80] sm:$0xff]
    %v5123 = vld [vmem:[%s5105 + $0x88] sm:$0xff]
    %v5124 = vld [vmem:[%s5105 + $0x90] sm:$0xff]
    %v5125 = vld [vmem:[%s5105 + $0x98] sm:$0xff]
    %v5126 = vld [vmem:[%s5105 + $0xa0] sm:$0xff]
    %v5127 = vld [vmem:[%s5105 + $0xa8] sm:$0xff]
    %v5128 = vld [vmem:[%s5105 + $0xb0] sm:$0xff]
    %v5129 = vld [vmem:[%s5105 + $0xb8] sm:$0xff]
    %v5130 = vld [vmem:[%s5105 + $0xc0] sm:$0xff]
    %v5131 = vld [vmem:[%s5105 + $0xc8] sm:$0xff]
    %v5132 = vld [vmem:[%s5105 + $0xd0] sm:$0xff]
    %v5133 = vld [vmem:[%s5105 + $0xd8] sm:$0xff]
    %v5134 = vld [vmem:[%s5105 + $0xe0] sm:$0xff]
    %v5135 = vld [vmem:[%s5105 + $0xe8] sm:$0xff]
    %v5136 = vld [vmem:[%s5105 + $0xf0] sm:$0xff]
    %v5137 = vld [vmem:[%s5105 + $0xf8] sm:$0xff]
    %v5138 = vld [vmem:[%s5105 + $0x100] sm:$0xff]
    %v5139 = vld [vmem:[%s5105 + $0x108] sm:$0xff]
    %v5140 = vld [vmem:[%s5105 + $0x110] sm:$0xff]
    %v5141 = vld [vmem:[%s5105 + $0x118] sm:$0xff]
    %v5142 = vld [vmem:[%s5105 + $0x120] sm:$0xff]
    %v5143 = vld [vmem:[%s5105 + $0x128] sm:$0xff]
    %v5144 = vld [vmem:[%s5105 + $0x130] sm:$0xff]
    %v5145 = vld [vmem:[%s5105 + $0x138] sm:$0xff]
    %v5146 = vld [vmem:[%s5105 + $0x140] sm:$0xff]
    %v5147 = vld [vmem:[%s5105 + $0x148] sm:$0xff]
    %v5148 = vld [vmem:[%s5105 + $0x150] sm:$0xff]
    %v5149 = vld [vmem:[%s5105 + $0x158] sm:$0xff]
    %v5150 = vld [vmem:[%s5105 + $0x160] sm:$0xff]
    %v5151 = vld [vmem:[%s5105 + $0x168] sm:$0xff]
    %v5152 = vld [vmem:[%s5105 + $0x170] sm:$0xff]
    %v5153 = vld [vmem:[%s5105 + $0x178] sm:$0xff]
    %v5202 = vunpack.c.l.b16 %v5106
    %v5203 = vunpack.c.h.b16 %v5106
    %v5204 = vunpack.c.l.b16 %v5107
    %v5205 = vunpack.c.h.b16 %v5107
    %v5206 = vunpack.c.l.b16 %v5108
    %v5207 = vunpack.c.h.b16 %v5108
    %v5208 = vunpack.c.l.b16 %v5109
    %v5209 = vunpack.c.h.b16 %v5109
    %v5210 = vunpack.c.l.b16 %v5110
    %v5211 = vunpack.c.h.b16 %v5110
    %v5212 = vunpack.c.l.b16 %v5111
    %v5213 = vunpack.c.h.b16 %v5111
    %v5214 = vunpack.c.l.b16 %v5112
    %v5215 = vunpack.c.h.b16 %v5112
    %v5216 = vunpack.c.l.b16 %v5113
    %v5217 = vunpack.c.h.b16 %v5113
    %v5218 = vunpack.c.l.b16 %v5114
    %v5219 = vunpack.c.h.b16 %v5114
    %v5220 = vunpack.c.l.b16 %v5115
    %v5221 = vunpack.c.h.b16 %v5115
    %v5222 = vunpack.c.l.b16 %v5116
    %v5223 = vunpack.c.h.b16 %v5116
    %v5224 = vunpack.c.l.b16 %v5117
    %v5225 = vunpack.c.h.b16 %v5117
    %v5226 = vunpack.c.l.b16 %v5118
    %v5227 = vunpack.c.h.b16 %v5118
    %v5228 = vunpack.c.l.b16 %v5119
    %v5229 = vunpack.c.h.b16 %v5119
    %v5230 = vunpack.c.l.b16 %v5120
    %v5231 = vunpack.c.h.b16 %v5120
    %v5232 = vunpack.c.l.b16 %v5121
    %v5233 = vunpack.c.h.b16 %v5121
    %v5234 = vunpack.c.l.b16 %v5122
    %v5235 = vunpack.c.h.b16 %v5122
    %v5236 = vunpack.c.l.b16 %v5123
    %v5237 = vunpack.c.h.b16 %v5123
    %v5238 = vunpack.c.l.b16 %v5124
    %v5239 = vunpack.c.h.b16 %v5124
    %v5240 = vunpack.c.l.b16 %v5125
    %v5241 = vunpack.c.h.b16 %v5125
    %v5242 = vunpack.c.l.b16 %v5126
    %v5243 = vunpack.c.h.b16 %v5126
    %v5244 = vunpack.c.l.b16 %v5127
    %v5245 = vunpack.c.h.b16 %v5127
    %v5246 = vunpack.c.l.b16 %v5128
    %v5247 = vunpack.c.h.b16 %v5128
    %v5248 = vunpack.c.l.b16 %v5129
    %v5249 = vunpack.c.h.b16 %v5129
    %v5250 = vunpack.c.l.b16 %v5130
    %v5251 = vunpack.c.h.b16 %v5130
    %v5252 = vunpack.c.l.b16 %v5131
    %v5253 = vunpack.c.h.b16 %v5131
    %v5254 = vunpack.c.l.b16 %v5132
    %v5255 = vunpack.c.h.b16 %v5132
    %v5256 = vunpack.c.l.b16 %v5133
    %v5257 = vunpack.c.h.b16 %v5133
    %v5258 = vunpack.c.l.b16 %v5134
    %v5259 = vunpack.c.h.b16 %v5134
    %v5260 = vunpack.c.l.b16 %v5135
    %v5261 = vunpack.c.h.b16 %v5135
    %v5262 = vunpack.c.l.b16 %v5136
    %v5263 = vunpack.c.h.b16 %v5136
    %v5264 = vunpack.c.l.b16 %v5137
    %v5265 = vunpack.c.h.b16 %v5137
    %v5266 = vunpack.c.l.b16 %v5138
    %v5267 = vunpack.c.h.b16 %v5138
    %v5268 = vunpack.c.l.b16 %v5139
    %v5269 = vunpack.c.h.b16 %v5139
    %v5270 = vunpack.c.l.b16 %v5140
    %v5271 = vunpack.c.h.b16 %v5140
    %v5272 = vunpack.c.l.b16 %v5141
    %v5273 = vunpack.c.h.b16 %v5141
    %v5274 = vunpack.c.l.b16 %v5142
    %v5275 = vunpack.c.h.b16 %v5142
    %v5276 = vunpack.c.l.b16 %v5143
    %v5277 = vunpack.c.h.b16 %v5143
    %v5278 = vunpack.c.l.b16 %v5144
    %v5279 = vunpack.c.h.b16 %v5144
    %v5280 = vunpack.c.l.b16 %v5145
    %v5281 = vunpack.c.h.b16 %v5145
    %v5282 = vunpack.c.l.b16 %v5146
    %v5283 = vunpack.c.h.b16 %v5146
    %v5284 = vunpack.c.l.b16 %v5147
    %v5285 = vunpack.c.h.b16 %v5147
    %v5286 = vunpack.c.l.b16 %v5148
    %v5287 = vunpack.c.h.b16 %v5148
    %v5288 = vunpack.c.l.b16 %v5149
    %v5289 = vunpack.c.h.b16 %v5149
    %v5290 = vunpack.c.l.b16 %v5150
    %v5291 = vunpack.c.h.b16 %v5150
    %v5292 = vunpack.c.l.b16 %v5151
    %v5293 = vunpack.c.h.b16 %v5151
    %v5294 = vunpack.c.l.b16 %v5152
    %v5295 = vunpack.c.h.b16 %v5152
    %v5296 = vunpack.c.l.b16 %v5153
    %v5297 = vunpack.c.h.b16 %v5153
    %v5298 = vpack.c.b16 %v5204, %v5202
    %v5299 = vpack.c.b16 %v5205, %v5203
    %v5300 = vpack.c.b16 %v5208, %v5206
    %v5301 = vpack.c.b16 %v5209, %v5207
    %v5302 = vpack.c.b16 %v5212, %v5210
    %v5303 = vpack.c.b16 %v5213, %v5211
    %v5304 = vpack.c.b16 %v5216, %v5214
    %v5305 = vpack.c.b16 %v5217, %v5215
    %v5306 = vpack.c.b16 %v5220, %v5218
    %v5307 = vpack.c.b16 %v5221, %v5219
    %v5308 = vpack.c.b16 %v5224, %v5222
    %v5309 = vpack.c.b16 %v5225, %v5223
    %v5310 = vpack.c.b16 %v5228, %v5226
    %v5311 = vpack.c.b16 %v5229, %v5227
    %v5312 = vpack.c.b16 %v5232, %v5230
    %v5313 = vpack.c.b16 %v5233, %v5231
    %v5314 = vpack.c.b16 %v5236, %v5234
    %v5315 = vpack.c.b16 %v5237, %v5235
    %v5316 = vpack.c.b16 %v5240, %v5238
    %v5317 = vpack.c.b16 %v5241, %v5239
    %v5318 = vpack.c.b16 %v5244, %v5242
    %v5319 = vpack.c.b16 %v5245, %v5243
    %v5320 = vpack.c.b16 %v5248, %v5246
    %v5321 = vpack.c.b16 %v5249, %v5247
    %v5322 = vpack.c.b16 %v5252, %v5250
    %v5323 = vpack.c.b16 %v5253, %v5251
    %v5324 = vpack.c.b16 %v5256, %v5254
    %v5325 = vpack.c.b16 %v5257, %v5255
    %v5326 = vpack.c.b16 %v5260, %v5258
    %v5327 = vpack.c.b16 %v5261, %v5259
    %v5328 = vpack.c.b16 %v5264, %v5262
    %v5329 = vpack.c.b16 %v5265, %v5263
    %v5330 = vpack.c.b16 %v5268, %v5266
    %v5331 = vpack.c.b16 %v5269, %v5267
    %v5332 = vpack.c.b16 %v5272, %v5270
    %v5333 = vpack.c.b16 %v5273, %v5271
    %v5334 = vpack.c.b16 %v5276, %v5274
    %v5335 = vpack.c.b16 %v5277, %v5275
    %v5336 = vpack.c.b16 %v5280, %v5278
    %v5337 = vpack.c.b16 %v5281, %v5279
    %v5338 = vpack.c.b16 %v5284, %v5282
    %v5339 = vpack.c.b16 %v5285, %v5283
    %v5340 = vpack.c.b16 %v5288, %v5286
    %v5341 = vpack.c.b16 %v5289, %v5287
    %v5342 = vpack.c.b16 %v5292, %v5290
    %v5343 = vpack.c.b16 %v5293, %v5291
    %v5344 = vpack.c.b16 %v5296, %v5294
    %v5345 = vpack.c.b16 %v5297, %v5295
    %5394 = vmatpush.bf16.msra.mxu0 %v5312
    %5395 = vmatpush.bf16.msra.mxu0 %v5310
    %5396 = vmatpush.bf16.msra.mxu0 %v5308
    %5397 = vmatpush.bf16.msra.mxu0 %v5306
    %5398 = vmatpush.bf16.msra.mxu0 %v5304
    %5399 = vmatpush.bf16.msra.mxu0 %v5302
    %5400 = vmatpush.bf16.msra.mxu0 %v5300
    %5401 = vmatpush.bf16.msra.mxu0 %v5298
    %5402 = vmatmul.bf16.gmra.mxu0 %v5093
    %v5403 = vpop.f32.mrf.mxu0
    %v5404 = vadd.f32 0.0, %v5403
    %v5405 = vpop.f32.mrf.mxu0
    %v5406 = vadd.f32 0.0, %v5405
    %5407 = vmatmul.bf16.gmra.mxu0 %v5096
    %v5408 = vpop.f32.mrf.mxu0
    %v5409 = vadd.f32 0.0, %v5408
    %v5410 = vpop.f32.mrf.mxu0
    %v5411 = vadd.f32 0.0, %v5410
    %5412 = vmatmul.bf16.gmra.mxu0 %v5099
    %v5413 = vpop.f32.mrf.mxu0
    %v5414 = vadd.f32 0.0, %v5413
    %v5415 = vpop.f32.mrf.mxu0
    %v5416 = vadd.f32 0.0, %v5415
    %5417 = vmatmul.bf16.gmra.mxu0 %v5102
    %v5418 = vpop.f32.mrf.mxu0
    %v5419 = vadd.f32 0.0, %v5418
    %v5420 = vpop.f32.mrf.mxu0
    %v5421 = vadd.f32 0.0, %v5420
    %5422 = vdwg.mxu0
    %5423 = vmatpush.bf16.msra.mxu0 %v5328
    %5424 = vmatpush.bf16.msra.mxu0 %v5326
    %5425 = vmatpush.bf16.msra.mxu0 %v5324
    %5426 = vmatpush.bf16.msra.mxu0 %v5322
    %5427 = vmatpush.bf16.msra.mxu0 %v5320
    %5428 = vmatpush.bf16.msra.mxu0 %v5318
    %5429 = vmatpush.bf16.msra.mxu0 %v5316
    %5430 = vmatpush.bf16.msra.mxu0 %v5314
    %5431 = vmatmul.bf16.gmra.mxu0 %v5094
    %v5432 = vpop.f32.mrf.mxu0
    %v5433 = vadd.f32 %v5404, %v5432
    %v5434 = vpop.f32.mrf.mxu0
    %v5435 = vadd.f32 %v5406, %v5434
    %5436 = vmatmul.bf16.gmra.mxu0 %v5097
    %v5437 = vpop.f32.mrf.mxu0
    %v5438 = vadd.f32 %v5409, %v5437
    %v5439 = vpop.f32.mrf.mxu0
    %v5440 = vadd.f32 %v5411, %v5439
    %5441 = vmatmul.bf16.gmra.mxu0 %v5100
    %v5442 = vpop.f32.mrf.mxu0
    %v5443 = vadd.f32 %v5414, %v5442
    %v5444 = vpop.f32.mrf.mxu0
    %v5445 = vadd.f32 %v5416, %v5444
    %5446 = vmatmul.bf16.gmra.mxu0 %v5103
    %v5447 = vpop.f32.mrf.mxu0
    %v5448 = vadd.f32 %v5419, %v5447
    %v5449 = vpop.f32.mrf.mxu0
    %v5450 = vadd.f32 %v5421, %v5449
    %5451 = vdwg.mxu0
    %5452 = vmatpush.bf16.msra.mxu0 %v5344
    %5453 = vmatpush.bf16.msra.mxu0 %v5342
    %5454 = vmatpush.bf16.msra.mxu0 %v5340
    %5455 = vmatpush.bf16.msra.mxu0 %v5338
    %5456 = vmatpush.bf16.msra.mxu0 %v5336
    %5457 = vmatpush.bf16.msra.mxu0 %v5334
    %5458 = vmatpush.bf16.msra.mxu0 %v5332
    %5459 = vmatpush.bf16.msra.mxu0 %v5330
    %5460 = vmatmul.bf16.gmra.mxu0 %v5095
    %v5461 = vpop.f32.mrf.mxu0
    %v5462 = vadd.f32 %v5433, %v5461
    %v5463 = vpop.f32.mrf.mxu0
    %v5464 = vadd.f32 %v5435, %v5463
    %5465 = vmatmul.bf16.gmra.mxu0 %v5098
    %v5466 = vpop.f32.mrf.mxu0
    %v5467 = vadd.f32 %v5438, %v5466
    %v5468 = vpop.f32.mrf.mxu0
    %v5469 = vadd.f32 %v5440, %v5468
    %5470 = vmatmul.bf16.gmra.mxu0 %v5101
    %v5471 = vpop.f32.mrf.mxu0
    %v5472 = vadd.f32 %v5443, %v5471
    %v5473 = vpop.f32.mrf.mxu0
    %v5474 = vadd.f32 %v5445, %v5473
    %5475 = vmatmul.bf16.gmra.mxu0 %v5104
    %v5476 = vpop.f32.mrf.mxu0
    %v5477 = vadd.f32 %v5448, %v5476
    %v5478 = vpop.f32.mrf.mxu0
    %v5479 = vadd.f32 %v5450, %v5478
    %5480 = vdwg.mxu0
    %5481 = vmatpush.bf16.msra.mxu0 %v5313
    %5482 = vmatpush.bf16.msra.mxu0 %v5311
    %5483 = vmatpush.bf16.msra.mxu0 %v5309
    %5484 = vmatpush.bf16.msra.mxu0 %v5307
    %5485 = vmatpush.bf16.msra.mxu0 %v5305
    %5486 = vmatpush.bf16.msra.mxu0 %v5303
    %5487 = vmatpush.bf16.msra.mxu0 %v5301
    %5488 = vmatpush.bf16.msra.mxu0 %v5299
    %5489 = vmatmul.bf16.gmra.mxu0 %v5093
    %v5490 = vpop.f32.mrf.mxu0
    %v5491 = vadd.f32 0.0, %v5490
    %v5492 = vpop.f32.mrf.mxu0
    %v5493 = vadd.f32 0.0, %v5492
    %5494 = vmatmul.bf16.gmra.mxu0 %v5096
    %v5495 = vpop.f32.mrf.mxu0
    %v5496 = vadd.f32 0.0, %v5495
    %v5497 = vpop.f32.mrf.mxu0
    %v5498 = vadd.f32 0.0, %v5497
    %5499 = vmatmul.bf16.gmra.mxu0 %v5099
    %v5500 = vpop.f32.mrf.mxu0
    %v5501 = vadd.f32 0.0, %v5500
    %v5502 = vpop.f32.mrf.mxu0
    %v5503 = vadd.f32 0.0, %v5502
    %5504 = vmatmul.bf16.gmra.mxu0 %v5102
    %v5505 = vpop.f32.mrf.mxu0
    %v5506 = vadd.f32 0.0, %v5505
    %v5507 = vpop.f32.mrf.mxu0
    %v5508 = vadd.f32 0.0, %v5507
    %5509 = vdwg.mxu0
    %5510 = vmatpush.bf16.msra.mxu0 %v5329
    %5511 = vmatpush.bf16.msra.mxu0 %v5327
    %5512 = vmatpush.bf16.msra.mxu0 %v5325
    %5513 = vmatpush.bf16.msra.mxu0 %v5323
    %5514 = vmatpush.bf16.msra.mxu0 %v5321
    %5515 = vmatpush.bf16.msra.mxu0 %v5319
    %5516 = vmatpush.bf16.msra.mxu0 %v5317
    %5517 = vmatpush.bf16.msra.mxu0 %v5315
    %5518 = vmatmul.bf16.gmra.mxu0 %v5094
    %v5519 = vpop.f32.mrf.mxu0
    %v5520 = vadd.f32 %v5491, %v5519
    %v5521 = vpop.f32.mrf.mxu0
    %v5522 = vadd.f32 %v5493, %v5521
    %5523 = vmatmul.bf16.gmra.mxu0 %v5097
    %v5524 = vpop.f32.mrf.mxu0
    %v5525 = vadd.f32 %v5496, %v5524
    %v5526 = vpop.f32.mrf.mxu0
    %v5527 = vadd.f32 %v5498, %v5526
    %5528 = vmatmul.bf16.gmra.mxu0 %v5100
    %v5529 = vpop.f32.mrf.mxu0
    %v5530 = vadd.f32 %v5501, %v5529
    %v5531 = vpop.f32.mrf.mxu0
    %v5532 = vadd.f32 %v5503, %v5531
    %5533 = vmatmul.bf16.gmra.mxu0 %v5103
    %v5534 = vpop.f32.mrf.mxu0
    %v5535 = vadd.f32 %v5506, %v5534
    %v5536 = vpop.f32.mrf.mxu0
    %v5537 = vadd.f32 %v5508, %v5536
    %5538 = vdwg.mxu0
    %5539 = vmatpush.bf16.msra.mxu0 %v5345
    %5540 = vmatpush.bf16.msra.mxu0 %v5343
    %5541 = vmatpush.bf16.msra.mxu0 %v5341
    %5542 = vmatpush.bf16.msra.mxu0 %v5339
    %5543 = vmatpush.bf16.msra.mxu0 %v5337
    %5544 = vmatpush.bf16.msra.mxu0 %v5335
    %5545 = vmatpush.bf16.msra.mxu0 %v5333
    %5546 = vmatpush.bf16.msra.mxu0 %v5331
    %5547 = vmatmul.bf16.gmra.mxu0 %v5095
    %v5548 = vpop.f32.mrf.mxu0
    %v5549 = vadd.f32 %v5520, %v5548
    %v5550 = vpop.f32.mrf.mxu0
    %v5551 = vadd.f32 %v5522, %v5550
    %5552 = vmatmul.bf16.gmra.mxu0 %v5098
    %v5553 = vpop.f32.mrf.mxu0
    %v5554 = vadd.f32 %v5525, %v5553
    %v5555 = vpop.f32.mrf.mxu0
    %v5556 = vadd.f32 %v5527, %v5555
    %5557 = vmatmul.bf16.gmra.mxu0 %v5101
    %v5558 = vpop.f32.mrf.mxu0
    %v5559 = vadd.f32 %v5530, %v5558
    %v5560 = vpop.f32.mrf.mxu0
    %v5561 = vadd.f32 %v5532, %v5560
    %5562 = vmatmul.bf16.gmra.mxu0 %v5104
    %v5563 = vpop.f32.mrf.mxu0
    %v5564 = vadd.f32 %v5535, %v5563
    %v5565 = vpop.f32.mrf.mxu0
    %v5566 = vadd.f32 %v5537, %v5565
    %5567 = vdwg.mxu0
    %v5568 = vadd.f32 %v5053, %v5462
    %v5569 = vadd.f32 %v5054, %v5549
    %v5570 = vadd.f32 %v5055, %v5464
    %v5571 = vadd.f32 %v5056, %v5551
    %v5572 = vadd.f32 %v5057, %v5467
    %v5573 = vadd.f32 %v5058, %v5554
    %v5574 = vadd.f32 %v5059, %v5469
    %v5575 = vadd.f32 %v5060, %v5556
    %v5576 = vadd.f32 %v5061, %v5472
    %v5577 = vadd.f32 %v5062, %v5559
    %v5578 = vadd.f32 %v5063, %v5474
    %v5579 = vadd.f32 %v5064, %v5561
    %v5580 = vadd.f32 %v5065, %v5477
    %v5581 = vadd.f32 %v5066, %v5564
    %v5582 = vadd.f32 %v5067, %v5479
    %v5583 = vadd.f32 %v5068, %v5566
    %v5584 = vld [vmem:[#allocation3 + $0x48] sm:$0xff]
    %v5585 = vld [vmem:[#allocation3 + $0x50] sm:$0xff]
    %v5586 = vld [vmem:[#allocation3 + $0x58] sm:$0xff]
    %v5587 = vld [vmem:[#allocation3 + $0x60] sm:$0xff]
    %v5588 = vld [vmem:[#allocation3 + $0x68] sm:$0xff]
    %v5589 = vld [vmem:[#allocation3 + $0x70] sm:$0xff]
    %v5590 = vld [vmem:[#allocation3 + $0x78] sm:$0xff]
    %v5591 = vld [vmem:[#allocation3 + $0x80] sm:$0xff]
    %v5592 = vld [vmem:[#allocation3 + $0x88] sm:$0xff]
    %v5593 = vld [vmem:[#allocation3 + $0x90] sm:$0xff]
    %v5594 = vld [vmem:[#allocation3 + $0x98] sm:$0xff]
    %v5595 = vld [vmem:[#allocation3 + $0xa0] sm:$0xff]
    %v5596 = vld [vmem:[#allocation3 + $0xa8] sm:$0xff]
    %v5597 = vld [vmem:[#allocation3 + $0xb0] sm:$0xff]
    %v5598 = vld [vmem:[#allocation3 + $0xb8] sm:$0xff]
    %v5599 = vld [vmem:[#allocation3 + $0xc0] sm:$0xff]
    %v5600 = vld [vmem:[#allocation3 + $0xc8] sm:$0xff]
    %v5601 = vld [vmem:[#allocation3 + $0xd0] sm:$0xff]
    %v5602 = vld [vmem:[#allocation3 + $0xd8] sm:$0xff]
    %v5603 = vld [vmem:[#allocation3 + $0xe0] sm:$0xff]
    %v5604 = vld [vmem:[#allocation3 + $0xe8] sm:$0xff]
    %v5605 = vld [vmem:[#allocation3 + $0xf0] sm:$0xff]
    %v5606 = vld [vmem:[#allocation3 + $0xf8] sm:$0xff]
    %v5607 = vld [vmem:[#allocation3 + $0x100] sm:$0xff]
    %v5608 = vpack.c.bf16 %v5587, %v5584
    %v5609 = vpack.c.bf16 %v5588, %v5585
    %v5610 = vpack.c.bf16 %v5589, %v5586
    %v5611 = vpack.c.bf16 %v5593, %v5590
    %v5612 = vpack.c.bf16 %v5594, %v5591
    %v5613 = vpack.c.bf16 %v5595, %v5592
    %v5614 = vpack.c.bf16 %v5599, %v5596
    %v5615 = vpack.c.bf16 %v5600, %v5597
    %v5616 = vpack.c.bf16 %v5601, %v5598
    %v5617 = vpack.c.bf16 %v5605, %v5602
    %v5618 = vpack.c.bf16 %v5606, %v5603
    %v5619 = vpack.c.bf16 %v5607, %v5604
    %s5620 = scalar_lea.vmem [#allocation4], 1152
    %v5621 = vld [vmem:[%s5620] sm:$0xff]
    %v5622 = vld [vmem:[%s5620 + $0x8] sm:$0xff]
    %v5623 = vld [vmem:[%s5620 + $0x10] sm:$0xff]
    %v5624 = vld [vmem:[%s5620 + $0x18] sm:$0xff]
    %v5625 = vld [vmem:[%s5620 + $0x20] sm:$0xff]
    %v5626 = vld [vmem:[%s5620 + $0x28] sm:$0xff]
    %v5627 = vld [vmem:[%s5620 + $0x30] sm:$0xff]
    %v5628 = vld [vmem:[%s5620 + $0x38] sm:$0xff]
    %v5629 = vld [vmem:[%s5620 + $0x40] sm:$0xff]
    %v5630 = vld [vmem:[%s5620 + $0x48] sm:$0xff]
    %v5631 = vld [vmem:[%s5620 + $0x50] sm:$0xff]
    %v5632 = vld [vmem:[%s5620 + $0x58] sm:$0xff]
    %v5633 = vld [vmem:[%s5620 + $0x60] sm:$0xff]
    %v5634 = vld [vmem:[%s5620 + $0x68] sm:$0xff]
    %v5635 = vld [vmem:[%s5620 + $0x70] sm:$0xff]
    %v5636 = vld [vmem:[%s5620 + $0x78] sm:$0xff]
    %v5637 = vld [vmem:[%s5620 + $0x80] sm:$0xff]
    %v5638 = vld [vmem:[%s5620 + $0x88] sm:$0xff]
    %v5639 = vld [vmem:[%s5620 + $0x90] sm:$0xff]
    %v5640 = vld [vmem:[%s5620 + $0x98] sm:$0xff]
    %v5641 = vld [vmem:[%s5620 + $0xa0] sm:$0xff]
    %v5642 = vld [vmem:[%s5620 + $0xa8] sm:$0xff]
    %v5643 = vld [vmem:[%s5620 + $0xb0] sm:$0xff]
    %v5644 = vld [vmem:[%s5620 + $0xb8] sm:$0xff]
    %v5645 = vld [vmem:[%s5620 + $0xc0] sm:$0xff]
    %v5646 = vld [vmem:[%s5620 + $0xc8] sm:$0xff]
    %v5647 = vld [vmem:[%s5620 + $0xd0] sm:$0xff]
    %v5648 = vld [vmem:[%s5620 + $0xd8] sm:$0xff]
    %v5649 = vld [vmem:[%s5620 + $0xe0] sm:$0xff]
    %v5650 = vld [vmem:[%s5620 + $0xe8] sm:$0xff]
    %v5651 = vld [vmem:[%s5620 + $0xf0] sm:$0xff]
    %v5652 = vld [vmem:[%s5620 + $0xf8] sm:$0xff]
    %v5653 = vld [vmem:[%s5620 + $0x100] sm:$0xff]
    %v5654 = vld [vmem:[%s5620 + $0x108] sm:$0xff]
    %v5655 = vld [vmem:[%s5620 + $0x110] sm:$0xff]
    %v5656 = vld [vmem:[%s5620 + $0x118] sm:$0xff]
    %v5657 = vld [vmem:[%s5620 + $0x120] sm:$0xff]
    %v5658 = vld [vmem:[%s5620 + $0x128] sm:$0xff]
    %v5659 = vld [vmem:[%s5620 + $0x130] sm:$0xff]
    %v5660 = vld [vmem:[%s5620 + $0x138] sm:$0xff]
    %v5661 = vld [vmem:[%s5620 + $0x140] sm:$0xff]
    %v5662 = vld [vmem:[%s5620 + $0x148] sm:$0xff]
    %v5663 = vld [vmem:[%s5620 + $0x150] sm:$0xff]
    %v5664 = vld [vmem:[%s5620 + $0x158] sm:$0xff]
    %v5665 = vld [vmem:[%s5620 + $0x160] sm:$0xff]
    %v5666 = vld [vmem:[%s5620 + $0x168] sm:$0xff]
    %v5667 = vld [vmem:[%s5620 + $0x170] sm:$0xff]
    %v5668 = vld [vmem:[%s5620 + $0x178] sm:$0xff]
    %v5717 = vunpack.c.l.b16 %v5621
    %v5718 = vunpack.c.h.b16 %v5621
    %v5719 = vunpack.c.l.b16 %v5622
    %v5720 = vunpack.c.h.b16 %v5622
    %v5721 = vunpack.c.l.b16 %v5623
    %v5722 = vunpack.c.h.b16 %v5623
    %v5723 = vunpack.c.l.b16 %v5624
    %v5724 = vunpack.c.h.b16 %v5624
    %v5725 = vunpack.c.l.b16 %v5625
    %v5726 = vunpack.c.h.b16 %v5625
    %v5727 = vunpack.c.l.b16 %v5626
    %v5728 = vunpack.c.h.b16 %v5626
    %v5729 = vunpack.c.l.b16 %v5627
    %v5730 = vunpack.c.h.b16 %v5627
    %v5731 = vunpack.c.l.b16 %v5628
    %v5732 = vunpack.c.h.b16 %v5628
    %v5733 = vunpack.c.l.b16 %v5629
    %v5734 = vunpack.c.h.b16 %v5629
    %v5735 = vunpack.c.l.b16 %v5630
    %v5736 = vunpack.c.h.b16 %v5630
    %v5737 = vunpack.c.l.b16 %v5631
    %v5738 = vunpack.c.h.b16 %v5631
    %v5739 = vunpack.c.l.b16 %v5632
    %v5740 = vunpack.c.h.b16 %v5632
    %v5741 = vunpack.c.l.b16 %v5633
    %v5742 = vunpack.c.h.b16 %v5633
    %v5743 = vunpack.c.l.b16 %v5634
    %v5744 = vunpack.c.h.b16 %v5634
    %v5745 = vunpack.c.l.b16 %v5635
    %v5746 = vunpack.c.h.b16 %v5635
    %v5747 = vunpack.c.l.b16 %v5636
    %v5748 = vunpack.c.h.b16 %v5636
    %v5749 = vunpack.c.l.b16 %v5637
    %v5750 = vunpack.c.h.b16 %v5637
    %v5751 = vunpack.c.l.b16 %v5638
    %v5752 = vunpack.c.h.b16 %v5638
    %v5753 = vunpack.c.l.b16 %v5639
    %v5754 = vunpack.c.h.b16 %v5639
    %v5755 = vunpack.c.l.b16 %v5640
    %v5756 = vunpack.c.h.b16 %v5640
    %v5757 = vunpack.c.l.b16 %v5641
    %v5758 = vunpack.c.h.b16 %v5641
    %v5759 = vunpack.c.l.b16 %v5642
    %v5760 = vunpack.c.h.b16 %v5642
    %v5761 = vunpack.c.l.b16 %v5643
    %v5762 = vunpack.c.h.b16 %v5643
    %v5763 = vunpack.c.l.b16 %v5644
    %v5764 = vunpack.c.h.b16 %v5644
    %v5765 = vunpack.c.l.b16 %v5645
    %v5766 = vunpack.c.h.b16 %v5645
    %v5767 = vunpack.c.l.b16 %v5646
    %v5768 = vunpack.c.h.b16 %v5646
    %v5769 = vunpack.c.l.b16 %v5647
    %v5770 = vunpack.c.h.b16 %v5647
    %v5771 = vunpack.c.l.b16 %v5648
    %v5772 = vunpack.c.h.b16 %v5648
    %v5773 = vunpack.c.l.b16 %v5649
    %v5774 = vunpack.c.h.b16 %v5649
    %v5775 = vunpack.c.l.b16 %v5650
    %v5776 = vunpack.c.h.b16 %v5650
    %v5777 = vunpack.c.l.b16 %v5651
    %v5778 = vunpack.c.h.b16 %v5651
    %v5779 = vunpack.c.l.b16 %v5652
    %v5780 = vunpack.c.h.b16 %v5652
    %v5781 = vunpack.c.l.b16 %v5653
    %v5782 = vunpack.c.h.b16 %v5653
    %v5783 = vunpack.c.l.b16 %v5654
    %v5784 = vunpack.c.h.b16 %v5654
    %v5785 = vunpack.c.l.b16 %v5655
    %v5786 = vunpack.c.h.b16 %v5655
    %v5787 = vunpack.c.l.b16 %v5656
    %v5788 = vunpack.c.h.b16 %v5656
    %v5789 = vunpack.c.l.b16 %v5657
    %v5790 = vunpack.c.h.b16 %v5657
    %v5791 = vunpack.c.l.b16 %v5658
    %v5792 = vunpack.c.h.b16 %v5658
    %v5793 = vunpack.c.l.b16 %v5659
    %v5794 = vunpack.c.h.b16 %v5659
    %v5795 = vunpack.c.l.b16 %v5660
    %v5796 = vunpack.c.h.b16 %v5660
    %v5797 = vunpack.c.l.b16 %v5661
    %v5798 = vunpack.c.h.b16 %v5661
    %v5799 = vunpack.c.l.b16 %v5662
    %v5800 = vunpack.c.h.b16 %v5662
    %v5801 = vunpack.c.l.b16 %v5663
    %v5802 = vunpack.c.h.b16 %v5663
    %v5803 = vunpack.c.l.b16 %v5664
    %v5804 = vunpack.c.h.b16 %v5664
    %v5805 = vunpack.c.l.b16 %v5665
    %v5806 = vunpack.c.h.b16 %v5665
    %v5807 = vunpack.c.l.b16 %v5666
    %v5808 = vunpack.c.h.b16 %v5666
    %v5809 = vunpack.c.l.b16 %v5667
    %v5810 = vunpack.c.h.b16 %v5667
    %v5811 = vunpack.c.l.b16 %v5668
    %v5812 = vunpack.c.h.b16 %v5668
    %v5813 = vpack.c.b16 %v5719, %v5717
    %v5814 = vpack.c.b16 %v5720, %v5718
    %v5815 = vpack.c.b16 %v5723, %v5721
    %v5816 = vpack.c.b16 %v5724, %v5722
    %v5817 = vpack.c.b16 %v5727, %v5725
    %v5818 = vpack.c.b16 %v5728, %v5726
    %v5819 = vpack.c.b16 %v5731, %v5729
    %v5820 = vpack.c.b16 %v5732, %v5730
    %v5821 = vpack.c.b16 %v5735, %v5733
    %v5822 = vpack.c.b16 %v5736, %v5734
    %v5823 = vpack.c.b16 %v5739, %v5737
    %v5824 = vpack.c.b16 %v5740, %v5738
    %v5825 = vpack.c.b16 %v5743, %v5741
    %v5826 = vpack.c.b16 %v5744, %v5742
    %v5827 = vpack.c.b16 %v5747, %v5745
    %v5828 = vpack.c.b16 %v5748, %v5746
    %v5829 = vpack.c.b16 %v5751, %v5749
    %v5830 = vpack.c.b16 %v5752, %v5750
    %v5831 = vpack.c.b16 %v5755, %v5753
    %v5832 = vpack.c.b16 %v5756, %v5754
    %v5833 = vpack.c.b16 %v5759, %v5757
    %v5834 = vpack.c.b16 %v5760, %v5758
    %v5835 = vpack.c.b16 %v5763, %v5761
    %v5836 = vpack.c.b16 %v5764, %v5762
    %v5837 = vpack.c.b16 %v5767, %v5765
    %v5838 = vpack.c.b16 %v5768, %v5766
    %v5839 = vpack.c.b16 %v5771, %v5769
    %v5840 = vpack.c.b16 %v5772, %v5770
    %v5841 = vpack.c.b16 %v5775, %v5773
    %v5842 = vpack.c.b16 %v5776, %v5774
    %v5843 = vpack.c.b16 %v5779, %v5777
    %v5844 = vpack.c.b16 %v5780, %v5778
    %v5845 = vpack.c.b16 %v5783, %v5781
    %v5846 = vpack.c.b16 %v5784, %v5782
    %v5847 = vpack.c.b16 %v5787, %v5785
    %v5848 = vpack.c.b16 %v5788, %v5786
    %v5849 = vpack.c.b16 %v5791, %v5789
    %v5850 = vpack.c.b16 %v5792, %v5790
    %v5851 = vpack.c.b16 %v5795, %v5793
    %v5852 = vpack.c.b16 %v5796, %v5794
    %v5853 = vpack.c.b16 %v5799, %v5797
    %v5854 = vpack.c.b16 %v5800, %v5798
    %v5855 = vpack.c.b16 %v5803, %v5801
    %v5856 = vpack.c.b16 %v5804, %v5802
    %v5857 = vpack.c.b16 %v5807, %v5805
    %v5858 = vpack.c.b16 %v5808, %v5806
    %v5859 = vpack.c.b16 %v5811, %v5809
    %v5860 = vpack.c.b16 %v5812, %v5810
    %5909 = vmatpush.bf16.msra.mxu0 %v5827
    %5910 = vmatpush.bf16.msra.mxu0 %v5825
    %5911 = vmatpush.bf16.msra.mxu0 %v5823
    %5912 = vmatpush.bf16.msra.mxu0 %v5821
    %5913 = vmatpush.bf16.msra.mxu0 %v5819
    %5914 = vmatpush.bf16.msra.mxu0 %v5817
    %5915 = vmatpush.bf16.msra.mxu0 %v5815
    %5916 = vmatpush.bf16.msra.mxu0 %v5813
    %5917 = vmatmul.bf16.gmra.mxu0 %v5608
    %v5918 = vpop.f32.mrf.mxu0
    %v5919 = vadd.f32 0.0, %v5918
    %v5920 = vpop.f32.mrf.mxu0
    %v5921 = vadd.f32 0.0, %v5920
    %5922 = vmatmul.bf16.gmra.mxu0 %v5611
    %v5923 = vpop.f32.mrf.mxu0
    %v5924 = vadd.f32 0.0, %v5923
    %v5925 = vpop.f32.mrf.mxu0
    %v5926 = vadd.f32 0.0, %v5925
    %5927 = vmatmul.bf16.gmra.mxu0 %v5614
    %v5928 = vpop.f32.mrf.mxu0
    %v5929 = vadd.f32 0.0, %v5928
    %v5930 = vpop.f32.mrf.mxu0
    %v5931 = vadd.f32 0.0, %v5930
    %5932 = vmatmul.bf16.gmra.mxu0 %v5617
    %v5933 = vpop.f32.mrf.mxu0
    %v5934 = vadd.f32 0.0, %v5933
    %v5935 = vpop.f32.mrf.mxu0
    %v5936 = vadd.f32 0.0, %v5935
    %5937 = vdwg.mxu0
    %5938 = vmatpush.bf16.msra.mxu0 %v5843
    %5939 = vmatpush.bf16.msra.mxu0 %v5841
    %5940 = vmatpush.bf16.msra.mxu0 %v5839
    %5941 = vmatpush.bf16.msra.mxu0 %v5837
    %5942 = vmatpush.bf16.msra.mxu0 %v5835
    %5943 = vmatpush.bf16.msra.mxu0 %v5833
    %5944 = vmatpush.bf16.msra.mxu0 %v5831
    %5945 = vmatpush.bf16.msra.mxu0 %v5829
    %5946 = vmatmul.bf16.gmra.mxu0 %v5609
    %v5947 = vpop.f32.mrf.mxu0
    %v5948 = vadd.f32 %v5919, %v5947
    %v5949 = vpop.f32.mrf.mxu0
    %v5950 = vadd.f32 %v5921, %v5949
    %5951 = vmatmul.bf16.gmra.mxu0 %v5612
    %v5952 = vpop.f32.mrf.mxu0
    %v5953 = vadd.f32 %v5924, %v5952
    %v5954 = vpop.f32.mrf.mxu0
    %v5955 = vadd.f32 %v5926, %v5954
    %5956 = vmatmul.bf16.gmra.mxu0 %v5615
    %v5957 = vpop.f32.mrf.mxu0
    %v5958 = vadd.f32 %v5929, %v5957
    %v5959 = vpop.f32.mrf.mxu0
    %v5960 = vadd.f32 %v5931, %v5959
    %5961 = vmatmul.bf16.gmra.mxu0 %v5618
    %v5962 = vpop.f32.mrf.mxu0
    %v5963 = vadd.f32 %v5934, %v5962
    %v5964 = vpop.f32.mrf.mxu0
    %v5965 = vadd.f32 %v5936, %v5964
    %5966 = vdwg.mxu0
    %5967 = vmatpush.bf16.msra.mxu0 %v5859
    %5968 = vmatpush.bf16.msra.mxu0 %v5857
    %5969 = vmatpush.bf16.msra.mxu0 %v5855
    %5970 = vmatpush.bf16.msra.mxu0 %v5853
    %5971 = vmatpush.bf16.msra.mxu0 %v5851
    %5972 = vmatpush.bf16.msra.mxu0 %v5849
    %5973 = vmatpush.bf16.msra.mxu0 %v5847
    %5974 = vmatpush.bf16.msra.mxu0 %v5845
    %5975 = vmatmul.bf16.gmra.mxu0 %v5610
    %v5976 = vpop.f32.mrf.mxu0
    %v5977 = vadd.f32 %v5948, %v5976
    %v5978 = vpop.f32.mrf.mxu0
    %v5979 = vadd.f32 %v5950, %v5978
    %5980 = vmatmul.bf16.gmra.mxu0 %v5613
    %v5981 = vpop.f32.mrf.mxu0
    %v5982 = vadd.f32 %v5953, %v5981
    %v5983 = vpop.f32.mrf.mxu0
    %v5984 = vadd.f32 %v5955, %v5983
    %5985 = vmatmul.bf16.gmra.mxu0 %v5616
    %v5986 = vpop.f32.mrf.mxu0
    %v5987 = vadd.f32 %v5958, %v5986
    %v5988 = vpop.f32.mrf.mxu0
    %v5989 = vadd.f32 %v5960, %v5988
    %5990 = vmatmul.bf16.gmra.mxu0 %v5619
    %v5991 = vpop.f32.mrf.mxu0
    %v5992 = vadd.f32 %v5963, %v5991
    %v5993 = vpop.f32.mrf.mxu0
    %v5994 = vadd.f32 %v5965, %v5993
    %5995 = vdwg.mxu0
    %5996 = vmatpush.bf16.msra.mxu0 %v5828
    %5997 = vmatpush.bf16.msra.mxu0 %v5826
    %5998 = vmatpush.bf16.msra.mxu0 %v5824
    %5999 = vmatpush.bf16.msra.mxu0 %v5822
    %6000 = vmatpush.bf16.msra.mxu0 %v5820
    %6001 = vmatpush.bf16.msra.mxu0 %v5818
    %6002 = vmatpush.bf16.msra.mxu0 %v5816
    %6003 = vmatpush.bf16.msra.mxu0 %v5814
    %6004 = vmatmul.bf16.gmra.mxu0 %v5608
    %v6005 = vpop.f32.mrf.mxu0
    %v6006 = vadd.f32 0.0, %v6005
    %v6007 = vpop.f32.mrf.mxu0
    %v6008 = vadd.f32 0.0, %v6007
    %6009 = vmatmul.bf16.gmra.mxu0 %v5611
    %v6010 = vpop.f32.mrf.mxu0
    %v6011 = vadd.f32 0.0, %v6010
    %v6012 = vpop.f32.mrf.mxu0
    %v6013 = vadd.f32 0.0, %v6012
    %6014 = vmatmul.bf16.gmra.mxu0 %v5614
    %v6015 = vpop.f32.mrf.mxu0
    %v6016 = vadd.f32 0.0, %v6015
    %v6017 = vpop.f32.mrf.mxu0
    %v6018 = vadd.f32 0.0, %v6017
    %6019 = vmatmul.bf16.gmra.mxu0 %v5617
    %v6020 = vpop.f32.mrf.mxu0
    %v6021 = vadd.f32 0.0, %v6020
    %v6022 = vpop.f32.mrf.mxu0
    %v6023 = vadd.f32 0.0, %v6022
    %6024 = vdwg.mxu0
    %6025 = vmatpush.bf16.msra.mxu0 %v5844
    %6026 = vmatpush.bf16.msra.mxu0 %v5842
    %6027 = vmatpush.bf16.msra.mxu0 %v5840
    %6028 = vmatpush.bf16.msra.mxu0 %v5838
    %6029 = vmatpush.bf16.msra.mxu0 %v5836
    %6030 = vmatpush.bf16.msra.mxu0 %v5834
    %6031 = vmatpush.bf16.msra.mxu0 %v5832
    %6032 = vmatpush.bf16.msra.mxu0 %v5830
    %6033 = vmatmul.bf16.gmra.mxu0 %v5609
    %v6034 = vpop.f32.mrf.mxu0
    %v6035 = vadd.f32 %v6006, %v6034
    %v6036 = vpop.f32.mrf.mxu0
    %v6037 = vadd.f32 %v6008, %v6036
    %6038 = vmatmul.bf16.gmra.mxu0 %v5612
    %v6039 = vpop.f32.mrf.mxu0
    %v6040 = vadd.f32 %v6011, %v6039
    %v6041 = vpop.f32.mrf.mxu0
    %v6042 = vadd.f32 %v6013, %v6041
    %6043 = vmatmul.bf16.gmra.mxu0 %v5615
    %v6044 = vpop.f32.mrf.mxu0
    %v6045 = vadd.f32 %v6016, %v6044
    %v6046 = vpop.f32.mrf.mxu0
    %v6047 = vadd.f32 %v6018, %v6046
    %6048 = vmatmul.bf16.gmra.mxu0 %v5618
    %v6049 = vpop.f32.mrf.mxu0
    %v6050 = vadd.f32 %v6021, %v6049
    %v6051 = vpop.f32.mrf.mxu0
    %v6052 = vadd.f32 %v6023, %v6051
    %6053 = vdwg.mxu0
    %6054 = vmatpush.bf16.msra.mxu0 %v5860
    %6055 = vmatpush.bf16.msra.mxu0 %v5858
    %6056 = vmatpush.bf16.msra.mxu0 %v5856
    %6057 = vmatpush.bf16.msra.mxu0 %v5854
    %6058 = vmatpush.bf16.msra.mxu0 %v5852
    %6059 = vmatpush.bf16.msra.mxu0 %v5850
    %6060 = vmatpush.bf16.msra.mxu0 %v5848
    %6061 = vmatpush.bf16.msra.mxu0 %v5846
    %6062 = vmatmul.bf16.gmra.mxu0 %v5610
    %v6063 = vpop.f32.mrf.mxu0
    %v6064 = vadd.f32 %v6035, %v6063
    %v6065 = vpop.f32.mrf.mxu0
    %v6066 = vadd.f32 %v6037, %v6065
    %6067 = vmatmul.bf16.gmra.mxu0 %v5613
    %v6068 = vpop.f32.mrf.mxu0
    %v6069 = vadd.f32 %v6040, %v6068
    %v6070 = vpop.f32.mrf.mxu0
    %v6071 = vadd.f32 %v6042, %v6070
    %6072 = vmatmul.bf16.gmra.mxu0 %v5616
    %v6073 = vpop.f32.mrf.mxu0
    %v6074 = vadd.f32 %v6045, %v6073
    %v6075 = vpop.f32.mrf.mxu0
    %v6076 = vadd.f32 %v6047, %v6075
    %6077 = vmatmul.bf16.gmra.mxu0 %v5619
    %v6078 = vpop.f32.mrf.mxu0
    %v6079 = vadd.f32 %v6050, %v6078
    %v6080 = vpop.f32.mrf.mxu0
    %v6081 = vadd.f32 %v6052, %v6080
    %6082 = vdwg.mxu0
    %v6083 = vadd.f32 %v5568, %v5977
    %v6084 = vadd.f32 %v5569, %v6064
    %v6085 = vadd.f32 %v5570, %v5979
    %v6086 = vadd.f32 %v5571, %v6066
    %v6087 = vadd.f32 %v5572, %v5982
    %v6088 = vadd.f32 %v5573, %v6069
    %v6089 = vadd.f32 %v5574, %v5984
    %v6090 = vadd.f32 %v5575, %v6071
    %v6091 = vadd.f32 %v5576, %v5987
    %v6092 = vadd.f32 %v5577, %v6074
    %v6093 = vadd.f32 %v5578, %v5989
    %v6094 = vadd.f32 %v5579, %v6076
    %v6095 = vadd.f32 %v5580, %v5992
    %v6096 = vadd.f32 %v5581, %v6079
    %v6097 = vadd.f32 %v5582, %v5994
    %v6098 = vadd.f32 %v5583, %v6081
    %v6099 = vld [vmem:[#allocation3 + $0x60] sm:$0xff]
    %v6100 = vld [vmem:[#allocation3 + $0x68] sm:$0xff]
    %v6101 = vld [vmem:[#allocation3 + $0x70] sm:$0xff]
    %v6102 = vld [vmem:[#allocation3 + $0x78] sm:$0xff]
    %v6103 = vld [vmem:[#allocation3 + $0x80] sm:$0xff]
    %v6104 = vld [vmem:[#allocation3 + $0x88] sm:$0xff]
    %v6105 = vld [vmem:[#allocation3 + $0x90] sm:$0xff]
    %v6106 = vld [vmem:[#allocation3 + $0x98] sm:$0xff]
    %v6107 = vld [vmem:[#allocation3 + $0xa0] sm:$0xff]
    %v6108 = vld [vmem:[#allocation3 + $0xa8] sm:$0xff]
    %v6109 = vld [vmem:[#allocation3 + $0xb0] sm:$0xff]
    %v6110 = vld [vmem:[#allocation3 + $0xb8] sm:$0xff]
    %v6111 = vld [vmem:[#allocation3 + $0xc0] sm:$0xff]
    %v6112 = vld [vmem:[#allocation3 + $0xc8] sm:$0xff]
    %v6113 = vld [vmem:[#allocation3 + $0xd0] sm:$0xff]
    %v6114 = vld [vmem:[#allocation3 + $0xd8] sm:$0xff]
    %v6115 = vld [vmem:[#allocation3 + $0xe0] sm:$0xff]
    %v6116 = vld [vmem:[#allocation3 + $0xe8] sm:$0xff]
    %v6117 = vld [vmem:[#allocation3 + $0xf0] sm:$0xff]
    %v6118 = vld [vmem:[#allocation3 + $0xf8] sm:$0xff]
    %v6119 = vld [vmem:[#allocation3 + $0x100] sm:$0xff]
    %v6120 = vld [vmem:[#allocation3 + $0x108] sm:$0xff]
    %v6121 = vld [vmem:[#allocation3 + $0x110] sm:$0xff]
    %v6122 = vld [vmem:[#allocation3 + $0x118] sm:$0xff]
    %v6123 = vpack.c.bf16 %v6102, %v6099
    %v6124 = vpack.c.bf16 %v6103, %v6100
    %v6125 = vpack.c.bf16 %v6104, %v6101
    %v6126 = vpack.c.bf16 %v6108, %v6105
    %v6127 = vpack.c.bf16 %v6109, %v6106
    %v6128 = vpack.c.bf16 %v6110, %v6107
    %v6129 = vpack.c.bf16 %v6114, %v6111
    %v6130 = vpack.c.bf16 %v6115, %v6112
    %v6131 = vpack.c.bf16 %v6116, %v6113
    %v6132 = vpack.c.bf16 %v6120, %v6117
    %v6133 = vpack.c.bf16 %v6121, %v6118
    %v6134 = vpack.c.bf16 %v6122, %v6119
    %s6135 = scalar_lea.vmem [#allocation4], 1536
    %v6136 = vld [vmem:[%s6135] sm:$0xff]
    %v6137 = vld [vmem:[%s6135 + $0x8] sm:$0xff]
    %v6138 = vld [vmem:[%s6135 + $0x10] sm:$0xff]
    %v6139 = vld [vmem:[%s6135 + $0x18] sm:$0xff]
    %v6140 = vld [vmem:[%s6135 + $0x20] sm:$0xff]
    %v6141 = vld [vmem:[%s6135 + $0x28] sm:$0xff]
    %v6142 = vld [vmem:[%s6135 + $0x30] sm:$0xff]
    %v6143 = vld [vmem:[%s6135 + $0x38] sm:$0xff]
    %v6144 = vld [vmem:[%s6135 + $0x40] sm:$0xff]
    %v6145 = vld [vmem:[%s6135 + $0x48] sm:$0xff]
    %v6146 = vld [vmem:[%s6135 + $0x50] sm:$0xff]
    %v6147 = vld [vmem:[%s6135 + $0x58] sm:$0xff]
    %v6148 = vld [vmem:[%s6135 + $0x60] sm:$0xff]
    %v6149 = vld [vmem:[%s6135 + $0x68] sm:$0xff]
    %v6150 = vld [vmem:[%s6135 + $0x70] sm:$0xff]
    %v6151 = vld [vmem:[%s6135 + $0x78] sm:$0xff]
    %v6152 = vld [vmem:[%s6135 + $0x80] sm:$0xff]
    %v6153 = vld [vmem:[%s6135 + $0x88] sm:$0xff]
    %v6154 = vld [vmem:[%s6135 + $0x90] sm:$0xff]
    %v6155 = vld [vmem:[%s6135 + $0x98] sm:$0xff]
    %v6156 = vld [vmem:[%s6135 + $0xa0] sm:$0xff]
    %v6157 = vld [vmem:[%s6135 + $0xa8] sm:$0xff]
    %v6158 = vld [vmem:[%s6135 + $0xb0] sm:$0xff]
    %v6159 = vld [vmem:[%s6135 + $0xb8] sm:$0xff]
    %v6160 = vld [vmem:[%s6135 + $0xc0] sm:$0xff]
    %v6161 = vld [vmem:[%s6135 + $0xc8] sm:$0xff]
    %v6162 = vld [vmem:[%s6135 + $0xd0] sm:$0xff]
    %v6163 = vld [vmem:[%s6135 + $0xd8] sm:$0xff]
    %v6164 = vld [vmem:[%s6135 + $0xe0] sm:$0xff]
    %v6165 = vld [vmem:[%s6135 + $0xe8] sm:$0xff]
    %v6166 = vld [vmem:[%s6135 + $0xf0] sm:$0xff]
    %v6167 = vld [vmem:[%s6135 + $0xf8] sm:$0xff]
    %v6168 = vld [vmem:[%s6135 + $0x100] sm:$0xff]
    %v6169 = vld [vmem:[%s6135 + $0x108] sm:$0xff]
    %v6170 = vld [vmem:[%s6135 + $0x110] sm:$0xff]
    %v6171 = vld [vmem:[%s6135 + $0x118] sm:$0xff]
    %v6172 = vld [vmem:[%s6135 + $0x120] sm:$0xff]
    %v6173 = vld [vmem:[%s6135 + $0x128] sm:$0xff]
    %v6174 = vld [vmem:[%s6135 + $0x130] sm:$0xff]
    %v6175 = vld [vmem:[%s6135 + $0x138] sm:$0xff]
    %v6176 = vld [vmem:[%s6135 + $0x140] sm:$0xff]
    %v6177 = vld [vmem:[%s6135 + $0x148] sm:$0xff]
    %v6178 = vld [vmem:[%s6135 + $0x150] sm:$0xff]
    %v6179 = vld [vmem:[%s6135 + $0x158] sm:$0xff]
    %v6180 = vld [vmem:[%s6135 + $0x160] sm:$0xff]
    %v6181 = vld [vmem:[%s6135 + $0x168] sm:$0xff]
    %v6182 = vld [vmem:[%s6135 + $0x170] sm:$0xff]
    %v6183 = vld [vmem:[%s6135 + $0x178] sm:$0xff]
    %v6232 = vunpack.c.l.b16 %v6136
    %v6233 = vunpack.c.h.b16 %v6136
    %v6234 = vunpack.c.l.b16 %v6137
    %v6235 = vunpack.c.h.b16 %v6137
    %v6236 = vunpack.c.l.b16 %v6138
    %v6237 = vunpack.c.h.b16 %v6138
    %v6238 = vunpack.c.l.b16 %v6139
    %v6239 = vunpack.c.h.b16 %v6139
    %v6240 = vunpack.c.l.b16 %v6140
    %v6241 = vunpack.c.h.b16 %v6140
    %v6242 = vunpack.c.l.b16 %v6141
    %v6243 = vunpack.c.h.b16 %v6141
    %v6244 = vunpack.c.l.b16 %v6142
    %v6245 = vunpack.c.h.b16 %v6142
    %v6246 = vunpack.c.l.b16 %v6143
    %v6247 = vunpack.c.h.b16 %v6143
    %v6248 = vunpack.c.l.b16 %v6144
    %v6249 = vunpack.c.h.b16 %v6144
    %v6250 = vunpack.c.l.b16 %v6145
    %v6251 = vunpack.c.h.b16 %v6145
    %v6252 = vunpack.c.l.b16 %v6146
    %v6253 = vunpack.c.h.b16 %v6146
    %v6254 = vunpack.c.l.b16 %v6147
    %v6255 = vunpack.c.h.b16 %v6147
    %v6256 = vunpack.c.l.b16 %v6148
    %v6257 = vunpack.c.h.b16 %v6148
    %v6258 = vunpack.c.l.b16 %v6149
    %v6259 = vunpack.c.h.b16 %v6149
    %v6260 = vunpack.c.l.b16 %v6150
    %v6261 = vunpack.c.h.b16 %v6150
    %v6262 = vunpack.c.l.b16 %v6151
    %v6263 = vunpack.c.h.b16 %v6151
    %v6264 = vunpack.c.l.b16 %v6152
    %v6265 = vunpack.c.h.b16 %v6152
    %v6266 = vunpack.c.l.b16 %v6153
    %v6267 = vunpack.c.h.b16 %v6153
    %v6268 = vunpack.c.l.b16 %v6154
    %v6269 = vunpack.c.h.b16 %v6154
    %v6270 = vunpack.c.l.b16 %v6155
    %v6271 = vunpack.c.h.b16 %v6155
    %v6272 = vunpack.c.l.b16 %v6156
    %v6273 = vunpack.c.h.b16 %v6156
    %v6274 = vunpack.c.l.b16 %v6157
    %v6275 = vunpack.c.h.b16 %v6157
    %v6276 = vunpack.c.l.b16 %v6158
    %v6277 = vunpack.c.h.b16 %v6158
    %v6278 = vunpack.c.l.b16 %v6159
    %v6279 = vunpack.c.h.b16 %v6159
    %v6280 = vunpack.c.l.b16 %v6160
    %v6281 = vunpack.c.h.b16 %v6160
    %v6282 = vunpack.c.l.b16 %v6161
    %v6283 = vunpack.c.h.b16 %v6161
    %v6284 = vunpack.c.l.b16 %v6162
    %v6285 = vunpack.c.h.b16 %v6162
    %v6286 = vunpack.c.l.b16 %v6163
    %v6287 = vunpack.c.h.b16 %v6163
    %v6288 = vunpack.c.l.b16 %v6164
    %v6289 = vunpack.c.h.b16 %v6164
    %v6290 = vunpack.c.l.b16 %v6165
    %v6291 = vunpack.c.h.b16 %v6165
    %v6292 = vunpack.c.l.b16 %v6166
    %v6293 = vunpack.c.h.b16 %v6166
    %v6294 = vunpack.c.l.b16 %v6167
    %v6295 = vunpack.c.h.b16 %v6167
    %v6296 = vunpack.c.l.b16 %v6168
    %v6297 = vunpack.c.h.b16 %v6168
    %v6298 = vunpack.c.l.b16 %v6169
    %v6299 = vunpack.c.h.b16 %v6169
    %v6300 = vunpack.c.l.b16 %v6170
    %v6301 = vunpack.c.h.b16 %v6170
    %v6302 = vunpack.c.l.b16 %v6171
    %v6303 = vunpack.c.h.b16 %v6171
    %v6304 = vunpack.c.l.b16 %v6172
    %v6305 = vunpack.c.h.b16 %v6172
    %v6306 = vunpack.c.l.b16 %v6173
    %v6307 = vunpack.c.h.b16 %v6173
    %v6308 = vunpack.c.l.b16 %v6174
    %v6309 = vunpack.c.h.b16 %v6174
    %v6310 = vunpack.c.l.b16 %v6175
    %v6311 = vunpack.c.h.b16 %v6175
    %v6312 = vunpack.c.l.b16 %v6176
    %v6313 = vunpack.c.h.b16 %v6176
    %v6314 = vunpack.c.l.b16 %v6177
    %v6315 = vunpack.c.h.b16 %v6177
    %v6316 = vunpack.c.l.b16 %v6178
    %v6317 = vunpack.c.h.b16 %v6178
    %v6318 = vunpack.c.l.b16 %v6179
    %v6319 = vunpack.c.h.b16 %v6179
    %v6320 = vunpack.c.l.b16 %v6180
    %v6321 = vunpack.c.h.b16 %v6180
    %v6322 = vunpack.c.l.b16 %v6181
    %v6323 = vunpack.c.h.b16 %v6181
    %v6324 = vunpack.c.l.b16 %v6182
    %v6325 = vunpack.c.h.b16 %v6182
    %v6326 = vunpack.c.l.b16 %v6183
    %v6327 = vunpack.c.h.b16 %v6183
    %v6328 = vpack.c.b16 %v6234, %v6232
    %v6329 = vpack.c.b16 %v6235, %v6233
    %v6330 = vpack.c.b16 %v6238, %v6236
    %v6331 = vpack.c.b16 %v6239, %v6237
    %v6332 = vpack.c.b16 %v6242, %v6240
    %v6333 = vpack.c.b16 %v6243, %v6241
    %v6334 = vpack.c.b16 %v6246, %v6244
    %v6335 = vpack.c.b16 %v6247, %v6245
    %v6336 = vpack.c.b16 %v6250, %v6248
    %v6337 = vpack.c.b16 %v6251, %v6249
    %v6338 = vpack.c.b16 %v6254, %v6252
    %v6339 = vpack.c.b16 %v6255, %v6253
    %v6340 = vpack.c.b16 %v6258, %v6256
    %v6341 = vpack.c.b16 %v6259, %v6257
    %v6342 = vpack.c.b16 %v6262, %v6260
    %v6343 = vpack.c.b16 %v6263, %v6261
    %v6344 = vpack.c.b16 %v6266, %v6264
    %v6345 = vpack.c.b16 %v6267, %v6265
    %v6346 = vpack.c.b16 %v6270, %v6268
    %v6347 = vpack.c.b16 %v6271, %v6269
    %v6348 = vpack.c.b16 %v6274, %v6272
    %v6349 = vpack.c.b16 %v6275, %v6273
    %v6350 = vpack.c.b16 %v6278, %v6276
    %v6351 = vpack.c.b16 %v6279, %v6277
    %v6352 = vpack.c.b16 %v6282, %v6280
    %v6353 = vpack.c.b16 %v6283, %v6281
    %v6354 = vpack.c.b16 %v6286, %v6284
    %v6355 = vpack.c.b16 %v6287, %v6285
    %v6356 = vpack.c.b16 %v6290, %v6288
    %v6357 = vpack.c.b16 %v6291, %v6289
    %v6358 = vpack.c.b16 %v6294, %v6292
    %v6359 = vpack.c.b16 %v6295, %v6293
    %v6360 = vpack.c.b16 %v6298, %v6296
    %v6361 = vpack.c.b16 %v6299, %v6297
    %v6362 = vpack.c.b16 %v6302, %v6300
    %v6363 = vpack.c.b16 %v6303, %v6301
    %v6364 = vpack.c.b16 %v6306, %v6304
    %v6365 = vpack.c.b16 %v6307, %v6305
    %v6366 = vpack.c.b16 %v6310, %v6308
    %v6367 = vpack.c.b16 %v6311, %v6309
    %v6368 = vpack.c.b16 %v6314, %v6312
    %v6369 = vpack.c.b16 %v6315, %v6313
    %v6370 = vpack.c.b16 %v6318, %v6316
    %v6371 = vpack.c.b16 %v6319, %v6317
    %v6372 = vpack.c.b16 %v6322, %v6320
    %v6373 = vpack.c.b16 %v6323, %v6321
    %v6374 = vpack.c.b16 %v6326, %v6324
    %v6375 = vpack.c.b16 %v6327, %v6325
    %6424 = vmatpush.bf16.msra.mxu0 %v6342
    %6425 = vmatpush.bf16.msra.mxu0 %v6340
    %6426 = vmatpush.bf16.msra.mxu0 %v6338
    %6427 = vmatpush.bf16.msra.mxu0 %v6336
    %6428 = vmatpush.bf16.msra.mxu0 %v6334
    %6429 = vmatpush.bf16.msra.mxu0 %v6332
    %6430 = vmatpush.bf16.msra.mxu0 %v6330
    %6431 = vmatpush.bf16.msra.mxu0 %v6328
    %6432 = vmatmul.bf16.gmra.mxu0 %v6123
    %v6433 = vpop.f32.mrf.mxu0
    %v6434 = vadd.f32 0.0, %v6433
    %v6435 = vpop.f32.mrf.mxu0
    %v6436 = vadd.f32 0.0, %v6435
    %6437 = vmatmul.bf16.gmra.mxu0 %v6126
    %v6438 = vpop.f32.mrf.mxu0
    %v6439 = vadd.f32 0.0, %v6438
    %v6440 = vpop.f32.mrf.mxu0
    %v6441 = vadd.f32 0.0, %v6440
    %6442 = vmatmul.bf16.gmra.mxu0 %v6129
    %v6443 = vpop.f32.mrf.mxu0
    %v6444 = vadd.f32 0.0, %v6443
    %v6445 = vpop.f32.mrf.mxu0
    %v6446 = vadd.f32 0.0, %v6445
    %6447 = vmatmul.bf16.gmra.mxu0 %v6132
    %v6448 = vpop.f32.mrf.mxu0
    %v6449 = vadd.f32 0.0, %v6448
    %v6450 = vpop.f32.mrf.mxu0
    %v6451 = vadd.f32 0.0, %v6450
    %6452 = vdwg.mxu0
    %6453 = vmatpush.bf16.msra.mxu0 %v6358
    %6454 = vmatpush.bf16.msra.mxu0 %v6356
    %6455 = vmatpush.bf16.msra.mxu0 %v6354
    %6456 = vmatpush.bf16.msra.mxu0 %v6352
    %6457 = vmatpush.bf16.msra.mxu0 %v6350
    %6458 = vmatpush.bf16.msra.mxu0 %v6348
    %6459 = vmatpush.bf16.msra.mxu0 %v6346
    %6460 = vmatpush.bf16.msra.mxu0 %v6344
    %6461 = vmatmul.bf16.gmra.mxu0 %v6124
    %v6462 = vpop.f32.mrf.mxu0
    %v6463 = vadd.f32 %v6434, %v6462
    %v6464 = vpop.f32.mrf.mxu0
    %v6465 = vadd.f32 %v6436, %v6464
    %6466 = vmatmul.bf16.gmra.mxu0 %v6127
    %v6467 = vpop.f32.mrf.mxu0
    %v6468 = vadd.f32 %v6439, %v6467
    %v6469 = vpop.f32.mrf.mxu0
    %v6470 = vadd.f32 %v6441, %v6469
    %6471 = vmatmul.bf16.gmra.mxu0 %v6130
    %v6472 = vpop.f32.mrf.mxu0
    %v6473 = vadd.f32 %v6444, %v6472
    %v6474 = vpop.f32.mrf.mxu0
    %v6475 = vadd.f32 %v6446, %v6474
    %6476 = vmatmul.bf16.gmra.mxu0 %v6133
    %v6477 = vpop.f32.mrf.mxu0
    %v6478 = vadd.f32 %v6449, %v6477
    %v6479 = vpop.f32.mrf.mxu0
    %v6480 = vadd.f32 %v6451, %v6479
    %6481 = vdwg.mxu0
    %6482 = vmatpush.bf16.msra.mxu0 %v6374
    %6483 = vmatpush.bf16.msra.mxu0 %v6372
    %6484 = vmatpush.bf16.msra.mxu0 %v6370
    %6485 = vmatpush.bf16.msra.mxu0 %v6368
    %6486 = vmatpush.bf16.msra.mxu0 %v6366
    %6487 = vmatpush.bf16.msra.mxu0 %v6364
    %6488 = vmatpush.bf16.msra.mxu0 %v6362
    %6489 = vmatpush.bf16.msra.mxu0 %v6360
    %6490 = vmatmul.bf16.gmra.mxu0 %v6125
    %v6491 = vpop.f32.mrf.mxu0
    %v6492 = vadd.f32 %v6463, %v6491
    %v6493 = vpop.f32.mrf.mxu0
    %v6494 = vadd.f32 %v6465, %v6493
    %6495 = vmatmul.bf16.gmra.mxu0 %v6128
    %v6496 = vpop.f32.mrf.mxu0
    %v6497 = vadd.f32 %v6468, %v6496
    %v6498 = vpop.f32.mrf.mxu0
    %v6499 = vadd.f32 %v6470, %v6498
    %6500 = vmatmul.bf16.gmra.mxu0 %v6131
    %v6501 = vpop.f32.mrf.mxu0
    %v6502 = vadd.f32 %v6473, %v6501
    %v6503 = vpop.f32.mrf.mxu0
    %v6504 = vadd.f32 %v6475, %v6503
    %6505 = vmatmul.bf16.gmra.mxu0 %v6134
    %v6506 = vpop.f32.mrf.mxu0
    %v6507 = vadd.f32 %v6478, %v6506
    %v6508 = vpop.f32.mrf.mxu0
    %v6509 = vadd.f32 %v6480, %v6508
    %6510 = vdwg.mxu0
    %6511 = vmatpush.bf16.msra.mxu0 %v6343
    %6512 = vmatpush.bf16.msra.mxu0 %v6341
    %6513 = vmatpush.bf16.msra.mxu0 %v6339
    %6514 = vmatpush.bf16.msra.mxu0 %v6337
    %6515 = vmatpush.bf16.msra.mxu0 %v6335
    %6516 = vmatpush.bf16.msra.mxu0 %v6333
    %6517 = vmatpush.bf16.msra.mxu0 %v6331
    %6518 = vmatpush.bf16.msra.mxu0 %v6329
    %6519 = vmatmul.bf16.gmra.mxu0 %v6123
    %v6520 = vpop.f32.mrf.mxu0
    %v6521 = vadd.f32 0.0, %v6520
    %v6522 = vpop.f32.mrf.mxu0
    %v6523 = vadd.f32 0.0, %v6522
    %6524 = vmatmul.bf16.gmra.mxu0 %v6126
    %v6525 = vpop.f32.mrf.mxu0
    %v6526 = vadd.f32 0.0, %v6525
    %v6527 = vpop.f32.mrf.mxu0
    %v6528 = vadd.f32 0.0, %v6527
    %6529 = vmatmul.bf16.gmra.mxu0 %v6129
    %v6530 = vpop.f32.mrf.mxu0
    %v6531 = vadd.f32 0.0, %v6530
    %v6532 = vpop.f32.mrf.mxu0
    %v6533 = vadd.f32 0.0, %v6532
    %6534 = vmatmul.bf16.gmra.mxu0 %v6132
    %v6535 = vpop.f32.mrf.mxu0
    %v6536 = vadd.f32 0.0, %v6535
    %v6537 = vpop.f32.mrf.mxu0
    %v6538 = vadd.f32 0.0, %v6537
    %6539 = vdwg.mxu0
    %6540 = vmatpush.bf16.msra.mxu0 %v6359
    %6541 = vmatpush.bf16.msra.mxu0 %v6357
    %6542 = vmatpush.bf16.msra.mxu0 %v6355
    %6543 = vmatpush.bf16.msra.mxu0 %v6353
    %6544 = vmatpush.bf16.msra.mxu0 %v6351
    %6545 = vmatpush.bf16.msra.mxu0 %v6349
    %6546 = vmatpush.bf16.msra.mxu0 %v6347
    %6547 = vmatpush.bf16.msra.mxu0 %v6345
    %6548 = vmatmul.bf16.gmra.mxu0 %v6124
    %v6549 = vpop.f32.mrf.mxu0
    %v6550 = vadd.f32 %v6521, %v6549
    %v6551 = vpop.f32.mrf.mxu0
    %v6552 = vadd.f32 %v6523, %v6551
    %6553 = vmatmul.bf16.gmra.mxu0 %v6127
    %v6554 = vpop.f32.mrf.mxu0
    %v6555 = vadd.f32 %v6526, %v6554
    %v6556 = vpop.f32.mrf.mxu0
    %v6557 = vadd.f32 %v6528, %v6556
    %6558 = vmatmul.bf16.gmra.mxu0 %v6130
    %v6559 = vpop.f32.mrf.mxu0
    %v6560 = vadd.f32 %v6531, %v6559
    %v6561 = vpop.f32.mrf.mxu0
    %v6562 = vadd.f32 %v6533, %v6561
    %6563 = vmatmul.bf16.gmra.mxu0 %v6133
    %v6564 = vpop.f32.mrf.mxu0
    %v6565 = vadd.f32 %v6536, %v6564
    %v6566 = vpop.f32.mrf.mxu0
    %v6567 = vadd.f32 %v6538, %v6566
    %6568 = vdwg.mxu0
    %6569 = vmatpush.bf16.msra.mxu0 %v6375
    %6570 = vmatpush.bf16.msra.mxu0 %v6373
    %6571 = vmatpush.bf16.msra.mxu0 %v6371
    %6572 = vmatpush.bf16.msra.mxu0 %v6369
    %6573 = vmatpush.bf16.msra.mxu0 %v6367
    %6574 = vmatpush.bf16.msra.mxu0 %v6365
    %6575 = vmatpush.bf16.msra.mxu0 %v6363
    %6576 = vmatpush.bf16.msra.mxu0 %v6361
    %6577 = vmatmul.bf16.gmra.mxu0 %v6125
    %v6578 = vpop.f32.mrf.mxu0
    %v6579 = vadd.f32 %v6550, %v6578
    %v6580 = vpop.f32.mrf.mxu0
    %v6581 = vadd.f32 %v6552, %v6580
    %6582 = vmatmul.bf16.gmra.mxu0 %v6128
    %v6583 = vpop.f32.mrf.mxu0
    %v6584 = vadd.f32 %v6555, %v6583
    %v6585 = vpop.f32.mrf.mxu0
    %v6586 = vadd.f32 %v6557, %v6585
    %6587 = vmatmul.bf16.gmra.mxu0 %v6131
    %v6588 = vpop.f32.mrf.mxu0
    %v6589 = vadd.f32 %v6560, %v6588
    %v6590 = vpop.f32.mrf.mxu0
    %v6591 = vadd.f32 %v6562, %v6590
    %6592 = vmatmul.bf16.gmra.mxu0 %v6134
    %v6593 = vpop.f32.mrf.mxu0
    %v6594 = vadd.f32 %v6565, %v6593
    %v6595 = vpop.f32.mrf.mxu0
    %v6596 = vadd.f32 %v6567, %v6595
    %6597 = vdwg.mxu0
    %v6598 = vadd.f32 %v6083, %v6492
    %v6599 = vadd.f32 %v6084, %v6579
    %v6600 = vadd.f32 %v6085, %v6494
    %v6601 = vadd.f32 %v6086, %v6581
    %v6602 = vadd.f32 %v6087, %v6497
    %v6603 = vadd.f32 %v6088, %v6584
    %v6604 = vadd.f32 %v6089, %v6499
    %v6605 = vadd.f32 %v6090, %v6586
    %v6606 = vadd.f32 %v6091, %v6502
    %v6607 = vadd.f32 %v6092, %v6589
    %v6608 = vadd.f32 %v6093, %v6504
    %v6609 = vadd.f32 %v6094, %v6591
    %v6610 = vadd.f32 %v6095, %v6507
    %v6611 = vadd.f32 %v6096, %v6594
    %v6612 = vadd.f32 %v6097, %v6509
    %v6613 = vadd.f32 %v6098, %v6596
    %v6614 = vmax.f32 %v6598, 0.0
    %v6615 = vmax.f32 %v6599, 0.0
    %v6616 = vmax.f32 %v6600, 0.0
    %v6617 = vmax.f32 %v6601, 0.0
    %v6618 = vmax.f32 %v6602, 0.0
    %v6619 = vmax.f32 %v6603, 0.0
    %v6620 = vmax.f32 %v6604, 0.0
    %v6621 = vmax.f32 %v6605, 0.0
    %v6622 = vmax.f32 %v6606, 0.0
    %v6623 = vmax.f32 %v6607, 0.0
    %v6624 = vmax.f32 %v6608, 0.0
    %v6625 = vmax.f32 %v6609, 0.0
    %v6626 = vmax.f32 %v6610, 0.0
    %v6627 = vmax.f32 %v6611, 0.0
    %v6628 = vmax.f32 %v6612, 0.0
    %v6629 = vmax.f32 %v6613, 0.0
    %v6630 = vmax.f32 %v6614, %v6616
    %v6631 = vmax.f32 %v6615, %v6617
    %v6632 = vmax.f32 %v6630, %v6631
    %v6633 = vmax.f32 %v6618, %v6620
    %v6634 = vmax.f32 %v6619, %v6621
    %v6635 = vmax.f32 %v6633, %v6634
    %v6636 = vmax.f32 %v6622, %v6624
    %v6637 = vmax.f32 %v6623, %v6625
    %v6638 = vmax.f32 %v6636, %v6637
    %v6639 = vmax.f32 %v6626, %v6628
    %v6640 = vmax.f32 %v6627, %v6629
    %v6641 = vmax.f32 %v6639, %v6640
    %v6642 = vpack.c.bf16 %v6632, %v6632
    %v6643 = vpack.c.bf16 %v6635, %v6635
    %v6644 = vpack.c.bf16 %v6638, %v6638
    %v6645 = vpack.c.bf16 %v6641, %v6641
    %v6646 = vld [vmem:[#allocation6] sm:$0xff]
    %v6647 = vld [vmem:[#allocation6 + $0x8] sm:$0xff]
    %v6648 = vld [vmem:[#allocation6 + $0x10] sm:$0xff]
    %v6649 = vld [vmem:[#allocation6 + $0x18] sm:$0xff]
    %v6650 = vld [vmem:[#allocation6 + $0x20] sm:$0xff]
    %v6651 = vld [vmem:[#allocation6 + $0x28] sm:$0xff]
    %v6652 = vld [vmem:[#allocation6 + $0x30] sm:$0xff]
    %v6653 = vld [vmem:[#allocation6 + $0x38] sm:$0xff]
    %v6654 = vld [vmem:[#allocation6 + $0x40] sm:$0xff]
    %v6655 = vld [vmem:[#allocation6 + $0x48] sm:$0xff]
    %v6656 = vld [vmem:[#allocation6 + $0x50] sm:$0xff]
    %v6657 = vld [vmem:[#allocation6 + $0x58] sm:$0xff]
    %v6658 = vld [vmem:[#allocation6 + $0x60] sm:$0xff]
    %v6659 = vld [vmem:[#allocation6 + $0x68] sm:$0xff]
    %v6660 = vld [vmem:[#allocation6 + $0x70] sm:$0xff]
    %v6661 = vld [vmem:[#allocation6 + $0x78] sm:$0xff]
    %v6662 = vld [vmem:[#allocation6 + $0x80] sm:$0xff]
    %v6663 = vld [vmem:[#allocation6 + $0x88] sm:$0xff]
    %v6664 = vld [vmem:[#allocation6 + $0x90] sm:$0xff]
    %v6665 = vld [vmem:[#allocation6 + $0x98] sm:$0xff]
    %v6666 = vld [vmem:[#allocation6 + $0xa0] sm:$0xff]
    %v6667 = vld [vmem:[#allocation6 + $0xa8] sm:$0xff]
    %v6668 = vld [vmem:[#allocation6 + $0xb0] sm:$0xff]
    %v6669 = vld [vmem:[#allocation6 + $0xb8] sm:$0xff]
    %v6670 = vld [vmem:[#allocation6 + $0xc0] sm:$0xff]
    %v6671 = vld [vmem:[#allocation6 + $0xc8] sm:$0xff]
    %v6672 = vld [vmem:[#allocation6 + $0xd0] sm:$0xff]
    %v6673 = vld [vmem:[#allocation6 + $0xd8] sm:$0xff]
    %v6674 = vld [vmem:[#allocation6 + $0xe0] sm:$0xff]
    %v6675 = vld [vmem:[#allocation6 + $0xe8] sm:$0xff]
    %v6676 = vld [vmem:[#allocation6 + $0xf0] sm:$0xff]
    %v6677 = vld [vmem:[#allocation6 + $0xf8] sm:$0xff]
    %v6678 = vld [vmem:[#allocation6 + $0x100] sm:$0xff]
    %v6679 = vld [vmem:[#allocation6 + $0x108] sm:$0xff]
    %v6680 = vld [vmem:[#allocation6 + $0x110] sm:$0xff]
    %v6681 = vld [vmem:[#allocation6 + $0x118] sm:$0xff]
    %v6682 = vld [vmem:[#allocation6 + $0x120] sm:$0xff]
    %v6683 = vld [vmem:[#allocation6 + $0x128] sm:$0xff]
    %v6684 = vld [vmem:[#allocation6 + $0x130] sm:$0xff]
    %v6685 = vld [vmem:[#allocation6 + $0x138] sm:$0xff]
    %v6686 = vld [vmem:[#allocation6 + $0x140] sm:$0xff]
    %v6687 = vld [vmem:[#allocation6 + $0x148] sm:$0xff]
    %v6688 = vld [vmem:[#allocation6 + $0x150] sm:$0xff]
    %v6689 = vld [vmem:[#allocation6 + $0x158] sm:$0xff]
    %v6690 = vld [vmem:[#allocation6 + $0x160] sm:$0xff]
    %v6691 = vld [vmem:[#allocation6 + $0x168] sm:$0xff]
    %v6692 = vld [vmem:[#allocation6 + $0x170] sm:$0xff]
    %v6693 = vld [vmem:[#allocation6 + $0x178] sm:$0xff]
    %v6694 = vld [vmem:[#allocation6 + $0x180] sm:$0xff]
    %v6695 = vld [vmem:[#allocation6 + $0x188] sm:$0xff]
    %v6696 = vld [vmem:[#allocation6 + $0x190] sm:$0xff]
    %v6697 = vld [vmem:[#allocation6 + $0x198] sm:$0xff]
    %v6698 = vld [vmem:[#allocation6 + $0x1a0] sm:$0xff]
    %v6699 = vld [vmem:[#allocation6 + $0x1a8] sm:$0xff]
    %v6700 = vld [vmem:[#allocation6 + $0x1b0] sm:$0xff]
    %v6701 = vld [vmem:[#allocation6 + $0x1b8] sm:$0xff]
    %v6702 = vld [vmem:[#allocation6 + $0x1c0] sm:$0xff]
    %v6703 = vld [vmem:[#allocation6 + $0x1c8] sm:$0xff]
    %v6704 = vld [vmem:[#allocation6 + $0x1d0] sm:$0xff]
    %v6705 = vld [vmem:[#allocation6 + $0x1d8] sm:$0xff]
    %v6706 = vld [vmem:[#allocation6 + $0x1e0] sm:$0xff]
    %v6707 = vld [vmem:[#allocation6 + $0x1e8] sm:$0xff]
    %v6708 = vld [vmem:[#allocation6 + $0x1f0] sm:$0xff]
    %v6709 = vld [vmem:[#allocation6 + $0x1f8] sm:$0xff]
    %v6710 = vld [vmem:[#allocation6 + $0x200] sm:$0xff]
    %v6711 = vld [vmem:[#allocation6 + $0x208] sm:$0xff]
    %v6712 = vld [vmem:[#allocation6 + $0x210] sm:$0xff]
    %v6713 = vld [vmem:[#allocation6 + $0x218] sm:$0xff]
    %v6714 = vld [vmem:[#allocation6 + $0x220] sm:$0xff]
    %v6715 = vld [vmem:[#allocation6 + $0x228] sm:$0xff]
    %v6716 = vld [vmem:[#allocation6 + $0x230] sm:$0xff]
    %v6717 = vld [vmem:[#allocation6 + $0x238] sm:$0xff]
    %v6718 = vld [vmem:[#allocation6 + $0x240] sm:$0xff]
    %v6719 = vld [vmem:[#allocation6 + $0x248] sm:$0xff]
    %v6720 = vld [vmem:[#allocation6 + $0x250] sm:$0xff]
    %v6721 = vld [vmem:[#allocation6 + $0x258] sm:$0xff]
    %v6722 = vld [vmem:[#allocation6 + $0x260] sm:$0xff]
    %v6723 = vld [vmem:[#allocation6 + $0x268] sm:$0xff]
    %v6724 = vld [vmem:[#allocation6 + $0x270] sm:$0xff]
    %v6725 = vld [vmem:[#allocation6 + $0x278] sm:$0xff]
    %v6726 = vld [vmem:[#allocation6 + $0x280] sm:$0xff]
    %v6727 = vld [vmem:[#allocation6 + $0x288] sm:$0xff]
    %v6728 = vld [vmem:[#allocation6 + $0x290] sm:$0xff]
    %v6729 = vld [vmem:[#allocation6 + $0x298] sm:$0xff]
    %v6730 = vld [vmem:[#allocation6 + $0x2a0] sm:$0xff]
    %v6731 = vld [vmem:[#allocation6 + $0x2a8] sm:$0xff]
    %v6732 = vld [vmem:[#allocation6 + $0x2b0] sm:$0xff]
    %v6733 = vld [vmem:[#allocation6 + $0x2b8] sm:$0xff]
    %v6734 = vld [vmem:[#allocation6 + $0x2c0] sm:$0xff]
    %v6735 = vld [vmem:[#allocation6 + $0x2c8] sm:$0xff]
    %v6736 = vld [vmem:[#allocation6 + $0x2d0] sm:$0xff]
    %v6737 = vld [vmem:[#allocation6 + $0x2d8] sm:$0xff]
    %v6738 = vld [vmem:[#allocation6 + $0x2e0] sm:$0xff]
    %v6739 = vld [vmem:[#allocation6 + $0x2e8] sm:$0xff]
    %v6740 = vld [vmem:[#allocation6 + $0x2f0] sm:$0xff]
    %v6741 = vld [vmem:[#allocation6 + $0x2f8] sm:$0xff]
    %v6742 = vld [vmem:[#allocation6 + $0x300] sm:$0xff]
    %v6743 = vld [vmem:[#allocation6 + $0x308] sm:$0xff]
    %v6744 = vld [vmem:[#allocation6 + $0x310] sm:$0xff]
    %v6745 = vld [vmem:[#allocation6 + $0x318] sm:$0xff]
    %v6746 = vld [vmem:[#allocation6 + $0x320] sm:$0xff]
    %v6747 = vld [vmem:[#allocation6 + $0x328] sm:$0xff]
    %v6748 = vld [vmem:[#allocation6 + $0x330] sm:$0xff]
    %v6749 = vld [vmem:[#allocation6 + $0x338] sm:$0xff]
    %v6750 = vld [vmem:[#allocation6 + $0x340] sm:$0xff]
    %v6751 = vld [vmem:[#allocation6 + $0x348] sm:$0xff]
    %v6752 = vld [vmem:[#allocation6 + $0x350] sm:$0xff]
    %v6753 = vld [vmem:[#allocation6 + $0x358] sm:$0xff]
    %v6754 = vld [vmem:[#allocation6 + $0x360] sm:$0xff]
    %v6755 = vld [vmem:[#allocation6 + $0x368] sm:$0xff]
    %v6756 = vld [vmem:[#allocation6 + $0x370] sm:$0xff]
    %v6757 = vld [vmem:[#allocation6 + $0x378] sm:$0xff]
    %v6758 = vld [vmem:[#allocation6 + $0x380] sm:$0xff]
    %v6759 = vld [vmem:[#allocation6 + $0x388] sm:$0xff]
    %v6760 = vld [vmem:[#allocation6 + $0x390] sm:$0xff]
    %v6761 = vld [vmem:[#allocation6 + $0x398] sm:$0xff]
    %v6762 = vld [vmem:[#allocation6 + $0x3a0] sm:$0xff]
    %v6763 = vld [vmem:[#allocation6 + $0x3a8] sm:$0xff]
    %v6764 = vld [vmem:[#allocation6 + $0x3b0] sm:$0xff]
    %v6765 = vld [vmem:[#allocation6 + $0x3b8] sm:$0xff]
    %v6766 = vld [vmem:[#allocation6 + $0x3c0] sm:$0xff]
    %v6767 = vld [vmem:[#allocation6 + $0x3c8] sm:$0xff]
    %v6768 = vld [vmem:[#allocation6 + $0x3d0] sm:$0xff]
    %v6769 = vld [vmem:[#allocation6 + $0x3d8] sm:$0xff]
    %v6770 = vld [vmem:[#allocation6 + $0x3e0] sm:$0xff]
    %v6771 = vld [vmem:[#allocation6 + $0x3e8] sm:$0xff]
    %v6772 = vld [vmem:[#allocation6 + $0x3f0] sm:$0xff]
    %v6773 = vld [vmem:[#allocation6 + $0x3f8] sm:$0xff]
    %v6774 = vld [vmem:[#allocation6 + $0x400] sm:$0xff]
    %v6775 = vld [vmem:[#allocation6 + $0x408] sm:$0xff]
    %v6776 = vld [vmem:[#allocation6 + $0x410] sm:$0xff]
    %v6777 = vld [vmem:[#allocation6 + $0x418] sm:$0xff]
    %v6778 = vld [vmem:[#allocation6 + $0x420] sm:$0xff]
    %v6779 = vld [vmem:[#allocation6 + $0x428] sm:$0xff]
    %v6780 = vld [vmem:[#allocation6 + $0x430] sm:$0xff]
    %v6781 = vld [vmem:[#allocation6 + $0x438] sm:$0xff]
    %v6782 = vld [vmem:[#allocation6 + $0x440] sm:$0xff]
    %v6783 = vld [vmem:[#allocation6 + $0x448] sm:$0xff]
    %v6784 = vld [vmem:[#allocation6 + $0x450] sm:$0xff]
    %v6785 = vld [vmem:[#allocation6 + $0x458] sm:$0xff]
    %v6786 = vld [vmem:[#allocation6 + $0x460] sm:$0xff]
    %v6787 = vld [vmem:[#allocation6 + $0x468] sm:$0xff]
    %v6788 = vld [vmem:[#allocation6 + $0x470] sm:$0xff]
    %v6789 = vld [vmem:[#allocation6 + $0x478] sm:$0xff]
    %v6790 = vld [vmem:[#allocation6 + $0x480] sm:$0xff]
    %v6791 = vld [vmem:[#allocation6 + $0x488] sm:$0xff]
    %v6792 = vld [vmem:[#allocation6 + $0x490] sm:$0xff]
    %v6793 = vld [vmem:[#allocation6 + $0x498] sm:$0xff]
    %v6794 = vld [vmem:[#allocation6 + $0x4a0] sm:$0xff]
    %v6795 = vld [vmem:[#allocation6 + $0x4a8] sm:$0xff]
    %v6796 = vld [vmem:[#allocation6 + $0x4b0] sm:$0xff]
    %v6797 = vld [vmem:[#allocation6 + $0x4b8] sm:$0xff]
    %v6798 = vld [vmem:[#allocation6 + $0x4c0] sm:$0xff]
    %v6799 = vld [vmem:[#allocation6 + $0x4c8] sm:$0xff]
    %v6800 = vld [vmem:[#allocation6 + $0x4d0] sm:$0xff]
    %v6801 = vld [vmem:[#allocation6 + $0x4d8] sm:$0xff]
    %v6802 = vld [vmem:[#allocation6 + $0x4e0] sm:$0xff]
    %v6803 = vld [vmem:[#allocation6 + $0x4e8] sm:$0xff]
    %v6804 = vld [vmem:[#allocation6 + $0x4f0] sm:$0xff]
    %v6805 = vld [vmem:[#allocation6 + $0x4f8] sm:$0xff]
    %v6806 = vld [vmem:[#allocation6 + $0x500] sm:$0xff]
    %v6807 = vld [vmem:[#allocation6 + $0x508] sm:$0xff]
    %v6808 = vld [vmem:[#allocation6 + $0x510] sm:$0xff]
    %v6809 = vld [vmem:[#allocation6 + $0x518] sm:$0xff]
    %v6810 = vld [vmem:[#allocation6 + $0x520] sm:$0xff]
    %v6811 = vld [vmem:[#allocation6 + $0x528] sm:$0xff]
    %v6812 = vld [vmem:[#allocation6 + $0x530] sm:$0xff]
    %v6813 = vld [vmem:[#allocation6 + $0x538] sm:$0xff]
    %v6814 = vld [vmem:[#allocation6 + $0x540] sm:$0xff]
    %v6815 = vld [vmem:[#allocation6 + $0x548] sm:$0xff]
    %v6816 = vld [vmem:[#allocation6 + $0x550] sm:$0xff]
    %v6817 = vld [vmem:[#allocation6 + $0x558] sm:$0xff]
    %v6818 = vld [vmem:[#allocation6 + $0x560] sm:$0xff]
    %v6819 = vld [vmem:[#allocation6 + $0x568] sm:$0xff]
    %v6820 = vld [vmem:[#allocation6 + $0x570] sm:$0xff]
    %v6821 = vld [vmem:[#allocation6 + $0x578] sm:$0xff]
    %v6822 = vld [vmem:[#allocation6 + $0x580] sm:$0xff]
    %v6823 = vld [vmem:[#allocation6 + $0x588] sm:$0xff]
    %v6824 = vld [vmem:[#allocation6 + $0x590] sm:$0xff]
    %v6825 = vld [vmem:[#allocation6 + $0x598] sm:$0xff]
    %v6826 = vld [vmem:[#allocation6 + $0x5a0] sm:$0xff]
    %v6827 = vld [vmem:[#allocation6 + $0x5a8] sm:$0xff]
    %v6828 = vld [vmem:[#allocation6 + $0x5b0] sm:$0xff]
    %v6829 = vld [vmem:[#allocation6 + $0x5b8] sm:$0xff]
    %v6830 = vld [vmem:[#allocation6 + $0x5c0] sm:$0xff]
    %v6831 = vld [vmem:[#allocation6 + $0x5c8] sm:$0xff]
    %v6832 = vld [vmem:[#allocation6 + $0x5d0] sm:$0xff]
    %v6833 = vld [vmem:[#allocation6 + $0x5d8] sm:$0xff]
    %v6834 = vld [vmem:[#allocation6 + $0x5e0] sm:$0xff]
    %v6835 = vld [vmem:[#allocation6 + $0x5e8] sm:$0xff]
    %v6836 = vld [vmem:[#allocation6 + $0x5f0] sm:$0xff]
    %v6837 = vld [vmem:[#allocation6 + $0x5f8] sm:$0xff]
    %v6838 = vld [vmem:[#allocation6 + $0x600] sm:$0xff]
    %v6839 = vld [vmem:[#allocation6 + $0x608] sm:$0xff]
    %v6840 = vld [vmem:[#allocation6 + $0x610] sm:$0xff]
    %v6841 = vld [vmem:[#allocation6 + $0x618] sm:$0xff]
    %v6842 = vld [vmem:[#allocation6 + $0x620] sm:$0xff]
    %v6843 = vld [vmem:[#allocation6 + $0x628] sm:$0xff]
    %v6844 = vld [vmem:[#allocation6 + $0x630] sm:$0xff]
    %v6845 = vld [vmem:[#allocation6 + $0x638] sm:$0xff]
    %v6846 = vld [vmem:[#allocation6 + $0x640] sm:$0xff]
    %v6847 = vld [vmem:[#allocation6 + $0x648] sm:$0xff]
    %v6848 = vld [vmem:[#allocation6 + $0x650] sm:$0xff]
    %v6849 = vld [vmem:[#allocation6 + $0x658] sm:$0xff]
    %v6850 = vld [vmem:[#allocation6 + $0x660] sm:$0xff]
    %v6851 = vld [vmem:[#allocation6 + $0x668] sm:$0xff]
    %v6852 = vld [vmem:[#allocation6 + $0x670] sm:$0xff]
    %v6853 = vld [vmem:[#allocation6 + $0x678] sm:$0xff]
    %v6854 = vld [vmem:[#allocation6 + $0x680] sm:$0xff]
    %v6855 = vld [vmem:[#allocation6 + $0x688] sm:$0xff]
    %v6856 = vld [vmem:[#allocation6 + $0x690] sm:$0xff]
    %v6857 = vld [vmem:[#allocation6 + $0x698] sm:$0xff]
    %v6858 = vld [vmem:[#allocation6 + $0x6a0] sm:$0xff]
    %v6859 = vld [vmem:[#allocation6 + $0x6a8] sm:$0xff]
    %v6860 = vld [vmem:[#allocation6 + $0x6b0] sm:$0xff]
    %v6861 = vld [vmem:[#allocation6 + $0x6b8] sm:$0xff]
    %v6862 = vld [vmem:[#allocation6 + $0x6c0] sm:$0xff]
    %v6863 = vld [vmem:[#allocation6 + $0x6c8] sm:$0xff]
    %v6864 = vld [vmem:[#allocation6 + $0x6d0] sm:$0xff]
    %v6865 = vld [vmem:[#allocation6 + $0x6d8] sm:$0xff]
    %v6866 = vld [vmem:[#allocation6 + $0x6e0] sm:$0xff]
    %v6867 = vld [vmem:[#allocation6 + $0x6e8] sm:$0xff]
    %v6868 = vld [vmem:[#allocation6 + $0x6f0] sm:$0xff]
    %v6869 = vld [vmem:[#allocation6 + $0x6f8] sm:$0xff]
    %v6870 = vld [vmem:[#allocation6 + $0x700] sm:$0xff]
    %v6871 = vld [vmem:[#allocation6 + $0x708] sm:$0xff]
    %v6872 = vld [vmem:[#allocation6 + $0x710] sm:$0xff]
    %v6873 = vld [vmem:[#allocation6 + $0x718] sm:$0xff]
    %v6874 = vld [vmem:[#allocation6 + $0x720] sm:$0xff]
    %v6875 = vld [vmem:[#allocation6 + $0x728] sm:$0xff]
    %v6876 = vld [vmem:[#allocation6 + $0x730] sm:$0xff]
    %v6877 = vld [vmem:[#allocation6 + $0x738] sm:$0xff]
    %v6878 = vld [vmem:[#allocation6 + $0x740] sm:$0xff]
    %v6879 = vld [vmem:[#allocation6 + $0x748] sm:$0xff]
    %v6880 = vld [vmem:[#allocation6 + $0x750] sm:$0xff]
    %v6881 = vld [vmem:[#allocation6 + $0x758] sm:$0xff]
    %v6882 = vld [vmem:[#allocation6 + $0x760] sm:$0xff]
    %v6883 = vld [vmem:[#allocation6 + $0x768] sm:$0xff]
    %v6884 = vld [vmem:[#allocation6 + $0x770] sm:$0xff]
    %v6885 = vld [vmem:[#allocation6 + $0x778] sm:$0xff]
    %v6886 = vld [vmem:[#allocation6 + $0x780] sm:$0xff]
    %v6887 = vld [vmem:[#allocation6 + $0x788] sm:$0xff]
    %v6888 = vld [vmem:[#allocation6 + $0x790] sm:$0xff]
    %v6889 = vld [vmem:[#allocation6 + $0x798] sm:$0xff]
    %v6890 = vld [vmem:[#allocation6 + $0x7a0] sm:$0xff]
    %v6891 = vld [vmem:[#allocation6 + $0x7a8] sm:$0xff]
    %v6892 = vld [vmem:[#allocation6 + $0x7b0] sm:$0xff]
    %v6893 = vld [vmem:[#allocation6 + $0x7b8] sm:$0xff]
    %v6894 = vld [vmem:[#allocation6 + $0x7c0] sm:$0xff]
    %v6895 = vld [vmem:[#allocation6 + $0x7c8] sm:$0xff]
    %v6896 = vld [vmem:[#allocation6 + $0x7d0] sm:$0xff]
    %v6897 = vld [vmem:[#allocation6 + $0x7d8] sm:$0xff]
    %v6898 = vld [vmem:[#allocation6 + $0x7e0] sm:$0xff]
    %v6899 = vld [vmem:[#allocation6 + $0x7e8] sm:$0xff]
    %v6900 = vld [vmem:[#allocation6 + $0x7f0] sm:$0xff]
    %v6901 = vld [vmem:[#allocation6 + $0x7f8] sm:$0xff]
    %v6902 = vld [vmem:[%s6] sm:$0xff]
    %v6904 = vperm.slane %v6902, 0
    %v6905 = vperm.slane %v6902, 1
    %v6906 = vperm.slane %v6902, 2
    %v6907 = vperm.slane %v6902, 3
    %v6908 = vperm.slane %v6902, 4
    %v6909 = vperm.slane %v6902, 5
    %v6910 = vperm.slane %v6902, 6
    %v6911 = vperm.slane %v6902, 7
    %v7176 = vunpack.c.l.b16 %v6646
    %v7177 = vunpack.c.h.b16 %v6646
    %v7178 = vunpack.c.l.b16 %v6647
    %v7179 = vunpack.c.h.b16 %v6647
    %v7180 = vunpack.c.l.b16 %v6648
    %v7181 = vunpack.c.h.b16 %v6648
    %v7182 = vunpack.c.l.b16 %v6649
    %v7183 = vunpack.c.h.b16 %v6649
    %v7184 = vunpack.c.l.b16 %v6650
    %v7185 = vunpack.c.h.b16 %v6650
    %v7186 = vunpack.c.l.b16 %v6651
    %v7187 = vunpack.c.h.b16 %v6651
    %v7188 = vunpack.c.l.b16 %v6652
    %v7189 = vunpack.c.h.b16 %v6652
    %v7190 = vunpack.c.l.b16 %v6653
    %v7191 = vunpack.c.h.b16 %v6653
    %v7192 = vunpack.c.l.b16 %v6654
    %v7193 = vunpack.c.h.b16 %v6654
    %v7194 = vunpack.c.l.b16 %v6655
    %v7195 = vunpack.c.h.b16 %v6655
    %v7196 = vunpack.c.l.b16 %v6656
    %v7197 = vunpack.c.h.b16 %v6656
    %v7198 = vunpack.c.l.b16 %v6657
    %v7199 = vunpack.c.h.b16 %v6657
    %v7200 = vunpack.c.l.b16 %v6658
    %v7201 = vunpack.c.h.b16 %v6658
    %v7202 = vunpack.c.l.b16 %v6659
    %v7203 = vunpack.c.h.b16 %v6659
    %v7204 = vunpack.c.l.b16 %v6660
    %v7205 = vunpack.c.h.b16 %v6660
    %v7206 = vunpack.c.l.b16 %v6661
    %v7207 = vunpack.c.h.b16 %v6661
    %v7208 = vunpack.c.l.b16 %v6662
    %v7209 = vunpack.c.h.b16 %v6662
    %v7210 = vunpack.c.l.b16 %v6663
    %v7211 = vunpack.c.h.b16 %v6663
    %v7212 = vunpack.c.l.b16 %v6664
    %v7213 = vunpack.c.h.b16 %v6664
    %v7214 = vunpack.c.l.b16 %v6665
    %v7215 = vunpack.c.h.b16 %v6665
    %v7216 = vunpack.c.l.b16 %v6666
    %v7217 = vunpack.c.h.b16 %v6666
    %v7218 = vunpack.c.l.b16 %v6667
    %v7219 = vunpack.c.h.b16 %v6667
    %v7220 = vunpack.c.l.b16 %v6668
    %v7221 = vunpack.c.h.b16 %v6668
    %v7222 = vunpack.c.l.b16 %v6669
    %v7223 = vunpack.c.h.b16 %v6669
    %v7224 = vunpack.c.l.b16 %v6670
    %v7225 = vunpack.c.h.b16 %v6670
    %v7226 = vunpack.c.l.b16 %v6671
    %v7227 = vunpack.c.h.b16 %v6671
    %v7228 = vunpack.c.l.b16 %v6672
    %v7229 = vunpack.c.h.b16 %v6672
    %v7230 = vunpack.c.l.b16 %v6673
    %v7231 = vunpack.c.h.b16 %v6673
    %v7232 = vunpack.c.l.b16 %v6674
    %v7233 = vunpack.c.h.b16 %v6674
    %v7234 = vunpack.c.l.b16 %v6675
    %v7235 = vunpack.c.h.b16 %v6675
    %v7236 = vunpack.c.l.b16 %v6676
    %v7237 = vunpack.c.h.b16 %v6676
    %v7238 = vunpack.c.l.b16 %v6677
    %v7239 = vunpack.c.h.b16 %v6677
    %v7240 = vunpack.c.l.b16 %v6678
    %v7241 = vunpack.c.h.b16 %v6678
    %v7242 = vunpack.c.l.b16 %v6679
    %v7243 = vunpack.c.h.b16 %v6679
    %v7244 = vunpack.c.l.b16 %v6680
    %v7245 = vunpack.c.h.b16 %v6680
    %v7246 = vunpack.c.l.b16 %v6681
    %v7247 = vunpack.c.h.b16 %v6681
    %v7248 = vunpack.c.l.b16 %v6682
    %v7249 = vunpack.c.h.b16 %v6682
    %v7250 = vunpack.c.l.b16 %v6683
    %v7251 = vunpack.c.h.b16 %v6683
    %v7252 = vunpack.c.l.b16 %v6684
    %v7253 = vunpack.c.h.b16 %v6684
    %v7254 = vunpack.c.l.b16 %v6685
    %v7255 = vunpack.c.h.b16 %v6685
    %v7256 = vunpack.c.l.b16 %v6686
    %v7257 = vunpack.c.h.b16 %v6686
    %v7258 = vunpack.c.l.b16 %v6687
    %v7259 = vunpack.c.h.b16 %v6687
    %v7260 = vunpack.c.l.b16 %v6688
    %v7261 = vunpack.c.h.b16 %v6688
    %v7262 = vunpack.c.l.b16 %v6689
    %v7263 = vunpack.c.h.b16 %v6689
    %v7264 = vunpack.c.l.b16 %v6690
    %v7265 = vunpack.c.h.b16 %v6690
    %v7266 = vunpack.c.l.b16 %v6691
    %v7267 = vunpack.c.h.b16 %v6691
    %v7268 = vunpack.c.l.b16 %v6692
    %v7269 = vunpack.c.h.b16 %v6692
    %v7270 = vunpack.c.l.b16 %v6693
    %v7271 = vunpack.c.h.b16 %v6693
    %v7272 = vunpack.c.l.b16 %v6694
    %v7273 = vunpack.c.h.b16 %v6694
    %v7274 = vunpack.c.l.b16 %v6695
    %v7275 = vunpack.c.h.b16 %v6695
    %v7276 = vunpack.c.l.b16 %v6696
    %v7277 = vunpack.c.h.b16 %v6696
    %v7278 = vunpack.c.l.b16 %v6697
    %v7279 = vunpack.c.h.b16 %v6697
    %v7280 = vunpack.c.l.b16 %v6698
    %v7281 = vunpack.c.h.b16 %v6698
    %v7282 = vunpack.c.l.b16 %v6699
    %v7283 = vunpack.c.h.b16 %v6699
    %v7284 = vunpack.c.l.b16 %v6700
    %v7285 = vunpack.c.h.b16 %v6700
    %v7286 = vunpack.c.l.b16 %v6701
    %v7287 = vunpack.c.h.b16 %v6701
    %v7288 = vunpack.c.l.b16 %v6702
    %v7289 = vunpack.c.h.b16 %v6702
    %v7290 = vunpack.c.l.b16 %v6703
    %v7291 = vunpack.c.h.b16 %v6703
    %v7292 = vunpack.c.l.b16 %v6704
    %v7293 = vunpack.c.h.b16 %v6704
    %v7294 = vunpack.c.l.b16 %v6705
    %v7295 = vunpack.c.h.b16 %v6705
    %v7296 = vunpack.c.l.b16 %v6706
    %v7297 = vunpack.c.h.b16 %v6706
    %v7298 = vunpack.c.l.b16 %v6707
    %v7299 = vunpack.c.h.b16 %v6707
    %v7300 = vunpack.c.l.b16 %v6708
    %v7301 = vunpack.c.h.b16 %v6708
    %v7302 = vunpack.c.l.b16 %v6709
    %v7303 = vunpack.c.h.b16 %v6709
    %v7304 = vunpack.c.l.b16 %v6710
    %v7305 = vunpack.c.h.b16 %v6710
    %v7306 = vunpack.c.l.b16 %v6711
    %v7307 = vunpack.c.h.b16 %v6711
    %v7308 = vunpack.c.l.b16 %v6712
    %v7309 = vunpack.c.h.b16 %v6712
    %v7310 = vunpack.c.l.b16 %v6713
    %v7311 = vunpack.c.h.b16 %v6713
    %v7312 = vunpack.c.l.b16 %v6714
    %v7313 = vunpack.c.h.b16 %v6714
    %v7314 = vunpack.c.l.b16 %v6715
    %v7315 = vunpack.c.h.b16 %v6715
    %v7316 = vunpack.c.l.b16 %v6716
    %v7317 = vunpack.c.h.b16 %v6716
    %v7318 = vunpack.c.l.b16 %v6717
    %v7319 = vunpack.c.h.b16 %v6717
    %v7320 = vunpack.c.l.b16 %v6718
    %v7321 = vunpack.c.h.b16 %v6718
    %v7322 = vunpack.c.l.b16 %v6719
    %v7323 = vunpack.c.h.b16 %v6719
    %v7324 = vunpack.c.l.b16 %v6720
    %v7325 = vunpack.c.h.b16 %v6720
    %v7326 = vunpack.c.l.b16 %v6721
    %v7327 = vunpack.c.h.b16 %v6721
    %v7328 = vunpack.c.l.b16 %v6722
    %v7329 = vunpack.c.h.b16 %v6722
    %v7330 = vunpack.c.l.b16 %v6723
    %v7331 = vunpack.c.h.b16 %v6723
    %v7332 = vunpack.c.l.b16 %v6724
    %v7333 = vunpack.c.h.b16 %v6724
    %v7334 = vunpack.c.l.b16 %v6725
    %v7335 = vunpack.c.h.b16 %v6725
    %v7336 = vunpack.c.l.b16 %v6726
    %v7337 = vunpack.c.h.b16 %v6726
    %v7338 = vunpack.c.l.b16 %v6727
    %v7339 = vunpack.c.h.b16 %v6727
    %v7340 = vunpack.c.l.b16 %v6728
    %v7341 = vunpack.c.h.b16 %v6728
    %v7342 = vunpack.c.l.b16 %v6729
    %v7343 = vunpack.c.h.b16 %v6729
    %v7344 = vunpack.c.l.b16 %v6730
    %v7345 = vunpack.c.h.b16 %v6730
    %v7346 = vunpack.c.l.b16 %v6731
    %v7347 = vunpack.c.h.b16 %v6731
    %v7348 = vunpack.c.l.b16 %v6732
    %v7349 = vunpack.c.h.b16 %v6732
    %v7350 = vunpack.c.l.b16 %v6733
    %v7351 = vunpack.c.h.b16 %v6733
    %v7352 = vunpack.c.l.b16 %v6734
    %v7353 = vunpack.c.h.b16 %v6734
    %v7354 = vunpack.c.l.b16 %v6735
    %v7355 = vunpack.c.h.b16 %v6735
    %v7356 = vunpack.c.l.b16 %v6736
    %v7357 = vunpack.c.h.b16 %v6736
    %v7358 = vunpack.c.l.b16 %v6737
    %v7359 = vunpack.c.h.b16 %v6737
    %v7360 = vunpack.c.l.b16 %v6738
    %v7361 = vunpack.c.h.b16 %v6738
    %v7362 = vunpack.c.l.b16 %v6739
    %v7363 = vunpack.c.h.b16 %v6739
    %v7364 = vunpack.c.l.b16 %v6740
    %v7365 = vunpack.c.h.b16 %v6740
    %v7366 = vunpack.c.l.b16 %v6741
    %v7367 = vunpack.c.h.b16 %v6741
    %v7368 = vunpack.c.l.b16 %v6742
    %v7369 = vunpack.c.h.b16 %v6742
    %v7370 = vunpack.c.l.b16 %v6743
    %v7371 = vunpack.c.h.b16 %v6743
    %v7372 = vunpack.c.l.b16 %v6744
    %v7373 = vunpack.c.h.b16 %v6744
    %v7374 = vunpack.c.l.b16 %v6745
    %v7375 = vunpack.c.h.b16 %v6745
    %v7376 = vunpack.c.l.b16 %v6746
    %v7377 = vunpack.c.h.b16 %v6746
    %v7378 = vunpack.c.l.b16 %v6747
    %v7379 = vunpack.c.h.b16 %v6747
    %v7380 = vunpack.c.l.b16 %v6748
    %v7381 = vunpack.c.h.b16 %v6748
    %v7382 = vunpack.c.l.b16 %v6749
    %v7383 = vunpack.c.h.b16 %v6749
    %v7384 = vunpack.c.l.b16 %v6750
    %v7385 = vunpack.c.h.b16 %v6750
    %v7386 = vunpack.c.l.b16 %v6751
    %v7387 = vunpack.c.h.b16 %v6751
    %v7388 = vunpack.c.l.b16 %v6752
    %v7389 = vunpack.c.h.b16 %v6752
    %v7390 = vunpack.c.l.b16 %v6753
    %v7391 = vunpack.c.h.b16 %v6753
    %v7392 = vunpack.c.l.b16 %v6754
    %v7393 = vunpack.c.h.b16 %v6754
    %v7394 = vunpack.c.l.b16 %v6755
    %v7395 = vunpack.c.h.b16 %v6755
    %v7396 = vunpack.c.l.b16 %v6756
    %v7397 = vunpack.c.h.b16 %v6756
    %v7398 = vunpack.c.l.b16 %v6757
    %v7399 = vunpack.c.h.b16 %v6757
    %v7400 = vunpack.c.l.b16 %v6758
    %v7401 = vunpack.c.h.b16 %v6758
    %v7402 = vunpack.c.l.b16 %v6759
    %v7403 = vunpack.c.h.b16 %v6759
    %v7404 = vunpack.c.l.b16 %v6760
    %v7405 = vunpack.c.h.b16 %v6760
    %v7406 = vunpack.c.l.b16 %v6761
    %v7407 = vunpack.c.h.b16 %v6761
    %v7408 = vunpack.c.l.b16 %v6762
    %v7409 = vunpack.c.h.b16 %v6762
    %v7410 = vunpack.c.l.b16 %v6763
    %v7411 = vunpack.c.h.b16 %v6763
    %v7412 = vunpack.c.l.b16 %v6764
    %v7413 = vunpack.c.h.b16 %v6764
    %v7414 = vunpack.c.l.b16 %v6765
    %v7415 = vunpack.c.h.b16 %v6765
    %v7416 = vunpack.c.l.b16 %v6766
    %v7417 = vunpack.c.h.b16 %v6766
    %v7418 = vunpack.c.l.b16 %v6767
    %v7419 = vunpack.c.h.b16 %v6767
    %v7420 = vunpack.c.l.b16 %v6768
    %v7421 = vunpack.c.h.b16 %v6768
    %v7422 = vunpack.c.l.b16 %v6769
    %v7423 = vunpack.c.h.b16 %v6769
    %v7424 = vunpack.c.l.b16 %v6770
    %v7425 = vunpack.c.h.b16 %v6770
    %v7426 = vunpack.c.l.b16 %v6771
    %v7427 = vunpack.c.h.b16 %v6771
    %v7428 = vunpack.c.l.b16 %v6772
    %v7429 = vunpack.c.h.b16 %v6772
    %v7430 = vunpack.c.l.b16 %v6773
    %v7431 = vunpack.c.h.b16 %v6773
    %v7432 = vunpack.c.l.b16 %v6774
    %v7433 = vunpack.c.h.b16 %v6774
    %v7434 = vunpack.c.l.b16 %v6775
    %v7435 = vunpack.c.h.b16 %v6775
    %v7436 = vunpack.c.l.b16 %v6776
    %v7437 = vunpack.c.h.b16 %v6776
    %v7438 = vunpack.c.l.b16 %v6777
    %v7439 = vunpack.c.h.b16 %v6777
    %v7440 = vunpack.c.l.b16 %v6778
    %v7441 = vunpack.c.h.b16 %v6778
    %v7442 = vunpack.c.l.b16 %v6779
    %v7443 = vunpack.c.h.b16 %v6779
    %v7444 = vunpack.c.l.b16 %v6780
    %v7445 = vunpack.c.h.b16 %v6780
    %v7446 = vunpack.c.l.b16 %v6781
    %v7447 = vunpack.c.h.b16 %v6781
    %v7448 = vunpack.c.l.b16 %v6782
    %v7449 = vunpack.c.h.b16 %v6782
    %v7450 = vunpack.c.l.b16 %v6783
    %v7451 = vunpack.c.h.b16 %v6783
    %v7452 = vunpack.c.l.b16 %v6784
    %v7453 = vunpack.c.h.b16 %v6784
    %v7454 = vunpack.c.l.b16 %v6785
    %v7455 = vunpack.c.h.b16 %v6785
    %v7456 = vunpack.c.l.b16 %v6786
    %v7457 = vunpack.c.h.b16 %v6786
    %v7458 = vunpack.c.l.b16 %v6787
    %v7459 = vunpack.c.h.b16 %v6787
    %v7460 = vunpack.c.l.b16 %v6788
    %v7461 = vunpack.c.h.b16 %v6788
    %v7462 = vunpack.c.l.b16 %v6789
    %v7463 = vunpack.c.h.b16 %v6789
    %v7464 = vunpack.c.l.b16 %v6790
    %v7465 = vunpack.c.h.b16 %v6790
    %v7466 = vunpack.c.l.b16 %v6791
    %v7467 = vunpack.c.h.b16 %v6791
    %v7468 = vunpack.c.l.b16 %v6792
    %v7469 = vunpack.c.h.b16 %v6792
    %v7470 = vunpack.c.l.b16 %v6793
    %v7471 = vunpack.c.h.b16 %v6793
    %v7472 = vunpack.c.l.b16 %v6794
    %v7473 = vunpack.c.h.b16 %v6794
    %v7474 = vunpack.c.l.b16 %v6795
    %v7475 = vunpack.c.h.b16 %v6795
    %v7476 = vunpack.c.l.b16 %v6796
    %v7477 = vunpack.c.h.b16 %v6796
    %v7478 = vunpack.c.l.b16 %v6797
    %v7479 = vunpack.c.h.b16 %v6797
    %v7480 = vunpack.c.l.b16 %v6798
    %v7481 = vunpack.c.h.b16 %v6798
    %v7482 = vunpack.c.l.b16 %v6799
    %v7483 = vunpack.c.h.b16 %v6799
    %v7484 = vunpack.c.l.b16 %v6800
    %v7485 = vunpack.c.h.b16 %v6800
    %v7486 = vunpack.c.l.b16 %v6801
    %v7487 = vunpack.c.h.b16 %v6801
    %v7488 = vunpack.c.l.b16 %v6802
    %v7489 = vunpack.c.h.b16 %v6802
    %v7490 = vunpack.c.l.b16 %v6803
    %v7491 = vunpack.c.h.b16 %v6803
    %v7492 = vunpack.c.l.b16 %v6804
    %v7493 = vunpack.c.h.b16 %v6804
    %v7494 = vunpack.c.l.b16 %v6805
    %v7495 = vunpack.c.h.b16 %v6805
    %v7496 = vunpack.c.l.b16 %v6806
    %v7497 = vunpack.c.h.b16 %v6806
    %v7498 = vunpack.c.l.b16 %v6807
    %v7499 = vunpack.c.h.b16 %v6807
    %v7500 = vunpack.c.l.b16 %v6808
    %v7501 = vunpack.c.h.b16 %v6808
    %v7502 = vunpack.c.l.b16 %v6809
    %v7503 = vunpack.c.h.b16 %v6809
    %v7504 = vunpack.c.l.b16 %v6810
    %v7505 = vunpack.c.h.b16 %v6810
    %v7506 = vunpack.c.l.b16 %v6811
    %v7507 = vunpack.c.h.b16 %v6811
    %v7508 = vunpack.c.l.b16 %v6812
    %v7509 = vunpack.c.h.b16 %v6812
    %v7510 = vunpack.c.l.b16 %v6813
    %v7511 = vunpack.c.h.b16 %v6813
    %v7512 = vunpack.c.l.b16 %v6814
    %v7513 = vunpack.c.h.b16 %v6814
    %v7514 = vunpack.c.l.b16 %v6815
    %v7515 = vunpack.c.h.b16 %v6815
    %v7516 = vunpack.c.l.b16 %v6816
    %v7517 = vunpack.c.h.b16 %v6816
    %v7518 = vunpack.c.l.b16 %v6817
    %v7519 = vunpack.c.h.b16 %v6817
    %v7520 = vunpack.c.l.b16 %v6818
    %v7521 = vunpack.c.h.b16 %v6818
    %v7522 = vunpack.c.l.b16 %v6819
    %v7523 = vunpack.c.h.b16 %v6819
    %v7524 = vunpack.c.l.b16 %v6820
    %v7525 = vunpack.c.h.b16 %v6820
    %v7526 = vunpack.c.l.b16 %v6821
    %v7527 = vunpack.c.h.b16 %v6821
    %v7528 = vunpack.c.l.b16 %v6822
    %v7529 = vunpack.c.h.b16 %v6822
    %v7530 = vunpack.c.l.b16 %v6823
    %v7531 = vunpack.c.h.b16 %v6823
    %v7532 = vunpack.c.l.b16 %v6824
    %v7533 = vunpack.c.h.b16 %v6824
    %v7534 = vunpack.c.l.b16 %v6825
    %v7535 = vunpack.c.h.b16 %v6825
    %v7536 = vunpack.c.l.b16 %v6826
    %v7537 = vunpack.c.h.b16 %v6826
    %v7538 = vunpack.c.l.b16 %v6827
    %v7539 = vunpack.c.h.b16 %v6827
    %v7540 = vunpack.c.l.b16 %v6828
    %v7541 = vunpack.c.h.b16 %v6828
    %v7542 = vunpack.c.l.b16 %v6829
    %v7543 = vunpack.c.h.b16 %v6829
    %v7544 = vunpack.c.l.b16 %v6830
    %v7545 = vunpack.c.h.b16 %v6830
    %v7546 = vunpack.c.l.b16 %v6831
    %v7547 = vunpack.c.h.b16 %v6831
    %v7548 = vunpack.c.l.b16 %v6832
    %v7549 = vunpack.c.h.b16 %v6832
    %v7550 = vunpack.c.l.b16 %v6833
    %v7551 = vunpack.c.h.b16 %v6833
    %v7552 = vunpack.c.l.b16 %v6834
    %v7553 = vunpack.c.h.b16 %v6834
    %v7554 = vunpack.c.l.b16 %v6835
    %v7555 = vunpack.c.h.b16 %v6835
    %v7556 = vunpack.c.l.b16 %v6836
    %v7557 = vunpack.c.h.b16 %v6836
    %v7558 = vunpack.c.l.b16 %v6837
    %v7559 = vunpack.c.h.b16 %v6837
    %v7560 = vunpack.c.l.b16 %v6838
    %v7561 = vunpack.c.h.b16 %v6838
    %v7562 = vunpack.c.l.b16 %v6839
    %v7563 = vunpack.c.h.b16 %v6839
    %v7564 = vunpack.c.l.b16 %v6840
    %v7565 = vunpack.c.h.b16 %v6840
    %v7566 = vunpack.c.l.b16 %v6841
    %v7567 = vunpack.c.h.b16 %v6841
    %v7568 = vunpack.c.l.b16 %v6842
    %v7569 = vunpack.c.h.b16 %v6842
    %v7570 = vunpack.c.l.b16 %v6843
    %v7571 = vunpack.c.h.b16 %v6843
    %v7572 = vunpack.c.l.b16 %v6844
    %v7573 = vunpack.c.h.b16 %v6844
    %v7574 = vunpack.c.l.b16 %v6845
    %v7575 = vunpack.c.h.b16 %v6845
    %v7576 = vunpack.c.l.b16 %v6846
    %v7577 = vunpack.c.h.b16 %v6846
    %v7578 = vunpack.c.l.b16 %v6847
    %v7579 = vunpack.c.h.b16 %v6847
    %v7580 = vunpack.c.l.b16 %v6848
    %v7581 = vunpack.c.h.b16 %v6848
    %v7582 = vunpack.c.l.b16 %v6849
    %v7583 = vunpack.c.h.b16 %v6849
    %v7584 = vunpack.c.l.b16 %v6850
    %v7585 = vunpack.c.h.b16 %v6850
    %v7586 = vunpack.c.l.b16 %v6851
    %v7587 = vunpack.c.h.b16 %v6851
    %v7588 = vunpack.c.l.b16 %v6852
    %v7589 = vunpack.c.h.b16 %v6852
    %v7590 = vunpack.c.l.b16 %v6853
    %v7591 = vunpack.c.h.b16 %v6853
    %v7592 = vunpack.c.l.b16 %v6854
    %v7593 = vunpack.c.h.b16 %v6854
    %v7594 = vunpack.c.l.b16 %v6855
    %v7595 = vunpack.c.h.b16 %v6855
    %v7596 = vunpack.c.l.b16 %v6856
    %v7597 = vunpack.c.h.b16 %v6856
    %v7598 = vunpack.c.l.b16 %v6857
    %v7599 = vunpack.c.h.b16 %v6857
    %v7600 = vunpack.c.l.b16 %v6858
    %v7601 = vunpack.c.h.b16 %v6858
    %v7602 = vunpack.c.l.b16 %v6859
    %v7603 = vunpack.c.h.b16 %v6859
    %v7604 = vunpack.c.l.b16 %v6860
    %v7605 = vunpack.c.h.b16 %v6860
    %v7606 = vunpack.c.l.b16 %v6861
    %v7607 = vunpack.c.h.b16 %v6861
    %v7608 = vunpack.c.l.b16 %v6862
    %v7609 = vunpack.c.h.b16 %v6862
    %v7610 = vunpack.c.l.b16 %v6863
    %v7611 = vunpack.c.h.b16 %v6863
    %v7612 = vunpack.c.l.b16 %v6864
    %v7613 = vunpack.c.h.b16 %v6864
    %v7614 = vunpack.c.l.b16 %v6865
    %v7615 = vunpack.c.h.b16 %v6865
    %v7616 = vunpack.c.l.b16 %v6866
    %v7617 = vunpack.c.h.b16 %v6866
    %v7618 = vunpack.c.l.b16 %v6867
    %v7619 = vunpack.c.h.b16 %v6867
    %v7620 = vunpack.c.l.b16 %v6868
    %v7621 = vunpack.c.h.b16 %v6868
    %v7622 = vunpack.c.l.b16 %v6869
    %v7623 = vunpack.c.h.b16 %v6869
    %v7624 = vunpack.c.l.b16 %v6870
    %v7625 = vunpack.c.h.b16 %v6870
    %v7626 = vunpack.c.l.b16 %v6871
    %v7627 = vunpack.c.h.b16 %v6871
    %v7628 = vunpack.c.l.b16 %v6872
    %v7629 = vunpack.c.h.b16 %v6872
    %v7630 = vunpack.c.l.b16 %v6873
    %v7631 = vunpack.c.h.b16 %v6873
    %v7632 = vunpack.c.l.b16 %v6874
    %v7633 = vunpack.c.h.b16 %v6874
    %v7634 = vunpack.c.l.b16 %v6875
    %v7635 = vunpack.c.h.b16 %v6875
    %v7636 = vunpack.c.l.b16 %v6876
    %v7637 = vunpack.c.h.b16 %v6876
    %v7638 = vunpack.c.l.b16 %v6877
    %v7639 = vunpack.c.h.b16 %v6877
    %v7640 = vunpack.c.l.b16 %v6878
    %v7641 = vunpack.c.h.b16 %v6878
    %v7642 = vunpack.c.l.b16 %v6879
    %v7643 = vunpack.c.h.b16 %v6879
    %v7644 = vunpack.c.l.b16 %v6880
    %v7645 = vunpack.c.h.b16 %v6880
    %v7646 = vunpack.c.l.b16 %v6881
    %v7647 = vunpack.c.h.b16 %v6881
    %v7648 = vunpack.c.l.b16 %v6882
    %v7649 = vunpack.c.h.b16 %v6882
    %v7650 = vunpack.c.l.b16 %v6883
    %v7651 = vunpack.c.h.b16 %v6883
    %v7652 = vunpack.c.l.b16 %v6884
    %v7653 = vunpack.c.h.b16 %v6884
    %v7654 = vunpack.c.l.b16 %v6885
    %v7655 = vunpack.c.h.b16 %v6885
    %v7656 = vunpack.c.l.b16 %v6886
    %v7657 = vunpack.c.h.b16 %v6886
    %v7658 = vunpack.c.l.b16 %v6887
    %v7659 = vunpack.c.h.b16 %v6887
    %v7660 = vunpack.c.l.b16 %v6888
    %v7661 = vunpack.c.h.b16 %v6888
    %v7662 = vunpack.c.l.b16 %v6889
    %v7663 = vunpack.c.h.b16 %v6889
    %v7664 = vunpack.c.l.b16 %v6890
    %v7665 = vunpack.c.h.b16 %v6890
    %v7666 = vunpack.c.l.b16 %v6891
    %v7667 = vunpack.c.h.b16 %v6891
    %v7668 = vunpack.c.l.b16 %v6892
    %v7669 = vunpack.c.h.b16 %v6892
    %v7670 = vunpack.c.l.b16 %v6893
    %v7671 = vunpack.c.h.b16 %v6893
    %v7672 = vunpack.c.l.b16 %v6894
    %v7673 = vunpack.c.h.b16 %v6894
    %v7674 = vunpack.c.l.b16 %v6895
    %v7675 = vunpack.c.h.b16 %v6895
    %v7676 = vunpack.c.l.b16 %v6896
    %v7677 = vunpack.c.h.b16 %v6896
    %v7678 = vunpack.c.l.b16 %v6897
    %v7679 = vunpack.c.h.b16 %v6897
    %v7680 = vunpack.c.l.b16 %v6898
    %v7681 = vunpack.c.h.b16 %v6898
    %v7682 = vunpack.c.l.b16 %v6899
    %v7683 = vunpack.c.h.b16 %v6899
    %v7684 = vunpack.c.l.b16 %v6900
    %v7685 = vunpack.c.h.b16 %v6900
    %v7686 = vunpack.c.l.b16 %v6901
    %v7687 = vunpack.c.h.b16 %v6901
    %v7688 = vpack.c.b16 %v7184, %v7176
    %v7689 = vpack.c.b16 %v7185, %v7177
    %v7690 = vpack.c.b16 %v7186, %v7178
    %v7691 = vpack.c.b16 %v7187, %v7179
    %v7692 = vpack.c.b16 %v7188, %v7180
    %v7693 = vpack.c.b16 %v7189, %v7181
    %v7694 = vpack.c.b16 %v7190, %v7182
    %v7695 = vpack.c.b16 %v7191, %v7183
    %v7696 = vpack.c.b16 %v7200, %v7192
    %v7697 = vpack.c.b16 %v7201, %v7193
    %v7698 = vpack.c.b16 %v7202, %v7194
    %v7699 = vpack.c.b16 %v7203, %v7195
    %v7700 = vpack.c.b16 %v7204, %v7196
    %v7701 = vpack.c.b16 %v7205, %v7197
    %v7702 = vpack.c.b16 %v7206, %v7198
    %v7703 = vpack.c.b16 %v7207, %v7199
    %v7704 = vpack.c.b16 %v7216, %v7208
    %v7705 = vpack.c.b16 %v7217, %v7209
    %v7706 = vpack.c.b16 %v7218, %v7210
    %v7707 = vpack.c.b16 %v7219, %v7211
    %v7708 = vpack.c.b16 %v7220, %v7212
    %v7709 = vpack.c.b16 %v7221, %v7213
    %v7710 = vpack.c.b16 %v7222, %v7214
    %v7711 = vpack.c.b16 %v7223, %v7215
    %v7712 = vpack.c.b16 %v7232, %v7224
    %v7713 = vpack.c.b16 %v7233, %v7225
    %v7714 = vpack.c.b16 %v7234, %v7226
    %v7715 = vpack.c.b16 %v7235, %v7227
    %v7716 = vpack.c.b16 %v7236, %v7228
    %v7717 = vpack.c.b16 %v7237, %v7229
    %v7718 = vpack.c.b16 %v7238, %v7230
    %v7719 = vpack.c.b16 %v7239, %v7231
    %v7720 = vpack.c.b16 %v7248, %v7240
    %v7721 = vpack.c.b16 %v7249, %v7241
    %v7722 = vpack.c.b16 %v7250, %v7242
    %v7723 = vpack.c.b16 %v7251, %v7243
    %v7724 = vpack.c.b16 %v7252, %v7244
    %v7725 = vpack.c.b16 %v7253, %v7245
    %v7726 = vpack.c.b16 %v7254, %v7246
    %v7727 = vpack.c.b16 %v7255, %v7247
    %v7728 = vpack.c.b16 %v7264, %v7256
    %v7729 = vpack.c.b16 %v7265, %v7257
    %v7730 = vpack.c.b16 %v7266, %v7258
    %v7731 = vpack.c.b16 %v7267, %v7259
    %v7732 = vpack.c.b16 %v7268, %v7260
    %v7733 = vpack.c.b16 %v7269, %v7261
    %v7734 = vpack.c.b16 %v7270, %v7262
    %v7735 = vpack.c.b16 %v7271, %v7263
    %v7736 = vpack.c.b16 %v7280, %v7272
    %v7737 = vpack.c.b16 %v7281, %v7273
    %v7738 = vpack.c.b16 %v7282, %v7274
    %v7739 = vpack.c.b16 %v7283, %v7275
    %v7740 = vpack.c.b16 %v7284, %v7276
    %v7741 = vpack.c.b16 %v7285, %v7277
    %v7742 = vpack.c.b16 %v7286, %v7278
    %v7743 = vpack.c.b16 %v7287, %v7279
    %v7744 = vpack.c.b16 %v7296, %v7288
    %v7745 = vpack.c.b16 %v7297, %v7289
    %v7746 = vpack.c.b16 %v7298, %v7290
    %v7747 = vpack.c.b16 %v7299, %v7291
    %v7748 = vpack.c.b16 %v7300, %v7292
    %v7749 = vpack.c.b16 %v7301, %v7293
    %v7750 = vpack.c.b16 %v7302, %v7294
    %v7751 = vpack.c.b16 %v7303, %v7295
    %v7752 = vpack.c.b16 %v7312, %v7304
    %v7753 = vpack.c.b16 %v7313, %v7305
    %v7754 = vpack.c.b16 %v7314, %v7306
    %v7755 = vpack.c.b16 %v7315, %v7307
    %v7756 = vpack.c.b16 %v7316, %v7308
    %v7757 = vpack.c.b16 %v7317, %v7309
    %v7758 = vpack.c.b16 %v7318, %v7310
    %v7759 = vpack.c.b16 %v7319, %v7311
    %v7760 = vpack.c.b16 %v7328, %v7320
    %v7761 = vpack.c.b16 %v7329, %v7321
    %v7762 = vpack.c.b16 %v7330, %v7322
    %v7763 = vpack.c.b16 %v7331, %v7323
    %v7764 = vpack.c.b16 %v7332, %v7324
    %v7765 = vpack.c.b16 %v7333, %v7325
    %v7766 = vpack.c.b16 %v7334, %v7326
    %v7767 = vpack.c.b16 %v7335, %v7327
    %v7768 = vpack.c.b16 %v7344, %v7336
    %v7769 = vpack.c.b16 %v7345, %v7337
    %v7770 = vpack.c.b16 %v7346, %v7338
    %v7771 = vpack.c.b16 %v7347, %v7339
    %v7772 = vpack.c.b16 %v7348, %v7340
    %v7773 = vpack.c.b16 %v7349, %v7341
    %v7774 = vpack.c.b16 %v7350, %v7342
    %v7775 = vpack.c.b16 %v7351, %v7343
    %v7776 = vpack.c.b16 %v7360, %v7352
    %v7777 = vpack.c.b16 %v7361, %v7353
    %v7778 = vpack.c.b16 %v7362, %v7354
    %v7779 = vpack.c.b16 %v7363, %v7355
    %v7780 = vpack.c.b16 %v7364, %v7356
    %v7781 = vpack.c.b16 %v7365, %v7357
    %v7782 = vpack.c.b16 %v7366, %v7358
    %v7783 = vpack.c.b16 %v7367, %v7359
    %v7784 = vpack.c.b16 %v7376, %v7368
    %v7785 = vpack.c.b16 %v7377, %v7369
    %v7786 = vpack.c.b16 %v7378, %v7370
    %v7787 = vpack.c.b16 %v7379, %v7371
    %v7788 = vpack.c.b16 %v7380, %v7372
    %v7789 = vpack.c.b16 %v7381, %v7373
    %v7790 = vpack.c.b16 %v7382, %v7374
    %v7791 = vpack.c.b16 %v7383, %v7375
    %v7792 = vpack.c.b16 %v7392, %v7384
    %v7793 = vpack.c.b16 %v7393, %v7385
    %v7794 = vpack.c.b16 %v7394, %v7386
    %v7795 = vpack.c.b16 %v7395, %v7387
    %v7796 = vpack.c.b16 %v7396, %v7388
    %v7797 = vpack.c.b16 %v7397, %v7389
    %v7798 = vpack.c.b16 %v7398, %v7390
    %v7799 = vpack.c.b16 %v7399, %v7391
    %v7800 = vpack.c.b16 %v7408, %v7400
    %v7801 = vpack.c.b16 %v7409, %v7401
    %v7802 = vpack.c.b16 %v7410, %v7402
    %v7803 = vpack.c.b16 %v7411, %v7403
    %v7804 = vpack.c.b16 %v7412, %v7404
    %v7805 = vpack.c.b16 %v7413, %v7405
    %v7806 = vpack.c.b16 %v7414, %v7406
    %v7807 = vpack.c.b16 %v7415, %v7407
    %v7808 = vpack.c.b16 %v7424, %v7416
    %v7809 = vpack.c.b16 %v7425, %v7417
    %v7810 = vpack.c.b16 %v7426, %v7418
    %v7811 = vpack.c.b16 %v7427, %v7419
    %v7812 = vpack.c.b16 %v7428, %v7420
    %v7813 = vpack.c.b16 %v7429, %v7421
    %v7814 = vpack.c.b16 %v7430, %v7422
    %v7815 = vpack.c.b16 %v7431, %v7423
    %v7816 = vpack.c.b16 %v7440, %v7432
    %v7817 = vpack.c.b16 %v7441, %v7433
    %v7818 = vpack.c.b16 %v7442, %v7434
    %v7819 = vpack.c.b16 %v7443, %v7435
    %v7820 = vpack.c.b16 %v7444, %v7436
    %v7821 = vpack.c.b16 %v7445, %v7437
    %v7822 = vpack.c.b16 %v7446, %v7438
    %v7823 = vpack.c.b16 %v7447, %v7439
    %v7824 = vpack.c.b16 %v7456, %v7448
    %v7825 = vpack.c.b16 %v7457, %v7449
    %v7826 = vpack.c.b16 %v7458, %v7450
    %v7827 = vpack.c.b16 %v7459, %v7451
    %v7828 = vpack.c.b16 %v7460, %v7452
    %v7829 = vpack.c.b16 %v7461, %v7453
    %v7830 = vpack.c.b16 %v7462, %v7454
    %v7831 = vpack.c.b16 %v7463, %v7455
    %v7832 = vpack.c.b16 %v7472, %v7464
    %v7833 = vpack.c.b16 %v7473, %v7465
    %v7834 = vpack.c.b16 %v7474, %v7466
    %v7835 = vpack.c.b16 %v7475, %v7467
    %v7836 = vpack.c.b16 %v7476, %v7468
    %v7837 = vpack.c.b16 %v7477, %v7469
    %v7838 = vpack.c.b16 %v7478, %v7470
    %v7839 = vpack.c.b16 %v7479, %v7471
    %v7840 = vpack.c.b16 %v7488, %v7480
    %v7841 = vpack.c.b16 %v7489, %v7481
    %v7842 = vpack.c.b16 %v7490, %v7482
    %v7843 = vpack.c.b16 %v7491, %v7483
    %v7844 = vpack.c.b16 %v7492, %v7484
    %v7845 = vpack.c.b16 %v7493, %v7485
    %v7846 = vpack.c.b16 %v7494, %v7486
    %v7847 = vpack.c.b16 %v7495, %v7487
    %v7848 = vpack.c.b16 %v7504, %v7496
    %v7849 = vpack.c.b16 %v7505, %v7497
    %v7850 = vpack.c.b16 %v7506, %v7498
    %v7851 = vpack.c.b16 %v7507, %v7499
    %v7852 = vpack.c.b16 %v7508, %v7500
    %v7853 = vpack.c.b16 %v7509, %v7501
    %v7854 = vpack.c.b16 %v7510, %v7502
    %v7855 = vpack.c.b16 %v7511, %v7503
    %v7856 = vpack.c.b16 %v7520, %v7512
    %v7857 = vpack.c.b16 %v7521, %v7513
    %v7858 = vpack.c.b16 %v7522, %v7514
    %v7859 = vpack.c.b16 %v7523, %v7515
    %v7860 = vpack.c.b16 %v7524, %v7516
    %v7861 = vpack.c.b16 %v7525, %v7517
    %v7862 = vpack.c.b16 %v7526, %v7518
    %v7863 = vpack.c.b16 %v7527, %v7519
    %v7864 = vpack.c.b16 %v7536, %v7528
    %v7865 = vpack.c.b16 %v7537, %v7529
    %v7866 = vpack.c.b16 %v7538, %v7530
    %v7867 = vpack.c.b16 %v7539, %v7531
    %v7868 = vpack.c.b16 %v7540, %v7532
    %v7869 = vpack.c.b16 %v7541, %v7533
    %v7870 = vpack.c.b16 %v7542, %v7534
    %v7871 = vpack.c.b16 %v7543, %v7535
    %v7872 = vpack.c.b16 %v7552, %v7544
    %v7873 = vpack.c.b16 %v7553, %v7545
    %v7874 = vpack.c.b16 %v7554, %v7546
    %v7875 = vpack.c.b16 %v7555, %v7547
    %v7876 = vpack.c.b16 %v7556, %v7548
    %v7877 = vpack.c.b16 %v7557, %v7549
    %v7878 = vpack.c.b16 %v7558, %v7550
    %v7879 = vpack.c.b16 %v7559, %v7551
    %v7880 = vpack.c.b16 %v7568, %v7560
    %v7881 = vpack.c.b16 %v7569, %v7561
    %v7882 = vpack.c.b16 %v7570, %v7562
    %v7883 = vpack.c.b16 %v7571, %v7563
    %v7884 = vpack.c.b16 %v7572, %v7564
    %v7885 = vpack.c.b16 %v7573, %v7565
    %v7886 = vpack.c.b16 %v7574, %v7566
    %v7887 = vpack.c.b16 %v7575, %v7567
    %v7888 = vpack.c.b16 %v7584, %v7576
    %v7889 = vpack.c.b16 %v7585, %v7577
    %v7890 = vpack.c.b16 %v7586, %v7578
    %v7891 = vpack.c.b16 %v7587, %v7579
    %v7892 = vpack.c.b16 %v7588, %v7580
    %v7893 = vpack.c.b16 %v7589, %v7581
    %v7894 = vpack.c.b16 %v7590, %v7582
    %v7895 = vpack.c.b16 %v7591, %v7583
    %v7896 = vpack.c.b16 %v7600, %v7592
    %v7897 = vpack.c.b16 %v7601, %v7593
    %v7898 = vpack.c.b16 %v7602, %v7594
    %v7899 = vpack.c.b16 %v7603, %v7595
    %v7900 = vpack.c.b16 %v7604, %v7596
    %v7901 = vpack.c.b16 %v7605, %v7597
    %v7902 = vpack.c.b16 %v7606, %v7598
    %v7903 = vpack.c.b16 %v7607, %v7599
    %v7904 = vpack.c.b16 %v7616, %v7608
    %v7905 = vpack.c.b16 %v7617, %v7609
    %v7906 = vpack.c.b16 %v7618, %v7610
    %v7907 = vpack.c.b16 %v7619, %v7611
    %v7908 = vpack.c.b16 %v7620, %v7612
    %v7909 = vpack.c.b16 %v7621, %v7613
    %v7910 = vpack.c.b16 %v7622, %v7614
    %v7911 = vpack.c.b16 %v7623, %v7615
    %v7912 = vpack.c.b16 %v7632, %v7624
    %v7913 = vpack.c.b16 %v7633, %v7625
    %v7914 = vpack.c.b16 %v7634, %v7626
    %v7915 = vpack.c.b16 %v7635, %v7627
    %v7916 = vpack.c.b16 %v7636, %v7628
    %v7917 = vpack.c.b16 %v7637, %v7629
    %v7918 = vpack.c.b16 %v7638, %v7630
    %v7919 = vpack.c.b16 %v7639, %v7631
    %v7920 = vpack.c.b16 %v7648, %v7640
    %v7921 = vpack.c.b16 %v7649, %v7641
    %v7922 = vpack.c.b16 %v7650, %v7642
    %v7923 = vpack.c.b16 %v7651, %v7643
    %v7924 = vpack.c.b16 %v7652, %v7644
    %v7925 = vpack.c.b16 %v7653, %v7645
    %v7926 = vpack.c.b16 %v7654, %v7646
    %v7927 = vpack.c.b16 %v7655, %v7647
    %v7928 = vpack.c.b16 %v7664, %v7656
    %v7929 = vpack.c.b16 %v7665, %v7657
    %v7930 = vpack.c.b16 %v7666, %v7658
    %v7931 = vpack.c.b16 %v7667, %v7659
    %v7932 = vpack.c.b16 %v7668, %v7660
    %v7933 = vpack.c.b16 %v7669, %v7661
    %v7934 = vpack.c.b16 %v7670, %v7662
    %v7935 = vpack.c.b16 %v7671, %v7663
    %v7936 = vpack.c.b16 %v7680, %v7672
    %v7937 = vpack.c.b16 %v7681, %v7673
    %v7938 = vpack.c.b16 %v7682, %v7674
    %v7939 = vpack.c.b16 %v7683, %v7675
    %v7940 = vpack.c.b16 %v7684, %v7676
    %v7941 = vpack.c.b16 %v7685, %v7677
    %v7942 = vpack.c.b16 %v7686, %v7678
    %v7943 = vpack.c.b16 %v7687, %v7679
    %8200 = vmatpush.bf16.msra.mxu0 %v7744
    %8201 = vmatpush.bf16.msra.mxu0 %v7736
    %8202 = vmatpush.bf16.msra.mxu0 %v7728
    %8203 = vmatpush.bf16.msra.mxu0 %v7720
    %8204 = vmatpush.bf16.msra.mxu0 %v7712
    %8205 = vmatpush.bf16.msra.mxu0 %v7704
    %8206 = vmatpush.bf16.msra.mxu0 %v7696
    %8207 = vmatpush.bf16.msra.mxu0 %v7688
    %8208 = vmatmul.bf16.gmra.mxu0 %v6642
    %v8209 = vpop.f32.mrf.mxu0
    %v8210 = vadd.f32 %v6904, %v8209
    %v8211 = vpop.f32.mrf.mxu0
    %8212 = vdwg.mxu0
    %8213 = vmatpush.bf16.msra.mxu0 %v7808
    %8214 = vmatpush.bf16.msra.mxu0 %v7800
    %8215 = vmatpush.bf16.msra.mxu0 %v7792
    %8216 = vmatpush.bf16.msra.mxu0 %v7784
    %8217 = vmatpush.bf16.msra.mxu0 %v7776
    %8218 = vmatpush.bf16.msra.mxu0 %v7768
    %8219 = vmatpush.bf16.msra.mxu0 %v7760
    %8220 = vmatpush.bf16.msra.mxu0 %v7752
    %8221 = vmatmul.bf16.gmra.mxu0 %v6643
    %v8222 = vpop.f32.mrf.mxu0
    %v8223 = vadd.f32 %v8210, %v8222
    %v8224 = vpop.f32.mrf.mxu0
    %8225 = vdwg.mxu0
    %8226 = vmatpush.bf16.msra.mxu0 %v7872
    %8227 = vmatpush.bf16.msra.mxu0 %v7864
    %8228 = vmatpush.bf16.msra.mxu0 %v7856
    %8229 = vmatpush.bf16.msra.mxu0 %v7848
    %8230 = vmatpush.bf16.msra.mxu0 %v7840
    %8231 = vmatpush.bf16.msra.mxu0 %v7832
    %8232 = vmatpush.bf16.msra.mxu0 %v7824
    %8233 = vmatpush.bf16.msra.mxu0 %v7816
    %8234 = vmatmul.bf16.gmra.mxu0 %v6644
    %v8235 = vpop.f32.mrf.mxu0
    %v8236 = vadd.f32 %v8223, %v8235
    %v8237 = vpop.f32.mrf.mxu0
    %8238 = vdwg.mxu0
    %8239 = vmatpush.bf16.msra.mxu0 %v7936
    %8240 = vmatpush.bf16.msra.mxu0 %v7928
    %8241 = vmatpush.bf16.msra.mxu0 %v7920
    %8242 = vmatpush.bf16.msra.mxu0 %v7912
    %8243 = vmatpush.bf16.msra.mxu0 %v7904
    %8244 = vmatpush.bf16.msra.mxu0 %v7896
    %8245 = vmatpush.bf16.msra.mxu0 %v7888
    %8246 = vmatpush.bf16.msra.mxu0 %v7880
    %8247 = vmatmul.bf16.gmra.mxu0 %v6645
    %v8248 = vpop.f32.mrf.mxu0
    %v8249 = vadd.f32 %v8236, %v8248
    %v8250 = vpop.f32.mrf.mxu0
    %8251 = vdwg.mxu0
    %8252 = vmatpush.bf16.msra.mxu0 %v7745
    %8253 = vmatpush.bf16.msra.mxu0 %v7737
    %8254 = vmatpush.bf16.msra.mxu0 %v7729
    %8255 = vmatpush.bf16.msra.mxu0 %v7721
    %8256 = vmatpush.bf16.msra.mxu0 %v7713
    %8257 = vmatpush.bf16.msra.mxu0 %v7705
    %8258 = vmatpush.bf16.msra.mxu0 %v7697
    %8259 = vmatpush.bf16.msra.mxu0 %v7689
    %8260 = vmatmul.bf16.gmra.mxu0 %v6642
    %v8261 = vpop.f32.mrf.mxu0
    %v8262 = vadd.f32 %v6905, %v8261
    %v8263 = vpop.f32.mrf.mxu0
    %8264 = vdwg.mxu0
    %8265 = vmatpush.bf16.msra.mxu0 %v7809
    %8266 = vmatpush.bf16.msra.mxu0 %v7801
    %8267 = vmatpush.bf16.msra.mxu0 %v7793
    %8268 = vmatpush.bf16.msra.mxu0 %v7785
    %8269 = vmatpush.bf16.msra.mxu0 %v7777
    %8270 = vmatpush.bf16.msra.mxu0 %v7769
    %8271 = vmatpush.bf16.msra.mxu0 %v7761
    %8272 = vmatpush.bf16.msra.mxu0 %v7753
    %8273 = vmatmul.bf16.gmra.mxu0 %v6643
    %v8274 = vpop.f32.mrf.mxu0
    %v8275 = vadd.f32 %v8262, %v8274
    %v8276 = vpop.f32.mrf.mxu0
    %8277 = vdwg.mxu0
    %8278 = vmatpush.bf16.msra.mxu0 %v7873
    %8279 = vmatpush.bf16.msra.mxu0 %v7865
    %8280 = vmatpush.bf16.msra.mxu0 %v7857
    %8281 = vmatpush.bf16.msra.mxu0 %v7849
    %8282 = vmatpush.bf16.msra.mxu0 %v7841
    %8283 = vmatpush.bf16.msra.mxu0 %v7833
    %8284 = vmatpush.bf16.msra.mxu0 %v7825
    %8285 = vmatpush.bf16.msra.mxu0 %v7817
    %8286 = vmatmul.bf16.gmra.mxu0 %v6644
    %v8287 = vpop.f32.mrf.mxu0
    %v8288 = vadd.f32 %v8275, %v8287
    %v8289 = vpop.f32.mrf.mxu0
    %8290 = vdwg.mxu0
    %8291 = vmatpush.bf16.msra.mxu0 %v7937
    %8292 = vmatpush.bf16.msra.mxu0 %v7929
    %8293 = vmatpush.bf16.msra.mxu0 %v7921
    %8294 = vmatpush.bf16.msra.mxu0 %v7913
    %8295 = vmatpush.bf16.msra.mxu0 %v7905
    %8296 = vmatpush.bf16.msra.mxu0 %v7897
    %8297 = vmatpush.bf16.msra.mxu0 %v7889
    %8298 = vmatpush.bf16.msra.mxu0 %v7881
    %8299 = vmatmul.bf16.gmra.mxu0 %v6645
    %v8300 = vpop.f32.mrf.mxu0
    %v8301 = vadd.f32 %v8288, %v8300
    %v8302 = vpop.f32.mrf.mxu0
    %8303 = vdwg.mxu0
    %8304 = vmatpush.bf16.msra.mxu0 %v7746
    %8305 = vmatpush.bf16.msra.mxu0 %v7738
    %8306 = vmatpush.bf16.msra.mxu0 %v7730
    %8307 = vmatpush.bf16.msra.mxu0 %v7722
    %8308 = vmatpush.bf16.msra.mxu0 %v7714
    %8309 = vmatpush.bf16.msra.mxu0 %v7706
    %8310 = vmatpush.bf16.msra.mxu0 %v7698
    %8311 = vmatpush.bf16.msra.mxu0 %v7690
    %8312 = vmatmul.bf16.gmra.mxu0 %v6642
    %v8313 = vpop.f32.mrf.mxu0
    %v8314 = vadd.f32 %v6906, %v8313
    %v8315 = vpop.f32.mrf.mxu0
    %8316 = vdwg.mxu0
    %8317 = vmatpush.bf16.msra.mxu0 %v7810
    %8318 = vmatpush.bf16.msra.mxu0 %v7802
    %8319 = vmatpush.bf16.msra.mxu0 %v7794
    %8320 = vmatpush.bf16.msra.mxu0 %v7786
    %8321 = vmatpush.bf16.msra.mxu0 %v7778
    %8322 = vmatpush.bf16.msra.mxu0 %v7770
    %8323 = vmatpush.bf16.msra.mxu0 %v7762
    %8324 = vmatpush.bf16.msra.mxu0 %v7754
    %8325 = vmatmul.bf16.gmra.mxu0 %v6643
    %v8326 = vpop.f32.mrf.mxu0
    %v8327 = vadd.f32 %v8314, %v8326
    %v8328 = vpop.f32.mrf.mxu0
    %8329 = vdwg.mxu0
    %8330 = vmatpush.bf16.msra.mxu0 %v7874
    %8331 = vmatpush.bf16.msra.mxu0 %v7866
    %8332 = vmatpush.bf16.msra.mxu0 %v7858
    %8333 = vmatpush.bf16.msra.mxu0 %v7850
    %8334 = vmatpush.bf16.msra.mxu0 %v7842
    %8335 = vmatpush.bf16.msra.mxu0 %v7834
    %8336 = vmatpush.bf16.msra.mxu0 %v7826
    %8337 = vmatpush.bf16.msra.mxu0 %v7818
    %8338 = vmatmul.bf16.gmra.mxu0 %v6644
    %v8339 = vpop.f32.mrf.mxu0
    %v8340 = vadd.f32 %v8327, %v8339
    %v8341 = vpop.f32.mrf.mxu0
    %8342 = vdwg.mxu0
    %8343 = vmatpush.bf16.msra.mxu0 %v7938
    %8344 = vmatpush.bf16.msra.mxu0 %v7930
    %8345 = vmatpush.bf16.msra.mxu0 %v7922
    %8346 = vmatpush.bf16.msra.mxu0 %v7914
    %8347 = vmatpush.bf16.msra.mxu0 %v7906
    %8348 = vmatpush.bf16.msra.mxu0 %v7898
    %8349 = vmatpush.bf16.msra.mxu0 %v7890
    %8350 = vmatpush.bf16.msra.mxu0 %v7882
    %8351 = vmatmul.bf16.gmra.mxu0 %v6645
    %v8352 = vpop.f32.mrf.mxu0
    %v8353 = vadd.f32 %v8340, %v8352
    %v8354 = vpop.f32.mrf.mxu0
    %8355 = vdwg.mxu0
    %8356 = vmatpush.bf16.msra.mxu0 %v7747
    %8357 = vmatpush.bf16.msra.mxu0 %v7739
    %8358 = vmatpush.bf16.msra.mxu0 %v7731
    %8359 = vmatpush.bf16.msra.mxu0 %v7723
    %8360 = vmatpush.bf16.msra.mxu0 %v7715
    %8361 = vmatpush.bf16.msra.mxu0 %v7707
    %8362 = vmatpush.bf16.msra.mxu0 %v7699
    %8363 = vmatpush.bf16.msra.mxu0 %v7691
    %8364 = vmatmul.bf16.gmra.mxu0 %v6642
    %v8365 = vpop.f32.mrf.mxu0
    %v8366 = vadd.f32 %v6907, %v8365
    %v8367 = vpop.f32.mrf.mxu0
    %8368 = vdwg.mxu0
    %8369 = vmatpush.bf16.msra.mxu0 %v7811
    %8370 = vmatpush.bf16.msra.mxu0 %v7803
    %8371 = vmatpush.bf16.msra.mxu0 %v7795
    %8372 = vmatpush.bf16.msra.mxu0 %v7787
    %8373 = vmatpush.bf16.msra.mxu0 %v7779
    %8374 = vmatpush.bf16.msra.mxu0 %v7771
    %8375 = vmatpush.bf16.msra.mxu0 %v7763
    %8376 = vmatpush.bf16.msra.mxu0 %v7755
    %8377 = vmatmul.bf16.gmra.mxu0 %v6643
    %v8378 = vpop.f32.mrf.mxu0
    %v8379 = vadd.f32 %v8366, %v8378
    %v8380 = vpop.f32.mrf.mxu0
    %8381 = vdwg.mxu0
    %8382 = vmatpush.bf16.msra.mxu0 %v7875
    %8383 = vmatpush.bf16.msra.mxu0 %v7867
    %8384 = vmatpush.bf16.msra.mxu0 %v7859
    %8385 = vmatpush.bf16.msra.mxu0 %v7851
    %8386 = vmatpush.bf16.msra.mxu0 %v7843
    %8387 = vmatpush.bf16.msra.mxu0 %v7835
    %8388 = vmatpush.bf16.msra.mxu0 %v7827
    %8389 = vmatpush.bf16.msra.mxu0 %v7819
    %8390 = vmatmul.bf16.gmra.mxu0 %v6644
    %v8391 = vpop.f32.mrf.mxu0
    %v8392 = vadd.f32 %v8379, %v8391
    %v8393 = vpop.f32.mrf.mxu0
    %8394 = vdwg.mxu0
    %8395 = vmatpush.bf16.msra.mxu0 %v7939
    %8396 = vmatpush.bf16.msra.mxu0 %v7931
    %8397 = vmatpush.bf16.msra.mxu0 %v7923
    %8398 = vmatpush.bf16.msra.mxu0 %v7915
    %8399 = vmatpush.bf16.msra.mxu0 %v7907
    %8400 = vmatpush.bf16.msra.mxu0 %v7899
    %8401 = vmatpush.bf16.msra.mxu0 %v7891
    %8402 = vmatpush.bf16.msra.mxu0 %v7883
    %8403 = vmatmul.bf16.gmra.mxu0 %v6645
    %v8404 = vpop.f32.mrf.mxu0
    %v8405 = vadd.f32 %v8392, %v8404
    %v8406 = vpop.f32.mrf.mxu0
    %8407 = vdwg.mxu0
    %8408 = vmatpush.bf16.msra.mxu0 %v7748
    %8409 = vmatpush.bf16.msra.mxu0 %v7740
    %8410 = vmatpush.bf16.msra.mxu0 %v7732
    %8411 = vmatpush.bf16.msra.mxu0 %v7724
    %8412 = vmatpush.bf16.msra.mxu0 %v7716
    %8413 = vmatpush.bf16.msra.mxu0 %v7708
    %8414 = vmatpush.bf16.msra.mxu0 %v7700
    %8415 = vmatpush.bf16.msra.mxu0 %v7692
    %8416 = vmatmul.bf16.gmra.mxu0 %v6642
    %v8417 = vpop.f32.mrf.mxu0
    %v8418 = vadd.f32 %v6908, %v8417
    %v8419 = vpop.f32.mrf.mxu0
    %8420 = vdwg.mxu0
    %8421 = vmatpush.bf16.msra.mxu0 %v7812
    %8422 = vmatpush.bf16.msra.mxu0 %v7804
    %8423 = vmatpush.bf16.msra.mxu0 %v7796
    %8424 = vmatpush.bf16.msra.mxu0 %v7788
    %8425 = vmatpush.bf16.msra.mxu0 %v7780
    %8426 = vmatpush.bf16.msra.mxu0 %v7772
    %8427 = vmatpush.bf16.msra.mxu0 %v7764
    %8428 = vmatpush.bf16.msra.mxu0 %v7756
    %8429 = vmatmul.bf16.gmra.mxu0 %v6643
    %v8430 = vpop.f32.mrf.mxu0
    %v8431 = vadd.f32 %v8418, %v8430
    %v8432 = vpop.f32.mrf.mxu0
    %8433 = vdwg.mxu0
    %8434 = vmatpush.bf16.msra.mxu0 %v7876
    %8435 = vmatpush.bf16.msra.mxu0 %v7868
    %8436 = vmatpush.bf16.msra.mxu0 %v7860
    %8437 = vmatpush.bf16.msra.mxu0 %v7852
    %8438 = vmatpush.bf16.msra.mxu0 %v7844
    %8439 = vmatpush.bf16.msra.mxu0 %v7836
    %8440 = vmatpush.bf16.msra.mxu0 %v7828
    %8441 = vmatpush.bf16.msra.mxu0 %v7820
    %8442 = vmatmul.bf16.gmra.mxu0 %v6644
    %v8443 = vpop.f32.mrf.mxu0
    %v8444 = vadd.f32 %v8431, %v8443
    %v8445 = vpop.f32.mrf.mxu0
    %8446 = vdwg.mxu0
    %8447 = vmatpush.bf16.msra.mxu0 %v7940
    %8448 = vmatpush.bf16.msra.mxu0 %v7932
    %8449 = vmatpush.bf16.msra.mxu0 %v7924
    %8450 = vmatpush.bf16.msra.mxu0 %v7916
    %8451 = vmatpush.bf16.msra.mxu0 %v7908
    %8452 = vmatpush.bf16.msra.mxu0 %v7900
    %8453 = vmatpush.bf16.msra.mxu0 %v7892
    %8454 = vmatpush.bf16.msra.mxu0 %v7884
    %8455 = vmatmul.bf16.gmra.mxu0 %v6645
    %v8456 = vpop.f32.mrf.mxu0
    %v8457 = vadd.f32 %v8444, %v8456
    %v8458 = vpop.f32.mrf.mxu0
    %8459 = vdwg.mxu0
    %8460 = vmatpush.bf16.msra.mxu0 %v7749
    %8461 = vmatpush.bf16.msra.mxu0 %v7741
    %8462 = vmatpush.bf16.msra.mxu0 %v7733
    %8463 = vmatpush.bf16.msra.mxu0 %v7725
    %8464 = vmatpush.bf16.msra.mxu0 %v7717
    %8465 = vmatpush.bf16.msra.mxu0 %v7709
    %8466 = vmatpush.bf16.msra.mxu0 %v7701
    %8467 = vmatpush.bf16.msra.mxu0 %v7693
    %8468 = vmatmul.bf16.gmra.mxu0 %v6642
    %v8469 = vpop.f32.mrf.mxu0
    %v8470 = vadd.f32 %v6909, %v8469
    %v8471 = vpop.f32.mrf.mxu0
    %8472 = vdwg.mxu0
    %8473 = vmatpush.bf16.msra.mxu0 %v7813
    %8474 = vmatpush.bf16.msra.mxu0 %v7805
    %8475 = vmatpush.bf16.msra.mxu0 %v7797
    %8476 = vmatpush.bf16.msra.mxu0 %v7789
    %8477 = vmatpush.bf16.msra.mxu0 %v7781
    %8478 = vmatpush.bf16.msra.mxu0 %v7773
    %8479 = vmatpush.bf16.msra.mxu0 %v7765
    %8480 = vmatpush.bf16.msra.mxu0 %v7757
    %8481 = vmatmul.bf16.gmra.mxu0 %v6643
    %v8482 = vpop.f32.mrf.mxu0
    %v8483 = vadd.f32 %v8470, %v8482
    %v8484 = vpop.f32.mrf.mxu0
    %8485 = vdwg.mxu0
    %8486 = vmatpush.bf16.msra.mxu0 %v7877
    %8487 = vmatpush.bf16.msra.mxu0 %v7869
    %8488 = vmatpush.bf16.msra.mxu0 %v7861
    %8489 = vmatpush.bf16.msra.mxu0 %v7853
    %8490 = vmatpush.bf16.msra.mxu0 %v7845
    %8491 = vmatpush.bf16.msra.mxu0 %v7837
    %8492 = vmatpush.bf16.msra.mxu0 %v7829
    %8493 = vmatpush.bf16.msra.mxu0 %v7821
    %8494 = vmatmul.bf16.gmra.mxu0 %v6644
    %v8495 = vpop.f32.mrf.mxu0
    %v8496 = vadd.f32 %v8483, %v8495
    %v8497 = vpop.f32.mrf.mxu0
    %8498 = vdwg.mxu0
    %8499 = vmatpush.bf16.msra.mxu0 %v7941
    %8500 = vmatpush.bf16.msra.mxu0 %v7933
    %8501 = vmatpush.bf16.msra.mxu0 %v7925
    %8502 = vmatpush.bf16.msra.mxu0 %v7917
    %8503 = vmatpush.bf16.msra.mxu0 %v7909
    %8504 = vmatpush.bf16.msra.mxu0 %v7901
    %8505 = vmatpush.bf16.msra.mxu0 %v7893
    %8506 = vmatpush.bf16.msra.mxu0 %v7885
    %8507 = vmatmul.bf16.gmra.mxu0 %v6645
    %v8508 = vpop.f32.mrf.mxu0
    %v8509 = vadd.f32 %v8496, %v8508
    %v8510 = vpop.f32.mrf.mxu0
    %8511 = vdwg.mxu0
    %8512 = vmatpush.bf16.msra.mxu0 %v7750
    %8513 = vmatpush.bf16.msra.mxu0 %v7742
    %8514 = vmatpush.bf16.msra.mxu0 %v7734
    %8515 = vmatpush.bf16.msra.mxu0 %v7726
    %8516 = vmatpush.bf16.msra.mxu0 %v7718
    %8517 = vmatpush.bf16.msra.mxu0 %v7710
    %8518 = vmatpush.bf16.msra.mxu0 %v7702
    %8519 = vmatpush.bf16.msra.mxu0 %v7694
    %8520 = vmatmul.bf16.gmra.mxu0 %v6642
    %v8521 = vpop.f32.mrf.mxu0
    %v8522 = vadd.f32 %v6910, %v8521
    %v8523 = vpop.f32.mrf.mxu0
    %8524 = vdwg.mxu0
    %8525 = vmatpush.bf16.msra.mxu0 %v7814
    %8526 = vmatpush.bf16.msra.mxu0 %v7806
    %8527 = vmatpush.bf16.msra.mxu0 %v7798
    %8528 = vmatpush.bf16.msra.mxu0 %v7790
    %8529 = vmatpush.bf16.msra.mxu0 %v7782
    %8530 = vmatpush.bf16.msra.mxu0 %v7774
    %8531 = vmatpush.bf16.msra.mxu0 %v7766
    %8532 = vmatpush.bf16.msra.mxu0 %v7758
    %8533 = vmatmul.bf16.gmra.mxu0 %v6643
    %v8534 = vpop.f32.mrf.mxu0
    %v8535 = vadd.f32 %v8522, %v8534
    %v8536 = vpop.f32.mrf.mxu0
    %8537 = vdwg.mxu0
    %8538 = vmatpush.bf16.msra.mxu0 %v7878
    %8539 = vmatpush.bf16.msra.mxu0 %v7870
    %8540 = vmatpush.bf16.msra.mxu0 %v7862
    %8541 = vmatpush.bf16.msra.mxu0 %v7854
    %8542 = vmatpush.bf16.msra.mxu0 %v7846
    %8543 = vmatpush.bf16.msra.mxu0 %v7838
    %8544 = vmatpush.bf16.msra.mxu0 %v7830
    %8545 = vmatpush.bf16.msra.mxu0 %v7822
    %8546 = vmatmul.bf16.gmra.mxu0 %v6644
    %v8547 = vpop.f32.mrf.mxu0
    %v8548 = vadd.f32 %v8535, %v8547
    %v8549 = vpop.f32.mrf.mxu0
    %8550 = vdwg.mxu0
    %8551 = vmatpush.bf16.msra.mxu0 %v7942
    %8552 = vmatpush.bf16.msra.mxu0 %v7934
    %8553 = vmatpush.bf16.msra.mxu0 %v7926
    %8554 = vmatpush.bf16.msra.mxu0 %v7918
    %8555 = vmatpush.bf16.msra.mxu0 %v7910
    %8556 = vmatpush.bf16.msra.mxu0 %v7902
    %8557 = vmatpush.bf16.msra.mxu0 %v7894
    %8558 = vmatpush.bf16.msra.mxu0 %v7886
    %8559 = vmatmul.bf16.gmra.mxu0 %v6645
    %v8560 = vpop.f32.mrf.mxu0
    %v8561 = vadd.f32 %v8548, %v8560
    %v8562 = vpop.f32.mrf.mxu0
    %8563 = vdwg.mxu0
    %8564 = vmatpush.bf16.msra.mxu0 %v7751
    %8565 = vmatpush.bf16.msra.mxu0 %v7743
    %8566 = vmatpush.bf16.msra.mxu0 %v7735
    %8567 = vmatpush.bf16.msra.mxu0 %v7727
    %8568 = vmatpush.bf16.msra.mxu0 %v7719
    %8569 = vmatpush.bf16.msra.mxu0 %v7711
    %8570 = vmatpush.bf16.msra.mxu0 %v7703
    %8571 = vmatpush.bf16.msra.mxu0 %v7695
    %8572 = vmatmul.bf16.gmra.mxu0 %v6642
    %v8573 = vpop.f32.mrf.mxu0
    %v8574 = vadd.f32 %v6911, %v8573
    %v8575 = vpop.f32.mrf.mxu0
    %8576 = vdwg.mxu0
    %8577 = vmatpush.bf16.msra.mxu0 %v7815
    %8578 = vmatpush.bf16.msra.mxu0 %v7807
    %8579 = vmatpush.bf16.msra.mxu0 %v7799
    %8580 = vmatpush.bf16.msra.mxu0 %v7791
    %8581 = vmatpush.bf16.msra.mxu0 %v7783
    %8582 = vmatpush.bf16.msra.mxu0 %v7775
    %8583 = vmatpush.bf16.msra.mxu0 %v7767
    %8584 = vmatpush.bf16.msra.mxu0 %v7759
    %8585 = vmatmul.bf16.gmra.mxu0 %v6643
    %v8586 = vpop.f32.mrf.mxu0
    %v8587 = vadd.f32 %v8574, %v8586
    %v8588 = vpop.f32.mrf.mxu0
    %8589 = vdwg.mxu0
    %8590 = vmatpush.bf16.msra.mxu0 %v7879
    %8591 = vmatpush.bf16.msra.mxu0 %v7871
    %8592 = vmatpush.bf16.msra.mxu0 %v7863
    %8593 = vmatpush.bf16.msra.mxu0 %v7855
    %8594 = vmatpush.bf16.msra.mxu0 %v7847
    %8595 = vmatpush.bf16.msra.mxu0 %v7839
    %8596 = vmatpush.bf16.msra.mxu0 %v7831
    %8597 = vmatpush.bf16.msra.mxu0 %v7823
    %8598 = vmatmul.bf16.gmra.mxu0 %v6644
    %v8599 = vpop.f32.mrf.mxu0
    %v8600 = vadd.f32 %v8587, %v8599
    %v8601 = vpop.f32.mrf.mxu0
    %8602 = vdwg.mxu0
    %8603 = vmatpush.bf16.msra.mxu0 %v7943
    %8604 = vmatpush.bf16.msra.mxu0 %v7935
    %8605 = vmatpush.bf16.msra.mxu0 %v7927
    %8606 = vmatpush.bf16.msra.mxu0 %v7919
    %8607 = vmatpush.bf16.msra.mxu0 %v7911
    %8608 = vmatpush.bf16.msra.mxu0 %v7903
    %8609 = vmatpush.bf16.msra.mxu0 %v7895
    %8610 = vmatpush.bf16.msra.mxu0 %v7887
    %8611 = vmatmul.bf16.gmra.mxu0 %v6645
    %v8612 = vpop.f32.mrf.mxu0
    %v8613 = vadd.f32 %v8600, %v8612
    %v8614 = vpop.f32.mrf.mxu0
    %8615 = vdwg.mxu0
    %v8616 = vmax.f32 %v8249, 0.0
    %v8617 = vmax.f32 %v8301, 0.0
    %v8618 = vmax.f32 %v8353, 0.0
    %v8619 = vmax.f32 %v8405, 0.0
    %v8620 = vmax.f32 %v8457, 0.0
    %v8621 = vmax.f32 %v8509, 0.0
    %v8622 = vmax.f32 %v8561, 0.0
    %v8623 = vmax.f32 %v8613, 0.0
    %v8624 = vld [vmem:[%s7] sm:$0xff]
    %v8625 = vld [vmem:[%s7 + $0x8] sm:$0xff]
    %v8626 = vld [vmem:[%s7 + $0x10] sm:$0xff]
    %v8627 = vld [vmem:[%s7 + $0x18] sm:$0xff]
    %v8628 = vld [vmem:[%s7 + $0x20] sm:$0xff]
    %v8629 = vld [vmem:[%s7 + $0x28] sm:$0xff]
    %v8630 = vld [vmem:[%s7 + $0x30] sm:$0xff]
    %v8631 = vld [vmem:[%s7 + $0x38] sm:$0xff]
    %v8632 = vld [vmem:[%s7 + $0x40] sm:$0xff]
    %v8633 = vld [vmem:[%s7 + $0x48] sm:$0xff]
    %v8634 = vld [vmem:[%s7 + $0x50] sm:$0xff]
    %v8635 = vld [vmem:[%s7 + $0x58] sm:$0xff]
    %v8636 = vld [vmem:[%s7 + $0x60] sm:$0xff]
    %v8637 = vld [vmem:[%s7 + $0x68] sm:$0xff]
    %v8638 = vld [vmem:[%s7 + $0x70] sm:$0xff]
    %v8639 = vld [vmem:[%s7 + $0x78] sm:$0xff]
    %v8640 = vld [vmem:[%s7 + $0x80] sm:$0xff]
    %v8641 = vld [vmem:[%s7 + $0x88] sm:$0xff]
    %v8642 = vld [vmem:[%s7 + $0x90] sm:$0xff]
    %v8643 = vld [vmem:[%s7 + $0x98] sm:$0xff]
    %v8644 = vld [vmem:[%s7 + $0xa0] sm:$0xff]
    %v8645 = vld [vmem:[%s7 + $0xa8] sm:$0xff]
    %v8646 = vld [vmem:[%s7 + $0xb0] sm:$0xff]
    %v8647 = vld [vmem:[%s7 + $0xb8] sm:$0xff]
    %v8648 = vld [vmem:[%s7 + $0xc0] sm:$0xff]
    %v8649 = vld [vmem:[%s7 + $0xc8] sm:$0xff]
    %v8650 = vld [vmem:[%s7 + $0xd0] sm:$0xff]
    %v8651 = vld [vmem:[%s7 + $0xd8] sm:$0xff]
    %v8652 = vld [vmem:[%s7 + $0xe0] sm:$0xff]
    %v8653 = vld [vmem:[%s7 + $0xe8] sm:$0xff]
    %v8654 = vld [vmem:[%s7 + $0xf0] sm:$0xff]
    %v8655 = vld [vmem:[%s7 + $0xf8] sm:$0xff]
    %v8656 = vld [vmem:[%s7 + $0x100] sm:$0xff]
    %v8657 = vld [vmem:[%s7 + $0x108] sm:$0xff]
    %v8658 = vld [vmem:[%s7 + $0x110] sm:$0xff]
    %v8659 = vld [vmem:[%s7 + $0x118] sm:$0xff]
    %v8660 = vld [vmem:[%s7 + $0x120] sm:$0xff]
    %v8661 = vld [vmem:[%s7 + $0x128] sm:$0xff]
    %v8662 = vld [vmem:[%s7 + $0x130] sm:$0xff]
    %v8663 = vld [vmem:[%s7 + $0x138] sm:$0xff]
    %v8664 = vld [vmem:[%s7 + $0x140] sm:$0xff]
    %v8665 = vld [vmem:[%s7 + $0x148] sm:$0xff]
    %v8666 = vld [vmem:[%s7 + $0x150] sm:$0xff]
    %v8667 = vld [vmem:[%s7 + $0x158] sm:$0xff]
    %v8668 = vld [vmem:[%s7 + $0x160] sm:$0xff]
    %v8669 = vld [vmem:[%s7 + $0x168] sm:$0xff]
    %v8670 = vld [vmem:[%s7 + $0x170] sm:$0xff]
    %v8671 = vld [vmem:[%s7 + $0x178] sm:$0xff]
    %v8672 = vld [vmem:[%s7 + $0x180] sm:$0xff]
    %v8673 = vld [vmem:[%s7 + $0x188] sm:$0xff]
    %v8674 = vld [vmem:[%s7 + $0x190] sm:$0xff]
    %v8675 = vld [vmem:[%s7 + $0x198] sm:$0xff]
    %v8676 = vld [vmem:[%s7 + $0x1a0] sm:$0xff]
    %v8677 = vld [vmem:[%s7 + $0x1a8] sm:$0xff]
    %v8678 = vld [vmem:[%s7 + $0x1b0] sm:$0xff]
    %v8679 = vld [vmem:[%s7 + $0x1b8] sm:$0xff]
    %v8680 = vld [vmem:[%s7 + $0x1c0] sm:$0xff]
    %v8681 = vld [vmem:[%s7 + $0x1c8] sm:$0xff]
    %v8682 = vld [vmem:[%s7 + $0x1d0] sm:$0xff]
    %v8683 = vld [vmem:[%s7 + $0x1d8] sm:$0xff]
    %v8684 = vld [vmem:[%s7 + $0x1e0] sm:$0xff]
    %v8685 = vld [vmem:[%s7 + $0x1e8] sm:$0xff]
    %v8686 = vld [vmem:[%s7 + $0x1f0] sm:$0xff]
    %v8687 = vld [vmem:[%s7 + $0x1f8] sm:$0xff]
    %v8688 = vld [vmem:[%s7 + $0x200] sm:$0xff]
    %v8689 = vld [vmem:[%s7 + $0x208] sm:$0xff]
    %v8690 = vld [vmem:[%s7 + $0x210] sm:$0xff]
    %v8691 = vld [vmem:[%s7 + $0x218] sm:$0xff]
    %v8692 = vld [vmem:[%s7 + $0x220] sm:$0xff]
    %v8693 = vld [vmem:[%s7 + $0x228] sm:$0xff]
    %v8694 = vld [vmem:[%s7 + $0x230] sm:$0xff]
    %v8695 = vld [vmem:[%s7 + $0x238] sm:$0xff]
    %v8696 = vld [vmem:[%s7 + $0x240] sm:$0xff]
    %v8697 = vld [vmem:[%s7 + $0x248] sm:$0xff]
    %v8698 = vld [vmem:[%s7 + $0x250] sm:$0xff]
    %v8699 = vld [vmem:[%s7 + $0x258] sm:$0xff]
    %v8700 = vld [vmem:[%s7 + $0x260] sm:$0xff]
    %v8701 = vld [vmem:[%s7 + $0x268] sm:$0xff]
    %v8702 = vld [vmem:[%s7 + $0x270] sm:$0xff]
    %v8703 = vld [vmem:[%s7 + $0x278] sm:$0xff]
    %v8704 = vld [vmem:[%s7 + $0x280] sm:$0xff]
    %v8705 = vld [vmem:[%s7 + $0x288] sm:$0xff]
    %v8706 = vld [vmem:[%s7 + $0x290] sm:$0xff]
    %v8707 = vld [vmem:[%s7 + $0x298] sm:$0xff]
    %v8708 = vld [vmem:[%s7 + $0x2a0] sm:$0xff]
    %v8709 = vld [vmem:[%s7 + $0x2a8] sm:$0xff]
    %v8710 = vld [vmem:[%s7 + $0x2b0] sm:$0xff]
    %v8711 = vld [vmem:[%s7 + $0x2b8] sm:$0xff]
    %v8712 = vld [vmem:[%s7 + $0x2c0] sm:$0xff]
    %v8713 = vld [vmem:[%s7 + $0x2c8] sm:$0xff]
    %v8714 = vld [vmem:[%s7 + $0x2d0] sm:$0xff]
    %v8715 = vld [vmem:[%s7 + $0x2d8] sm:$0xff]
    %v8716 = vld [vmem:[%s7 + $0x2e0] sm:$0xff]
    %v8717 = vld [vmem:[%s7 + $0x2e8] sm:$0xff]
    %v8718 = vld [vmem:[%s7 + $0x2f0] sm:$0xff]
    %v8719 = vld [vmem:[%s7 + $0x2f8] sm:$0xff]
    %v8720 = vld [vmem:[%s7 + $0x300] sm:$0xff]
    %v8721 = vld [vmem:[%s7 + $0x308] sm:$0xff]
    %v8722 = vld [vmem:[%s7 + $0x310] sm:$0xff]
    %v8723 = vld [vmem:[%s7 + $0x318] sm:$0xff]
    %v8724 = vld [vmem:[%s7 + $0x320] sm:$0xff]
    %v8725 = vld [vmem:[%s7 + $0x328] sm:$0xff]
    %v8726 = vld [vmem:[%s7 + $0x330] sm:$0xff]
    %v8727 = vld [vmem:[%s7 + $0x338] sm:$0xff]
    %v8728 = vld [vmem:[%s7 + $0x340] sm:$0xff]
    %v8729 = vld [vmem:[%s7 + $0x348] sm:$0xff]
    %v8730 = vld [vmem:[%s7 + $0x350] sm:$0xff]
    %v8731 = vld [vmem:[%s7 + $0x358] sm:$0xff]
    %v8732 = vld [vmem:[%s7 + $0x360] sm:$0xff]
    %v8733 = vld [vmem:[%s7 + $0x368] sm:$0xff]
    %v8734 = vld [vmem:[%s7 + $0x370] sm:$0xff]
    %v8735 = vld [vmem:[%s7 + $0x378] sm:$0xff]
    %v8736 = vld [vmem:[%s7 + $0x380] sm:$0xff]
    %v8737 = vld [vmem:[%s7 + $0x388] sm:$0xff]
    %v8738 = vld [vmem:[%s7 + $0x390] sm:$0xff]
    %v8739 = vld [vmem:[%s7 + $0x398] sm:$0xff]
    %v8740 = vld [vmem:[%s7 + $0x3a0] sm:$0xff]
    %v8741 = vld [vmem:[%s7 + $0x3a8] sm:$0xff]
    %v8742 = vld [vmem:[%s7 + $0x3b0] sm:$0xff]
    %v8743 = vld [vmem:[%s7 + $0x3b8] sm:$0xff]
    %v8744 = vld [vmem:[%s7 + $0x3c0] sm:$0xff]
    %v8745 = vld [vmem:[%s7 + $0x3c8] sm:$0xff]
    %v8746 = vld [vmem:[%s7 + $0x3d0] sm:$0xff]
    %v8747 = vld [vmem:[%s7 + $0x3d8] sm:$0xff]
    %v8748 = vld [vmem:[%s7 + $0x3e0] sm:$0xff]
    %v8749 = vld [vmem:[%s7 + $0x3e8] sm:$0xff]
    %v8750 = vld [vmem:[%s7 + $0x3f0] sm:$0xff]
    %v8751 = vld [vmem:[%s7 + $0x3f8] sm:$0xff]
    %v8752 = vld [vmem:[%s8] sm:$0x1]
    %v8754 = vperm.slane %v8752, 0
    %8756 = vmatpush.msra.mxu0 %v8639
    %8757 = vmatpush.msra.mxu0 %v8638
    %8758 = vmatpush.msra.mxu0 %v8637
    %8759 = vmatpush.msra.mxu0 %v8636
    %8760 = vmatpush.msra.mxu0 %v8635
    %8761 = vmatpush.msra.mxu0 %v8634
    %8762 = vmatpush.msra.mxu0 %v8633
    %8763 = vmatpush.msra.mxu0 %v8632
    %8764 = vmatpush.msra.mxu0 %v8631
    %8765 = vmatpush.msra.mxu0 %v8630
    %8766 = vmatpush.msra.mxu0 %v8629
    %8767 = vmatpush.msra.mxu0 %v8628
    %8768 = vmatpush.msra.mxu0 %v8627
    %8769 = vmatpush.msra.mxu0 %v8626
    %8770 = vmatpush.msra.mxu0 %v8625
    %8771 = vmatpush.msra.mxu0 %v8624
    %8772 = vmatmul.f32.gmra.mxu0 %v8616
    %v8773 = vpop.f32.mrf.mxu0
    %v8774 = vadd.f32 %v8754, %v8773
    %8775 = vdwg.mxu0
    %8776 = vmatpush.msra.mxu0 %v8655
    %8777 = vmatpush.msra.mxu0 %v8654
    %8778 = vmatpush.msra.mxu0 %v8653
    %8779 = vmatpush.msra.mxu0 %v8652
    %8780 = vmatpush.msra.mxu0 %v8651
    %8781 = vmatpush.msra.mxu0 %v8650
    %8782 = vmatpush.msra.mxu0 %v8649
    %8783 = vmatpush.msra.mxu0 %v8648
    %8784 = vmatpush.msra.mxu0 %v8647
    %8785 = vmatpush.msra.mxu0 %v8646
    %8786 = vmatpush.msra.mxu0 %v8645
    %8787 = vmatpush.msra.mxu0 %v8644
    %8788 = vmatpush.msra.mxu0 %v8643
    %8789 = vmatpush.msra.mxu0 %v8642
    %8790 = vmatpush.msra.mxu0 %v8641
    %8791 = vmatpush.msra.mxu0 %v8640
    %8792 = vmatmul.f32.gmra.mxu0 %v8617
    %v8793 = vpop.f32.mrf.mxu0
    %v8794 = vadd.f32 %v8774, %v8793
    %8795 = vdwg.mxu0
    %8796 = vmatpush.msra.mxu0 %v8671
    %8797 = vmatpush.msra.mxu0 %v8670
    %8798 = vmatpush.msra.mxu0 %v8669
    %8799 = vmatpush.msra.mxu0 %v8668
    %8800 = vmatpush.msra.mxu0 %v8667
    %8801 = vmatpush.msra.mxu0 %v8666
    %8802 = vmatpush.msra.mxu0 %v8665
    %8803 = vmatpush.msra.mxu0 %v8664
    %8804 = vmatpush.msra.mxu0 %v8663
    %8805 = vmatpush.msra.mxu0 %v8662
    %8806 = vmatpush.msra.mxu0 %v8661
    %8807 = vmatpush.msra.mxu0 %v8660
    %8808 = vmatpush.msra.mxu0 %v8659
    %8809 = vmatpush.msra.mxu0 %v8658
    %8810 = vmatpush.msra.mxu0 %v8657
    %8811 = vmatpush.msra.mxu0 %v8656
    %8812 = vmatmul.f32.gmra.mxu0 %v8618
    %v8813 = vpop.f32.mrf.mxu0
    %v8814 = vadd.f32 %v8794, %v8813
    %8815 = vdwg.mxu0
    %8816 = vmatpush.msra.mxu0 %v8687
    %8817 = vmatpush.msra.mxu0 %v8686
    %8818 = vmatpush.msra.mxu0 %v8685
    %8819 = vmatpush.msra.mxu0 %v8684
    %8820 = vmatpush.msra.mxu0 %v8683
    %8821 = vmatpush.msra.mxu0 %v8682
    %8822 = vmatpush.msra.mxu0 %v8681
    %8823 = vmatpush.msra.mxu0 %v8680
    %8824 = vmatpush.msra.mxu0 %v8679
    %8825 = vmatpush.msra.mxu0 %v8678
    %8826 = vmatpush.msra.mxu0 %v8677
    %8827 = vmatpush.msra.mxu0 %v8676
    %8828 = vmatpush.msra.mxu0 %v8675
    %8829 = vmatpush.msra.mxu0 %v8674
    %8830 = vmatpush.msra.mxu0 %v8673
    %8831 = vmatpush.msra.mxu0 %v8672
    %8832 = vmatmul.f32.gmra.mxu0 %v8619
    %v8833 = vpop.f32.mrf.mxu0
    %v8834 = vadd.f32 %v8814, %v8833
    %8835 = vdwg.mxu0
    %8836 = vmatpush.msra.mxu0 %v8703
    %8837 = vmatpush.msra.mxu0 %v8702
    %8838 = vmatpush.msra.mxu0 %v8701
    %8839 = vmatpush.msra.mxu0 %v8700
    %8840 = vmatpush.msra.mxu0 %v8699
    %8841 = vmatpush.msra.mxu0 %v8698
    %8842 = vmatpush.msra.mxu0 %v8697
    %8843 = vmatpush.msra.mxu0 %v8696
    %8844 = vmatpush.msra.mxu0 %v8695
    %8845 = vmatpush.msra.mxu0 %v8694
    %8846 = vmatpush.msra.mxu0 %v8693
    %8847 = vmatpush.msra.mxu0 %v8692
    %8848 = vmatpush.msra.mxu0 %v8691
    %8849 = vmatpush.msra.mxu0 %v8690
    %8850 = vmatpush.msra.mxu0 %v8689
    %8851 = vmatpush.msra.mxu0 %v8688
    %8852 = vmatmul.f32.gmra.mxu0 %v8620
    %v8853 = vpop.f32.mrf.mxu0
    %v8854 = vadd.f32 %v8834, %v8853
    %8855 = vdwg.mxu0
    %8856 = vmatpush.msra.mxu0 %v8719
    %8857 = vmatpush.msra.mxu0 %v8718
    %8858 = vmatpush.msra.mxu0 %v8717
    %8859 = vmatpush.msra.mxu0 %v8716
    %8860 = vmatpush.msra.mxu0 %v8715
    %8861 = vmatpush.msra.mxu0 %v8714
    %8862 = vmatpush.msra.mxu0 %v8713
    %8863 = vmatpush.msra.mxu0 %v8712
    %8864 = vmatpush.msra.mxu0 %v8711
    %8865 = vmatpush.msra.mxu0 %v8710
    %8866 = vmatpush.msra.mxu0 %v8709
    %8867 = vmatpush.msra.mxu0 %v8708
    %8868 = vmatpush.msra.mxu0 %v8707
    %8869 = vmatpush.msra.mxu0 %v8706
    %8870 = vmatpush.msra.mxu0 %v8705
    %8871 = vmatpush.msra.mxu0 %v8704
    %8872 = vmatmul.f32.gmra.mxu0 %v8621
    %v8873 = vpop.f32.mrf.mxu0
    %v8874 = vadd.f32 %v8854, %v8873
    %8875 = vdwg.mxu0
    %8876 = vmatpush.msra.mxu0 %v8735
    %8877 = vmatpush.msra.mxu0 %v8734
    %8878 = vmatpush.msra.mxu0 %v8733
    %8879 = vmatpush.msra.mxu0 %v8732
    %8880 = vmatpush.msra.mxu0 %v8731
    %8881 = vmatpush.msra.mxu0 %v8730
    %8882 = vmatpush.msra.mxu0 %v8729
    %8883 = vmatpush.msra.mxu0 %v8728
    %8884 = vmatpush.msra.mxu0 %v8727
    %8885 = vmatpush.msra.mxu0 %v8726
    %8886 = vmatpush.msra.mxu0 %v8725
    %8887 = vmatpush.msra.mxu0 %v8724
    %8888 = vmatpush.msra.mxu0 %v8723
    %8889 = vmatpush.msra.mxu0 %v8722
    %8890 = vmatpush.msra.mxu0 %v8721
    %8891 = vmatpush.msra.mxu0 %v8720
    %8892 = vmatmul.f32.gmra.mxu0 %v8622
    %v8893 = vpop.f32.mrf.mxu0
    %v8894 = vadd.f32 %v8874, %v8893
    %8895 = vdwg.mxu0
    %8896 = vmatpush.msra.mxu0 %v8751
    %8897 = vmatpush.msra.mxu0 %v8750
    %8898 = vmatpush.msra.mxu0 %v8749
    %8899 = vmatpush.msra.mxu0 %v8748
    %8900 = vmatpush.msra.mxu0 %v8747
    %8901 = vmatpush.msra.mxu0 %v8746
    %8902 = vmatpush.msra.mxu0 %v8745
    %8903 = vmatpush.msra.mxu0 %v8744
    %8904 = vmatpush.msra.mxu0 %v8743
    %8905 = vmatpush.msra.mxu0 %v8742
    %8906 = vmatpush.msra.mxu0 %v8741
    %8907 = vmatpush.msra.mxu0 %v8740
    %8908 = vmatpush.msra.mxu0 %v8739
    %8909 = vmatpush.msra.mxu0 %v8738
    %8910 = vmatpush.msra.mxu0 %v8737
    %8911 = vmatpush.msra.mxu0 %v8736
    %8912 = vmatmul.f32.gmra.mxu0 %v8623
    %v8913 = vpop.f32.mrf.mxu0
    %v8914 = vadd.f32 %v8894, %v8913
    %8915 = vdwg.mxu0
    %vm8916 = vcmask 80896
    %8917 = vst.msk [vmem:[%s9] sm:$0xff] %vm8916, %v8914
    // Predicated region
    $region46: #{model_c_forward.1} parent=1 // pred_check
      _
    $region47: #{model_c_forward.1} parent=1 // pred_check_branch
      %8919 = sbr.rel (0) target = $region49
    $region48: #{model_c_forward.1} parent=1 // pred_region
      _
    $region49: #{model_c_forward.1} parent=1 // pred_fallthru
      _
    // Predicated region
    $region50: #{model_c_forward.1} parent=1 // pred_check
      _
    $region51: #{model_c_forward.1} parent=1 // pred_check_branch
      %8921 = sbr.rel (0) target = $region53
    $region52: #{model_c_forward.1} parent=1 // pred_region
      _
    $region53: #{model_c_forward.1} parent=1 // pred_fallthru
      _
    %8922 = vsyncpa [#allocation5], 1
    %8923 = vsyncpa [#allocation7], 1

</llo_original>
